<compile_context>
chip_gen: v7x
topology: tpu7x:2x2x1
jax: 0.10.0
libtpu: 0.0.40
codegen_flags: <defaults>
</compile_context>

<pallas_src>
import jax
import jax.numpy as jnp
from jax import lax
from jax.experimental import pallas as pl
from jax.experimental.pallas import tpu as pltpu

# Full-precision f32 matmuls everywhere (kernel dots, wrapper GEMM, reference).
jax.config.update("jax_default_matmul_precision", "highest")

EPS = 1e-5
N_GROUPS = 8


def _mish_fast(v):
    # mish(x) = x * tanh(softplus(x)) = x * (u^2 + 2u) / (u^2 + 2u + 2), u = exp(x)
    # (exact identity; clamp avoids exp overflow, ratio -> 1 for large x).
    u = jnp.exp(jnp.minimum(v, 20.0))
    p = u * (u + 2.0)
    return v * p / (p + 2.0)


def _make_kernel(Cout, T, K, Bb):
    pad = (K - 1) // 2
    Nb = Bb * T

    def group_norm(y, gamma, beta, A, seg, segT):
        # y: (C, Nb) lane-dense; A: (C, C) block-diagonal group-average (incl. 1/n)
        rs = jnp.dot(y, segT, preferred_element_type=jnp.float32)       # (C, Bb)
        rq = jnp.dot(y * y, segT, preferred_element_type=jnp.float32)   # (C, Bb)
        mean = jnp.dot(A, rs, preferred_element_type=jnp.float32)       # (C, Bb)
        msq = jnp.dot(A, rq, preferred_element_type=jnp.float32)        # (C, Bb)
        var = jnp.maximum(msq - mean * mean, 0.0)
        inv = lax.rsqrt(var + EPS)
        a = inv * gamma                                                  # (C, Bb)
        sh = beta - mean * a                                             # (C, Bb)
        return (y * jnp.dot(a, seg, preferred_element_type=jnp.float32)
                + jnp.dot(sh, seg, preferred_element_type=jnp.float32))

    def kernel(x_ref, emb_ref, w1_ref, w2_ref, chan_ref, A_ref,
               seg_ref, segT_ref, out_ref):
        chan = chan_ref[...]          # (Cout, 8): [b1, rb, g1w, g1b, b2, g2w, g2b, 0]
        A = A_ref[...]
        seg = seg_ref[...]            # (Bb, Nb)
        segT = segT_ref[...]          # (Nb, Bb)

        # conv1 (im2col prebuilt in wrapper) + residual 1x1 conv: one MXU dot
        both = jnp.dot(w1_ref[...], x_ref[...],
                       preferred_element_type=jnp.float32)               # (2C, Nb)
        y = both[:Cout] + chan[:, 0:1]                                    # conv1 + b1
        res = both[Cout:] + chan[:, 1:2]                                  # residual + rb

        # block 0: GroupNorm -> Mish, then add fused time/cond/bool embedding bias
        y = _mish_fast(group_norm(y, chan[:, 2:3], chan[:, 3:4], A, seg, segT))
        y = y + emb_ref[...]

        # conv2: K-tap im2col slab via lane rolls + per-sequence boundary masks
        t_idx = lax.broadcasted_iota(jnp.int32, (1, Nb), 1) % T
        taps = []
        for k in range(K):                      # static unroll, K small
            s = k - pad
            shifted = y if s == 0 else pltpu.roll(y, (-s) % Nb, 1)
            valid = (t_idx + s >= 0) & (t_idx + s < T)
            taps.append(jnp.where(valid, shifted, 0.0))
        slab = jnp.concatenate(taps, axis=0)                              # (K*C, Nb)
        y2 = jnp.dot(w2_ref[...], slab,
                     preferred_element_type=jnp.float32) + chan[:, 4:5]
        y2 = _mish_fast(group_norm(y2, chan[:, 5:6], chan[:, 6:7], A, seg, segT))

        out_ref[...] = y2 + res

    return kernel


def residual_temporal_block(x, t, cemb, bemb, params, n_groups=N_GROUPS,
                            block_batch=8):
    """x: (B, Cin, T); t/cemb/bemb: (B, E). Returns (B, Cout, T)."""
    B, Cin, T = x.shape
    Cout, _, K = params["w1"].shape
    pad = (K - 1) // 2

    Bb = block_batch                      # Bb*T should be a multiple of 128
    Bp = ((B + Bb - 1) // Bb) * Bb        # pad batch to a whole number of blocks
    Nb = Bb * T
    pad_b = Bp - B

    x_p = jnp.pad(x.astype(jnp.float32), ((0, pad_b), (0, 0), (0, 0)))

    # ---- host-side (XLA) layout plumbing ------------------------------------
    # 1) im2col over time for conv1; row k*Cin + c, column b*T + t.
    xp = jnp.pad(x_p, ((0, 0), (0, 0), (pad, pad)))
    cols = jnp.stack([xp[:, :, k:k + T] for k in range(K)], axis=0)   # (K,Bp,Cin,T)
    x_im2col = cols.transpose(0, 2, 1, 3).reshape(K * Cin, Bp * T)

    # 2) the three (Mish -> Linear) embedding MLPs collapse to one GEMM.
    mish = lambda v: v * jnp.tanh(jax.nn.softplus(v))
    e_all = jnp.concatenate([mish(t), mish(cemb), mish(bemb)], axis=-1)     # (B, 3E)
    W_all = jnp.concatenate([params["tw"], params["cw"], params["bw"]], axis=-1)
    emb = e_all @ W_all.T + (params["tb"] + params["cb"] + params["bb"])    # (B, Cout)
    emb = jnp.pad(emb, ((0, pad_b), (0, 0)))
    emb_full = jnp.repeat(emb.T, T, axis=1)                                 # (Cout, Bp*T)

    # 3) fused conv1 + residual weights, flattened conv2 weight, packed channel vecs.
    w1_flat = jnp.transpose(params["w1"], (0, 2, 1)).reshape(Cout, K * Cin)
    rw_exp = jnp.zeros((Cout, K * Cin), jnp.float32)
    rw_exp = rw_exp.at[:, pad * Cin:(pad + 1) * Cin].set(params["rw"])
    w1cat = jnp.concatenate([w1_flat, rw_exp], axis=0)                      # (2Cout, K*Cin)
    w2_flat = jnp.transpose(params["w2"], (0, 2, 1)).reshape(Cout, K * Cout)

    chan = jnp.stack([params["b1"], params["rb"],
                      params["g1_w"], params["g1_b"], params["b2"],
                      params["g2_w"], params["g2_b"],
                      jnp.zeros((Cout,), jnp.float32)], axis=1)             # (Cout, 8)

    # 4) group-average matrix (includes 1/n) and per-batch lane-segment matrices.
    gid = jnp.arange(Cout) // (Cout // n_groups)
    A = (gid[:, None] == gid[None, :]).astype(jnp.float32) / float(
        (Cout // n_groups) * T)
    seg_col = jnp.arange(Nb) // T
    seg = (jnp.arange(Bb)[:, None] == seg_col[None, :]).astype(jnp.float32)  # (Bb, Nb)
    segT = seg.T                                                             # (Nb, Bb)

    kernel = _make_kernel(Cout, T, K, Bb)
    full2d = lambda a: pl.BlockSpec(a.shape, lambda i: (0, 0))

    out_lane = pl.pallas_call(
        kernel,
        out_shape=jax.ShapeDtypeStruct((Cout, Bp * T), jnp.float32),
        grid_spec=pltpu.PrefetchScalarGridSpec(
            num_scalar_prefetch=0,
            grid=(Bp // Bb,),
            in_specs=[
                pl.BlockSpec((K * Cin, Nb), lambda i: (0, i)),   # x im2col block
                pl.BlockSpec((Cout, Nb), lambda i: (0, i)),      # embedding bias block
                full2d(w1cat), full2d(w2_flat), full2d(chan),
                full2d(A), full2d(seg), full2d(segT),
            ],
            out_specs=pl.BlockSpec((Cout, Nb), lambda i: (0, i)),
        ),
        compiler_params=pltpu.CompilerParams(
            dimension_semantics=("parallel",)),
    )(x_im2col, emb_full, w1cat, w2_flat, chan, A, seg, segT)

    out = out_lane.reshape(Cout, Bp, T).transpose(1, 0, 2)   # (Bp, Cout, T)
    return out[:B]


def init_params(key, Cin, Cout, E, K):
    ks = jax.random.split(key, 16)
    u = lambda k, shape, fan: (jax.random.uniform(k, shape, jnp.float32, -1.0, 1.0)
                               / jnp.sqrt(float(fan)))
    return {
        # Conv1dBlock 0
        "w1": u(ks[0], (Cout, Cin, K), Cin * K), "b1": u(ks[1], (Cout,), Cin * K),
        "g1_w": u(ks[2], (Cout,), 1) + 1.0, "g1_b": u(ks[3], (Cout,), 1),
        # Conv1dBlock 1
        "w2": u(ks[4], (Cout, Cout, K), Cout * K), "b2": u(ks[5], (Cout,), Cout * K),
        "g2_w": u(ks[6], (Cout,), 1) + 1.0, "g2_b": u(ks[7], (Cout,), 1),
        # time / cond / bool MLPs (Linear(E, Cout))
        "tw": u(ks[8], (Cout, E), E), "tb": u(ks[9], (Cout,), E),
        "cw": u(ks[10], (Cout, E), E), "cb": u(ks[11], (Cout,), E),
        "bw": u(ks[12], (Cout, E), E), "bb": u(ks[13], (Cout,), E),
        # residual 1x1 conv (inp_channels != out_channels)
        "rw": u(ks[14], (Cout, Cin), Cin), "rb": u(ks[15], (Cout,), Cin),
    }


def reference(x, t, cemb, bemb, params, n_groups=N_GROUPS):
    # pure-JAX reference mirroring the PyTorch forward
    def mish(v):
        return v * jnp.tanh(jax.nn.softplus(v))

    def conv1d(xx, w, b):
        pad = (w.shape[2] - 1) // 2
        xp = jnp.pad(xx, ((0, 0), (0, 0), (pad, pad)))
        T = xx.shape[-1]
        acc = jnp.zeros((xx.shape[0], w.shape[0], T), jnp.float32)
        for k in range(w.shape[2]):
            acc = acc + jnp.einsum("oi,bit->bot", w[:, :, k], xp[:, :, k:k + T])
        return acc + b[None, :, None]

    def gn(y, gw, gb):
        B, C, T = y.shape
        y4 = y.reshape(B, n_groups, C // n_groups, T)
        m = jnp.mean(y4, axis=(2, 3), keepdims=True)
        v = jnp.mean((y4 - m) ** 2, axis=(2, 3), keepdims=True)
        yn = ((y4 - m) / jnp.sqrt(v + EPS)).reshape(B, C, T)
        return yn * gw[None, :, None] + gb[None, :, None]

    def block(xx, w, b, gw, gb):
        return mish(gn(conv1d(xx, w, b), gw, gb))

    def emb(e, w, b):
        return (mish(e) @ w.T + b)[:, :, None]

    out = block(x, params["w1"], params["b1"], params["g1_w"], params["g1_b"])
    out = (out + emb(t, params["tw"], params["tb"])
           + emb(cemb, params["cw"], params["cb"])
           + emb(bemb, params["bw"], params["bb"]))
    out = block(out, params["w2"], params["b2"], params["g2_w"], params["g2_b"])
    res = jnp.einsum("oi,bit->bot", params["rw"], x) + params["rb"][None, :, None]
    return out + res


if __name__ == "__main__":
    # B=16 with block_batch=8 -> grid of 2 parallel steps, 128-wide lane blocks.
    B, Cin, Cout, T, E, K = 16, 4, 16, 16, 32, 5

    key = jax.random.PRNGKey(0)
    kx, kt, kc, kb, kp = jax.random.split(key, 5)
    x = jax.random.normal(kx, (B, Cin, T), jnp.float32)
    t = jax.random.normal(kt, (B, E), jnp.float32)
    cemb = jax.random.normal(kc, (B, E), jnp.float32)
    bemb = jax.random.normal(kb, (B, E), jnp.float32)
    params = init_params(kp, Cin, Cout, E, K)

    fwd = jax.jit(residual_temporal_block)
    out = jax.block_until_ready(fwd(x, t, cemb, bemb, params))

    ref = reference(x, t, cemb, bemb, params)
    assert out.shape == (B, Cout, T)
    err = float(jnp.max(jnp.abs(out - ref)))
    assert jnp.allclose(out, ref, atol=2e-3, rtol=2e-3), err

    print("KERNEL_OK")
</pallas_src>

<mosaic_0001>
module attributes {stable_mosaic.version = 11 : i64} {
  func.func @kernel(%arg0: i32, %arg1: memref<20x128xf32, #tpu.memory_space<vmem>>, %arg2: memref<16x128xf32, #tpu.memory_space<vmem>>, %arg3: memref<32x20xf32, #tpu.memory_space<vmem>>, %arg4: memref<16x80xf32, #tpu.memory_space<vmem>>, %arg5: memref<16x8xf32, #tpu.memory_space<vmem>>, %arg6: memref<16x16xf32, #tpu.memory_space<vmem>>, %arg7: memref<8x128xf32, #tpu.memory_space<vmem>>, %arg8: memref<128x8xf32, #tpu.memory_space<vmem>>, %arg9: memref<16x128xf32, #tpu.memory_space<vmem>>) attributes {dimension_semantics = [#tpu.dimension_semantics<parallel>], iteration_bounds = array<i64: 2>, scalar_prefetch = 0 : i64, scratch_operands = 0 : i64, tpu.core_type = #tpu.core_type<tc>, window_params = [{transform_indices = @transform_0, window_bounds = array<i64: 20, 128>}, {transform_indices = @transform_1, window_bounds = array<i64: 16, 128>}, {pipeline_mode = #tpu.pipeline_mode<synchronous>, transform_indices = @transform_2, window_bounds = array<i64: 32, 20>}, {pipeline_mode = #tpu.pipeline_mode<synchronous>, transform_indices = @transform_3, window_bounds = array<i64: 16, 80>}, {pipeline_mode = #tpu.pipeline_mode<synchronous>, transform_indices = @transform_4, window_bounds = array<i64: 16, 8>}, {pipeline_mode = #tpu.pipeline_mode<synchronous>, transform_indices = @transform_5, window_bounds = array<i64: 16, 16>}, {pipeline_mode = #tpu.pipeline_mode<synchronous>, transform_indices = @transform_6, window_bounds = array<i64: 8, 128>}, {pipeline_mode = #tpu.pipeline_mode<synchronous>, transform_indices = @transform_7, window_bounds = array<i64: 128, 8>}, {transform_indices = @transform_8, window_bounds = array<i64: 16, 128>}]} {
    %c0 = arith.constant 0 : index
    %c0_0 = arith.constant 0 : index
    %0 = vector.load %arg5[%c0, %c0_0] : memref<16x8xf32, #tpu.memory_space<vmem>>, vector<16x8xf32>
    %c0_1 = arith.constant 0 : index
    %c0_2 = arith.constant 0 : index
    %1 = vector.load %arg6[%c0_1, %c0_2] : memref<16x16xf32, #tpu.memory_space<vmem>>, vector<16x16xf32>
    %c0_3 = arith.constant 0 : index
    %c0_4 = arith.constant 0 : index
    %2 = vector.load %arg7[%c0_3, %c0_4] : memref<8x128xf32, #tpu.memory_space<vmem>>, vector<8x128xf32>
    %c0_5 = arith.constant 0 : index
    %c0_6 = arith.constant 0 : index
    %3 = vector.load %arg8[%c0_5, %c0_6] : memref<128x8xf32, #tpu.memory_space<vmem>>, vector<128x8xf32>
    %c0_7 = arith.constant 0 : index
    %c0_8 = arith.constant 0 : index
    %4 = vector.load %arg3[%c0_7, %c0_8] : memref<32x20xf32, #tpu.memory_space<vmem>>, vector<32x20xf32>
    %c0_9 = arith.constant 0 : index
    %c0_10 = arith.constant 0 : index
    %5 = vector.load %arg1[%c0_9, %c0_10] : memref<20x128xf32, #tpu.memory_space<vmem>>, vector<20x128xf32>
    %cst = arith.constant dense<0.000000e+00> : vector<32x128xf32>
    %6 = tpu.matmul %4, %5, %cst {dimension_numbers = #tpu.dot_dimension_numbers<[1], [0], [0], [1], [0, 0, 1, 1], [], []>, precision = #tpu.contract_precision<fp32>} : vector<32x20xf32>, vector<20x128xf32>, vector<32x128xf32> -> vector<32x128xf32>
    %7 = vector.extract_strided_slice %6 {offsets = [0, 0], sizes = [16, 128], strides = [1, 1]} : vector<32x128xf32> to vector<16x128xf32>
    %8 = vector.extract_strided_slice %0 {offsets = [0, 0], sizes = [16, 1], strides = [1, 1]} : vector<16x8xf32> to vector<16x1xf32>
    %9 = vector.broadcast %8 : vector<16x1xf32> to vector<16x128xf32>
    %10 = arith.addf %7, %9 : vector<16x128xf32>
    %11 = vector.extract_strided_slice %6 {offsets = [16, 0], sizes = [16, 128], strides = [1, 1]} : vector<32x128xf32> to vector<16x128xf32>
    %12 = vector.extract_strided_slice %0 {offsets = [0, 1], sizes = [16, 1], strides = [1, 1]} : vector<16x8xf32> to vector<16x1xf32>
    %13 = vector.broadcast %12 : vector<16x1xf32> to vector<16x128xf32>
    %14 = arith.addf %11, %13 : vector<16x128xf32>
    %15 = vector.extract_strided_slice %0 {offsets = [0, 2], sizes = [16, 1], strides = [1, 1]} : vector<16x8xf32> to vector<16x1xf32>
    %16 = vector.extract_strided_slice %0 {offsets = [0, 3], sizes = [16, 1], strides = [1, 1]} : vector<16x8xf32> to vector<16x1xf32>
    %cst_11 = arith.constant dense<0.000000e+00> : vector<16x8xf32>
    %17 = tpu.matmul %10, %3, %cst_11 {dimension_numbers = #tpu.dot_dimension_numbers<[1], [0], [0], [1], [0, 0, 1, 1], [], []>, precision = #tpu.contract_precision<fp32>} : vector<16x128xf32>, vector<128x8xf32>, vector<16x8xf32> -> vector<16x8xf32>
    %18 = arith.mulf %10, %10 : vector<16x128xf32>
    %cst_12 = arith.constant dense<0.000000e+00> : vector<16x8xf32>
    %19 = tpu.matmul %18, %3, %cst_12 {dimension_numbers = #tpu.dot_dimension_numbers<[1], [0], [0], [1], [0, 0, 1, 1], [], []>, precision = #tpu.contract_precision<fp32>} : vector<16x128xf32>, vector<128x8xf32>, vector<16x8xf32> -> vector<16x8xf32>
    %cst_13 = arith.constant dense<0.000000e+00> : vector<16x8xf32>
    %20 = tpu.matmul %1, %17, %cst_13 {dimension_numbers = #tpu.dot_dimension_numbers<[1], [0], [0], [1], [0, 0, 1, 1], [], []>, precision = #tpu.contract_precision<fp32>} : vector<16x16xf32>, vector<16x8xf32>, vector<16x8xf32> -> vector<16x8xf32>
    %cst_14 = arith.constant dense<0.000000e+00> : vector<16x8xf32>
    %21 = tpu.matmul %1, %19, %cst_14 {dimension_numbers = #tpu.dot_dimension_numbers<[1], [0], [0], [1], [0, 0, 1, 1], [], []>, precision = #tpu.contract_precision<fp32>} : vector<16x16xf32>, vector<16x8xf32>, vector<16x8xf32> -> vector<16x8xf32>
    %22 = arith.mulf %20, %20 : vector<16x8xf32>
    %23 = arith.subf %21, %22 : vector<16x8xf32>
    %cst_15 = arith.constant 0.000000e+00 : f32
    %24 = vector.broadcast %cst_15 : f32 to vector<16x8xf32>
    %25 = arith.maximumf %23, %24 : vector<16x8xf32>
    %cst_16 = arith.constant 9.99999974E-6 : f32
    %26 = vector.broadcast %cst_16 : f32 to vector<16x8xf32>
    %27 = arith.addf %25, %26 : vector<16x8xf32>
    %28 = math.rsqrt %27 : vector<16x8xf32>
    %29 = vector.broadcast %15 : vector<16x1xf32> to vector<16x8xf32>
    %30 = arith.mulf %28, %29 : vector<16x8xf32>
    %31 = arith.mulf %20, %30 : vector<16x8xf32>
    %32 = vector.broadcast %16 : vector<16x1xf32> to vector<16x8xf32>
    %33 = arith.subf %32, %31 : vector<16x8xf32>
    %cst_17 = arith.constant dense<0.000000e+00> : vector<16x128xf32>
    %34 = tpu.matmul %30, %2, %cst_17 {dimension_numbers = #tpu.dot_dimension_numbers<[1], [0], [0], [1], [0, 0, 1, 1], [], []>, precision = #tpu.contract_precision<fp32>} : vector<16x8xf32>, vector<8x128xf32>, vector<16x128xf32> -> vector<16x128xf32>
    %35 = arith.mulf %10, %34 : vector<16x128xf32>
    %cst_18 = arith.constant dense<0.000000e+00> : vector<16x128xf32>
    %36 = tpu.matmul %33, %2, %cst_18 {dimension_numbers = #tpu.dot_dimension_numbers<[1], [0], [0], [1], [0, 0, 1, 1], [], []>, precision = #tpu.contract_precision<fp32>} : vector<16x8xf32>, vector<8x128xf32>, vector<16x128xf32> -> vector<16x128xf32>
    %37 = arith.addf %35, %36 : vector<16x128xf32>
    %cst_19 = arith.constant 2.000000e+01 : f32
    %38 = vector.broadcast %cst_19 : f32 to vector<16x128xf32>
    %39 = arith.minimumf %37, %38 : vector<16x128xf32>
    %40 = math.exp %39 : vector<16x128xf32>
    %cst_20 = arith.constant 2.000000e+00 : f32
    %41 = vector.broadcast %cst_20 : f32 to vector<16x128xf32>
    %42 = arith.addf %40, %41 : vector<16x128xf32>
    %43 = arith.mulf %40, %42 : vector<16x128xf32>
    %44 = arith.mulf %37, %43 : vector<16x128xf32>
    %cst_21 = arith.constant 2.000000e+00 : f32
    %45 = vector.broadcast %cst_21 : f32 to vector<16x128xf32>
    %46 = arith.addf %43, %45 : vector<16x128xf32>
    %47 = arith.divf %44, %46 : vector<16x128xf32>
    %c0_22 = arith.constant 0 : index
    %c0_23 = arith.constant 0 : index
    %48 = vector.load %arg2[%c0_22, %c0_23] : memref<16x128xf32, #tpu.memory_space<vmem>>, vector<16x128xf32>
    %49 = arith.addf %47, %48 : vector<16x128xf32>
    %50 = tpu.iota {dimensions = array<i32: 1>} : vector<1x128xi32>
    %c16_i32 = arith.constant 16 : i32
    %c0_i32 = arith.constant 0 : i32
    %51 = arith.cmpi eq, %c16_i32, %c0_i32 : i32
    %c1_i32 = arith.constant 1 : i32
    %52 = arith.select %51, %c1_i32, %c16_i32 : i32
    %53 = vector.broadcast %52 : i32 to vector<1x128xi32>
    %54 = arith.remsi %50, %53 : vector<1x128xi32>
    %c0_i32_24 = arith.constant 0 : i32
    %55 = vector.broadcast %c0_i32_24 : i32 to vector<1x128xi32>
    %56 = arith.cmpi ne, %54, %55 : vector<1x128xi32>
    %c0_i32_25 = arith.constant 0 : i32
    %57 = vector.broadcast %c0_i32_25 : i32 to vector<1x128xi32>
    %58 = arith.cmpi slt, %54, %57 : vector<1x128xi32>
    %c0_i32_26 = arith.constant 0 : i32
    %59 = arith.cmpi slt, %52, %c0_i32_26 : i32
    %60 = vector.broadcast %59 : i1 to vector<1x128xi1>
    %61 = vector.broadcast %60 : vector<1x128xi1> to vector<1x128xi1>
    %62 = arith.xori %58, %61 : vector<1x128xi1>
    %63 = arith.andi %62, %56 : vector<1x128xi1>
    %64 = vector.broadcast %52 : i32 to vector<1x128xi32>
    %65 = arith.addi %54, %64 : vector<1x128xi32>
    %66 = arith.select %63, %65, %54 : vector<1x128xi1>, vector<1x128xi32>
    %c2_i32 = arith.constant 2 : i32
    %67 = tpu.dynamic_rotate %49 by %c2_i32 dim 1 : vector<16x128xf32>, i32 -> vector<16x128xf32>
    %c-2_i32 = arith.constant -2 : i32
    %68 = vector.broadcast %c-2_i32 : i32 to vector<1x128xi32>
    %69 = arith.addi %66, %68 : vector<1x128xi32>
    %c0_i32_27 = arith.constant 0 : i32
    %70 = vector.broadcast %c0_i32_27 : i32 to vector<1x128xi32>
    %71 = arith.cmpi sge, %69, %70 : vector<1x128xi32>
    %c-2_i32_28 = arith.constant -2 : i32
    %72 = vector.broadcast %c-2_i32_28 : i32 to vector<1x128xi32>
    %73 = arith.addi %66, %72 : vector<1x128xi32>
    %c16_i32_29 = arith.constant 16 : i32
    %74 = vector.broadcast %c16_i32_29 : i32 to vector<1x128xi32>
    %75 = arith.cmpi slt, %73, %74 : vector<1x128xi32>
    %76 = arith.andi %71, %75 : vector<1x128xi1>
    %cst_30 = arith.constant 0.000000e+00 : f32
    %77 = vector.shape_cast %76 : vector<1x128xi1> to vector<1x128xi1>
    %78 = vector.broadcast %77 : vector<1x128xi1> to vector<16x128xi1>
    %79 = vector.broadcast %cst_30 : f32 to vector<16x128xf32>
    %80 = arith.select %78, %67, %79 : vector<16x128xi1>, vector<16x128xf32>
    %c1_i32_31 = arith.constant 1 : i32
    %81 = tpu.dynamic_rotate %49 by %c1_i32_31 dim 1 : vector<16x128xf32>, i32 -> vector<16x128xf32>
    %c-1_i32 = arith.constant -1 : i32
    %82 = vector.broadcast %c-1_i32 : i32 to vector<1x128xi32>
    %83 = arith.addi %66, %82 : vector<1x128xi32>
    %c0_i32_32 = arith.constant 0 : i32
    %84 = vector.broadcast %c0_i32_32 : i32 to vector<1x128xi32>
    %85 = arith.cmpi sge, %83, %84 : vector<1x128xi32>
    %c-1_i32_33 = arith.constant -1 : i32
    %86 = vector.broadcast %c-1_i32_33 : i32 to vector<1x128xi32>
    %87 = arith.addi %66, %86 : vector<1x128xi32>
    %c16_i32_34 = arith.constant 16 : i32
    %88 = vector.broadcast %c16_i32_34 : i32 to vector<1x128xi32>
    %89 = arith.cmpi slt, %87, %88 : vector<1x128xi32>
    %90 = arith.andi %85, %89 : vector<1x128xi1>
    %cst_35 = arith.constant 0.000000e+00 : f32
    %91 = vector.shape_cast %90 : vector<1x128xi1> to vector<1x128xi1>
    %92 = vector.broadcast %91 : vector<1x128xi1> to vector<16x128xi1>
    %93 = vector.broadcast %cst_35 : f32 to vector<16x128xf32>
    %94 = arith.select %92, %81, %93 : vector<16x128xi1>, vector<16x128xf32>
    %c0_i32_36 = arith.constant 0 : i32
    %95 = vector.broadcast %c0_i32_36 : i32 to vector<1x128xi32>
    %96 = arith.addi %66, %95 : vector<1x128xi32>
    %c0_i32_37 = arith.constant 0 : i32
    %97 = vector.broadcast %c0_i32_37 : i32 to vector<1x128xi32>
    %98 = arith.cmpi sge, %96, %97 : vector<1x128xi32>
    %c0_i32_38 = arith.constant 0 : i32
    %99 = vector.broadcast %c0_i32_38 : i32 to vector<1x128xi32>
    %100 = arith.addi %66, %99 : vector<1x128xi32>
    %c16_i32_39 = arith.constant 16 : i32
    %101 = vector.broadcast %c16_i32_39 : i32 to vector<1x128xi32>
    %102 = arith.cmpi slt, %100, %101 : vector<1x128xi32>
    %103 = arith.andi %98, %102 : vector<1x128xi1>
    %cst_40 = arith.constant 0.000000e+00 : f32
    %104 = vector.shape_cast %103 : vector<1x128xi1> to vector<1x128xi1>
    %105 = vector.broadcast %104 : vector<1x128xi1> to vector<16x128xi1>
    %106 = vector.broadcast %cst_40 : f32 to vector<16x128xf32>
    %107 = arith.select %105, %49, %106 : vector<16x128xi1>, vector<16x128xf32>
    %c127_i32 = arith.constant 127 : i32
    %108 = tpu.dynamic_rotate %49 by %c127_i32 dim 1 : vector<16x128xf32>, i32 -> vector<16x128xf32>
    %c1_i32_41 = arith.constant 1 : i32
    %109 = vector.broadcast %c1_i32_41 : i32 to vector<1x128xi32>
    %110 = arith.addi %66, %109 : vector<1x128xi32>
    %c0_i32_42 = arith.constant 0 : i32
    %111 = vector.broadcast %c0_i32_42 : i32 to vector<1x128xi32>
    %112 = arith.cmpi sge, %110, %111 : vector<1x128xi32>
    %c1_i32_43 = arith.constant 1 : i32
    %113 = vector.broadcast %c1_i32_43 : i32 to vector<1x128xi32>
    %114 = arith.addi %66, %113 : vector<1x128xi32>
    %c16_i32_44 = arith.constant 16 : i32
    %115 = vector.broadcast %c16_i32_44 : i32 to vector<1x128xi32>
    %116 = arith.cmpi slt, %114, %115 : vector<1x128xi32>
    %117 = arith.andi %112, %116 : vector<1x128xi1>
    %cst_45 = arith.constant 0.000000e+00 : f32
    %118 = vector.shape_cast %117 : vector<1x128xi1> to vector<1x128xi1>
    %119 = vector.broadcast %118 : vector<1x128xi1> to vector<16x128xi1>
    %120 = vector.broadcast %cst_45 : f32 to vector<16x128xf32>
    %121 = arith.select %119, %108, %120 : vector<16x128xi1>, vector<16x128xf32>
    %c126_i32 = arith.constant 126 : i32
    %122 = tpu.dynamic_rotate %49 by %c126_i32 dim 1 : vector<16x128xf32>, i32 -> vector<16x128xf32>
    %c2_i32_46 = arith.constant 2 : i32
    %123 = vector.broadcast %c2_i32_46 : i32 to vector<1x128xi32>
    %124 = arith.addi %66, %123 : vector<1x128xi32>
    %c0_i32_47 = arith.constant 0 : i32
    %125 = vector.broadcast %c0_i32_47 : i32 to vector<1x128xi32>
    %126 = arith.cmpi sge, %124, %125 : vector<1x128xi32>
    %c2_i32_48 = arith.constant 2 : i32
    %127 = vector.broadcast %c2_i32_48 : i32 to vector<1x128xi32>
    %128 = arith.addi %66, %127 : vector<1x128xi32>
    %c16_i32_49 = arith.constant 16 : i32
    %129 = vector.broadcast %c16_i32_49 : i32 to vector<1x128xi32>
    %130 = arith.cmpi slt, %128, %129 : vector<1x128xi32>
    %131 = arith.andi %126, %130 : vector<1x128xi1>
    %cst_50 = arith.constant 0.000000e+00 : f32
    %132 = vector.shape_cast %131 : vector<1x128xi1> to vector<1x128xi1>
    %133 = vector.broadcast %132 : vector<1x128xi1> to vector<16x128xi1>
    %134 = vector.broadcast %cst_50 : f32 to vector<16x128xf32>
    %135 = arith.select %133, %122, %134 : vector<16x128xi1>, vector<16x128xf32>
    %136 = tpu.concatenate %80, %94, %107, %121, %135 in 0 : vector<16x128xf32>, vector<16x128xf32>, vector<16x128xf32>, vector<16x128xf32>, vector<16x128xf32> -> vector<80x128xf32>
    %c0_51 = arith.constant 0 : index
    %c0_52 = arith.constant 0 : index
    %137 = vector.load %arg4[%c0_51, %c0_52] : memref<16x80xf32, #tpu.memory_space<vmem>>, vector<16x80xf32>
    %cst_53 = arith.constant dense<0.000000e+00> : vector<16x128xf32>
    %138 = tpu.matmul %137, %136, %cst_53 {dimension_numbers = #tpu.dot_dimension_numbers<[1], [0], [0], [1], [0, 0, 1, 1], [], []>, precision = #tpu.contract_precision<fp32>} : vector<16x80xf32>, vector<80x128xf32>, vector<16x128xf32> -> vector<16x128xf32>
    %139 = vector.extract_strided_slice %0 {offsets = [0, 4], sizes = [16, 1], strides = [1, 1]} : vector<16x8xf32> to vector<16x1xf32>
    %140 = vector.broadcast %139 : vector<16x1xf32> to vector<16x128xf32>
    %141 = arith.addf %138, %140 : vector<16x128xf32>
    %142 = vector.extract_strided_slice %0 {offsets = [0, 5], sizes = [16, 1], strides = [1, 1]} : vector<16x8xf32> to vector<16x1xf32>
    %143 = vector.extract_strided_slice %0 {offsets = [0, 6], sizes = [16, 1], strides = [1, 1]} : vector<16x8xf32> to vector<16x1xf32>
    %cst_54 = arith.constant dense<0.000000e+00> : vector<16x8xf32>
    %144 = tpu.matmul %141, %3, %cst_54 {dimension_numbers = #tpu.dot_dimension_numbers<[1], [0], [0], [1], [0, 0, 1, 1], [], []>, precision = #tpu.contract_precision<fp32>} : vector<16x128xf32>, vector<128x8xf32>, vector<16x8xf32> -> vector<16x8xf32>
    %145 = arith.mulf %141, %141 : vector<16x128xf32>
    %cst_55 = arith.constant dense<0.000000e+00> : vector<16x8xf32>
    %146 = tpu.matmul %145, %3, %cst_55 {dimension_numbers = #tpu.dot_dimension_numbers<[1], [0], [0], [1], [0, 0, 1, 1], [], []>, precision = #tpu.contract_precision<fp32>} : vector<16x128xf32>, vector<128x8xf32>, vector<16x8xf32> -> vector<16x8xf32>
    %cst_56 = arith.constant dense<0.000000e+00> : vector<16x8xf32>
    %147 = tpu.matmul %1, %144, %cst_56 {dimension_numbers = #tpu.dot_dimension_numbers<[1], [0], [0], [1], [0, 0, 1, 1], [], []>, precision = #tpu.contract_precision<fp32>} : vector<16x16xf32>, vector<16x8xf32>, vector<16x8xf32> -> vector<16x8xf32>
    %cst_57 = arith.constant dense<0.000000e+00> : vector<16x8xf32>
    %148 = tpu.matmul %1, %146, %cst_57 {dimension_numbers = #tpu.dot_dimension_numbers<[1], [0], [0], [1], [0, 0, 1, 1], [], []>, precision = #tpu.contract_precision<fp32>} : vector<16x16xf32>, vector<16x8xf32>, vector<16x8xf32> -> vector<16x8xf32>
    %149 = arith.mulf %147, %147 : vector<16x8xf32>
    %150 = arith.subf %148, %149 : vector<16x8xf32>
    %cst_58 = arith.constant 0.000000e+00 : f32
    %151 = vector.broadcast %cst_58 : f32 to vector<16x8xf32>
    %152 = arith.maximumf %150, %151 : vector<16x8xf32>
    %cst_59 = arith.constant 9.99999974E-6 : f32
    %153 = vector.broadcast %cst_59 : f32 to vector<16x8xf32>
    %154 = arith.addf %152, %153 : vector<16x8xf32>
    %155 = math.rsqrt %154 : vector<16x8xf32>
    %156 = vector.broadcast %142 : vector<16x1xf32> to vector<16x8xf32>
    %157 = arith.mulf %155, %156 : vector<16x8xf32>
    %158 = arith.mulf %147, %157 : vector<16x8xf32>
    %159 = vector.broadcast %143 : vector<16x1xf32> to vector<16x8xf32>
    %160 = arith.subf %159, %158 : vector<16x8xf32>
    %cst_60 = arith.constant dense<0.000000e+00> : vector<16x128xf32>
    %161 = tpu.matmul %157, %2, %cst_60 {dimension_numbers = #tpu.dot_dimension_numbers<[1], [0], [0], [1], [0, 0, 1, 1], [], []>, precision = #tpu.contract_precision<fp32>} : vector<16x8xf32>, vector<8x128xf32>, vector<16x128xf32> -> vector<16x128xf32>
    %162 = arith.mulf %141, %161 : vector<16x128xf32>
    %cst_61 = arith.constant dense<0.000000e+00> : vector<16x128xf32>
    %163 = tpu.matmul %160, %2, %cst_61 {dimension_numbers = #tpu.dot_dimension_numbers<[1], [0], [0], [1], [0, 0, 1, 1], [], []>, precision = #tpu.contract_precision<fp32>} : vector<16x8xf32>, vector<8x128xf32>, vector<16x128xf32> -> vector<16x128xf32>
    %164 = arith.addf %162, %163 : vector<16x128xf32>
    %cst_62 = arith.constant 2.000000e+01 : f32
    %165 = vector.broadcast %cst_62 : f32 to vector<16x128xf32>
    %166 = arith.minimumf %164, %165 : vector<16x128xf32>
    %167 = math.exp %166 : vector<16x128xf32>
    %cst_63 = arith.constant 2.000000e+00 : f32
    %168 = vector.broadcast %cst_63 : f32 to vector<16x128xf32>
    %169 = arith.addf %167, %168 : vector<16x128xf32>
    %170 = arith.mulf %167, %169 : vector<16x128xf32>
    %171 = arith.mulf %164, %170 : vector<16x128xf32>
    %cst_64 = arith.constant 2.000000e+00 : f32
    %172 = vector.broadcast %cst_64 : f32 to vector<16x128xf32>
    %173 = arith.addf %170, %172 : vector<16x128xf32>
    %174 = arith.divf %171, %173 : vector<16x128xf32>
    %175 = arith.addf %174, %14 : vector<16x128xf32>
    %c0_65 = arith.constant 0 : index
    %c0_66 = arith.constant 0 : index
    %176 = vector.load %arg9[%c0_65, %c0_66] : memref<16x128xf32, #tpu.memory_space<vmem>>, vector<16x128xf32>
    tpu.vector_store %arg9[%c0_65, %c0_66], %175 {strides = array<i32>} : memref<16x128xf32, #tpu.memory_space<vmem>>, vector<16x128xf32>,
    return
  }
  func.func @transform_0(%arg0: i32) -> (i32, i32) {
    %c0_i32 = arith.constant 0 : i32
    %c0_i32_0 = arith.constant 0 : i32
    return %c0_i32, %arg0 : i32, i32
  }
  func.func @transform_1(%arg0: i32) -> (i32, i32) {
    %c0_i32 = arith.constant 0 : i32
    %c0_i32_0 = arith.constant 0 : i32
    return %c0_i32, %arg0 : i32, i32
  }
  func.func @transform_2(%arg0: i32) -> (i32, i32) {
    %c0_i32 = arith.constant 0 : i32
    %c0_i32_0 = arith.constant 0 : i32
    %c0_i32_1 = arith.constant 0 : i32
    return %c0_i32, %c0_i32_0 : i32, i32
  }
  func.func @transform_3(%arg0: i32) -> (i32, i32) {
    %c0_i32 = arith.constant 0 : i32
    %c0_i32_0 = arith.constant 0 : i32
    %c0_i32_1 = arith.constant 0 : i32
    return %c0_i32, %c0_i32_0 : i32, i32
  }
  func.func @transform_4(%arg0: i32) -> (i32, i32) {
    %c0_i32 = arith.constant 0 : i32
    %c0_i32_0 = arith.constant 0 : i32
    %c0_i32_1 = arith.constant 0 : i32
    return %c0_i32, %c0_i32_0 : i32, i32
  }
  func.func @transform_5(%arg0: i32) -> (i32, i32) {
    %c0_i32 = arith.constant 0 : i32
    %c0_i32_0 = arith.constant 0 : i32
    %c0_i32_1 = arith.constant 0 : i32
    return %c0_i32, %c0_i32_0 : i32, i32
  }
  func.func @transform_6(%arg0: i32) -> (i32, i32) {
    %c0_i32 = arith.constant 0 : i32
    %c0_i32_0 = arith.constant 0 : i32
    %c0_i32_1 = arith.constant 0 : i32
    return %c0_i32, %c0_i32_0 : i32, i32
  }
  func.func @transform_7(%arg0: i32) -> (i32, i32) {
    %c0_i32 = arith.constant 0 : i32
    %c0_i32_0 = arith.constant 0 : i32
    %c0_i32_1 = arith.constant 0 : i32
    return %c0_i32, %c0_i32_0 : i32, i32
  }
  func.func @transform_8(%arg0: i32) -> (i32, i32) {
    %c0_i32 = arith.constant 0 : i32
    %c0_i32_0 = arith.constant 0 : i32
    return %c0_i32, %arg0 : i32, i32
  }
}

</mosaic_0001>

<llo_original>
// kernel: residual_temporal_block.1
$region0: #{residual_temporal_block.1}
  #allocation0 [shape = 'u32[]', space=smem, size = 0x4, offset = 0x4, fixed_abs, tag = 'smem constant byte address 0x4 - core index']
  #allocation1 [shape = 'u32[144,128]{1,0:T(1,128)}', space=vmem, size = 0x12000, scoped, tag = 'internal scratch']
  %s0 = inlined_call_operand.vmem [shape: f32[20,256], index: 0, kind: input, shape index: {}]
  %s1 = inlined_call_operand.vmem [shape: f32[16,256], index: 1, kind: input, shape index: {}]
  %s2 = inlined_call_operand.vmem [shape: f32[32,20], index: 2, kind: input, shape index: {}]
  %s3 = inlined_call_operand.vmem [shape: f32[16,80], index: 3, kind: input, shape index: {}]
  %s4 = inlined_call_operand.vmem [shape: f32[16,8], index: 4, kind: input, shape index: {}]
  %s5 = inlined_call_operand.vmem [shape: f32[16,16], index: 5, kind: input, shape index: {}]
  %s6 = inlined_call_operand.vmem [shape: f32[8,128], index: 6, kind: input, shape index: {}]
  %s7 = inlined_call_operand.vmem [shape: f32[128,8], index: 7, kind: input, shape index: {}]
  %s8 = inlined_call_operand.vmem [shape: f32[16,256], index: 8, kind: output, shape index: {}]
  %s9 = sld [smem:[#allocation0]]
  $region175: #{residual_temporal_block.1} parent=0
    _
  %s11 = ssub.s32 1, %s9
  %s12 = scalar_select 0, %s11, %s9
  $region1: #{residual_temporal_block.1} parent=0
    #allocation2 [shape = 'u8[24576]{0}', space=vmem, size = 0x6000, scoped, tag = 'input window, operand 0']
    #allocation3 [shape = 'u8[16384]{0}', space=vmem, size = 0x4000, scoped, tag = 'input window, operand 1']
    #allocation4 [shape = 'u8[16384]{0}', space=vmem, size = 0x4000, scoped, tag = 'output window, operand 0']
    loop: start=0, step=1, limit=4
    $region2: #{residual_temporal_block.1} parent=1 // loop_pre_header
      _
    $region3: #{residual_temporal_block.1} parent=1 // loop_header
      %s14 = sphi 0, %s18
      %p15 = scmp.ge.s32.totalorder %s14, 4
      %s24 = sphi 0, %s26
      %s27 = sphi 0, %s24
      %s28 = sphi 0, %s27
      %s44 = sphi 0, %s28
      %s50 = sphi 0, %s52
      %s53 = sphi 0, %s50
      %s54 = sphi 0, %s53
      %s70 = sphi 0, %s54
      %s74 = sphi 0, %s74
      %s76 = sphi 0, %s74
      %s77 = sphi 0, %s76
      %s91 = sphi 0, %s77
      %s95 = sphi 0, %s95
      %s97 = sphi 0, %s95
      %s98 = sphi 0, %s97
      %s112 = sphi 0, %s98
      %s116 = sphi 0, %s116
      %s118 = sphi 0, %s116
      %s119 = sphi 0, %s118
      %s133 = sphi 0, %s119
      %s137 = sphi 0, %s137
      %s139 = sphi 0, %s137
      %s140 = sphi 0, %s139
      %s154 = sphi 0, %s140
      %s158 = sphi 0, %s158
      %s160 = sphi 0, %s158
      %s161 = sphi 0, %s160
      %s175 = sphi 0, %s161
      %s179 = sphi 0, %s179
      %s181 = sphi 0, %s179
      %s182 = sphi 0, %s181
      %s196 = sphi 0, %s182
      %s202 = sphi 0, %s204
      %s205 = sphi 0, %s202
      %s206 = sphi 0, %s205
      %s222 = sphi 0, %s206
    $region4: #{residual_temporal_block.1} parent=1 // loop_header_branch
      %17 = sbr.rel (%p15) target = $region8
    $region5: #{residual_temporal_block.1} parent=1 // loop_body
      %s19 = ssub.s32 %s14, 1
      %s20 = ssub.s32 %s14, 2
      %s21 = sadd.s32 %s14, 1
      %s22 = ssub.s32 %s14, %s21
      %p23 = scmp.eq.s32.totalorder %s22, 0
      %s25 = sadd.s32 %s24, 1
      %s26 = scalar_select %p23, %s24, %s25
      %p29 = pneg %p23
      %p30 = scmp.eq.s32.totalorder %s14, 1
      %p31 = por %p29, %p30
      %p32 = scmp.ne.s32.totalorder %s24, %s27
      %p33 = scmp.eq.s32.totalorder %s14, 0
      %p34 = por %p32, %p33
      %p35 = scmp.ne.s32.totalorder %s24, %s27
      %p36 = scmp.eq.s32.totalorder %s19, 1
      %p37 = por %p35, %p36
      %p38 = scmp.ne.s32.totalorder %s27, %s28
      %p39 = scmp.eq.s32.totalorder %s19, 0
      %p40 = por %p38, %p39
      %p41 = scmp.ne.s32.totalorder %s27, %s28
      %p42 = scmp.eq.s32.totalorder %s20, 1
      %p43 = por %p41, %p42
      %p45 = scmp.ne.s32.totalorder %s28, %s44
      %p46 = scmp.eq.s32.totalorder %s20, 0
      %p47 = por %p45, %p46
      %s48 = ssub.s32 %s14, %s21
      %p49 = scmp.eq.s32.totalorder %s48, 0
      %s51 = sadd.s32 %s50, 1
      %s52 = scalar_select %p49, %s50, %s51
      %p55 = pneg %p49
      %p56 = scmp.eq.s32.totalorder %s14, 1
      %p57 = por %p55, %p56
      %p58 = scmp.ne.s32.totalorder %s50, %s53
      %p59 = scmp.eq.s32.totalorder %s14, 0
      %p60 = por %p58, %p59
      %p61 = scmp.ne.s32.totalorder %s50, %s53
      %p62 = scmp.eq.s32.totalorder %s19, 1
      %p63 = por %p61, %p62
      %p64 = scmp.ne.s32.totalorder %s53, %s54
      %p65 = scmp.eq.s32.totalorder %s19, 0
      %p66 = por %p64, %p65
      %p67 = scmp.ne.s32.totalorder %s53, %s54
      %p68 = scmp.eq.s32.totalorder %s20, 1
      %p69 = por %p67, %p68
      %p71 = scmp.ne.s32.totalorder %s54, %s70
      %p72 = scmp.eq.s32.totalorder %s20, 0
      %p73 = por %p71, %p72
      %s75 = sadd.s32 %s74, 1
      %p78 = scmp.eq.s32.totalorder %s14, 1
      %p79 = scmp.ne.s32.totalorder %s74, %s76
      %p80 = scmp.eq.s32.totalorder %s14, 0
      %p81 = por %p79, %p80
      %p82 = scmp.ne.s32.totalorder %s74, %s76
      %p83 = scmp.eq.s32.totalorder %s19, 1
      %p84 = por %p82, %p83
      %p85 = scmp.ne.s32.totalorder %s76, %s77
      %p86 = scmp.eq.s32.totalorder %s19, 0
      %p87 = por %p85, %p86
      %p88 = scmp.ne.s32.totalorder %s76, %s77
      %p89 = scmp.eq.s32.totalorder %s20, 1
      %p90 = por %p88, %p89
      %p92 = scmp.ne.s32.totalorder %s77, %s91
      %p93 = scmp.eq.s32.totalorder %s20, 0
      %p94 = por %p92, %p93
      %s96 = sadd.s32 %s95, 1
      %p99 = scmp.eq.s32.totalorder %s14, 1
      %p100 = scmp.ne.s32.totalorder %s95, %s97
      %p101 = scmp.eq.s32.totalorder %s14, 0
      %p102 = por %p100, %p101
      %p103 = scmp.ne.s32.totalorder %s95, %s97
      %p104 = scmp.eq.s32.totalorder %s19, 1
      %p105 = por %p103, %p104
      %p106 = scmp.ne.s32.totalorder %s97, %s98
      %p107 = scmp.eq.s32.totalorder %s19, 0
      %p108 = por %p106, %p107
      %p109 = scmp.ne.s32.totalorder %s97, %s98
      %p110 = scmp.eq.s32.totalorder %s20, 1
      %p111 = por %p109, %p110
      %p113 = scmp.ne.s32.totalorder %s98, %s112
      %p114 = scmp.eq.s32.totalorder %s20, 0
      %p115 = por %p113, %p114
      %s117 = sadd.s32 %s116, 1
      %p120 = scmp.eq.s32.totalorder %s14, 1
      %p121 = scmp.ne.s32.totalorder %s116, %s118
      %p122 = scmp.eq.s32.totalorder %s14, 0
      %p123 = por %p121, %p122
      %p124 = scmp.ne.s32.totalorder %s116, %s118
      %p125 = scmp.eq.s32.totalorder %s19, 1
      %p126 = por %p124, %p125
      %p127 = scmp.ne.s32.totalorder %s118, %s119
      %p128 = scmp.eq.s32.totalorder %s19, 0
      %p129 = por %p127, %p128
      %p130 = scmp.ne.s32.totalorder %s118, %s119
      %p131 = scmp.eq.s32.totalorder %s20, 1
      %p132 = por %p130, %p131
      %p134 = scmp.ne.s32.totalorder %s119, %s133
      %p135 = scmp.eq.s32.totalorder %s20, 0
      %p136 = por %p134, %p135
      %s138 = sadd.s32 %s137, 1
      %p141 = scmp.eq.s32.totalorder %s14, 1
      %p142 = scmp.ne.s32.totalorder %s137, %s139
      %p143 = scmp.eq.s32.totalorder %s14, 0
      %p144 = por %p142, %p143
      %p145 = scmp.ne.s32.totalorder %s137, %s139
      %p146 = scmp.eq.s32.totalorder %s19, 1
      %p147 = por %p145, %p146
      %p148 = scmp.ne.s32.totalorder %s139, %s140
      %p149 = scmp.eq.s32.totalorder %s19, 0
      %p150 = por %p148, %p149
      %p151 = scmp.ne.s32.totalorder %s139, %s140
      %p152 = scmp.eq.s32.totalorder %s20, 1
      %p153 = por %p151, %p152
      %p155 = scmp.ne.s32.totalorder %s140, %s154
      %p156 = scmp.eq.s32.totalorder %s20, 0
      %p157 = por %p155, %p156
      %s159 = sadd.s32 %s158, 1
      %p162 = scmp.eq.s32.totalorder %s14, 1
      %p163 = scmp.ne.s32.totalorder %s158, %s160
      %p164 = scmp.eq.s32.totalorder %s14, 0
      %p165 = por %p163, %p164
      %p166 = scmp.ne.s32.totalorder %s158, %s160
      %p167 = scmp.eq.s32.totalorder %s19, 1
      %p168 = por %p166, %p167
      %p169 = scmp.ne.s32.totalorder %s160, %s161
      %p170 = scmp.eq.s32.totalorder %s19, 0
      %p171 = por %p169, %p170
      %p172 = scmp.ne.s32.totalorder %s160, %s161
      %p173 = scmp.eq.s32.totalorder %s20, 1
      %p174 = por %p172, %p173
      %p176 = scmp.ne.s32.totalorder %s161, %s175
      %p177 = scmp.eq.s32.totalorder %s20, 0
      %p178 = por %p176, %p177
      %s180 = sadd.s32 %s179, 1
      %p183 = scmp.eq.s32.totalorder %s14, 1
      %p184 = scmp.ne.s32.totalorder %s179, %s181
      %p185 = scmp.eq.s32.totalorder %s14, 0
      %p186 = por %p184, %p185
      %p187 = scmp.ne.s32.totalorder %s179, %s181
      %p188 = scmp.eq.s32.totalorder %s19, 1
      %p189 = por %p187, %p188
      %p190 = scmp.ne.s32.totalorder %s181, %s182
      %p191 = scmp.eq.s32.totalorder %s19, 0
      %p192 = por %p190, %p191
      %p193 = scmp.ne.s32.totalorder %s181, %s182
      %p194 = scmp.eq.s32.totalorder %s20, 1
      %p195 = por %p193, %p194
      %p197 = scmp.ne.s32.totalorder %s182, %s196
      %p198 = scmp.eq.s32.totalorder %s20, 0
      %p199 = por %p197, %p198
      %s200 = ssub.s32 %s14, %s21
      %p201 = scmp.eq.s32.totalorder %s200, 0
      %s203 = sadd.s32 %s202, 1
      %s204 = scalar_select %p201, %s202, %s203
      %p207 = pneg %p201
      %p208 = scmp.eq.s32.totalorder %s14, 1
      %p209 = por %p207, %p208
      %p210 = scmp.ne.s32.totalorder %s202, %s205
      %p211 = scmp.eq.s32.totalorder %s14, 0
      %p212 = por %p210, %p211
      %p213 = scmp.ne.s32.totalorder %s202, %s205
      %p214 = scmp.eq.s32.totalorder %s19, 1
      %p215 = por %p213, %p214
      %p216 = scmp.ne.s32.totalorder %s205, %s206
      %p217 = scmp.eq.s32.totalorder %s19, 0
      %p218 = por %p216, %p217
      %p219 = scmp.ne.s32.totalorder %s205, %s206
      %p220 = scmp.eq.s32.totalorder %s20, 1
      %p221 = por %p219, %p220
      %p223 = scmp.ne.s32.totalorder %s206, %s222
      %p224 = scmp.eq.s32.totalorder %s20, 0
      %p225 = por %p223, %p224
      %p226 = scmp.le.s32.totalorder 1, %s14
      %p227 = scmp.lt.s32.totalorder %s14, 3
      %p228 = pnand %p226, %p227
      %p229 = pneg %p228
      // Predicated region
      $region9: #{residual_temporal_block.1} parent=5 // pred_check
        _
      $region10: #{residual_temporal_block.1} parent=5 // pred_check_branch
        %231 = sbr.rel (%p228) target = $region12
      $region11: #{residual_temporal_block.1} parent=5 // pred_region
        %s232 = ssub.s32 %s14, 1
        // Predicated region
        $region13: #{residual_temporal_block.1} parent=11 // pred_check
          %p233 = pneg %p87
        $region14: #{residual_temporal_block.1} parent=11 // pred_check_branch
          %235 = sbr.rel (%p233) target = $region16
        $region15: #{residual_temporal_block.1} parent=11 // pred_region
          _
        $region16: #{residual_temporal_block.1} parent=11 // pred_fallthru
          _
        // Predicated region
        $region17: #{residual_temporal_block.1} parent=11 // pred_check
          %p236 = pneg %p108
        $region18: #{residual_temporal_block.1} parent=11 // pred_check_branch
          %238 = sbr.rel (%p236) target = $region20
        $region19: #{residual_temporal_block.1} parent=11 // pred_region
          _
        $region20: #{residual_temporal_block.1} parent=11 // pred_fallthru
          _
        // Predicated region
        $region21: #{residual_temporal_block.1} parent=11 // pred_check
          %p239 = pneg %p129
        $region22: #{residual_temporal_block.1} parent=11 // pred_check_branch
          %241 = sbr.rel (%p239) target = $region24
        $region23: #{residual_temporal_block.1} parent=11 // pred_region
          _
        $region24: #{residual_temporal_block.1} parent=11 // pred_fallthru
          _
        // Predicated region
        $region25: #{residual_temporal_block.1} parent=11 // pred_check
          %p242 = pneg %p150
        $region26: #{residual_temporal_block.1} parent=11 // pred_check_branch
          %244 = sbr.rel (%p242) target = $region28
        $region27: #{residual_temporal_block.1} parent=11 // pred_region
          _
        $region28: #{residual_temporal_block.1} parent=11 // pred_fallthru
          _
        // Predicated region
        $region29: #{residual_temporal_block.1} parent=11 // pred_check
          %p245 = pneg %p171
        $region30: #{residual_temporal_block.1} parent=11 // pred_check_branch
          %247 = sbr.rel (%p245) target = $region32
        $region31: #{residual_temporal_block.1} parent=11 // pred_region
          _
        $region32: #{residual_temporal_block.1} parent=11 // pred_fallthru
          _
        // Predicated region
        $region33: #{residual_temporal_block.1} parent=11 // pred_check
          %p248 = pneg %p192
        $region34: #{residual_temporal_block.1} parent=11 // pred_check_branch
          %250 = sbr.rel (%p248) target = $region36
        $region35: #{residual_temporal_block.1} parent=11 // pred_region
          _
        $region36: #{residual_temporal_block.1} parent=11 // pred_fallthru
          _
      $region12: #{residual_temporal_block.1} parent=5 // pred_fallthru
        _
      %p251 = scmp.lt.s32.totalorder %s14, 2
      // Predicated region
      $region37: #{residual_temporal_block.1} parent=5 // pred_check
        %p252 = pneg %p251
      $region38: #{residual_temporal_block.1} parent=5 // pred_check_branch
        %254 = sbr.rel (%p252) target = $region40
      $region39: #{residual_temporal_block.1} parent=5 // pred_region
        // Predicated region
        $region41: #{residual_temporal_block.1} parent=39 // pred_check
          %p255 = pneg %p34
        $region42: #{residual_temporal_block.1} parent=39 // pred_check_branch
          %257 = sbr.rel (%p255) target = $region44
        $region43: #{residual_temporal_block.1} parent=39 // pred_region
          %s258 = sand.u32 %s24, 1
          %s259 = sand.u32 %s24, 1
          %s260 = smul.addr %s259, 24
          %s261 = scalar_lea.vmem [#allocation2], %s260
          %s262 = smul.addr %s14, 8
          %s263 = scalar_lea.vmem %s0, %s262
          // Predicated region
          $region45: #{residual_temporal_block.1} parent=43 // pred_check
            _
          $region46: #{residual_temporal_block.1} parent=43 // pred_check_branch
            %265 = sbr.rel (0) target = $region48
          $region47: #{residual_temporal_block.1} parent=43 // pred_region
            // Predicated region
            $region49: #{residual_temporal_block.1} parent=47 // pred_check
              _
            $region50: #{residual_temporal_block.1} parent=47 // pred_check_branch
              %267 = sbr.rel (0) target = $region52
            $region51: #{residual_temporal_block.1} parent=47 // pred_region
              // Predicated region
              $region64: #{residual_temporal_block.1} parent=51 // pred_check
                _
              $region65: #{residual_temporal_block.1} parent=51 // pred_check_branch
                %286 = sbr.rel (0) target = $region67
              $region66: #{residual_temporal_block.1} parent=51 // pred_region
                loop: start=0, step=1, limit=1
                $region68: #{residual_temporal_block.1} parent=66 // loop_pre_header
                  _
                $region69: #{residual_temporal_block.1} parent=66 // loop_header
                  %s288 = sphi 0, %s292
                  %p289 = scmp.ge.s32.totalorder %s288, 1
                  %s293 = sphi %s263, %s263
                  %s294 = sphi %s261, %s261
                $region70: #{residual_temporal_block.1} parent=66 // loop_header_branch
                  %291 = sbr.rel (%p289) target = $region74
                $region71: #{residual_temporal_block.1} parent=66 // loop_body
                  %v295 = vld [vmem:[%s293] sm:$0xff]
                  %296 = vst [vmem:[%s294] sm:$0xff] %v295
                  %v297 = vld [vmem:[%s293 + $0x10] sm:$0xff]
                  %298 = vst [vmem:[%s294 + $0x8] sm:$0xff] %v297
                  %v299 = vld [vmem:[%s293 + $0x20] sm:$0xff]
                  %300 = vst [vmem:[%s294 + $0x10] sm:$0xff] %v299
                $region72: #{residual_temporal_block.1} parent=66 // loop_footer
                  %s292 = sadd.s32 1, %s288
                $region73: #{residual_temporal_block.1} parent=66 // loop_footer_branch
                  %287 = sbr.rel target = $region69
                $region74: #{residual_temporal_block.1} parent=66 // loop_exit
                  _
              $region67: #{residual_temporal_block.1} parent=51 // pred_fallthru
                _
              // Predicated region
              $region75: #{residual_temporal_block.1} parent=51 // pred_check
                _
              $region76: #{residual_temporal_block.1} parent=51 // pred_check_branch
                %302 = sbr.rel target = $region78
              $region77: #{residual_temporal_block.1} parent=51 // pred_region
                _
              $region78: #{residual_temporal_block.1} parent=51 // pred_fallthru
                _
            $region52: #{residual_temporal_block.1} parent=47 // pred_fallthru
              _
            // Predicated region
            $region53: #{residual_temporal_block.1} parent=47 // pred_check
              _
            $region54: #{residual_temporal_block.1} parent=47 // pred_check_branch
              %269 = sbr.rel target = $region56
            $region55: #{residual_temporal_block.1} parent=47 // pred_region
              loop: start=0, step=1, limit=1
              $region57: #{residual_temporal_block.1} parent=55 // loop_pre_header
                _
              $region58: #{residual_temporal_block.1} parent=55 // loop_header
                %s272 = sphi 0, %s276
                %p273 = scmp.ge.s32.totalorder %s272, 1
                %s277 = sphi %s263, %s263
                %s278 = sphi %s261, %s261
              $region59: #{residual_temporal_block.1} parent=55 // loop_header_branch
                %275 = sbr.rel (%p273) target = $region63
              $region60: #{residual_temporal_block.1} parent=55 // loop_body
                %v279 = vld [vmem:[%s277] sm:$0xff]
                %280 = vst [vmem:[%s278] sm:$0xff] %v279
                %v281 = vld [vmem:[%s277 + $0x10] sm:$0xff]
                %282 = vst [vmem:[%s278 + $0x8] sm:$0xff] %v281
                %v283 = vld [vmem:[%s277 + $0x20] sm:$0xff]
                %284 = vst [vmem:[%s278 + $0x10] sm:$0xff] %v283
              $region61: #{residual_temporal_block.1} parent=55 // loop_footer
                %s276 = sadd.s32 1, %s272
              $region62: #{residual_temporal_block.1} parent=55 // loop_footer_branch
                %271 = sbr.rel target = $region58
              $region63: #{residual_temporal_block.1} parent=55 // loop_exit
                _
            $region56: #{residual_temporal_block.1} parent=47 // pred_fallthru
              _
          $region48: #{residual_temporal_block.1} parent=43 // pred_fallthru
            _
          %303 = vnop
        $region44: #{residual_temporal_block.1} parent=39 // pred_fallthru
          _
        // Predicated region
        $region79: #{residual_temporal_block.1} parent=39 // pred_check
          %p304 = pneg %p60
        $region80: #{residual_temporal_block.1} parent=39 // pred_check_branch
          %306 = sbr.rel (%p304) target = $region82
        $region81: #{residual_temporal_block.1} parent=39 // pred_region
          %s307 = sand.u32 %s50, 1
          %s308 = sand.u32 %s50, 1
          %s309 = smul.addr %s308, 16
          %s310 = scalar_lea.vmem [#allocation3], %s309
          %s311 = smul.addr %s14, 8
          %s312 = scalar_lea.vmem %s1, %s311
          // Predicated region
          $region83: #{residual_temporal_block.1} parent=81 // pred_check
            _
          $region84: #{residual_temporal_block.1} parent=81 // pred_check_branch
            %314 = sbr.rel (0) target = $region86
          $region85: #{residual_temporal_block.1} parent=81 // pred_region
            // Predicated region
            $region87: #{residual_temporal_block.1} parent=85 // pred_check
              _
            $region88: #{residual_temporal_block.1} parent=85 // pred_check_branch
              %316 = sbr.rel (0) target = $region90
            $region89: #{residual_temporal_block.1} parent=85 // pred_region
              // Predicated region
              $region102: #{residual_temporal_block.1} parent=89 // pred_check
                _
              $region103: #{residual_temporal_block.1} parent=89 // pred_check_branch
                %333 = sbr.rel (0) target = $region105
              $region104: #{residual_temporal_block.1} parent=89 // pred_region
                loop: start=0, step=1, limit=1
                $region106: #{residual_temporal_block.1} parent=104 // loop_pre_header
                  _
                $region107: #{residual_temporal_block.1} parent=104 // loop_header
                  %s335 = sphi 0, %s339
                  %p336 = scmp.ge.s32.totalorder %s335, 1
                  %s340 = sphi %s312, %s312
                  %s341 = sphi %s310, %s310
                $region108: #{residual_temporal_block.1} parent=104 // loop_header_branch
                  %338 = sbr.rel (%p336) target = $region112
                $region109: #{residual_temporal_block.1} parent=104 // loop_body
                  %v342 = vld [vmem:[%s340] sm:$0xff]
                  %343 = vst [vmem:[%s341] sm:$0xff] %v342
                  %v344 = vld [vmem:[%s340 + $0x10] sm:$0xff]
                  %345 = vst [vmem:[%s341 + $0x8] sm:$0xff] %v344
                $region110: #{residual_temporal_block.1} parent=104 // loop_footer
                  %s339 = sadd.s32 1, %s335
                $region111: #{residual_temporal_block.1} parent=104 // loop_footer_branch
                  %334 = sbr.rel target = $region107
                $region112: #{residual_temporal_block.1} parent=104 // loop_exit
                  _
              $region105: #{residual_temporal_block.1} parent=89 // pred_fallthru
                _
              // Predicated region
              $region113: #{residual_temporal_block.1} parent=89 // pred_check
                _
              $region114: #{residual_temporal_block.1} parent=89 // pred_check_branch
                %347 = sbr.rel target = $region116
              $region115: #{residual_temporal_block.1} parent=89 // pred_region
                _
              $region116: #{residual_temporal_block.1} parent=89 // pred_fallthru
                _
            $region90: #{residual_temporal_block.1} parent=85 // pred_fallthru
              _
            // Predicated region
            $region91: #{residual_temporal_block.1} parent=85 // pred_check
              _
            $region92: #{residual_temporal_block.1} parent=85 // pred_check_branch
              %318 = sbr.rel target = $region94
            $region93: #{residual_temporal_block.1} parent=85 // pred_region
              loop: start=0, step=1, limit=1
              $region95: #{residual_temporal_block.1} parent=93 // loop_pre_header
                _
              $region96: #{residual_temporal_block.1} parent=93 // loop_header
                %s321 = sphi 0, %s325
                %p322 = scmp.ge.s32.totalorder %s321, 1
                %s326 = sphi %s312, %s312
                %s327 = sphi %s310, %s310
              $region97: #{residual_temporal_block.1} parent=93 // loop_header_branch
                %324 = sbr.rel (%p322) target = $region101
              $region98: #{residual_temporal_block.1} parent=93 // loop_body
                %v328 = vld [vmem:[%s326] sm:$0xff]
                %329 = vst [vmem:[%s327] sm:$0xff] %v328
                %v330 = vld [vmem:[%s326 + $0x10] sm:$0xff]
                %331 = vst [vmem:[%s327 + $0x8] sm:$0xff] %v330
              $region99: #{residual_temporal_block.1} parent=93 // loop_footer
                %s325 = sadd.s32 1, %s321
              $region100: #{residual_temporal_block.1} parent=93 // loop_footer_branch
                %320 = sbr.rel target = $region96
              $region101: #{residual_temporal_block.1} parent=93 // loop_exit
                _
            $region94: #{residual_temporal_block.1} parent=85 // pred_fallthru
              _
          $region86: #{residual_temporal_block.1} parent=81 // pred_fallthru
            _
          %348 = vnop
        $region82: #{residual_temporal_block.1} parent=39 // pred_fallthru
          _
      $region40: #{residual_temporal_block.1} parent=5 // pred_fallthru
        _
      %p349 = scmp.le.s32.totalorder 1, %s14
      %p350 = scmp.lt.s32.totalorder %s14, 3
      %p351 = pnand %p349, %p350
      %p352 = pneg %p351
      // Predicated region
      $region117: #{residual_temporal_block.1} parent=5 // pred_check
        _
      $region118: #{residual_temporal_block.1} parent=5 // pred_check_branch
        %354 = sbr.rel (%p351) target = $region120
      $region119: #{residual_temporal_block.1} parent=5 // pred_region
        %s355 = ssub.s32 %s14, 1
        %s356 = sand.u32 %s27, 1
        %s357 = sand.u32 %s27, 1
        %s358 = smul.addr %s357, 24
        %s359 = scalar_lea.vmem [#allocation2], %s358
        // Predicated region
        $region121: #{residual_temporal_block.1} parent=119 // pred_check
          %p360 = pneg %p40
        $region122: #{residual_temporal_block.1} parent=119 // pred_check_branch
          %362 = sbr.rel (%p360) target = $region124
        $region123: #{residual_temporal_block.1} parent=119 // pred_region
          _
        $region124: #{residual_temporal_block.1} parent=119 // pred_fallthru
          _
        %s363 = sand.u32 %s53, 1
        %s364 = sand.u32 %s53, 1
        %s365 = smul.addr %s364, 16
        %s366 = scalar_lea.vmem [#allocation3], %s365
        // Predicated region
        $region125: #{residual_temporal_block.1} parent=119 // pred_check
          %p367 = pneg %p66
        $region126: #{residual_temporal_block.1} parent=119 // pred_check_branch
          %369 = sbr.rel (%p367) target = $region128
        $region127: #{residual_temporal_block.1} parent=119 // pred_region
          _
        $region128: #{residual_temporal_block.1} parent=119 // pred_fallthru
          _
        %s370 = sand.u32 %s27, 1
        %s371 = sand.u32 %s27, 1
        %s372 = smul.addr %s371, 24
        %s373 = scalar_lea.vmem [#allocation2], %s372
        %p374 = pneg %p40
        %p375 = pneg %p37
        %s376 = sand.u32 %s53, 1
        %s377 = sand.u32 %s53, 1
        %s378 = smul.addr %s377, 16
        %s379 = scalar_lea.vmem [#allocation3], %s378
        %p380 = pneg %p66
        %p381 = pneg %p63
        %p382 = pneg %p87
        %p383 = pneg %p84
        %p384 = pneg %p108
        %p385 = pneg %p105
        %p386 = pneg %p129
        %p387 = pneg %p126
        %p388 = pneg %p150
        %p389 = pneg %p147
        %p390 = pneg %p171
        %p391 = pneg %p168
        %p392 = pneg %p192
        %p393 = pneg %p189
        %p394 = pneg %p218
        %p395 = pneg %p215
        %s396 = sand.u32 %s205, 1
        %s397 = sand.u32 %s205, 1
        %s398 = smul.addr %s397, 16
        %s399 = scalar_lea.vmem [#allocation4], %s398
        %v400 = vld [vmem:[%s4] sm:$0xff]
        %v401 = vld [vmem:[%s4 + $0x8] sm:$0xff]
        %v402 = vld [vmem:[%s5] sm:$0xff]
        %v403 = vld [vmem:[%s5 + $0x8] sm:$0xff]
        %v404 = vld [vmem:[%s6] sm:$0xff]
        %v405 = vld [vmem:[%s7] sm:$0xff]
        %v406 = vld [vmem:[%s7 + $0x8] sm:$0xff]
        %v407 = vld [vmem:[%s7 + $0x10] sm:$0xff]
        %v408 = vld [vmem:[%s7 + $0x18] sm:$0xff]
        %v409 = vld [vmem:[%s7 + $0x20] sm:$0xff]
        %v410 = vld [vmem:[%s7 + $0x28] sm:$0xff]
        %v411 = vld [vmem:[%s7 + $0x30] sm:$0xff]
        %v412 = vld [vmem:[%s7 + $0x38] sm:$0xff]
        %v413 = vld [vmem:[%s7 + $0x40] sm:$0xff]
        %v414 = vld [vmem:[%s7 + $0x48] sm:$0xff]
        %v415 = vld [vmem:[%s7 + $0x50] sm:$0xff]
        %v416 = vld [vmem:[%s7 + $0x58] sm:$0xff]
        %v417 = vld [vmem:[%s7 + $0x60] sm:$0xff]
        %v418 = vld [vmem:[%s7 + $0x68] sm:$0xff]
        %v419 = vld [vmem:[%s7 + $0x70] sm:$0xff]
        %v420 = vld [vmem:[%s7 + $0x78] sm:$0xff]
        %v421 = vld [vmem:[%s2] sm:$0xff]
        %v422 = vld [vmem:[%s2 + $0x8] sm:$0xff]
        %v423 = vld [vmem:[%s2 + $0x10] sm:$0xff]
        %v424 = vld [vmem:[%s2 + $0x18] sm:$0xff]
        %v425 = vld [vmem:[%s359] sm:$0xff]
        %v426 = vld [vmem:[%s359 + $0x8] sm:$0xff]
        %v427 = vld [vmem:[%s359 + $0x10] sm:$0xf]
        %vm428 = vcmask 162816
        %v430 = vsel %vm428, %v421, 0
        %v433 = vsel %vm428, %v422, 0
        %v436 = vsel %vm428, %v423, 0
        %v439 = vsel %vm428, %v424, 0
        %vm441 = vcmask 1043456
        %v443 = vsel %vm441, %v427, 0
        %445 = vmatprep.subr.mxu0 0.0
        %v446 = vand.u32 %v425, 4294901760
        %447 = vmatpush1.msra.mxu0 %v446
        %448 = vmatprep.subr.mxu0 0.0
        %v449 = vand.u32 %v426, 4294901760
        %450 = vmatpush1.msra.mxu0 %v449
        %451 = vmatprep.subr.mxu0 0.0
        %v452 = vand.u32 %v443, 4294901760
        %453 = vmatpush1.msra.mxu0 %v452
        %454 = vmatprep.subr.mxu0 0.0
        %455 = vmatpush1.msra.mxu0 0.0
        %456 = vmatprep.subr.mxu0 0.0
        %457 = vmatpush1.msra.mxu0 0.0
        %458 = vmatprep.subr.mxu0 0.0
        %459 = vmatpush1.msra.mxu0 0.0
        %460 = vmatprep.subr.mxu0 0.0
        %461 = vmatpush1.msra.mxu0 0.0
        %462 = vmatprep.subr.mxu0 0.0
        %463 = vmatpush1.msra.mxu0 0.0
        %464 = vmatprep.subr.mxu0 0.0
        %465 = vmatpush1.msra.mxu0 0.0
        %466 = vmatprep.subr.mxu0 0.0
        %467 = vmatpush1.msra.mxu0 0.0
        %468 = vmatprep.subr.mxu0 0.0
        %469 = vmatpush1.msra.mxu0 0.0
        %470 = vmatprep.subr.mxu0 0.0
        %471 = vmatpush1.msra.mxu0 0.0
        %472 = vmatprep.subr.mxu0 0.0
        %473 = vmatpush1.msra.mxu0 0.0
        %474 = vmatprep.subr.mxu0 0.0
        %475 = vmatpush1.msra.mxu0 0.0
        %476 = vmatprep.subr.mxu0 0.0
        %477 = vmatpush1.msra.mxu0 0.0
        %478 = vmatprep.subr.mxu0 0.0
        %479 = vmatpush1.msra.mxu0 0.0
        %480 = vmatprep.subr.mxu0 0.0
        %481 = vmatpush1.msra.mxu0 0.0
        %482 = vmatprep.subr.mxu0 0.0
        %483 = vmatpush1.msra.mxu0 0.0
        %484 = vmatprep.subr.mxu0 0.0
        %485 = vmatpush1.msra.mxu0 0.0
        %486 = vmatprep.subr.mxu0 0.0
        %487 = vmatpush1.msra.mxu0 0.0
        %488 = vmatprep.subr.mxu0 0.0
        %489 = vmatpush1.msra.mxu0 0.0
        %490 = vmatprep.subr.mxu0 0.0
        %491 = vmatpush1.msra.mxu0 0.0
        %492 = vmatprep.subr.mxu0 0.0
        %493 = vmatpush1.msra.mxu0 0.0
        %494 = vmatprep.subr.mxu0 0.0
        %495 = vmatpush1.msra.mxu0 0.0
        %496 = vmatprep.subr.mxu0 0.0
        %497 = vmatpush1.msra.mxu0 0.0
        %498 = vmatprep.subr.mxu0 0.0
        %499 = vmatpush1.msra.mxu0 0.0
        %500 = vmatprep.subr.mxu0 0.0
        %501 = vmatpush1.msra.mxu0 0.0
        %502 = vmatprep.subr.mxu0 0.0
        %503 = vmatpush1.msra.mxu0 0.0
        %504 = vmatprep.subr.mxu0 0.0
        %505 = vmatpush1.msra.mxu0 0.0
        %506 = vmatprep.subr.mxu0 0.0
        %507 = vmatpush1.msra.mxu0 0.0
        %508 = vmatprep.subr.mxu0 0.0
        %509 = vmatpush1.msra.mxu0 0.0
        %510 = vmatprep.subr.mxu0 0.0
        %511 = vmatpush1.msra.mxu0 0.0
        %512 = vmatprep.mubr.f32.mxu0 0.0
        %v513 = vand.u32 %v430, 4294901760
        %v514 = vsub.f32 %v430, %v513
        %v515 = vand.u32 %v514, 4294901760
        %v516 = vsub.f32 %v514, %v515
        %v517 = vand.u32 %v516, 4294901760
        %518 = vmatmul.mubr.f32.gmra.mrb[0].mxu0 %v517
        %v519 = vpop.f32.mrb[0].mxu0
        %v520 = vadd.f32 0.0, %v519
        %v521 = vpop.f32.mrb[0].mxu0
        %522 = vmatprep.mubr.f32.mxu0 0.0
        %v523 = vand.u32 %v433, 4294901760
        %v524 = vsub.f32 %v433, %v523
        %v525 = vand.u32 %v524, 4294901760
        %v526 = vsub.f32 %v524, %v525
        %v527 = vand.u32 %v526, 4294901760
        %528 = vmatmul.mubr.f32.gmra.mrb[0].mxu0 %v527
        %v529 = vpop.f32.mrb[0].mxu0
        %v530 = vadd.f32 0.0, %v529
        %v531 = vpop.f32.mrb[0].mxu0
        %532 = vmatprep.mubr.f32.mxu0 0.0
        %v533 = vand.u32 %v436, 4294901760
        %v534 = vsub.f32 %v436, %v533
        %v535 = vand.u32 %v534, 4294901760
        %v536 = vsub.f32 %v534, %v535
        %v537 = vand.u32 %v536, 4294901760
        %538 = vmatmul.mubr.f32.gmra.mrb[0].mxu0 %v537
        %v539 = vpop.f32.mrb[0].mxu0
        %v540 = vadd.f32 0.0, %v539
        %v541 = vpop.f32.mrb[0].mxu0
        %542 = vmatprep.mubr.f32.mxu0 0.0
        %v543 = vand.u32 %v439, 4294901760
        %v544 = vsub.f32 %v439, %v543
        %v545 = vand.u32 %v544, 4294901760
        %v546 = vsub.f32 %v544, %v545
        %v547 = vand.u32 %v546, 4294901760
        %548 = vmatmul.mubr.f32.gmra.mrb[0].mxu0 %v547
        %v549 = vpop.f32.mrb[0].mxu0
        %v550 = vadd.f32 0.0, %v549
        %v551 = vpop.f32.mrb[0].mxu0
        %552 = vdwg.mxu0
        %553 = vmatprep.subr.mxu0 0.0
        %v554 = vand.u32 %v425, 4294901760
        %v555 = vsub.f32 %v425, %v554
        %v556 = vand.u32 %v555, 4294901760
        %v557 = vsub.f32 %v555, %v556
        %v558 = vand.u32 %v557, 4294901760
        %559 = vmatpush1.msra.mxu0 %v558
        %560 = vmatprep.subr.mxu0 0.0
        %v561 = vand.u32 %v426, 4294901760
        %v562 = vsub.f32 %v426, %v561
        %v563 = vand.u32 %v562, 4294901760
        %v564 = vsub.f32 %v562, %v563
        %v565 = vand.u32 %v564, 4294901760
        %566 = vmatpush1.msra.mxu0 %v565
        %567 = vmatprep.subr.mxu0 0.0
        %v568 = vand.u32 %v443, 4294901760
        %v569 = vsub.f32 %v443, %v568
        %v570 = vand.u32 %v569, 4294901760
        %v571 = vsub.f32 %v569, %v570
        %v572 = vand.u32 %v571, 4294901760
        %573 = vmatpush1.msra.mxu0 %v572
        %574 = vmatprep.subr.mxu0 0.0
        %575 = vmatpush1.msra.mxu0 0.0
        %576 = vmatprep.subr.mxu0 0.0
        %577 = vmatpush1.msra.mxu0 0.0
        %578 = vmatprep.subr.mxu0 0.0
        %579 = vmatpush1.msra.mxu0 0.0
        %580 = vmatprep.subr.mxu0 0.0
        %581 = vmatpush1.msra.mxu0 0.0
        %582 = vmatprep.subr.mxu0 0.0
        %583 = vmatpush1.msra.mxu0 0.0
        %584 = vmatprep.subr.mxu0 0.0
        %585 = vmatpush1.msra.mxu0 0.0
        %586 = vmatprep.subr.mxu0 0.0
        %587 = vmatpush1.msra.mxu0 0.0
        %588 = vmatprep.subr.mxu0 0.0
        %589 = vmatpush1.msra.mxu0 0.0
        %590 = vmatprep.subr.mxu0 0.0
        %591 = vmatpush1.msra.mxu0 0.0
        %592 = vmatprep.subr.mxu0 0.0
        %593 = vmatpush1.msra.mxu0 0.0
        %594 = vmatprep.subr.mxu0 0.0
        %595 = vmatpush1.msra.mxu0 0.0
        %596 = vmatprep.subr.mxu0 0.0
        %597 = vmatpush1.msra.mxu0 0.0
        %598 = vmatprep.subr.mxu0 0.0
        %599 = vmatpush1.msra.mxu0 0.0
        %600 = vmatprep.subr.mxu0 0.0
        %601 = vmatpush1.msra.mxu0 0.0
        %602 = vmatprep.subr.mxu0 0.0
        %603 = vmatpush1.msra.mxu0 0.0
        %604 = vmatprep.subr.mxu0 0.0
        %605 = vmatpush1.msra.mxu0 0.0
        %606 = vmatprep.subr.mxu0 0.0
        %607 = vmatpush1.msra.mxu0 0.0
        %608 = vmatprep.subr.mxu0 0.0
        %609 = vmatpush1.msra.mxu0 0.0
        %610 = vmatprep.subr.mxu0 0.0
        %611 = vmatpush1.msra.mxu0 0.0
        %612 = vmatprep.subr.mxu0 0.0
        %613 = vmatpush1.msra.mxu0 0.0
        %614 = vmatprep.subr.mxu0 0.0
        %615 = vmatpush1.msra.mxu0 0.0
        %616 = vmatprep.subr.mxu0 0.0
        %617 = vmatpush1.msra.mxu0 0.0
        %618 = vmatprep.subr.mxu0 0.0
        %619 = vmatpush1.msra.mxu0 0.0
        %620 = vmatprep.subr.mxu0 0.0
        %621 = vmatpush1.msra.mxu0 0.0
        %622 = vmatprep.subr.mxu0 0.0
        %623 = vmatpush1.msra.mxu0 0.0
        %624 = vmatprep.subr.mxu0 0.0
        %625 = vmatpush1.msra.mxu0 0.0
        %626 = vmatprep.subr.mxu0 0.0
        %627 = vmatpush1.msra.mxu0 0.0
        %628 = vmatprep.subr.mxu0 0.0
        %629 = vmatpush1.msra.mxu0 0.0
        %630 = vmatprep.subr.mxu0 0.0
        %631 = vmatpush1.msra.mxu0 0.0
        %632 = vmatprep.mubr.f32.mxu0 0.0
        %v633 = vand.u32 %v430, 4294901760
        %634 = vmatmul.mubr.f32.gmra.mrb[0].mxu0 %v633
        %v635 = vpop.f32.mrb[0].mxu0
        %v636 = vadd.f32 %v520, %v635
        %v637 = vpop.f32.mrb[0].mxu0
        %638 = vmatprep.mubr.f32.mxu0 0.0
        %v639 = vand.u32 %v433, 4294901760
        %640 = vmatmul.mubr.f32.gmra.mrb[0].mxu0 %v639
        %v641 = vpop.f32.mrb[0].mxu0
        %v642 = vadd.f32 %v530, %v641
        %v643 = vpop.f32.mrb[0].mxu0
        %644 = vmatprep.mubr.f32.mxu0 0.0
        %v645 = vand.u32 %v436, 4294901760
        %646 = vmatmul.mubr.f32.gmra.mrb[0].mxu0 %v645
        %v647 = vpop.f32.mrb[0].mxu0
        %v648 = vadd.f32 %v540, %v647
        %v649 = vpop.f32.mrb[0].mxu0
        %650 = vmatprep.mubr.f32.mxu0 0.0
        %v651 = vand.u32 %v439, 4294901760
        %652 = vmatmul.mubr.f32.gmra.mrb[0].mxu0 %v651
        %v653 = vpop.f32.mrb[0].mxu0
        %v654 = vadd.f32 %v550, %v653
        %v655 = vpop.f32.mrb[0].mxu0
        %656 = vdwg.mxu0
        %657 = vmatprep.subr.mxu0 0.0
        %v658 = vand.u32 %v425, 4294901760
        %v659 = vsub.f32 %v425, %v658
        %660 = vmatpush1.msra.mxu0 %v659
        %661 = vmatprep.subr.mxu0 0.0
        %v662 = vand.u32 %v426, 4294901760
        %v663 = vsub.f32 %v426, %v662
        %664 = vmatpush1.msra.mxu0 %v663
        %665 = vmatprep.subr.mxu0 0.0
        %v666 = vand.u32 %v443, 4294901760
        %v667 = vsub.f32 %v443, %v666
        %668 = vmatpush1.msra.mxu0 %v667
        %669 = vmatprep.subr.mxu0 0.0
        %670 = vmatpush1.msra.mxu0 0.0
        %671 = vmatprep.subr.mxu0 0.0
        %672 = vmatpush1.msra.mxu0 0.0
        %673 = vmatprep.subr.mxu0 0.0
        %674 = vmatpush1.msra.mxu0 0.0
        %675 = vmatprep.subr.mxu0 0.0
        %676 = vmatpush1.msra.mxu0 0.0
        %677 = vmatprep.subr.mxu0 0.0
        %678 = vmatpush1.msra.mxu0 0.0
        %679 = vmatprep.subr.mxu0 0.0
        %680 = vmatpush1.msra.mxu0 0.0
        %681 = vmatprep.subr.mxu0 0.0
        %682 = vmatpush1.msra.mxu0 0.0
        %683 = vmatprep.subr.mxu0 0.0
        %684 = vmatpush1.msra.mxu0 0.0
        %685 = vmatprep.subr.mxu0 0.0
        %686 = vmatpush1.msra.mxu0 0.0
        %687 = vmatprep.subr.mxu0 0.0
        %688 = vmatpush1.msra.mxu0 0.0
        %689 = vmatprep.subr.mxu0 0.0
        %690 = vmatpush1.msra.mxu0 0.0
        %691 = vmatprep.subr.mxu0 0.0
        %692 = vmatpush1.msra.mxu0 0.0
        %693 = vmatprep.subr.mxu0 0.0
        %694 = vmatpush1.msra.mxu0 0.0
        %695 = vmatprep.subr.mxu0 0.0
        %696 = vmatpush1.msra.mxu0 0.0
        %697 = vmatprep.subr.mxu0 0.0
        %698 = vmatpush1.msra.mxu0 0.0
        %699 = vmatprep.subr.mxu0 0.0
        %700 = vmatpush1.msra.mxu0 0.0
        %701 = vmatprep.subr.mxu0 0.0
        %702 = vmatpush1.msra.mxu0 0.0
        %703 = vmatprep.subr.mxu0 0.0
        %704 = vmatpush1.msra.mxu0 0.0
        %705 = vmatprep.subr.mxu0 0.0
        %706 = vmatpush1.msra.mxu0 0.0
        %707 = vmatprep.subr.mxu0 0.0
        %708 = vmatpush1.msra.mxu0 0.0
        %709 = vmatprep.subr.mxu0 0.0
        %710 = vmatpush1.msra.mxu0 0.0
        %711 = vmatprep.subr.mxu0 0.0
        %712 = vmatpush1.msra.mxu0 0.0
        %713 = vmatprep.subr.mxu0 0.0
        %714 = vmatpush1.msra.mxu0 0.0
        %715 = vmatprep.subr.mxu0 0.0
        %716 = vmatpush1.msra.mxu0 0.0
        %717 = vmatprep.subr.mxu0 0.0
        %718 = vmatpush1.msra.mxu0 0.0
        %719 = vmatprep.subr.mxu0 0.0
        %720 = vmatpush1.msra.mxu0 0.0
        %721 = vmatprep.subr.mxu0 0.0
        %722 = vmatpush1.msra.mxu0 0.0
        %723 = vmatprep.subr.mxu0 0.0
        %724 = vmatpush1.msra.mxu0 0.0
        %725 = vmatprep.subr.mxu0 0.0
        %726 = vmatpush1.msra.mxu0 0.0
        %727 = vmatprep.mubr.f32.mxu0 0.0
        %v728 = vand.u32 %v430, 4294901760
        %v729 = vsub.f32 %v430, %v728
        %730 = vmatmul.mubr.f32.gmra.mrb[0].mxu0 %v729
        %v731 = vpop.f32.mrb[0].mxu0
        %v732 = vadd.f32 %v636, %v731
        %v733 = vpop.f32.mrb[0].mxu0
        %734 = vmatprep.mubr.f32.mxu0 0.0
        %v735 = vand.u32 %v433, 4294901760
        %v736 = vsub.f32 %v433, %v735
        %737 = vmatmul.mubr.f32.gmra.mrb[0].mxu0 %v736
        %v738 = vpop.f32.mrb[0].mxu0
        %v739 = vadd.f32 %v642, %v738
        %v740 = vpop.f32.mrb[0].mxu0
        %741 = vmatprep.mubr.f32.mxu0 0.0
        %v742 = vand.u32 %v436, 4294901760
        %v743 = vsub.f32 %v436, %v742
        %744 = vmatmul.mubr.f32.gmra.mrb[0].mxu0 %v743
        %v745 = vpop.f32.mrb[0].mxu0
        %v746 = vadd.f32 %v648, %v745
        %v747 = vpop.f32.mrb[0].mxu0
        %748 = vmatprep.mubr.f32.mxu0 0.0
        %v749 = vand.u32 %v439, 4294901760
        %v750 = vsub.f32 %v439, %v749
        %751 = vmatmul.mubr.f32.gmra.mrb[0].mxu0 %v750
        %v752 = vpop.f32.mrb[0].mxu0
        %v753 = vadd.f32 %v654, %v752
        %v754 = vpop.f32.mrb[0].mxu0
        %755 = vdwg.mxu0
        %756 = vmatprep.subr.mxu0 0.0
        %v757 = vand.u32 %v425, 4294901760
        %758 = vmatpush1.msra.mxu0 %v757
        %759 = vmatprep.subr.mxu0 0.0
        %v760 = vand.u32 %v426, 4294901760
        %761 = vmatpush1.msra.mxu0 %v760
        %762 = vmatprep.subr.mxu0 0.0
        %v763 = vand.u32 %v443, 4294901760
        %764 = vmatpush1.msra.mxu0 %v763
        %765 = vmatprep.subr.mxu0 0.0
        %766 = vmatpush1.msra.mxu0 0.0
        %767 = vmatprep.subr.mxu0 0.0
        %768 = vmatpush1.msra.mxu0 0.0
        %769 = vmatprep.subr.mxu0 0.0
        %770 = vmatpush1.msra.mxu0 0.0
        %771 = vmatprep.subr.mxu0 0.0
        %772 = vmatpush1.msra.mxu0 0.0
        %773 = vmatprep.subr.mxu0 0.0
        %774 = vmatpush1.msra.mxu0 0.0
        %775 = vmatprep.subr.mxu0 0.0
        %776 = vmatpush1.msra.mxu0 0.0
        %777 = vmatprep.subr.mxu0 0.0
        %778 = vmatpush1.msra.mxu0 0.0
        %779 = vmatprep.subr.mxu0 0.0
        %780 = vmatpush1.msra.mxu0 0.0
        %781 = vmatprep.subr.mxu0 0.0
        %782 = vmatpush1.msra.mxu0 0.0
        %783 = vmatprep.subr.mxu0 0.0
        %784 = vmatpush1.msra.mxu0 0.0
        %785 = vmatprep.subr.mxu0 0.0
        %786 = vmatpush1.msra.mxu0 0.0
        %787 = vmatprep.subr.mxu0 0.0
        %788 = vmatpush1.msra.mxu0 0.0
        %789 = vmatprep.subr.mxu0 0.0
        %790 = vmatpush1.msra.mxu0 0.0
        %791 = vmatprep.subr.mxu0 0.0
        %792 = vmatpush1.msra.mxu0 0.0
        %793 = vmatprep.subr.mxu0 0.0
        %794 = vmatpush1.msra.mxu0 0.0
        %795 = vmatprep.subr.mxu0 0.0
        %796 = vmatpush1.msra.mxu0 0.0
        %797 = vmatprep.subr.mxu0 0.0
        %798 = vmatpush1.msra.mxu0 0.0
        %799 = vmatprep.subr.mxu0 0.0
        %800 = vmatpush1.msra.mxu0 0.0
        %801 = vmatprep.subr.mxu0 0.0
        %802 = vmatpush1.msra.mxu0 0.0
        %803 = vmatprep.subr.mxu0 0.0
        %804 = vmatpush1.msra.mxu0 0.0
        %805 = vmatprep.subr.mxu0 0.0
        %806 = vmatpush1.msra.mxu0 0.0
        %807 = vmatprep.subr.mxu0 0.0
        %808 = vmatpush1.msra.mxu0 0.0
        %809 = vmatprep.subr.mxu0 0.0
        %810 = vmatpush1.msra.mxu0 0.0
        %811 = vmatprep.subr.mxu0 0.0
        %812 = vmatpush1.msra.mxu0 0.0
        %813 = vmatprep.subr.mxu0 0.0
        %814 = vmatpush1.msra.mxu0 0.0
        %815 = vmatprep.subr.mxu0 0.0
        %816 = vmatpush1.msra.mxu0 0.0
        %817 = vmatprep.subr.mxu0 0.0
        %818 = vmatpush1.msra.mxu0 0.0
        %819 = vmatprep.subr.mxu0 0.0
        %820 = vmatpush1.msra.mxu0 0.0
        %821 = vmatprep.subr.mxu0 0.0
        %822 = vmatpush1.msra.mxu0 0.0
        %823 = vmatprep.mubr.f32.mxu0 0.0
        %v824 = vand.u32 %v430, 4294901760
        %v825 = vsub.f32 %v430, %v824
        %v826 = vand.u32 %v825, 4294901760
        %827 = vmatmul.mubr.f32.gmra.mrb[0].mxu0 %v826
        %v828 = vpop.f32.mrb[0].mxu0
        %v829 = vadd.f32 %v732, %v828
        %v830 = vpop.f32.mrb[0].mxu0
        %831 = vmatprep.mubr.f32.mxu0 0.0
        %v832 = vand.u32 %v433, 4294901760
        %v833 = vsub.f32 %v433, %v832
        %v834 = vand.u32 %v833, 4294901760
        %835 = vmatmul.mubr.f32.gmra.mrb[0].mxu0 %v834
        %v836 = vpop.f32.mrb[0].mxu0
        %v837 = vadd.f32 %v739, %v836
        %v838 = vpop.f32.mrb[0].mxu0
        %839 = vmatprep.mubr.f32.mxu0 0.0
        %v840 = vand.u32 %v436, 4294901760
        %v841 = vsub.f32 %v436, %v840
        %v842 = vand.u32 %v841, 4294901760
        %843 = vmatmul.mubr.f32.gmra.mrb[0].mxu0 %v842
        %v844 = vpop.f32.mrb[0].mxu0
        %v845 = vadd.f32 %v746, %v844
        %v846 = vpop.f32.mrb[0].mxu0
        %847 = vmatprep.mubr.f32.mxu0 0.0
        %v848 = vand.u32 %v439, 4294901760
        %v849 = vsub.f32 %v439, %v848
        %v850 = vand.u32 %v849, 4294901760
        %851 = vmatmul.mubr.f32.gmra.mrb[0].mxu0 %v850
        %v852 = vpop.f32.mrb[0].mxu0
        %v853 = vadd.f32 %v753, %v852
        %v854 = vpop.f32.mrb[0].mxu0
        %855 = vdwg.mxu0
        %856 = vmatprep.subr.mxu0 0.0
        %v857 = vand.u32 %v425, 4294901760
        %v858 = vsub.f32 %v425, %v857
        %v859 = vand.u32 %v858, 4294901760
        %860 = vmatpush1.msra.mxu0 %v859
        %861 = vmatprep.subr.mxu0 0.0
        %v862 = vand.u32 %v426, 4294901760
        %v863 = vsub.f32 %v426, %v862
        %v864 = vand.u32 %v863, 4294901760
        %865 = vmatpush1.msra.mxu0 %v864
        %866 = vmatprep.subr.mxu0 0.0
        %v867 = vand.u32 %v443, 4294901760
        %v868 = vsub.f32 %v443, %v867
        %v869 = vand.u32 %v868, 4294901760
        %870 = vmatpush1.msra.mxu0 %v869
        %871 = vmatprep.subr.mxu0 0.0
        %872 = vmatpush1.msra.mxu0 0.0
        %873 = vmatprep.subr.mxu0 0.0
        %874 = vmatpush1.msra.mxu0 0.0
        %875 = vmatprep.subr.mxu0 0.0
        %876 = vmatpush1.msra.mxu0 0.0
        %877 = vmatprep.subr.mxu0 0.0
        %878 = vmatpush1.msra.mxu0 0.0
        %879 = vmatprep.subr.mxu0 0.0
        %880 = vmatpush1.msra.mxu0 0.0
        %881 = vmatprep.subr.mxu0 0.0
        %882 = vmatpush1.msra.mxu0 0.0
        %883 = vmatprep.subr.mxu0 0.0
        %884 = vmatpush1.msra.mxu0 0.0
        %885 = vmatprep.subr.mxu0 0.0
        %886 = vmatpush1.msra.mxu0 0.0
        %887 = vmatprep.subr.mxu0 0.0
        %888 = vmatpush1.msra.mxu0 0.0
        %889 = vmatprep.subr.mxu0 0.0
        %890 = vmatpush1.msra.mxu0 0.0
        %891 = vmatprep.subr.mxu0 0.0
        %892 = vmatpush1.msra.mxu0 0.0
        %893 = vmatprep.subr.mxu0 0.0
        %894 = vmatpush1.msra.mxu0 0.0
        %895 = vmatprep.subr.mxu0 0.0
        %896 = vmatpush1.msra.mxu0 0.0
        %897 = vmatprep.subr.mxu0 0.0
        %898 = vmatpush1.msra.mxu0 0.0
        %899 = vmatprep.subr.mxu0 0.0
        %900 = vmatpush1.msra.mxu0 0.0
        %901 = vmatprep.subr.mxu0 0.0
        %902 = vmatpush1.msra.mxu0 0.0
        %903 = vmatprep.subr.mxu0 0.0
        %904 = vmatpush1.msra.mxu0 0.0
        %905 = vmatprep.subr.mxu0 0.0
        %906 = vmatpush1.msra.mxu0 0.0
        %907 = vmatprep.subr.mxu0 0.0
        %908 = vmatpush1.msra.mxu0 0.0
        %909 = vmatprep.subr.mxu0 0.0
        %910 = vmatpush1.msra.mxu0 0.0
        %911 = vmatprep.subr.mxu0 0.0
        %912 = vmatpush1.msra.mxu0 0.0
        %913 = vmatprep.subr.mxu0 0.0
        %914 = vmatpush1.msra.mxu0 0.0
        %915 = vmatprep.subr.mxu0 0.0
        %916 = vmatpush1.msra.mxu0 0.0
        %917 = vmatprep.subr.mxu0 0.0
        %918 = vmatpush1.msra.mxu0 0.0
        %919 = vmatprep.subr.mxu0 0.0
        %920 = vmatpush1.msra.mxu0 0.0
        %921 = vmatprep.subr.mxu0 0.0
        %922 = vmatpush1.msra.mxu0 0.0
        %923 = vmatprep.subr.mxu0 0.0
        %924 = vmatpush1.msra.mxu0 0.0
        %925 = vmatprep.subr.mxu0 0.0
        %926 = vmatpush1.msra.mxu0 0.0
        %927 = vmatprep.subr.mxu0 0.0
        %928 = vmatpush1.msra.mxu0 0.0
        %929 = vmatprep.mubr.f32.mxu0 0.0
        %v930 = vand.u32 %v430, 4294901760
        %931 = vmatmul.mubr.f32.gmra.mrb[0].mxu0 %v930
        %v932 = vpop.f32.mrb[0].mxu0
        %v933 = vadd.f32 %v829, %v932
        %v934 = vpop.f32.mrb[0].mxu0
        %935 = vmatprep.mubr.f32.mxu0 0.0
        %v936 = vand.u32 %v433, 4294901760
        %937 = vmatmul.mubr.f32.gmra.mrb[0].mxu0 %v936
        %v938 = vpop.f32.mrb[0].mxu0
        %v939 = vadd.f32 %v837, %v938
        %v940 = vpop.f32.mrb[0].mxu0
        %941 = vmatprep.mubr.f32.mxu0 0.0
        %v942 = vand.u32 %v436, 4294901760
        %943 = vmatmul.mubr.f32.gmra.mrb[0].mxu0 %v942
        %v944 = vpop.f32.mrb[0].mxu0
        %v945 = vadd.f32 %v845, %v944
        %v946 = vpop.f32.mrb[0].mxu0
        %947 = vmatprep.mubr.f32.mxu0 0.0
        %v948 = vand.u32 %v439, 4294901760
        %949 = vmatmul.mubr.f32.gmra.mrb[0].mxu0 %v948
        %v950 = vpop.f32.mrb[0].mxu0
        %v951 = vadd.f32 %v853, %v950
        %v952 = vpop.f32.mrb[0].mxu0
        %953 = vdwg.mxu0
        %954 = vmatprep.subr.mxu0 0.0
        %v955 = vand.u32 %v425, 4294901760
        %956 = vmatpush1.msra.mxu0 %v955
        %957 = vmatprep.subr.mxu0 0.0
        %v958 = vand.u32 %v426, 4294901760
        %959 = vmatpush1.msra.mxu0 %v958
        %960 = vmatprep.subr.mxu0 0.0
        %v961 = vand.u32 %v443, 4294901760
        %962 = vmatpush1.msra.mxu0 %v961
        %963 = vmatprep.subr.mxu0 0.0
        %964 = vmatpush1.msra.mxu0 0.0
        %965 = vmatprep.subr.mxu0 0.0
        %966 = vmatpush1.msra.mxu0 0.0
        %967 = vmatprep.subr.mxu0 0.0
        %968 = vmatpush1.msra.mxu0 0.0
        %969 = vmatprep.subr.mxu0 0.0
        %970 = vmatpush1.msra.mxu0 0.0
        %971 = vmatprep.subr.mxu0 0.0
        %972 = vmatpush1.msra.mxu0 0.0
        %973 = vmatprep.subr.mxu0 0.0
        %974 = vmatpush1.msra.mxu0 0.0
        %975 = vmatprep.subr.mxu0 0.0
        %976 = vmatpush1.msra.mxu0 0.0
        %977 = vmatprep.subr.mxu0 0.0
        %978 = vmatpush1.msra.mxu0 0.0
        %979 = vmatprep.subr.mxu0 0.0
        %980 = vmatpush1.msra.mxu0 0.0
        %981 = vmatprep.subr.mxu0 0.0
        %982 = vmatpush1.msra.mxu0 0.0
        %983 = vmatprep.subr.mxu0 0.0
        %984 = vmatpush1.msra.mxu0 0.0
        %985 = vmatprep.subr.mxu0 0.0
        %986 = vmatpush1.msra.mxu0 0.0
        %987 = vmatprep.subr.mxu0 0.0
        %988 = vmatpush1.msra.mxu0 0.0
        %989 = vmatprep.subr.mxu0 0.0
        %990 = vmatpush1.msra.mxu0 0.0
        %991 = vmatprep.subr.mxu0 0.0
        %992 = vmatpush1.msra.mxu0 0.0
        %993 = vmatprep.subr.mxu0 0.0
        %994 = vmatpush1.msra.mxu0 0.0
        %995 = vmatprep.subr.mxu0 0.0
        %996 = vmatpush1.msra.mxu0 0.0
        %997 = vmatprep.subr.mxu0 0.0
        %998 = vmatpush1.msra.mxu0 0.0
        %999 = vmatprep.subr.mxu0 0.0
        %1000 = vmatpush1.msra.mxu0 0.0
        %1001 = vmatprep.subr.mxu0 0.0
        %1002 = vmatpush1.msra.mxu0 0.0
        %1003 = vmatprep.subr.mxu0 0.0
        %1004 = vmatpush1.msra.mxu0 0.0
        %1005 = vmatprep.subr.mxu0 0.0
        %1006 = vmatpush1.msra.mxu0 0.0
        %1007 = vmatprep.subr.mxu0 0.0
        %1008 = vmatpush1.msra.mxu0 0.0
        %1009 = vmatprep.subr.mxu0 0.0
        %1010 = vmatpush1.msra.mxu0 0.0
        %1011 = vmatprep.subr.mxu0 0.0
        %1012 = vmatpush1.msra.mxu0 0.0
        %1013 = vmatprep.subr.mxu0 0.0
        %1014 = vmatpush1.msra.mxu0 0.0
        %1015 = vmatprep.subr.mxu0 0.0
        %1016 = vmatpush1.msra.mxu0 0.0
        %1017 = vmatprep.subr.mxu0 0.0
        %1018 = vmatpush1.msra.mxu0 0.0
        %1019 = vmatprep.subr.mxu0 0.0
        %1020 = vmatpush1.msra.mxu0 0.0
        %1021 = vmatprep.mubr.f32.mxu0 0.0
        %v1022 = vand.u32 %v430, 4294901760
        %1023 = vmatmul.mubr.f32.gmra.mrb[0].mxu0 %v1022
        %v1024 = vpop.f32.mrb[0].mxu0
        %v1025 = vadd.f32 %v933, %v1024
        %v1026 = vpop.f32.mrb[0].mxu0
        %1027 = vmatprep.mubr.f32.mxu0 0.0
        %v1028 = vand.u32 %v433, 4294901760
        %1029 = vmatmul.mubr.f32.gmra.mrb[0].mxu0 %v1028
        %v1030 = vpop.f32.mrb[0].mxu0
        %v1031 = vadd.f32 %v939, %v1030
        %v1032 = vpop.f32.mrb[0].mxu0
        %1033 = vmatprep.mubr.f32.mxu0 0.0
        %v1034 = vand.u32 %v436, 4294901760
        %1035 = vmatmul.mubr.f32.gmra.mrb[0].mxu0 %v1034
        %v1036 = vpop.f32.mrb[0].mxu0
        %v1037 = vadd.f32 %v945, %v1036
        %v1038 = vpop.f32.mrb[0].mxu0
        %1039 = vmatprep.mubr.f32.mxu0 0.0
        %v1040 = vand.u32 %v439, 4294901760
        %1041 = vmatmul.mubr.f32.gmra.mrb[0].mxu0 %v1040
        %v1042 = vpop.f32.mrb[0].mxu0
        %v1043 = vadd.f32 %v951, %v1042
        %v1044 = vpop.f32.mrb[0].mxu0
        %1045 = vdwg.mxu0
        %1047 = vset.pattern.permute.xlu0 0
        %1048 = vperm.xlu0 %1047, %v400
        %v1049 = vpop.permute.xlu0 %1048
        %1052 = vset.pattern.permute.xlu0 0
        %1053 = vperm.xlu0 %1052, %v401
        %v1054 = vpop.permute.xlu0 %1053
        %v1056 = vadd.f32 %v1025, %v1049
        %v1057 = vadd.f32 %v1031, %v1054
        %1058 = vset.pattern.permute.xlu0 1
        %1059 = vperm.xlu0 %1058, %v400
        %v1060 = vpop.permute.xlu0 %1059
        %1062 = vset.pattern.permute.xlu0 1
        %1063 = vperm.xlu0 %1062, %v401
        %v1064 = vpop.permute.xlu0 %1063
        %v1066 = vadd.f32 %v1037, %v1060
        %v1067 = vadd.f32 %v1043, %v1064
        %1068 = vmatprep.subr.mxu0 0.0
        %v1069 = vand.u32 %v405, 4294901760
        %1070 = vmatpush1.msra.mxu0 %v1069
        %1071 = vmatprep.subr.mxu0 0.0
        %v1072 = vand.u32 %v406, 4294901760
        %1073 = vmatpush1.msra.mxu0 %v1072
        %1074 = vmatprep.subr.mxu0 0.0
        %v1075 = vand.u32 %v407, 4294901760
        %1076 = vmatpush1.msra.mxu0 %v1075
        %1077 = vmatprep.subr.mxu0 0.0
        %v1078 = vand.u32 %v408, 4294901760
        %1079 = vmatpush1.msra.mxu0 %v1078
        %1080 = vmatprep.subr.mxu0 0.0
        %v1081 = vand.u32 %v409, 4294901760
        %1082 = vmatpush1.msra.mxu0 %v1081
        %1083 = vmatprep.subr.mxu0 0.0
        %v1084 = vand.u32 %v410, 4294901760
        %1085 = vmatpush1.msra.mxu0 %v1084
        %1086 = vmatprep.subr.mxu0 0.0
        %v1087 = vand.u32 %v411, 4294901760
        %1088 = vmatpush1.msra.mxu0 %v1087
        %1089 = vmatprep.subr.mxu0 0.0
        %v1090 = vand.u32 %v412, 4294901760
        %1091 = vmatpush1.msra.mxu0 %v1090
        %1092 = vmatprep.subr.mxu0 0.0
        %v1093 = vand.u32 %v413, 4294901760
        %1094 = vmatpush1.msra.mxu0 %v1093
        %1095 = vmatprep.subr.mxu0 0.0
        %v1096 = vand.u32 %v414, 4294901760
        %1097 = vmatpush1.msra.mxu0 %v1096
        %1098 = vmatprep.subr.mxu0 0.0
        %v1099 = vand.u32 %v415, 4294901760
        %1100 = vmatpush1.msra.mxu0 %v1099
        %1101 = vmatprep.subr.mxu0 0.0
        %v1102 = vand.u32 %v416, 4294901760
        %1103 = vmatpush1.msra.mxu0 %v1102
        %1104 = vmatprep.subr.mxu0 0.0
        %v1105 = vand.u32 %v417, 4294901760
        %1106 = vmatpush1.msra.mxu0 %v1105
        %1107 = vmatprep.subr.mxu0 0.0
        %v1108 = vand.u32 %v418, 4294901760
        %1109 = vmatpush1.msra.mxu0 %v1108
        %1110 = vmatprep.subr.mxu0 0.0
        %v1111 = vand.u32 %v419, 4294901760
        %1112 = vmatpush1.msra.mxu0 %v1111
        %1113 = vmatprep.subr.mxu0 0.0
        %v1114 = vand.u32 %v420, 4294901760
        %1115 = vmatpush1.msra.mxu0 %v1114
        %1116 = vmatprep.subr.mxu0 0.0
        %1117 = vmatpush1.msra.mxu0 0.0
        %1118 = vmatprep.subr.mxu0 0.0
        %1119 = vmatpush1.msra.mxu0 0.0
        %1120 = vmatprep.subr.mxu0 0.0
        %1121 = vmatpush1.msra.mxu0 0.0
        %1122 = vmatprep.subr.mxu0 0.0
        %1123 = vmatpush1.msra.mxu0 0.0
        %1124 = vmatprep.subr.mxu0 0.0
        %1125 = vmatpush1.msra.mxu0 0.0
        %1126 = vmatprep.subr.mxu0 0.0
        %1127 = vmatpush1.msra.mxu0 0.0
        %1128 = vmatprep.subr.mxu0 0.0
        %1129 = vmatpush1.msra.mxu0 0.0
        %1130 = vmatprep.subr.mxu0 0.0
        %1131 = vmatpush1.msra.mxu0 0.0
        %1132 = vmatprep.subr.mxu0 0.0
        %1133 = vmatpush1.msra.mxu0 0.0
        %1134 = vmatprep.subr.mxu0 0.0
        %1135 = vmatpush1.msra.mxu0 0.0
        %1136 = vmatprep.subr.mxu0 0.0
        %1137 = vmatpush1.msra.mxu0 0.0
        %1138 = vmatprep.subr.mxu0 0.0
        %1139 = vmatpush1.msra.mxu0 0.0
        %1140 = vmatprep.subr.mxu0 0.0
        %1141 = vmatpush1.msra.mxu0 0.0
        %1142 = vmatprep.subr.mxu0 0.0
        %1143 = vmatpush1.msra.mxu0 0.0
        %1144 = vmatprep.subr.mxu0 0.0
        %1145 = vmatpush1.msra.mxu0 0.0
        %1146 = vmatprep.subr.mxu0 0.0
        %1147 = vmatpush1.msra.mxu0 0.0
        %1148 = vmatprep.mubr.f32.mxu0 0.0
        %v1149 = vand.u32 %v1056, 4294901760
        %v1150 = vsub.f32 %v1056, %v1149
        %v1151 = vand.u32 %v1150, 4294901760
        %v1152 = vsub.f32 %v1150, %v1151
        %v1153 = vand.u32 %v1152, 4294901760
        %1154 = vmatmul.mubr.f32.gmra.mrb[0].mxu0 %v1153
        %v1155 = vpop.f32.mrb[0].mxu0
        %v1156 = vadd.f32 0.0, %v1155
        %v1157 = vpop.f32.mrb[0].mxu0
        %1158 = vmatprep.mubr.f32.mxu0 0.0
        %v1159 = vand.u32 %v1057, 4294901760
        %v1160 = vsub.f32 %v1057, %v1159
        %v1161 = vand.u32 %v1160, 4294901760
        %v1162 = vsub.f32 %v1160, %v1161
        %v1163 = vand.u32 %v1162, 4294901760
        %1164 = vmatmul.mubr.f32.gmra.mrb[0].mxu0 %v1163
        %v1165 = vpop.f32.mrb[0].mxu0
        %v1166 = vadd.f32 0.0, %v1165
        %v1167 = vpop.f32.mrb[0].mxu0
        %1168 = vdwg.mxu0
        %1169 = vmatprep.subr.mxu0 0.0
        %v1170 = vand.u32 %v405, 4294901760
        %v1171 = vsub.f32 %v405, %v1170
        %v1172 = vand.u32 %v1171, 4294901760
        %v1173 = vsub.f32 %v1171, %v1172
        %v1174 = vand.u32 %v1173, 4294901760
        %1175 = vmatpush1.msra.mxu0 %v1174
        %1176 = vmatprep.subr.mxu0 0.0
        %v1177 = vand.u32 %v406, 4294901760
        %v1178 = vsub.f32 %v406, %v1177
        %v1179 = vand.u32 %v1178, 4294901760
        %v1180 = vsub.f32 %v1178, %v1179
        %v1181 = vand.u32 %v1180, 4294901760
        %1182 = vmatpush1.msra.mxu0 %v1181
        %1183 = vmatprep.subr.mxu0 0.0
        %v1184 = vand.u32 %v407, 4294901760
        %v1185 = vsub.f32 %v407, %v1184
        %v1186 = vand.u32 %v1185, 4294901760
        %v1187 = vsub.f32 %v1185, %v1186
        %v1188 = vand.u32 %v1187, 4294901760
        %1189 = vmatpush1.msra.mxu0 %v1188
        %1190 = vmatprep.subr.mxu0 0.0
        %v1191 = vand.u32 %v408, 4294901760
        %v1192 = vsub.f32 %v408, %v1191
        %v1193 = vand.u32 %v1192, 4294901760
        %v1194 = vsub.f32 %v1192, %v1193
        %v1195 = vand.u32 %v1194, 4294901760
        %1196 = vmatpush1.msra.mxu0 %v1195
        %1197 = vmatprep.subr.mxu0 0.0
        %v1198 = vand.u32 %v409, 4294901760
        %v1199 = vsub.f32 %v409, %v1198
        %v1200 = vand.u32 %v1199, 4294901760
        %v1201 = vsub.f32 %v1199, %v1200
        %v1202 = vand.u32 %v1201, 4294901760
        %1203 = vmatpush1.msra.mxu0 %v1202
        %1204 = vmatprep.subr.mxu0 0.0
        %v1205 = vand.u32 %v410, 4294901760
        %v1206 = vsub.f32 %v410, %v1205
        %v1207 = vand.u32 %v1206, 4294901760
        %v1208 = vsub.f32 %v1206, %v1207
        %v1209 = vand.u32 %v1208, 4294901760
        %1210 = vmatpush1.msra.mxu0 %v1209
        %1211 = vmatprep.subr.mxu0 0.0
        %v1212 = vand.u32 %v411, 4294901760
        %v1213 = vsub.f32 %v411, %v1212
        %v1214 = vand.u32 %v1213, 4294901760
        %v1215 = vsub.f32 %v1213, %v1214
        %v1216 = vand.u32 %v1215, 4294901760
        %1217 = vmatpush1.msra.mxu0 %v1216
        %1218 = vmatprep.subr.mxu0 0.0
        %v1219 = vand.u32 %v412, 4294901760
        %v1220 = vsub.f32 %v412, %v1219
        %v1221 = vand.u32 %v1220, 4294901760
        %v1222 = vsub.f32 %v1220, %v1221
        %v1223 = vand.u32 %v1222, 4294901760
        %1224 = vmatpush1.msra.mxu0 %v1223
        %1225 = vmatprep.subr.mxu0 0.0
        %v1226 = vand.u32 %v413, 4294901760
        %v1227 = vsub.f32 %v413, %v1226
        %v1228 = vand.u32 %v1227, 4294901760
        %v1229 = vsub.f32 %v1227, %v1228
        %v1230 = vand.u32 %v1229, 4294901760
        %1231 = vmatpush1.msra.mxu0 %v1230
        %1232 = vmatprep.subr.mxu0 0.0
        %v1233 = vand.u32 %v414, 4294901760
        %v1234 = vsub.f32 %v414, %v1233
        %v1235 = vand.u32 %v1234, 4294901760
        %v1236 = vsub.f32 %v1234, %v1235
        %v1237 = vand.u32 %v1236, 4294901760
        %1238 = vmatpush1.msra.mxu0 %v1237
        %1239 = vmatprep.subr.mxu0 0.0
        %v1240 = vand.u32 %v415, 4294901760
        %v1241 = vsub.f32 %v415, %v1240
        %v1242 = vand.u32 %v1241, 4294901760
        %v1243 = vsub.f32 %v1241, %v1242
        %v1244 = vand.u32 %v1243, 4294901760
        %1245 = vmatpush1.msra.mxu0 %v1244
        %1246 = vmatprep.subr.mxu0 0.0
        %v1247 = vand.u32 %v416, 4294901760
        %v1248 = vsub.f32 %v416, %v1247
        %v1249 = vand.u32 %v1248, 4294901760
        %v1250 = vsub.f32 %v1248, %v1249
        %v1251 = vand.u32 %v1250, 4294901760
        %1252 = vmatpush1.msra.mxu0 %v1251
        %1253 = vmatprep.subr.mxu0 0.0
        %v1254 = vand.u32 %v417, 4294901760
        %v1255 = vsub.f32 %v417, %v1254
        %v1256 = vand.u32 %v1255, 4294901760
        %v1257 = vsub.f32 %v1255, %v1256
        %v1258 = vand.u32 %v1257, 4294901760
        %1259 = vmatpush1.msra.mxu0 %v1258
        %1260 = vmatprep.subr.mxu0 0.0
        %v1261 = vand.u32 %v418, 4294901760
        %v1262 = vsub.f32 %v418, %v1261
        %v1263 = vand.u32 %v1262, 4294901760
        %v1264 = vsub.f32 %v1262, %v1263
        %v1265 = vand.u32 %v1264, 4294901760
        %1266 = vmatpush1.msra.mxu0 %v1265
        %1267 = vmatprep.subr.mxu0 0.0
        %v1268 = vand.u32 %v419, 4294901760
        %v1269 = vsub.f32 %v419, %v1268
        %v1270 = vand.u32 %v1269, 4294901760
        %v1271 = vsub.f32 %v1269, %v1270
        %v1272 = vand.u32 %v1271, 4294901760
        %1273 = vmatpush1.msra.mxu0 %v1272
        %1274 = vmatprep.subr.mxu0 0.0
        %v1275 = vand.u32 %v420, 4294901760
        %v1276 = vsub.f32 %v420, %v1275
        %v1277 = vand.u32 %v1276, 4294901760
        %v1278 = vsub.f32 %v1276, %v1277
        %v1279 = vand.u32 %v1278, 4294901760
        %1280 = vmatpush1.msra.mxu0 %v1279
        %1281 = vmatprep.subr.mxu0 0.0
        %1282 = vmatpush1.msra.mxu0 0.0
        %1283 = vmatprep.subr.mxu0 0.0
        %1284 = vmatpush1.msra.mxu0 0.0
        %1285 = vmatprep.subr.mxu0 0.0
        %1286 = vmatpush1.msra.mxu0 0.0
        %1287 = vmatprep.subr.mxu0 0.0
        %1288 = vmatpush1.msra.mxu0 0.0
        %1289 = vmatprep.subr.mxu0 0.0
        %1290 = vmatpush1.msra.mxu0 0.0
        %1291 = vmatprep.subr.mxu0 0.0
        %1292 = vmatpush1.msra.mxu0 0.0
        %1293 = vmatprep.subr.mxu0 0.0
        %1294 = vmatpush1.msra.mxu0 0.0
        %1295 = vmatprep.subr.mxu0 0.0
        %1296 = vmatpush1.msra.mxu0 0.0
        %1297 = vmatprep.subr.mxu0 0.0
        %1298 = vmatpush1.msra.mxu0 0.0
        %1299 = vmatprep.subr.mxu0 0.0
        %1300 = vmatpush1.msra.mxu0 0.0
        %1301 = vmatprep.subr.mxu0 0.0
        %1302 = vmatpush1.msra.mxu0 0.0
        %1303 = vmatprep.subr.mxu0 0.0
        %1304 = vmatpush1.msra.mxu0 0.0
        %1305 = vmatprep.subr.mxu0 0.0
        %1306 = vmatpush1.msra.mxu0 0.0
        %1307 = vmatprep.subr.mxu0 0.0
        %1308 = vmatpush1.msra.mxu0 0.0
        %1309 = vmatprep.subr.mxu0 0.0
        %1310 = vmatpush1.msra.mxu0 0.0
        %1311 = vmatprep.subr.mxu0 0.0
        %1312 = vmatpush1.msra.mxu0 0.0
        %1313 = vmatprep.mubr.f32.mxu0 0.0
        %v1314 = vand.u32 %v1056, 4294901760
        %1315 = vmatmul.mubr.f32.gmra.mrb[0].mxu0 %v1314
        %v1316 = vpop.f32.mrb[0].mxu0
        %v1317 = vadd.f32 %v1156, %v1316
        %v1318 = vpop.f32.mrb[0].mxu0
        %1319 = vmatprep.mubr.f32.mxu0 0.0
        %v1320 = vand.u32 %v1057, 4294901760
        %1321 = vmatmul.mubr.f32.gmra.mrb[0].mxu0 %v1320
        %v1322 = vpop.f32.mrb[0].mxu0
        %v1323 = vadd.f32 %v1166, %v1322
        %v1324 = vpop.f32.mrb[0].mxu0
        %1325 = vdwg.mxu0
        %1326 = vmatprep.subr.mxu0 0.0
        %v1327 = vand.u32 %v405, 4294901760
        %v1328 = vsub.f32 %v405, %v1327
        %1329 = vmatpush1.msra.mxu0 %v1328
        %1330 = vmatprep.subr.mxu0 0.0
        %v1331 = vand.u32 %v406, 4294901760
        %v1332 = vsub.f32 %v406, %v1331
        %1333 = vmatpush1.msra.mxu0 %v1332
        %1334 = vmatprep.subr.mxu0 0.0
        %v1335 = vand.u32 %v407, 4294901760
        %v1336 = vsub.f32 %v407, %v1335
        %1337 = vmatpush1.msra.mxu0 %v1336
        %1338 = vmatprep.subr.mxu0 0.0
        %v1339 = vand.u32 %v408, 4294901760
        %v1340 = vsub.f32 %v408, %v1339
        %1341 = vmatpush1.msra.mxu0 %v1340
        %1342 = vmatprep.subr.mxu0 0.0
        %v1343 = vand.u32 %v409, 4294901760
        %v1344 = vsub.f32 %v409, %v1343
        %1345 = vmatpush1.msra.mxu0 %v1344
        %1346 = vmatprep.subr.mxu0 0.0
        %v1347 = vand.u32 %v410, 4294901760
        %v1348 = vsub.f32 %v410, %v1347
        %1349 = vmatpush1.msra.mxu0 %v1348
        %1350 = vmatprep.subr.mxu0 0.0
        %v1351 = vand.u32 %v411, 4294901760
        %v1352 = vsub.f32 %v411, %v1351
        %1353 = vmatpush1.msra.mxu0 %v1352
        %1354 = vmatprep.subr.mxu0 0.0
        %v1355 = vand.u32 %v412, 4294901760
        %v1356 = vsub.f32 %v412, %v1355
        %1357 = vmatpush1.msra.mxu0 %v1356
        %1358 = vmatprep.subr.mxu0 0.0
        %v1359 = vand.u32 %v413, 4294901760
        %v1360 = vsub.f32 %v413, %v1359
        %1361 = vmatpush1.msra.mxu0 %v1360
        %1362 = vmatprep.subr.mxu0 0.0
        %v1363 = vand.u32 %v414, 4294901760
        %v1364 = vsub.f32 %v414, %v1363
        %1365 = vmatpush1.msra.mxu0 %v1364
        %1366 = vmatprep.subr.mxu0 0.0
        %v1367 = vand.u32 %v415, 4294901760
        %v1368 = vsub.f32 %v415, %v1367
        %1369 = vmatpush1.msra.mxu0 %v1368
        %1370 = vmatprep.subr.mxu0 0.0
        %v1371 = vand.u32 %v416, 4294901760
        %v1372 = vsub.f32 %v416, %v1371
        %1373 = vmatpush1.msra.mxu0 %v1372
        %1374 = vmatprep.subr.mxu0 0.0
        %v1375 = vand.u32 %v417, 4294901760
        %v1376 = vsub.f32 %v417, %v1375
        %1377 = vmatpush1.msra.mxu0 %v1376
        %1378 = vmatprep.subr.mxu0 0.0
        %v1379 = vand.u32 %v418, 4294901760
        %v1380 = vsub.f32 %v418, %v1379
        %1381 = vmatpush1.msra.mxu0 %v1380
        %1382 = vmatprep.subr.mxu0 0.0
        %v1383 = vand.u32 %v419, 4294901760
        %v1384 = vsub.f32 %v419, %v1383
        %1385 = vmatpush1.msra.mxu0 %v1384
        %1386 = vmatprep.subr.mxu0 0.0
        %v1387 = vand.u32 %v420, 4294901760
        %v1388 = vsub.f32 %v420, %v1387
        %1389 = vmatpush1.msra.mxu0 %v1388
        %1390 = vmatprep.subr.mxu0 0.0
        %1391 = vmatpush1.msra.mxu0 0.0
        %1392 = vmatprep.subr.mxu0 0.0
        %1393 = vmatpush1.msra.mxu0 0.0
        %1394 = vmatprep.subr.mxu0 0.0
        %1395 = vmatpush1.msra.mxu0 0.0
        %1396 = vmatprep.subr.mxu0 0.0
        %1397 = vmatpush1.msra.mxu0 0.0
        %1398 = vmatprep.subr.mxu0 0.0
        %1399 = vmatpush1.msra.mxu0 0.0
        %1400 = vmatprep.subr.mxu0 0.0
        %1401 = vmatpush1.msra.mxu0 0.0
        %1402 = vmatprep.subr.mxu0 0.0
        %1403 = vmatpush1.msra.mxu0 0.0
        %1404 = vmatprep.subr.mxu0 0.0
        %1405 = vmatpush1.msra.mxu0 0.0
        %1406 = vmatprep.subr.mxu0 0.0
        %1407 = vmatpush1.msra.mxu0 0.0
        %1408 = vmatprep.subr.mxu0 0.0
        %1409 = vmatpush1.msra.mxu0 0.0
        %1410 = vmatprep.subr.mxu0 0.0
        %1411 = vmatpush1.msra.mxu0 0.0
        %1412 = vmatprep.subr.mxu0 0.0
        %1413 = vmatpush1.msra.mxu0 0.0
        %1414 = vmatprep.subr.mxu0 0.0
        %1415 = vmatpush1.msra.mxu0 0.0
        %1416 = vmatprep.subr.mxu0 0.0
        %1417 = vmatpush1.msra.mxu0 0.0
        %1418 = vmatprep.subr.mxu0 0.0
        %1419 = vmatpush1.msra.mxu0 0.0
        %1420 = vmatprep.subr.mxu0 0.0
        %1421 = vmatpush1.msra.mxu0 0.0
        %1422 = vmatprep.mubr.f32.mxu0 0.0
        %v1423 = vand.u32 %v1056, 4294901760
        %v1424 = vsub.f32 %v1056, %v1423
        %1425 = vmatmul.mubr.f32.gmra.mrb[0].mxu0 %v1424
        %v1426 = vpop.f32.mrb[0].mxu0
        %v1427 = vadd.f32 %v1317, %v1426
        %v1428 = vpop.f32.mrb[0].mxu0
        %1429 = vmatprep.mubr.f32.mxu0 0.0
        %v1430 = vand.u32 %v1057, 4294901760
        %v1431 = vsub.f32 %v1057, %v1430
        %1432 = vmatmul.mubr.f32.gmra.mrb[0].mxu0 %v1431
        %v1433 = vpop.f32.mrb[0].mxu0
        %v1434 = vadd.f32 %v1323, %v1433
        %v1435 = vpop.f32.mrb[0].mxu0
        %1436 = vdwg.mxu0
        %1437 = vmatprep.subr.mxu0 0.0
        %v1438 = vand.u32 %v405, 4294901760
        %1439 = vmatpush1.msra.mxu0 %v1438
        %1440 = vmatprep.subr.mxu0 0.0
        %v1441 = vand.u32 %v406, 4294901760
        %1442 = vmatpush1.msra.mxu0 %v1441
        %1443 = vmatprep.subr.mxu0 0.0
        %v1444 = vand.u32 %v407, 4294901760
        %1445 = vmatpush1.msra.mxu0 %v1444
        %1446 = vmatprep.subr.mxu0 0.0
        %v1447 = vand.u32 %v408, 4294901760
        %1448 = vmatpush1.msra.mxu0 %v1447
        %1449 = vmatprep.subr.mxu0 0.0
        %v1450 = vand.u32 %v409, 4294901760
        %1451 = vmatpush1.msra.mxu0 %v1450
        %1452 = vmatprep.subr.mxu0 0.0
        %v1453 = vand.u32 %v410, 4294901760
        %1454 = vmatpush1.msra.mxu0 %v1453
        %1455 = vmatprep.subr.mxu0 0.0
        %v1456 = vand.u32 %v411, 4294901760
        %1457 = vmatpush1.msra.mxu0 %v1456
        %1458 = vmatprep.subr.mxu0 0.0
        %v1459 = vand.u32 %v412, 4294901760
        %1460 = vmatpush1.msra.mxu0 %v1459
        %1461 = vmatprep.subr.mxu0 0.0
        %v1462 = vand.u32 %v413, 4294901760
        %1463 = vmatpush1.msra.mxu0 %v1462
        %1464 = vmatprep.subr.mxu0 0.0
        %v1465 = vand.u32 %v414, 4294901760
        %1466 = vmatpush1.msra.mxu0 %v1465
        %1467 = vmatprep.subr.mxu0 0.0
        %v1468 = vand.u32 %v415, 4294901760
        %1469 = vmatpush1.msra.mxu0 %v1468
        %1470 = vmatprep.subr.mxu0 0.0
        %v1471 = vand.u32 %v416, 4294901760
        %1472 = vmatpush1.msra.mxu0 %v1471
        %1473 = vmatprep.subr.mxu0 0.0
        %v1474 = vand.u32 %v417, 4294901760
        %1475 = vmatpush1.msra.mxu0 %v1474
        %1476 = vmatprep.subr.mxu0 0.0
        %v1477 = vand.u32 %v418, 4294901760
        %1478 = vmatpush1.msra.mxu0 %v1477
        %1479 = vmatprep.subr.mxu0 0.0
        %v1480 = vand.u32 %v419, 4294901760
        %1481 = vmatpush1.msra.mxu0 %v1480
        %1482 = vmatprep.subr.mxu0 0.0
        %v1483 = vand.u32 %v420, 4294901760
        %1484 = vmatpush1.msra.mxu0 %v1483
        %1485 = vmatprep.subr.mxu0 0.0
        %1486 = vmatpush1.msra.mxu0 0.0
        %1487 = vmatprep.subr.mxu0 0.0
        %1488 = vmatpush1.msra.mxu0 0.0
        %1489 = vmatprep.subr.mxu0 0.0
        %1490 = vmatpush1.msra.mxu0 0.0
        %1491 = vmatprep.subr.mxu0 0.0
        %1492 = vmatpush1.msra.mxu0 0.0
        %1493 = vmatprep.subr.mxu0 0.0
        %1494 = vmatpush1.msra.mxu0 0.0
        %1495 = vmatprep.subr.mxu0 0.0
        %1496 = vmatpush1.msra.mxu0 0.0
        %1497 = vmatprep.subr.mxu0 0.0
        %1498 = vmatpush1.msra.mxu0 0.0
        %1499 = vmatprep.subr.mxu0 0.0
        %1500 = vmatpush1.msra.mxu0 0.0
        %1501 = vmatprep.subr.mxu0 0.0
        %1502 = vmatpush1.msra.mxu0 0.0
        %1503 = vmatprep.subr.mxu0 0.0
        %1504 = vmatpush1.msra.mxu0 0.0
        %1505 = vmatprep.subr.mxu0 0.0
        %1506 = vmatpush1.msra.mxu0 0.0
        %1507 = vmatprep.subr.mxu0 0.0
        %1508 = vmatpush1.msra.mxu0 0.0
        %1509 = vmatprep.subr.mxu0 0.0
        %1510 = vmatpush1.msra.mxu0 0.0
        %1511 = vmatprep.subr.mxu0 0.0
        %1512 = vmatpush1.msra.mxu0 0.0
        %1513 = vmatprep.subr.mxu0 0.0
        %1514 = vmatpush1.msra.mxu0 0.0
        %1515 = vmatprep.subr.mxu0 0.0
        %1516 = vmatpush1.msra.mxu0 0.0
        %1517 = vmatprep.mubr.f32.mxu0 0.0
        %v1518 = vand.u32 %v1056, 4294901760
        %v1519 = vsub.f32 %v1056, %v1518
        %v1520 = vand.u32 %v1519, 4294901760
        %1521 = vmatmul.mubr.f32.gmra.mrb[0].mxu0 %v1520
        %v1522 = vpop.f32.mrb[0].mxu0
        %v1523 = vadd.f32 %v1427, %v1522
        %v1524 = vpop.f32.mrb[0].mxu0
        %1525 = vmatprep.mubr.f32.mxu0 0.0
        %v1526 = vand.u32 %v1057, 4294901760
        %v1527 = vsub.f32 %v1057, %v1526
        %v1528 = vand.u32 %v1527, 4294901760
        %1529 = vmatmul.mubr.f32.gmra.mrb[0].mxu0 %v1528
        %v1530 = vpop.f32.mrb[0].mxu0
        %v1531 = vadd.f32 %v1434, %v1530
        %v1532 = vpop.f32.mrb[0].mxu0
        %1533 = vdwg.mxu0
        %1534 = vmatprep.subr.mxu0 0.0
        %v1535 = vand.u32 %v405, 4294901760
        %v1536 = vsub.f32 %v405, %v1535
        %v1537 = vand.u32 %v1536, 4294901760
        %1538 = vmatpush1.msra.mxu0 %v1537
        %1539 = vmatprep.subr.mxu0 0.0
        %v1540 = vand.u32 %v406, 4294901760
        %v1541 = vsub.f32 %v406, %v1540
        %v1542 = vand.u32 %v1541, 4294901760
        %1543 = vmatpush1.msra.mxu0 %v1542
        %1544 = vmatprep.subr.mxu0 0.0
        %v1545 = vand.u32 %v407, 4294901760
        %v1546 = vsub.f32 %v407, %v1545
        %v1547 = vand.u32 %v1546, 4294901760
        %1548 = vmatpush1.msra.mxu0 %v1547
        %1549 = vmatprep.subr.mxu0 0.0
        %v1550 = vand.u32 %v408, 4294901760
        %v1551 = vsub.f32 %v408, %v1550
        %v1552 = vand.u32 %v1551, 4294901760
        %1553 = vmatpush1.msra.mxu0 %v1552
        %1554 = vmatprep.subr.mxu0 0.0
        %v1555 = vand.u32 %v409, 4294901760
        %v1556 = vsub.f32 %v409, %v1555
        %v1557 = vand.u32 %v1556, 4294901760
        %1558 = vmatpush1.msra.mxu0 %v1557
        %1559 = vmatprep.subr.mxu0 0.0
        %v1560 = vand.u32 %v410, 4294901760
        %v1561 = vsub.f32 %v410, %v1560
        %v1562 = vand.u32 %v1561, 4294901760
        %1563 = vmatpush1.msra.mxu0 %v1562
        %1564 = vmatprep.subr.mxu0 0.0
        %v1565 = vand.u32 %v411, 4294901760
        %v1566 = vsub.f32 %v411, %v1565
        %v1567 = vand.u32 %v1566, 4294901760
        %1568 = vmatpush1.msra.mxu0 %v1567
        %1569 = vmatprep.subr.mxu0 0.0
        %v1570 = vand.u32 %v412, 4294901760
        %v1571 = vsub.f32 %v412, %v1570
        %v1572 = vand.u32 %v1571, 4294901760
        %1573 = vmatpush1.msra.mxu0 %v1572
        %1574 = vmatprep.subr.mxu0 0.0
        %v1575 = vand.u32 %v413, 4294901760
        %v1576 = vsub.f32 %v413, %v1575
        %v1577 = vand.u32 %v1576, 4294901760
        %1578 = vmatpush1.msra.mxu0 %v1577
        %1579 = vmatprep.subr.mxu0 0.0
        %v1580 = vand.u32 %v414, 4294901760
        %v1581 = vsub.f32 %v414, %v1580
        %v1582 = vand.u32 %v1581, 4294901760
        %1583 = vmatpush1.msra.mxu0 %v1582
        %1584 = vmatprep.subr.mxu0 0.0
        %v1585 = vand.u32 %v415, 4294901760
        %v1586 = vsub.f32 %v415, %v1585
        %v1587 = vand.u32 %v1586, 4294901760
        %1588 = vmatpush1.msra.mxu0 %v1587
        %1589 = vmatprep.subr.mxu0 0.0
        %v1590 = vand.u32 %v416, 4294901760
        %v1591 = vsub.f32 %v416, %v1590
        %v1592 = vand.u32 %v1591, 4294901760
        %1593 = vmatpush1.msra.mxu0 %v1592
        %1594 = vmatprep.subr.mxu0 0.0
        %v1595 = vand.u32 %v417, 4294901760
        %v1596 = vsub.f32 %v417, %v1595
        %v1597 = vand.u32 %v1596, 4294901760
        %1598 = vmatpush1.msra.mxu0 %v1597
        %1599 = vmatprep.subr.mxu0 0.0
        %v1600 = vand.u32 %v418, 4294901760
        %v1601 = vsub.f32 %v418, %v1600
        %v1602 = vand.u32 %v1601, 4294901760
        %1603 = vmatpush1.msra.mxu0 %v1602
        %1604 = vmatprep.subr.mxu0 0.0
        %v1605 = vand.u32 %v419, 4294901760
        %v1606 = vsub.f32 %v419, %v1605
        %v1607 = vand.u32 %v1606, 4294901760
        %1608 = vmatpush1.msra.mxu0 %v1607
        %1609 = vmatprep.subr.mxu0 0.0
        %v1610 = vand.u32 %v420, 4294901760
        %v1611 = vsub.f32 %v420, %v1610
        %v1612 = vand.u32 %v1611, 4294901760
        %1613 = vmatpush1.msra.mxu0 %v1612
        %1614 = vmatprep.subr.mxu0 0.0
        %1615 = vmatpush1.msra.mxu0 0.0
        %1616 = vmatprep.subr.mxu0 0.0
        %1617 = vmatpush1.msra.mxu0 0.0
        %1618 = vmatprep.subr.mxu0 0.0
        %1619 = vmatpush1.msra.mxu0 0.0
        %1620 = vmatprep.subr.mxu0 0.0
        %1621 = vmatpush1.msra.mxu0 0.0
        %1622 = vmatprep.subr.mxu0 0.0
        %1623 = vmatpush1.msra.mxu0 0.0
        %1624 = vmatprep.subr.mxu0 0.0
        %1625 = vmatpush1.msra.mxu0 0.0
        %1626 = vmatprep.subr.mxu0 0.0
        %1627 = vmatpush1.msra.mxu0 0.0
        %1628 = vmatprep.subr.mxu0 0.0
        %1629 = vmatpush1.msra.mxu0 0.0
        %1630 = vmatprep.subr.mxu0 0.0
        %1631 = vmatpush1.msra.mxu0 0.0
        %1632 = vmatprep.subr.mxu0 0.0
        %1633 = vmatpush1.msra.mxu0 0.0
        %1634 = vmatprep.subr.mxu0 0.0
        %1635 = vmatpush1.msra.mxu0 0.0
        %1636 = vmatprep.subr.mxu0 0.0
        %1637 = vmatpush1.msra.mxu0 0.0
        %1638 = vmatprep.subr.mxu0 0.0
        %1639 = vmatpush1.msra.mxu0 0.0
        %1640 = vmatprep.subr.mxu0 0.0
        %1641 = vmatpush1.msra.mxu0 0.0
        %1642 = vmatprep.subr.mxu0 0.0
        %1643 = vmatpush1.msra.mxu0 0.0
        %1644 = vmatprep.subr.mxu0 0.0
        %1645 = vmatpush1.msra.mxu0 0.0
        %1646 = vmatprep.mubr.f32.mxu0 0.0
        %v1647 = vand.u32 %v1056, 4294901760
        %1648 = vmatmul.mubr.f32.gmra.mrb[0].mxu0 %v1647
        %v1649 = vpop.f32.mrb[0].mxu0
        %v1650 = vadd.f32 %v1523, %v1649
        %v1651 = vpop.f32.mrb[0].mxu0
        %1652 = vmatprep.mubr.f32.mxu0 0.0
        %v1653 = vand.u32 %v1057, 4294901760
        %1654 = vmatmul.mubr.f32.gmra.mrb[0].mxu0 %v1653
        %v1655 = vpop.f32.mrb[0].mxu0
        %v1656 = vadd.f32 %v1531, %v1655
        %v1657 = vpop.f32.mrb[0].mxu0
        %1658 = vdwg.mxu0
        %1659 = vmatprep.subr.mxu0 0.0
        %v1660 = vand.u32 %v405, 4294901760
        %1661 = vmatpush1.msra.mxu0 %v1660
        %1662 = vmatprep.subr.mxu0 0.0
        %v1663 = vand.u32 %v406, 4294901760
        %1664 = vmatpush1.msra.mxu0 %v1663
        %1665 = vmatprep.subr.mxu0 0.0
        %v1666 = vand.u32 %v407, 4294901760
        %1667 = vmatpush1.msra.mxu0 %v1666
        %1668 = vmatprep.subr.mxu0 0.0
        %v1669 = vand.u32 %v408, 4294901760
        %1670 = vmatpush1.msra.mxu0 %v1669
        %1671 = vmatprep.subr.mxu0 0.0
        %v1672 = vand.u32 %v409, 4294901760
        %1673 = vmatpush1.msra.mxu0 %v1672
        %1674 = vmatprep.subr.mxu0 0.0
        %v1675 = vand.u32 %v410, 4294901760
        %1676 = vmatpush1.msra.mxu0 %v1675
        %1677 = vmatprep.subr.mxu0 0.0
        %v1678 = vand.u32 %v411, 4294901760
        %1679 = vmatpush1.msra.mxu0 %v1678
        %1680 = vmatprep.subr.mxu0 0.0
        %v1681 = vand.u32 %v412, 4294901760
        %1682 = vmatpush1.msra.mxu0 %v1681
        %1683 = vmatprep.subr.mxu0 0.0
        %v1684 = vand.u32 %v413, 4294901760
        %1685 = vmatpush1.msra.mxu0 %v1684
        %1686 = vmatprep.subr.mxu0 0.0
        %v1687 = vand.u32 %v414, 4294901760
        %1688 = vmatpush1.msra.mxu0 %v1687
        %1689 = vmatprep.subr.mxu0 0.0
        %v1690 = vand.u32 %v415, 4294901760
        %1691 = vmatpush1.msra.mxu0 %v1690
        %1692 = vmatprep.subr.mxu0 0.0
        %v1693 = vand.u32 %v416, 4294901760
        %1694 = vmatpush1.msra.mxu0 %v1693
        %1695 = vmatprep.subr.mxu0 0.0
        %v1696 = vand.u32 %v417, 4294901760
        %1697 = vmatpush1.msra.mxu0 %v1696
        %1698 = vmatprep.subr.mxu0 0.0
        %v1699 = vand.u32 %v418, 4294901760
        %1700 = vmatpush1.msra.mxu0 %v1699
        %1701 = vmatprep.subr.mxu0 0.0
        %v1702 = vand.u32 %v419, 4294901760
        %1703 = vmatpush1.msra.mxu0 %v1702
        %1704 = vmatprep.subr.mxu0 0.0
        %v1705 = vand.u32 %v420, 4294901760
        %1706 = vmatpush1.msra.mxu0 %v1705
        %1707 = vmatprep.subr.mxu0 0.0
        %1708 = vmatpush1.msra.mxu0 0.0
        %1709 = vmatprep.subr.mxu0 0.0
        %1710 = vmatpush1.msra.mxu0 0.0
        %1711 = vmatprep.subr.mxu0 0.0
        %1712 = vmatpush1.msra.mxu0 0.0
        %1713 = vmatprep.subr.mxu0 0.0
        %1714 = vmatpush1.msra.mxu0 0.0
        %1715 = vmatprep.subr.mxu0 0.0
        %1716 = vmatpush1.msra.mxu0 0.0
        %1717 = vmatprep.subr.mxu0 0.0
        %1718 = vmatpush1.msra.mxu0 0.0
        %1719 = vmatprep.subr.mxu0 0.0
        %1720 = vmatpush1.msra.mxu0 0.0
        %1721 = vmatprep.subr.mxu0 0.0
        %1722 = vmatpush1.msra.mxu0 0.0
        %1723 = vmatprep.subr.mxu0 0.0
        %1724 = vmatpush1.msra.mxu0 0.0
        %1725 = vmatprep.subr.mxu0 0.0
        %1726 = vmatpush1.msra.mxu0 0.0
        %1727 = vmatprep.subr.mxu0 0.0
        %1728 = vmatpush1.msra.mxu0 0.0
        %1729 = vmatprep.subr.mxu0 0.0
        %1730 = vmatpush1.msra.mxu0 0.0
        %1731 = vmatprep.subr.mxu0 0.0
        %1732 = vmatpush1.msra.mxu0 0.0
        %1733 = vmatprep.subr.mxu0 0.0
        %1734 = vmatpush1.msra.mxu0 0.0
        %1735 = vmatprep.subr.mxu0 0.0
        %1736 = vmatpush1.msra.mxu0 0.0
        %1737 = vmatprep.subr.mxu0 0.0
        %1738 = vmatpush1.msra.mxu0 0.0
        %1739 = vmatprep.mubr.f32.mxu0 0.0
        %v1740 = vand.u32 %v1056, 4294901760
        %1741 = vmatmul.mubr.f32.gmra.mrb[0].mxu0 %v1740
        %v1742 = vpop.f32.mrb[0].mxu0
        %v1743 = vadd.f32 %v1650, %v1742
        %v1744 = vpop.f32.mrb[0].mxu0
        %1745 = vmatprep.mubr.f32.mxu0 0.0
        %v1746 = vand.u32 %v1057, 4294901760
        %1747 = vmatmul.mubr.f32.gmra.mrb[0].mxu0 %v1746
        %v1748 = vpop.f32.mrb[0].mxu0
        %v1749 = vadd.f32 %v1656, %v1748
        %v1750 = vpop.f32.mrb[0].mxu0
        %1751 = vdwg.mxu0
        %v1752 = vmul.f32 %v1056, %v1056
        %v1753 = vmul.f32 %v1057, %v1057
        %1754 = vmatprep.subr.mxu0 0.0
        %v1755 = vand.u32 %v405, 4294901760
        %1756 = vmatpush1.msra.mxu0 %v1755
        %1757 = vmatprep.subr.mxu0 0.0
        %v1758 = vand.u32 %v406, 4294901760
        %1759 = vmatpush1.msra.mxu0 %v1758
        %1760 = vmatprep.subr.mxu0 0.0
        %v1761 = vand.u32 %v407, 4294901760
        %1762 = vmatpush1.msra.mxu0 %v1761
        %1763 = vmatprep.subr.mxu0 0.0
        %v1764 = vand.u32 %v408, 4294901760
        %1765 = vmatpush1.msra.mxu0 %v1764
        %1766 = vmatprep.subr.mxu0 0.0
        %v1767 = vand.u32 %v409, 4294901760
        %1768 = vmatpush1.msra.mxu0 %v1767
        %1769 = vmatprep.subr.mxu0 0.0
        %v1770 = vand.u32 %v410, 4294901760
        %1771 = vmatpush1.msra.mxu0 %v1770
        %1772 = vmatprep.subr.mxu0 0.0
        %v1773 = vand.u32 %v411, 4294901760
        %1774 = vmatpush1.msra.mxu0 %v1773
        %1775 = vmatprep.subr.mxu0 0.0
        %v1776 = vand.u32 %v412, 4294901760
        %1777 = vmatpush1.msra.mxu0 %v1776
        %1778 = vmatprep.subr.mxu0 0.0
        %v1779 = vand.u32 %v413, 4294901760
        %1780 = vmatpush1.msra.mxu0 %v1779
        %1781 = vmatprep.subr.mxu0 0.0
        %v1782 = vand.u32 %v414, 4294901760
        %1783 = vmatpush1.msra.mxu0 %v1782
        %1784 = vmatprep.subr.mxu0 0.0
        %v1785 = vand.u32 %v415, 4294901760
        %1786 = vmatpush1.msra.mxu0 %v1785
        %1787 = vmatprep.subr.mxu0 0.0
        %v1788 = vand.u32 %v416, 4294901760
        %1789 = vmatpush1.msra.mxu0 %v1788
        %1790 = vmatprep.subr.mxu0 0.0
        %v1791 = vand.u32 %v417, 4294901760
        %1792 = vmatpush1.msra.mxu0 %v1791
        %1793 = vmatprep.subr.mxu0 0.0
        %v1794 = vand.u32 %v418, 4294901760
        %1795 = vmatpush1.msra.mxu0 %v1794
        %1796 = vmatprep.subr.mxu0 0.0
        %v1797 = vand.u32 %v419, 4294901760
        %1798 = vmatpush1.msra.mxu0 %v1797
        %1799 = vmatprep.subr.mxu0 0.0
        %v1800 = vand.u32 %v420, 4294901760
        %1801 = vmatpush1.msra.mxu0 %v1800
        %1802 = vmatprep.subr.mxu0 0.0
        %1803 = vmatpush1.msra.mxu0 0.0
        %1804 = vmatprep.subr.mxu0 0.0
        %1805 = vmatpush1.msra.mxu0 0.0
        %1806 = vmatprep.subr.mxu0 0.0
        %1807 = vmatpush1.msra.mxu0 0.0
        %1808 = vmatprep.subr.mxu0 0.0
        %1809 = vmatpush1.msra.mxu0 0.0
        %1810 = vmatprep.subr.mxu0 0.0
        %1811 = vmatpush1.msra.mxu0 0.0
        %1812 = vmatprep.subr.mxu0 0.0
        %1813 = vmatpush1.msra.mxu0 0.0
        %1814 = vmatprep.subr.mxu0 0.0
        %1815 = vmatpush1.msra.mxu0 0.0
        %1816 = vmatprep.subr.mxu0 0.0
        %1817 = vmatpush1.msra.mxu0 0.0
        %1818 = vmatprep.subr.mxu0 0.0
        %1819 = vmatpush1.msra.mxu0 0.0
        %1820 = vmatprep.subr.mxu0 0.0
        %1821 = vmatpush1.msra.mxu0 0.0
        %1822 = vmatprep.subr.mxu0 0.0
        %1823 = vmatpush1.msra.mxu0 0.0
        %1824 = vmatprep.subr.mxu0 0.0
        %1825 = vmatpush1.msra.mxu0 0.0
        %1826 = vmatprep.subr.mxu0 0.0
        %1827 = vmatpush1.msra.mxu0 0.0
        %1828 = vmatprep.subr.mxu0 0.0
        %1829 = vmatpush1.msra.mxu0 0.0
        %1830 = vmatprep.subr.mxu0 0.0
        %1831 = vmatpush1.msra.mxu0 0.0
        %1832 = vmatprep.subr.mxu0 0.0
        %1833 = vmatpush1.msra.mxu0 0.0
        %1834 = vmatprep.mubr.f32.mxu0 0.0
        %v1835 = vand.u32 %v1752, 4294901760
        %v1836 = vsub.f32 %v1752, %v1835
        %v1837 = vand.u32 %v1836, 4294901760
        %v1838 = vsub.f32 %v1836, %v1837
        %v1839 = vand.u32 %v1838, 4294901760
        %1840 = vmatmul.mubr.f32.gmra.mrb[0].mxu0 %v1839
        %v1841 = vpop.f32.mrb[0].mxu0
        %v1842 = vadd.f32 0.0, %v1841
        %v1843 = vpop.f32.mrb[0].mxu0
        %1844 = vmatprep.mubr.f32.mxu0 0.0
        %v1845 = vand.u32 %v1753, 4294901760
        %v1846 = vsub.f32 %v1753, %v1845
        %v1847 = vand.u32 %v1846, 4294901760
        %v1848 = vsub.f32 %v1846, %v1847
        %v1849 = vand.u32 %v1848, 4294901760
        %1850 = vmatmul.mubr.f32.gmra.mrb[0].mxu0 %v1849
        %v1851 = vpop.f32.mrb[0].mxu0
        %v1852 = vadd.f32 0.0, %v1851
        %v1853 = vpop.f32.mrb[0].mxu0
        %1854 = vdwg.mxu0
        %1855 = vmatprep.subr.mxu0 0.0
        %v1856 = vand.u32 %v405, 4294901760
        %v1857 = vsub.f32 %v405, %v1856
        %v1858 = vand.u32 %v1857, 4294901760
        %v1859 = vsub.f32 %v1857, %v1858
        %v1860 = vand.u32 %v1859, 4294901760
        %1861 = vmatpush1.msra.mxu0 %v1860
        %1862 = vmatprep.subr.mxu0 0.0
        %v1863 = vand.u32 %v406, 4294901760
        %v1864 = vsub.f32 %v406, %v1863
        %v1865 = vand.u32 %v1864, 4294901760
        %v1866 = vsub.f32 %v1864, %v1865
        %v1867 = vand.u32 %v1866, 4294901760
        %1868 = vmatpush1.msra.mxu0 %v1867
        %1869 = vmatprep.subr.mxu0 0.0
        %v1870 = vand.u32 %v407, 4294901760
        %v1871 = vsub.f32 %v407, %v1870
        %v1872 = vand.u32 %v1871, 4294901760
        %v1873 = vsub.f32 %v1871, %v1872
        %v1874 = vand.u32 %v1873, 4294901760
        %1875 = vmatpush1.msra.mxu0 %v1874
        %1876 = vmatprep.subr.mxu0 0.0
        %v1877 = vand.u32 %v408, 4294901760
        %v1878 = vsub.f32 %v408, %v1877
        %v1879 = vand.u32 %v1878, 4294901760
        %v1880 = vsub.f32 %v1878, %v1879
        %v1881 = vand.u32 %v1880, 4294901760
        %1882 = vmatpush1.msra.mxu0 %v1881
        %1883 = vmatprep.subr.mxu0 0.0
        %v1884 = vand.u32 %v409, 4294901760
        %v1885 = vsub.f32 %v409, %v1884
        %v1886 = vand.u32 %v1885, 4294901760
        %v1887 = vsub.f32 %v1885, %v1886
        %v1888 = vand.u32 %v1887, 4294901760
        %1889 = vmatpush1.msra.mxu0 %v1888
        %1890 = vmatprep.subr.mxu0 0.0
        %v1891 = vand.u32 %v410, 4294901760
        %v1892 = vsub.f32 %v410, %v1891
        %v1893 = vand.u32 %v1892, 4294901760
        %v1894 = vsub.f32 %v1892, %v1893
        %v1895 = vand.u32 %v1894, 4294901760
        %1896 = vmatpush1.msra.mxu0 %v1895
        %1897 = vmatprep.subr.mxu0 0.0
        %v1898 = vand.u32 %v411, 4294901760
        %v1899 = vsub.f32 %v411, %v1898
        %v1900 = vand.u32 %v1899, 4294901760
        %v1901 = vsub.f32 %v1899, %v1900
        %v1902 = vand.u32 %v1901, 4294901760
        %1903 = vmatpush1.msra.mxu0 %v1902
        %1904 = vmatprep.subr.mxu0 0.0
        %v1905 = vand.u32 %v412, 4294901760
        %v1906 = vsub.f32 %v412, %v1905
        %v1907 = vand.u32 %v1906, 4294901760
        %v1908 = vsub.f32 %v1906, %v1907
        %v1909 = vand.u32 %v1908, 4294901760
        %1910 = vmatpush1.msra.mxu0 %v1909
        %1911 = vmatprep.subr.mxu0 0.0
        %v1912 = vand.u32 %v413, 4294901760
        %v1913 = vsub.f32 %v413, %v1912
        %v1914 = vand.u32 %v1913, 4294901760
        %v1915 = vsub.f32 %v1913, %v1914
        %v1916 = vand.u32 %v1915, 4294901760
        %1917 = vmatpush1.msra.mxu0 %v1916
        %1918 = vmatprep.subr.mxu0 0.0
        %v1919 = vand.u32 %v414, 4294901760
        %v1920 = vsub.f32 %v414, %v1919
        %v1921 = vand.u32 %v1920, 4294901760
        %v1922 = vsub.f32 %v1920, %v1921
        %v1923 = vand.u32 %v1922, 4294901760
        %1924 = vmatpush1.msra.mxu0 %v1923
        %1925 = vmatprep.subr.mxu0 0.0
        %v1926 = vand.u32 %v415, 4294901760
        %v1927 = vsub.f32 %v415, %v1926
        %v1928 = vand.u32 %v1927, 4294901760
        %v1929 = vsub.f32 %v1927, %v1928
        %v1930 = vand.u32 %v1929, 4294901760
        %1931 = vmatpush1.msra.mxu0 %v1930
        %1932 = vmatprep.subr.mxu0 0.0
        %v1933 = vand.u32 %v416, 4294901760
        %v1934 = vsub.f32 %v416, %v1933
        %v1935 = vand.u32 %v1934, 4294901760
        %v1936 = vsub.f32 %v1934, %v1935
        %v1937 = vand.u32 %v1936, 4294901760
        %1938 = vmatpush1.msra.mxu0 %v1937
        %1939 = vmatprep.subr.mxu0 0.0
        %v1940 = vand.u32 %v417, 4294901760
        %v1941 = vsub.f32 %v417, %v1940
        %v1942 = vand.u32 %v1941, 4294901760
        %v1943 = vsub.f32 %v1941, %v1942
        %v1944 = vand.u32 %v1943, 4294901760
        %1945 = vmatpush1.msra.mxu0 %v1944
        %1946 = vmatprep.subr.mxu0 0.0
        %v1947 = vand.u32 %v418, 4294901760
        %v1948 = vsub.f32 %v418, %v1947
        %v1949 = vand.u32 %v1948, 4294901760
        %v1950 = vsub.f32 %v1948, %v1949
        %v1951 = vand.u32 %v1950, 4294901760
        %1952 = vmatpush1.msra.mxu0 %v1951
        %1953 = vmatprep.subr.mxu0 0.0
        %v1954 = vand.u32 %v419, 4294901760
        %v1955 = vsub.f32 %v419, %v1954
        %v1956 = vand.u32 %v1955, 4294901760
        %v1957 = vsub.f32 %v1955, %v1956
        %v1958 = vand.u32 %v1957, 4294901760
        %1959 = vmatpush1.msra.mxu0 %v1958
        %1960 = vmatprep.subr.mxu0 0.0
        %v1961 = vand.u32 %v420, 4294901760
        %v1962 = vsub.f32 %v420, %v1961
        %v1963 = vand.u32 %v1962, 4294901760
        %v1964 = vsub.f32 %v1962, %v1963
        %v1965 = vand.u32 %v1964, 4294901760
        %1966 = vmatpush1.msra.mxu0 %v1965
        %1967 = vmatprep.subr.mxu0 0.0
        %1968 = vmatpush1.msra.mxu0 0.0
        %1969 = vmatprep.subr.mxu0 0.0
        %1970 = vmatpush1.msra.mxu0 0.0
        %1971 = vmatprep.subr.mxu0 0.0
        %1972 = vmatpush1.msra.mxu0 0.0
        %1973 = vmatprep.subr.mxu0 0.0
        %1974 = vmatpush1.msra.mxu0 0.0
        %1975 = vmatprep.subr.mxu0 0.0
        %1976 = vmatpush1.msra.mxu0 0.0
        %1977 = vmatprep.subr.mxu0 0.0
        %1978 = vmatpush1.msra.mxu0 0.0
        %1979 = vmatprep.subr.mxu0 0.0
        %1980 = vmatpush1.msra.mxu0 0.0
        %1981 = vmatprep.subr.mxu0 0.0
        %1982 = vmatpush1.msra.mxu0 0.0
        %1983 = vmatprep.subr.mxu0 0.0
        %1984 = vmatpush1.msra.mxu0 0.0
        %1985 = vmatprep.subr.mxu0 0.0
        %1986 = vmatpush1.msra.mxu0 0.0
        %1987 = vmatprep.subr.mxu0 0.0
        %1988 = vmatpush1.msra.mxu0 0.0
        %1989 = vmatprep.subr.mxu0 0.0
        %1990 = vmatpush1.msra.mxu0 0.0
        %1991 = vmatprep.subr.mxu0 0.0
        %1992 = vmatpush1.msra.mxu0 0.0
        %1993 = vmatprep.subr.mxu0 0.0
        %1994 = vmatpush1.msra.mxu0 0.0
        %1995 = vmatprep.subr.mxu0 0.0
        %1996 = vmatpush1.msra.mxu0 0.0
        %1997 = vmatprep.subr.mxu0 0.0
        %1998 = vmatpush1.msra.mxu0 0.0
        %1999 = vmatprep.mubr.f32.mxu0 0.0
        %v2000 = vand.u32 %v1752, 4294901760
        %2001 = vmatmul.mubr.f32.gmra.mrb[0].mxu0 %v2000
        %v2002 = vpop.f32.mrb[0].mxu0
        %v2003 = vadd.f32 %v1842, %v2002
        %v2004 = vpop.f32.mrb[0].mxu0
        %2005 = vmatprep.mubr.f32.mxu0 0.0
        %v2006 = vand.u32 %v1753, 4294901760
        %2007 = vmatmul.mubr.f32.gmra.mrb[0].mxu0 %v2006
        %v2008 = vpop.f32.mrb[0].mxu0
        %v2009 = vadd.f32 %v1852, %v2008
        %v2010 = vpop.f32.mrb[0].mxu0
        %2011 = vdwg.mxu0
        %2012 = vmatprep.subr.mxu0 0.0
        %v2013 = vand.u32 %v405, 4294901760
        %v2014 = vsub.f32 %v405, %v2013
        %2015 = vmatpush1.msra.mxu0 %v2014
        %2016 = vmatprep.subr.mxu0 0.0
        %v2017 = vand.u32 %v406, 4294901760
        %v2018 = vsub.f32 %v406, %v2017
        %2019 = vmatpush1.msra.mxu0 %v2018
        %2020 = vmatprep.subr.mxu0 0.0
        %v2021 = vand.u32 %v407, 4294901760
        %v2022 = vsub.f32 %v407, %v2021
        %2023 = vmatpush1.msra.mxu0 %v2022
        %2024 = vmatprep.subr.mxu0 0.0
        %v2025 = vand.u32 %v408, 4294901760
        %v2026 = vsub.f32 %v408, %v2025
        %2027 = vmatpush1.msra.mxu0 %v2026
        %2028 = vmatprep.subr.mxu0 0.0
        %v2029 = vand.u32 %v409, 4294901760
        %v2030 = vsub.f32 %v409, %v2029
        %2031 = vmatpush1.msra.mxu0 %v2030
        %2032 = vmatprep.subr.mxu0 0.0
        %v2033 = vand.u32 %v410, 4294901760
        %v2034 = vsub.f32 %v410, %v2033
        %2035 = vmatpush1.msra.mxu0 %v2034
        %2036 = vmatprep.subr.mxu0 0.0
        %v2037 = vand.u32 %v411, 4294901760
        %v2038 = vsub.f32 %v411, %v2037
        %2039 = vmatpush1.msra.mxu0 %v2038
        %2040 = vmatprep.subr.mxu0 0.0
        %v2041 = vand.u32 %v412, 4294901760
        %v2042 = vsub.f32 %v412, %v2041
        %2043 = vmatpush1.msra.mxu0 %v2042
        %2044 = vmatprep.subr.mxu0 0.0
        %v2045 = vand.u32 %v413, 4294901760
        %v2046 = vsub.f32 %v413, %v2045
        %2047 = vmatpush1.msra.mxu0 %v2046
        %2048 = vmatprep.subr.mxu0 0.0
        %v2049 = vand.u32 %v414, 4294901760
        %v2050 = vsub.f32 %v414, %v2049
        %2051 = vmatpush1.msra.mxu0 %v2050
        %2052 = vmatprep.subr.mxu0 0.0
        %v2053 = vand.u32 %v415, 4294901760
        %v2054 = vsub.f32 %v415, %v2053
        %2055 = vmatpush1.msra.mxu0 %v2054
        %2056 = vmatprep.subr.mxu0 0.0
        %v2057 = vand.u32 %v416, 4294901760
        %v2058 = vsub.f32 %v416, %v2057
        %2059 = vmatpush1.msra.mxu0 %v2058
        %2060 = vmatprep.subr.mxu0 0.0
        %v2061 = vand.u32 %v417, 4294901760
        %v2062 = vsub.f32 %v417, %v2061
        %2063 = vmatpush1.msra.mxu0 %v2062
        %2064 = vmatprep.subr.mxu0 0.0
        %v2065 = vand.u32 %v418, 4294901760
        %v2066 = vsub.f32 %v418, %v2065
        %2067 = vmatpush1.msra.mxu0 %v2066
        %2068 = vmatprep.subr.mxu0 0.0
        %v2069 = vand.u32 %v419, 4294901760
        %v2070 = vsub.f32 %v419, %v2069
        %2071 = vmatpush1.msra.mxu0 %v2070
        %2072 = vmatprep.subr.mxu0 0.0
        %v2073 = vand.u32 %v420, 4294901760
        %v2074 = vsub.f32 %v420, %v2073
        %2075 = vmatpush1.msra.mxu0 %v2074
        %2076 = vmatprep.subr.mxu0 0.0
        %2077 = vmatpush1.msra.mxu0 0.0
        %2078 = vmatprep.subr.mxu0 0.0
        %2079 = vmatpush1.msra.mxu0 0.0
        %2080 = vmatprep.subr.mxu0 0.0
        %2081 = vmatpush1.msra.mxu0 0.0
        %2082 = vmatprep.subr.mxu0 0.0
        %2083 = vmatpush1.msra.mxu0 0.0
        %2084 = vmatprep.subr.mxu0 0.0
        %2085 = vmatpush1.msra.mxu0 0.0
        %2086 = vmatprep.subr.mxu0 0.0
        %2087 = vmatpush1.msra.mxu0 0.0
        %2088 = vmatprep.subr.mxu0 0.0
        %2089 = vmatpush1.msra.mxu0 0.0
        %2090 = vmatprep.subr.mxu0 0.0
        %2091 = vmatpush1.msra.mxu0 0.0
        %2092 = vmatprep.subr.mxu0 0.0
        %2093 = vmatpush1.msra.mxu0 0.0
        %2094 = vmatprep.subr.mxu0 0.0
        %2095 = vmatpush1.msra.mxu0 0.0
        %2096 = vmatprep.subr.mxu0 0.0
        %2097 = vmatpush1.msra.mxu0 0.0
        %2098 = vmatprep.subr.mxu0 0.0
        %2099 = vmatpush1.msra.mxu0 0.0
        %2100 = vmatprep.subr.mxu0 0.0
        %2101 = vmatpush1.msra.mxu0 0.0
        %2102 = vmatprep.subr.mxu0 0.0
        %2103 = vmatpush1.msra.mxu0 0.0
        %2104 = vmatprep.subr.mxu0 0.0
        %2105 = vmatpush1.msra.mxu0 0.0
        %2106 = vmatprep.subr.mxu0 0.0
        %2107 = vmatpush1.msra.mxu0 0.0
        %2108 = vmatprep.mubr.f32.mxu0 0.0
        %v2109 = vand.u32 %v1752, 4294901760
        %v2110 = vsub.f32 %v1752, %v2109
        %2111 = vmatmul.mubr.f32.gmra.mrb[0].mxu0 %v2110
        %v2112 = vpop.f32.mrb[0].mxu0
        %v2113 = vadd.f32 %v2003, %v2112
        %v2114 = vpop.f32.mrb[0].mxu0
        %2115 = vmatprep.mubr.f32.mxu0 0.0
        %v2116 = vand.u32 %v1753, 4294901760
        %v2117 = vsub.f32 %v1753, %v2116
        %2118 = vmatmul.mubr.f32.gmra.mrb[0].mxu0 %v2117
        %v2119 = vpop.f32.mrb[0].mxu0
        %v2120 = vadd.f32 %v2009, %v2119
        %v2121 = vpop.f32.mrb[0].mxu0
        %2122 = vdwg.mxu0
        %2123 = vmatprep.subr.mxu0 0.0
        %v2124 = vand.u32 %v405, 4294901760
        %2125 = vmatpush1.msra.mxu0 %v2124
        %2126 = vmatprep.subr.mxu0 0.0
        %v2127 = vand.u32 %v406, 4294901760
        %2128 = vmatpush1.msra.mxu0 %v2127
        %2129 = vmatprep.subr.mxu0 0.0
        %v2130 = vand.u32 %v407, 4294901760
        %2131 = vmatpush1.msra.mxu0 %v2130
        %2132 = vmatprep.subr.mxu0 0.0
        %v2133 = vand.u32 %v408, 4294901760
        %2134 = vmatpush1.msra.mxu0 %v2133
        %2135 = vmatprep.subr.mxu0 0.0
        %v2136 = vand.u32 %v409, 4294901760
        %2137 = vmatpush1.msra.mxu0 %v2136
        %2138 = vmatprep.subr.mxu0 0.0
        %v2139 = vand.u32 %v410, 4294901760
        %2140 = vmatpush1.msra.mxu0 %v2139
        %2141 = vmatprep.subr.mxu0 0.0
        %v2142 = vand.u32 %v411, 4294901760
        %2143 = vmatpush1.msra.mxu0 %v2142
        %2144 = vmatprep.subr.mxu0 0.0
        %v2145 = vand.u32 %v412, 4294901760
        %2146 = vmatpush1.msra.mxu0 %v2145
        %2147 = vmatprep.subr.mxu0 0.0
        %v2148 = vand.u32 %v413, 4294901760
        %2149 = vmatpush1.msra.mxu0 %v2148
        %2150 = vmatprep.subr.mxu0 0.0
        %v2151 = vand.u32 %v414, 4294901760
        %2152 = vmatpush1.msra.mxu0 %v2151
        %2153 = vmatprep.subr.mxu0 0.0
        %v2154 = vand.u32 %v415, 4294901760
        %2155 = vmatpush1.msra.mxu0 %v2154
        %2156 = vmatprep.subr.mxu0 0.0
        %v2157 = vand.u32 %v416, 4294901760
        %2158 = vmatpush1.msra.mxu0 %v2157
        %2159 = vmatprep.subr.mxu0 0.0
        %v2160 = vand.u32 %v417, 4294901760
        %2161 = vmatpush1.msra.mxu0 %v2160
        %2162 = vmatprep.subr.mxu0 0.0
        %v2163 = vand.u32 %v418, 4294901760
        %2164 = vmatpush1.msra.mxu0 %v2163
        %2165 = vmatprep.subr.mxu0 0.0
        %v2166 = vand.u32 %v419, 4294901760
        %2167 = vmatpush1.msra.mxu0 %v2166
        %2168 = vmatprep.subr.mxu0 0.0
        %v2169 = vand.u32 %v420, 4294901760
        %2170 = vmatpush1.msra.mxu0 %v2169
        %2171 = vmatprep.subr.mxu0 0.0
        %2172 = vmatpush1.msra.mxu0 0.0
        %2173 = vmatprep.subr.mxu0 0.0
        %2174 = vmatpush1.msra.mxu0 0.0
        %2175 = vmatprep.subr.mxu0 0.0
        %2176 = vmatpush1.msra.mxu0 0.0
        %2177 = vmatprep.subr.mxu0 0.0
        %2178 = vmatpush1.msra.mxu0 0.0
        %2179 = vmatprep.subr.mxu0 0.0
        %2180 = vmatpush1.msra.mxu0 0.0
        %2181 = vmatprep.subr.mxu0 0.0
        %2182 = vmatpush1.msra.mxu0 0.0
        %2183 = vmatprep.subr.mxu0 0.0
        %2184 = vmatpush1.msra.mxu0 0.0
        %2185 = vmatprep.subr.mxu0 0.0
        %2186 = vmatpush1.msra.mxu0 0.0
        %2187 = vmatprep.subr.mxu0 0.0
        %2188 = vmatpush1.msra.mxu0 0.0
        %2189 = vmatprep.subr.mxu0 0.0
        %2190 = vmatpush1.msra.mxu0 0.0
        %2191 = vmatprep.subr.mxu0 0.0
        %2192 = vmatpush1.msra.mxu0 0.0
        %2193 = vmatprep.subr.mxu0 0.0
        %2194 = vmatpush1.msra.mxu0 0.0
        %2195 = vmatprep.subr.mxu0 0.0
        %2196 = vmatpush1.msra.mxu0 0.0
        %2197 = vmatprep.subr.mxu0 0.0
        %2198 = vmatpush1.msra.mxu0 0.0
        %2199 = vmatprep.subr.mxu0 0.0
        %2200 = vmatpush1.msra.mxu0 0.0
        %2201 = vmatprep.subr.mxu0 0.0
        %2202 = vmatpush1.msra.mxu0 0.0
        %2203 = vmatprep.mubr.f32.mxu0 0.0
        %v2204 = vand.u32 %v1752, 4294901760
        %v2205 = vsub.f32 %v1752, %v2204
        %v2206 = vand.u32 %v2205, 4294901760
        %2207 = vmatmul.mubr.f32.gmra.mrb[0].mxu0 %v2206
        %v2208 = vpop.f32.mrb[0].mxu0
        %v2209 = vadd.f32 %v2113, %v2208
        %v2210 = vpop.f32.mrb[0].mxu0
        %2211 = vmatprep.mubr.f32.mxu0 0.0
        %v2212 = vand.u32 %v1753, 4294901760
        %v2213 = vsub.f32 %v1753, %v2212
        %v2214 = vand.u32 %v2213, 4294901760
        %2215 = vmatmul.mubr.f32.gmra.mrb[0].mxu0 %v2214
        %v2216 = vpop.f32.mrb[0].mxu0
        %v2217 = vadd.f32 %v2120, %v2216
        %v2218 = vpop.f32.mrb[0].mxu0
        %2219 = vdwg.mxu0
        %2220 = vmatprep.subr.mxu0 0.0
        %v2221 = vand.u32 %v405, 4294901760
        %v2222 = vsub.f32 %v405, %v2221
        %v2223 = vand.u32 %v2222, 4294901760
        %2224 = vmatpush1.msra.mxu0 %v2223
        %2225 = vmatprep.subr.mxu0 0.0
        %v2226 = vand.u32 %v406, 4294901760
        %v2227 = vsub.f32 %v406, %v2226
        %v2228 = vand.u32 %v2227, 4294901760
        %2229 = vmatpush1.msra.mxu0 %v2228
        %2230 = vmatprep.subr.mxu0 0.0
        %v2231 = vand.u32 %v407, 4294901760
        %v2232 = vsub.f32 %v407, %v2231
        %v2233 = vand.u32 %v2232, 4294901760
        %2234 = vmatpush1.msra.mxu0 %v2233
        %2235 = vmatprep.subr.mxu0 0.0
        %v2236 = vand.u32 %v408, 4294901760
        %v2237 = vsub.f32 %v408, %v2236
        %v2238 = vand.u32 %v2237, 4294901760
        %2239 = vmatpush1.msra.mxu0 %v2238
        %2240 = vmatprep.subr.mxu0 0.0
        %v2241 = vand.u32 %v409, 4294901760
        %v2242 = vsub.f32 %v409, %v2241
        %v2243 = vand.u32 %v2242, 4294901760
        %2244 = vmatpush1.msra.mxu0 %v2243
        %2245 = vmatprep.subr.mxu0 0.0
        %v2246 = vand.u32 %v410, 4294901760
        %v2247 = vsub.f32 %v410, %v2246
        %v2248 = vand.u32 %v2247, 4294901760
        %2249 = vmatpush1.msra.mxu0 %v2248
        %2250 = vmatprep.subr.mxu0 0.0
        %v2251 = vand.u32 %v411, 4294901760
        %v2252 = vsub.f32 %v411, %v2251
        %v2253 = vand.u32 %v2252, 4294901760
        %2254 = vmatpush1.msra.mxu0 %v2253
        %2255 = vmatprep.subr.mxu0 0.0
        %v2256 = vand.u32 %v412, 4294901760
        %v2257 = vsub.f32 %v412, %v2256
        %v2258 = vand.u32 %v2257, 4294901760
        %2259 = vmatpush1.msra.mxu0 %v2258
        %2260 = vmatprep.subr.mxu0 0.0
        %v2261 = vand.u32 %v413, 4294901760
        %v2262 = vsub.f32 %v413, %v2261
        %v2263 = vand.u32 %v2262, 4294901760
        %2264 = vmatpush1.msra.mxu0 %v2263
        %2265 = vmatprep.subr.mxu0 0.0
        %v2266 = vand.u32 %v414, 4294901760
        %v2267 = vsub.f32 %v414, %v2266
        %v2268 = vand.u32 %v2267, 4294901760
        %2269 = vmatpush1.msra.mxu0 %v2268
        %2270 = vmatprep.subr.mxu0 0.0
        %v2271 = vand.u32 %v415, 4294901760
        %v2272 = vsub.f32 %v415, %v2271
        %v2273 = vand.u32 %v2272, 4294901760
        %2274 = vmatpush1.msra.mxu0 %v2273
        %2275 = vmatprep.subr.mxu0 0.0
        %v2276 = vand.u32 %v416, 4294901760
        %v2277 = vsub.f32 %v416, %v2276
        %v2278 = vand.u32 %v2277, 4294901760
        %2279 = vmatpush1.msra.mxu0 %v2278
        %2280 = vmatprep.subr.mxu0 0.0
        %v2281 = vand.u32 %v417, 4294901760
        %v2282 = vsub.f32 %v417, %v2281
        %v2283 = vand.u32 %v2282, 4294901760
        %2284 = vmatpush1.msra.mxu0 %v2283
        %2285 = vmatprep.subr.mxu0 0.0
        %v2286 = vand.u32 %v418, 4294901760
        %v2287 = vsub.f32 %v418, %v2286
        %v2288 = vand.u32 %v2287, 4294901760
        %2289 = vmatpush1.msra.mxu0 %v2288
        %2290 = vmatprep.subr.mxu0 0.0
        %v2291 = vand.u32 %v419, 4294901760
        %v2292 = vsub.f32 %v419, %v2291
        %v2293 = vand.u32 %v2292, 4294901760
        %2294 = vmatpush1.msra.mxu0 %v2293
        %2295 = vmatprep.subr.mxu0 0.0
        %v2296 = vand.u32 %v420, 4294901760
        %v2297 = vsub.f32 %v420, %v2296
        %v2298 = vand.u32 %v2297, 4294901760
        %2299 = vmatpush1.msra.mxu0 %v2298
        %2300 = vmatprep.subr.mxu0 0.0
        %2301 = vmatpush1.msra.mxu0 0.0
        %2302 = vmatprep.subr.mxu0 0.0
        %2303 = vmatpush1.msra.mxu0 0.0
        %2304 = vmatprep.subr.mxu0 0.0
        %2305 = vmatpush1.msra.mxu0 0.0
        %2306 = vmatprep.subr.mxu0 0.0
        %2307 = vmatpush1.msra.mxu0 0.0
        %2308 = vmatprep.subr.mxu0 0.0
        %2309 = vmatpush1.msra.mxu0 0.0
        %2310 = vmatprep.subr.mxu0 0.0
        %2311 = vmatpush1.msra.mxu0 0.0
        %2312 = vmatprep.subr.mxu0 0.0
        %2313 = vmatpush1.msra.mxu0 0.0
        %2314 = vmatprep.subr.mxu0 0.0
        %2315 = vmatpush1.msra.mxu0 0.0
        %2316 = vmatprep.subr.mxu0 0.0
        %2317 = vmatpush1.msra.mxu0 0.0
        %2318 = vmatprep.subr.mxu0 0.0
        %2319 = vmatpush1.msra.mxu0 0.0
        %2320 = vmatprep.subr.mxu0 0.0
        %2321 = vmatpush1.msra.mxu0 0.0
        %2322 = vmatprep.subr.mxu0 0.0
        %2323 = vmatpush1.msra.mxu0 0.0
        %2324 = vmatprep.subr.mxu0 0.0
        %2325 = vmatpush1.msra.mxu0 0.0
        %2326 = vmatprep.subr.mxu0 0.0
        %2327 = vmatpush1.msra.mxu0 0.0
        %2328 = vmatprep.subr.mxu0 0.0
        %2329 = vmatpush1.msra.mxu0 0.0
        %2330 = vmatprep.subr.mxu0 0.0
        %2331 = vmatpush1.msra.mxu0 0.0
        %2332 = vmatprep.mubr.f32.mxu0 0.0
        %v2333 = vand.u32 %v1752, 4294901760
        %2334 = vmatmul.mubr.f32.gmra.mrb[0].mxu0 %v2333
        %v2335 = vpop.f32.mrb[0].mxu0
        %v2336 = vadd.f32 %v2209, %v2335
        %v2337 = vpop.f32.mrb[0].mxu0
        %2338 = vmatprep.mubr.f32.mxu0 0.0
        %v2339 = vand.u32 %v1753, 4294901760
        %2340 = vmatmul.mubr.f32.gmra.mrb[0].mxu0 %v2339
        %v2341 = vpop.f32.mrb[0].mxu0
        %v2342 = vadd.f32 %v2217, %v2341
        %v2343 = vpop.f32.mrb[0].mxu0
        %2344 = vdwg.mxu0
        %2345 = vmatprep.subr.mxu0 0.0
        %v2346 = vand.u32 %v405, 4294901760
        %2347 = vmatpush1.msra.mxu0 %v2346
        %2348 = vmatprep.subr.mxu0 0.0
        %v2349 = vand.u32 %v406, 4294901760
        %2350 = vmatpush1.msra.mxu0 %v2349
        %2351 = vmatprep.subr.mxu0 0.0
        %v2352 = vand.u32 %v407, 4294901760
        %2353 = vmatpush1.msra.mxu0 %v2352
        %2354 = vmatprep.subr.mxu0 0.0
        %v2355 = vand.u32 %v408, 4294901760
        %2356 = vmatpush1.msra.mxu0 %v2355
        %2357 = vmatprep.subr.mxu0 0.0
        %v2358 = vand.u32 %v409, 4294901760
        %2359 = vmatpush1.msra.mxu0 %v2358
        %2360 = vmatprep.subr.mxu0 0.0
        %v2361 = vand.u32 %v410, 4294901760
        %2362 = vmatpush1.msra.mxu0 %v2361
        %2363 = vmatprep.subr.mxu0 0.0
        %v2364 = vand.u32 %v411, 4294901760
        %2365 = vmatpush1.msra.mxu0 %v2364
        %2366 = vmatprep.subr.mxu0 0.0
        %v2367 = vand.u32 %v412, 4294901760
        %2368 = vmatpush1.msra.mxu0 %v2367
        %2369 = vmatprep.subr.mxu0 0.0
        %v2370 = vand.u32 %v413, 4294901760
        %2371 = vmatpush1.msra.mxu0 %v2370
        %2372 = vmatprep.subr.mxu0 0.0
        %v2373 = vand.u32 %v414, 4294901760
        %2374 = vmatpush1.msra.mxu0 %v2373
        %2375 = vmatprep.subr.mxu0 0.0
        %v2376 = vand.u32 %v415, 4294901760
        %2377 = vmatpush1.msra.mxu0 %v2376
        %2378 = vmatprep.subr.mxu0 0.0
        %v2379 = vand.u32 %v416, 4294901760
        %2380 = vmatpush1.msra.mxu0 %v2379
        %2381 = vmatprep.subr.mxu0 0.0
        %v2382 = vand.u32 %v417, 4294901760
        %2383 = vmatpush1.msra.mxu0 %v2382
        %2384 = vmatprep.subr.mxu0 0.0
        %v2385 = vand.u32 %v418, 4294901760
        %2386 = vmatpush1.msra.mxu0 %v2385
        %2387 = vmatprep.subr.mxu0 0.0
        %v2388 = vand.u32 %v419, 4294901760
        %2389 = vmatpush1.msra.mxu0 %v2388
        %2390 = vmatprep.subr.mxu0 0.0
        %v2391 = vand.u32 %v420, 4294901760
        %2392 = vmatpush1.msra.mxu0 %v2391
        %2393 = vmatprep.subr.mxu0 0.0
        %2394 = vmatpush1.msra.mxu0 0.0
        %2395 = vmatprep.subr.mxu0 0.0
        %2396 = vmatpush1.msra.mxu0 0.0
        %2397 = vmatprep.subr.mxu0 0.0
        %2398 = vmatpush1.msra.mxu0 0.0
        %2399 = vmatprep.subr.mxu0 0.0
        %2400 = vmatpush1.msra.mxu0 0.0
        %2401 = vmatprep.subr.mxu0 0.0
        %2402 = vmatpush1.msra.mxu0 0.0
        %2403 = vmatprep.subr.mxu0 0.0
        %2404 = vmatpush1.msra.mxu0 0.0
        %2405 = vmatprep.subr.mxu0 0.0
        %2406 = vmatpush1.msra.mxu0 0.0
        %2407 = vmatprep.subr.mxu0 0.0
        %2408 = vmatpush1.msra.mxu0 0.0
        %2409 = vmatprep.subr.mxu0 0.0
        %2410 = vmatpush1.msra.mxu0 0.0
        %2411 = vmatprep.subr.mxu0 0.0
        %2412 = vmatpush1.msra.mxu0 0.0
        %2413 = vmatprep.subr.mxu0 0.0
        %2414 = vmatpush1.msra.mxu0 0.0
        %2415 = vmatprep.subr.mxu0 0.0
        %2416 = vmatpush1.msra.mxu0 0.0
        %2417 = vmatprep.subr.mxu0 0.0
        %2418 = vmatpush1.msra.mxu0 0.0
        %2419 = vmatprep.subr.mxu0 0.0
        %2420 = vmatpush1.msra.mxu0 0.0
        %2421 = vmatprep.subr.mxu0 0.0
        %2422 = vmatpush1.msra.mxu0 0.0
        %2423 = vmatprep.subr.mxu0 0.0
        %2424 = vmatpush1.msra.mxu0 0.0
        %2425 = vmatprep.mubr.f32.mxu0 0.0
        %v2426 = vand.u32 %v1752, 4294901760
        %2427 = vmatmul.mubr.f32.gmra.mrb[0].mxu0 %v2426
        %v2428 = vpop.f32.mrb[0].mxu0
        %v2429 = vadd.f32 %v2336, %v2428
        %v2430 = vpop.f32.mrb[0].mxu0
        %2431 = vmatprep.mubr.f32.mxu0 0.0
        %v2432 = vand.u32 %v1753, 4294901760
        %2433 = vmatmul.mubr.f32.gmra.mrb[0].mxu0 %v2432
        %v2434 = vpop.f32.mrb[0].mxu0
        %v2435 = vadd.f32 %v2342, %v2434
        %v2436 = vpop.f32.mrb[0].mxu0
        %2437 = vdwg.mxu0
        %vm2438 = vcmask 130048
        %v2440 = vsel %vm2438, %v402, 0
        %v2443 = vsel %vm2438, %v403, 0
        %2445 = vmatprep.subr.mxu0 0.0
        %v2446 = vand.u32 %v1743, 4294901760
        %2447 = vmatpush1.msra.mxu0 %v2446
        %2448 = vmatprep.subr.mxu0 0.0
        %v2449 = vand.u32 %v1749, 4294901760
        %2450 = vmatpush1.msra.mxu0 %v2449
        %2451 = vmatprep.subr.mxu0 0.0
        %2452 = vmatpush1.msra.mxu0 0.0
        %2453 = vmatprep.subr.mxu0 0.0
        %2454 = vmatpush1.msra.mxu0 0.0
        %2455 = vmatprep.subr.mxu0 0.0
        %2456 = vmatpush1.msra.mxu0 0.0
        %2457 = vmatprep.subr.mxu0 0.0
        %2458 = vmatpush1.msra.mxu0 0.0
        %2459 = vmatprep.subr.mxu0 0.0
        %2460 = vmatpush1.msra.mxu0 0.0
        %2461 = vmatprep.subr.mxu0 0.0
        %2462 = vmatpush1.msra.mxu0 0.0
        %2463 = vmatprep.subr.mxu0 0.0
        %2464 = vmatpush1.msra.mxu0 0.0
        %2465 = vmatprep.subr.mxu0 0.0
        %2466 = vmatpush1.msra.mxu0 0.0
        %2467 = vmatprep.subr.mxu0 0.0
        %2468 = vmatpush1.msra.mxu0 0.0
        %2469 = vmatprep.subr.mxu0 0.0
        %2470 = vmatpush1.msra.mxu0 0.0
        %2471 = vmatprep.subr.mxu0 0.0
        %2472 = vmatpush1.msra.mxu0 0.0
        %2473 = vmatprep.subr.mxu0 0.0
        %2474 = vmatpush1.msra.mxu0 0.0
        %2475 = vmatprep.subr.mxu0 0.0
        %2476 = vmatpush1.msra.mxu0 0.0
        %2477 = vmatprep.subr.mxu0 0.0
        %2478 = vmatpush1.msra.mxu0 0.0
        %2479 = vmatprep.subr.mxu0 0.0
        %2480 = vmatpush1.msra.mxu0 0.0
        %2481 = vmatprep.subr.mxu0 0.0
        %2482 = vmatpush1.msra.mxu0 0.0
        %2483 = vmatprep.subr.mxu0 0.0
        %2484 = vmatpush1.msra.mxu0 0.0
        %2485 = vmatprep.subr.mxu0 0.0
        %2486 = vmatpush1.msra.mxu0 0.0
        %2487 = vmatprep.subr.mxu0 0.0
        %2488 = vmatpush1.msra.mxu0 0.0
        %2489 = vmatprep.subr.mxu0 0.0
        %2490 = vmatpush1.msra.mxu0 0.0
        %2491 = vmatprep.subr.mxu0 0.0
        %2492 = vmatpush1.msra.mxu0 0.0
        %2493 = vmatprep.subr.mxu0 0.0
        %2494 = vmatpush1.msra.mxu0 0.0
        %2495 = vmatprep.subr.mxu0 0.0
        %2496 = vmatpush1.msra.mxu0 0.0
        %2497 = vmatprep.subr.mxu0 0.0
        %2498 = vmatpush1.msra.mxu0 0.0
        %2499 = vmatprep.subr.mxu0 0.0
        %2500 = vmatpush1.msra.mxu0 0.0
        %2501 = vmatprep.subr.mxu0 0.0
        %2502 = vmatpush1.msra.mxu0 0.0
        %2503 = vmatprep.subr.mxu0 0.0
        %2504 = vmatpush1.msra.mxu0 0.0
        %2505 = vmatprep.subr.mxu0 0.0
        %2506 = vmatpush1.msra.mxu0 0.0
        %2507 = vmatprep.subr.mxu0 0.0
        %2508 = vmatpush1.msra.mxu0 0.0
        %2509 = vmatprep.subr.mxu0 0.0
        %2510 = vmatpush1.msra.mxu0 0.0
        %2511 = vmatprep.mubr.f32.mxu0 0.0
        %v2512 = vand.u32 %v2440, 4294901760
        %v2513 = vsub.f32 %v2440, %v2512
        %v2514 = vand.u32 %v2513, 4294901760
        %v2515 = vsub.f32 %v2513, %v2514
        %v2516 = vand.u32 %v2515, 4294901760
        %2517 = vmatmul.mubr.f32.gmra.mrb[0].mxu0 %v2516
        %v2518 = vpop.f32.mrb[0].mxu0
        %v2519 = vadd.f32 0.0, %v2518
        %v2520 = vpop.f32.mrb[0].mxu0
        %2521 = vmatprep.mubr.f32.mxu0 0.0
        %v2522 = vand.u32 %v2443, 4294901760
        %v2523 = vsub.f32 %v2443, %v2522
        %v2524 = vand.u32 %v2523, 4294901760
        %v2525 = vsub.f32 %v2523, %v2524
        %v2526 = vand.u32 %v2525, 4294901760
        %2527 = vmatmul.mubr.f32.gmra.mrb[0].mxu0 %v2526
        %v2528 = vpop.f32.mrb[0].mxu0
        %v2529 = vadd.f32 0.0, %v2528
        %v2530 = vpop.f32.mrb[0].mxu0
        %2531 = vdwg.mxu0
        %2532 = vmatprep.subr.mxu0 0.0
        %v2533 = vand.u32 %v1743, 4294901760
        %v2534 = vsub.f32 %v1743, %v2533
        %v2535 = vand.u32 %v2534, 4294901760
        %v2536 = vsub.f32 %v2534, %v2535
        %v2537 = vand.u32 %v2536, 4294901760
        %2538 = vmatpush1.msra.mxu0 %v2537
        %2539 = vmatprep.subr.mxu0 0.0
        %v2540 = vand.u32 %v1749, 4294901760
        %v2541 = vsub.f32 %v1749, %v2540
        %v2542 = vand.u32 %v2541, 4294901760
        %v2543 = vsub.f32 %v2541, %v2542
        %v2544 = vand.u32 %v2543, 4294901760
        %2545 = vmatpush1.msra.mxu0 %v2544
        %2546 = vmatprep.subr.mxu0 0.0
        %2547 = vmatpush1.msra.mxu0 0.0
        %2548 = vmatprep.subr.mxu0 0.0
        %2549 = vmatpush1.msra.mxu0 0.0
        %2550 = vmatprep.subr.mxu0 0.0
        %2551 = vmatpush1.msra.mxu0 0.0
        %2552 = vmatprep.subr.mxu0 0.0
        %2553 = vmatpush1.msra.mxu0 0.0
        %2554 = vmatprep.subr.mxu0 0.0
        %2555 = vmatpush1.msra.mxu0 0.0
        %2556 = vmatprep.subr.mxu0 0.0
        %2557 = vmatpush1.msra.mxu0 0.0
        %2558 = vmatprep.subr.mxu0 0.0
        %2559 = vmatpush1.msra.mxu0 0.0
        %2560 = vmatprep.subr.mxu0 0.0
        %2561 = vmatpush1.msra.mxu0 0.0
        %2562 = vmatprep.subr.mxu0 0.0
        %2563 = vmatpush1.msra.mxu0 0.0
        %2564 = vmatprep.subr.mxu0 0.0
        %2565 = vmatpush1.msra.mxu0 0.0
        %2566 = vmatprep.subr.mxu0 0.0
        %2567 = vmatpush1.msra.mxu0 0.0
        %2568 = vmatprep.subr.mxu0 0.0
        %2569 = vmatpush1.msra.mxu0 0.0
        %2570 = vmatprep.subr.mxu0 0.0
        %2571 = vmatpush1.msra.mxu0 0.0
        %2572 = vmatprep.subr.mxu0 0.0
        %2573 = vmatpush1.msra.mxu0 0.0
        %2574 = vmatprep.subr.mxu0 0.0
        %2575 = vmatpush1.msra.mxu0 0.0
        %2576 = vmatprep.subr.mxu0 0.0
        %2577 = vmatpush1.msra.mxu0 0.0
        %2578 = vmatprep.subr.mxu0 0.0
        %2579 = vmatpush1.msra.mxu0 0.0
        %2580 = vmatprep.subr.mxu0 0.0
        %2581 = vmatpush1.msra.mxu0 0.0
        %2582 = vmatprep.subr.mxu0 0.0
        %2583 = vmatpush1.msra.mxu0 0.0
        %2584 = vmatprep.subr.mxu0 0.0
        %2585 = vmatpush1.msra.mxu0 0.0
        %2586 = vmatprep.subr.mxu0 0.0
        %2587 = vmatpush1.msra.mxu0 0.0
        %2588 = vmatprep.subr.mxu0 0.0
        %2589 = vmatpush1.msra.mxu0 0.0
        %2590 = vmatprep.subr.mxu0 0.0
        %2591 = vmatpush1.msra.mxu0 0.0
        %2592 = vmatprep.subr.mxu0 0.0
        %2593 = vmatpush1.msra.mxu0 0.0
        %2594 = vmatprep.subr.mxu0 0.0
        %2595 = vmatpush1.msra.mxu0 0.0
        %2596 = vmatprep.subr.mxu0 0.0
        %2597 = vmatpush1.msra.mxu0 0.0
        %2598 = vmatprep.subr.mxu0 0.0
        %2599 = vmatpush1.msra.mxu0 0.0
        %2600 = vmatprep.subr.mxu0 0.0
        %2601 = vmatpush1.msra.mxu0 0.0
        %2602 = vmatprep.subr.mxu0 0.0
        %2603 = vmatpush1.msra.mxu0 0.0
        %2604 = vmatprep.subr.mxu0 0.0
        %2605 = vmatpush1.msra.mxu0 0.0
        %2606 = vmatprep.mubr.f32.mxu0 0.0
        %v2607 = vand.u32 %v2440, 4294901760
        %2608 = vmatmul.mubr.f32.gmra.mrb[0].mxu0 %v2607
        %v2609 = vpop.f32.mrb[0].mxu0
        %v2610 = vadd.f32 %v2519, %v2609
        %v2611 = vpop.f32.mrb[0].mxu0
        %2612 = vmatprep.mubr.f32.mxu0 0.0
        %v2613 = vand.u32 %v2443, 4294901760
        %2614 = vmatmul.mubr.f32.gmra.mrb[0].mxu0 %v2613
        %v2615 = vpop.f32.mrb[0].mxu0
        %v2616 = vadd.f32 %v2529, %v2615
        %v2617 = vpop.f32.mrb[0].mxu0
        %2618 = vdwg.mxu0
        %2619 = vmatprep.subr.mxu0 0.0
        %v2620 = vand.u32 %v1743, 4294901760
        %v2621 = vsub.f32 %v1743, %v2620
        %2622 = vmatpush1.msra.mxu0 %v2621
        %2623 = vmatprep.subr.mxu0 0.0
        %v2624 = vand.u32 %v1749, 4294901760
        %v2625 = vsub.f32 %v1749, %v2624
        %2626 = vmatpush1.msra.mxu0 %v2625
        %2627 = vmatprep.subr.mxu0 0.0
        %2628 = vmatpush1.msra.mxu0 0.0
        %2629 = vmatprep.subr.mxu0 0.0
        %2630 = vmatpush1.msra.mxu0 0.0
        %2631 = vmatprep.subr.mxu0 0.0
        %2632 = vmatpush1.msra.mxu0 0.0
        %2633 = vmatprep.subr.mxu0 0.0
        %2634 = vmatpush1.msra.mxu0 0.0
        %2635 = vmatprep.subr.mxu0 0.0
        %2636 = vmatpush1.msra.mxu0 0.0
        %2637 = vmatprep.subr.mxu0 0.0
        %2638 = vmatpush1.msra.mxu0 0.0
        %2639 = vmatprep.subr.mxu0 0.0
        %2640 = vmatpush1.msra.mxu0 0.0
        %2641 = vmatprep.subr.mxu0 0.0
        %2642 = vmatpush1.msra.mxu0 0.0
        %2643 = vmatprep.subr.mxu0 0.0
        %2644 = vmatpush1.msra.mxu0 0.0
        %2645 = vmatprep.subr.mxu0 0.0
        %2646 = vmatpush1.msra.mxu0 0.0
        %2647 = vmatprep.subr.mxu0 0.0
        %2648 = vmatpush1.msra.mxu0 0.0
        %2649 = vmatprep.subr.mxu0 0.0
        %2650 = vmatpush1.msra.mxu0 0.0
        %2651 = vmatprep.subr.mxu0 0.0
        %2652 = vmatpush1.msra.mxu0 0.0
        %2653 = vmatprep.subr.mxu0 0.0
        %2654 = vmatpush1.msra.mxu0 0.0
        %2655 = vmatprep.subr.mxu0 0.0
        %2656 = vmatpush1.msra.mxu0 0.0
        %2657 = vmatprep.subr.mxu0 0.0
        %2658 = vmatpush1.msra.mxu0 0.0
        %2659 = vmatprep.subr.mxu0 0.0
        %2660 = vmatpush1.msra.mxu0 0.0
        %2661 = vmatprep.subr.mxu0 0.0
        %2662 = vmatpush1.msra.mxu0 0.0
        %2663 = vmatprep.subr.mxu0 0.0
        %2664 = vmatpush1.msra.mxu0 0.0
        %2665 = vmatprep.subr.mxu0 0.0
        %2666 = vmatpush1.msra.mxu0 0.0
        %2667 = vmatprep.subr.mxu0 0.0
        %2668 = vmatpush1.msra.mxu0 0.0
        %2669 = vmatprep.subr.mxu0 0.0
        %2670 = vmatpush1.msra.mxu0 0.0
        %2671 = vmatprep.subr.mxu0 0.0
        %2672 = vmatpush1.msra.mxu0 0.0
        %2673 = vmatprep.subr.mxu0 0.0
        %2674 = vmatpush1.msra.mxu0 0.0
        %2675 = vmatprep.subr.mxu0 0.0
        %2676 = vmatpush1.msra.mxu0 0.0
        %2677 = vmatprep.subr.mxu0 0.0
        %2678 = vmatpush1.msra.mxu0 0.0
        %2679 = vmatprep.subr.mxu0 0.0
        %2680 = vmatpush1.msra.mxu0 0.0
        %2681 = vmatprep.subr.mxu0 0.0
        %2682 = vmatpush1.msra.mxu0 0.0
        %2683 = vmatprep.subr.mxu0 0.0
        %2684 = vmatpush1.msra.mxu0 0.0
        %2685 = vmatprep.subr.mxu0 0.0
        %2686 = vmatpush1.msra.mxu0 0.0
        %2687 = vmatprep.mubr.f32.mxu0 0.0
        %v2688 = vand.u32 %v2440, 4294901760
        %v2689 = vsub.f32 %v2440, %v2688
        %2690 = vmatmul.mubr.f32.gmra.mrb[0].mxu0 %v2689
        %v2691 = vpop.f32.mrb[0].mxu0
        %v2692 = vadd.f32 %v2610, %v2691
        %v2693 = vpop.f32.mrb[0].mxu0
        %2694 = vmatprep.mubr.f32.mxu0 0.0
        %v2695 = vand.u32 %v2443, 4294901760
        %v2696 = vsub.f32 %v2443, %v2695
        %2697 = vmatmul.mubr.f32.gmra.mrb[0].mxu0 %v2696
        %v2698 = vpop.f32.mrb[0].mxu0
        %v2699 = vadd.f32 %v2616, %v2698
        %v2700 = vpop.f32.mrb[0].mxu0
        %2701 = vdwg.mxu0
        %2702 = vmatprep.subr.mxu0 0.0
        %v2703 = vand.u32 %v1743, 4294901760
        %2704 = vmatpush1.msra.mxu0 %v2703
        %2705 = vmatprep.subr.mxu0 0.0
        %v2706 = vand.u32 %v1749, 4294901760
        %2707 = vmatpush1.msra.mxu0 %v2706
        %2708 = vmatprep.subr.mxu0 0.0
        %2709 = vmatpush1.msra.mxu0 0.0
        %2710 = vmatprep.subr.mxu0 0.0
        %2711 = vmatpush1.msra.mxu0 0.0
        %2712 = vmatprep.subr.mxu0 0.0
        %2713 = vmatpush1.msra.mxu0 0.0
        %2714 = vmatprep.subr.mxu0 0.0
        %2715 = vmatpush1.msra.mxu0 0.0
        %2716 = vmatprep.subr.mxu0 0.0
        %2717 = vmatpush1.msra.mxu0 0.0
        %2718 = vmatprep.subr.mxu0 0.0
        %2719 = vmatpush1.msra.mxu0 0.0
        %2720 = vmatprep.subr.mxu0 0.0
        %2721 = vmatpush1.msra.mxu0 0.0
        %2722 = vmatprep.subr.mxu0 0.0
        %2723 = vmatpush1.msra.mxu0 0.0
        %2724 = vmatprep.subr.mxu0 0.0
        %2725 = vmatpush1.msra.mxu0 0.0
        %2726 = vmatprep.subr.mxu0 0.0
        %2727 = vmatpush1.msra.mxu0 0.0
        %2728 = vmatprep.subr.mxu0 0.0
        %2729 = vmatpush1.msra.mxu0 0.0
        %2730 = vmatprep.subr.mxu0 0.0
        %2731 = vmatpush1.msra.mxu0 0.0
        %2732 = vmatprep.subr.mxu0 0.0
        %2733 = vmatpush1.msra.mxu0 0.0
        %2734 = vmatprep.subr.mxu0 0.0
        %2735 = vmatpush1.msra.mxu0 0.0
        %2736 = vmatprep.subr.mxu0 0.0
        %2737 = vmatpush1.msra.mxu0 0.0
        %2738 = vmatprep.subr.mxu0 0.0
        %2739 = vmatpush1.msra.mxu0 0.0
        %2740 = vmatprep.subr.mxu0 0.0
        %2741 = vmatpush1.msra.mxu0 0.0
        %2742 = vmatprep.subr.mxu0 0.0
        %2743 = vmatpush1.msra.mxu0 0.0
        %2744 = vmatprep.subr.mxu0 0.0
        %2745 = vmatpush1.msra.mxu0 0.0
        %2746 = vmatprep.subr.mxu0 0.0
        %2747 = vmatpush1.msra.mxu0 0.0
        %2748 = vmatprep.subr.mxu0 0.0
        %2749 = vmatpush1.msra.mxu0 0.0
        %2750 = vmatprep.subr.mxu0 0.0
        %2751 = vmatpush1.msra.mxu0 0.0
        %2752 = vmatprep.subr.mxu0 0.0
        %2753 = vmatpush1.msra.mxu0 0.0
        %2754 = vmatprep.subr.mxu0 0.0
        %2755 = vmatpush1.msra.mxu0 0.0
        %2756 = vmatprep.subr.mxu0 0.0
        %2757 = vmatpush1.msra.mxu0 0.0
        %2758 = vmatprep.subr.mxu0 0.0
        %2759 = vmatpush1.msra.mxu0 0.0
        %2760 = vmatprep.subr.mxu0 0.0
        %2761 = vmatpush1.msra.mxu0 0.0
        %2762 = vmatprep.subr.mxu0 0.0
        %2763 = vmatpush1.msra.mxu0 0.0
        %2764 = vmatprep.subr.mxu0 0.0
        %2765 = vmatpush1.msra.mxu0 0.0
        %2766 = vmatprep.subr.mxu0 0.0
        %2767 = vmatpush1.msra.mxu0 0.0
        %2768 = vmatprep.mubr.f32.mxu0 0.0
        %v2769 = vand.u32 %v2440, 4294901760
        %v2770 = vsub.f32 %v2440, %v2769
        %v2771 = vand.u32 %v2770, 4294901760
        %2772 = vmatmul.mubr.f32.gmra.mrb[0].mxu0 %v2771
        %v2773 = vpop.f32.mrb[0].mxu0
        %v2774 = vadd.f32 %v2692, %v2773
        %v2775 = vpop.f32.mrb[0].mxu0
        %2776 = vmatprep.mubr.f32.mxu0 0.0
        %v2777 = vand.u32 %v2443, 4294901760
        %v2778 = vsub.f32 %v2443, %v2777
        %v2779 = vand.u32 %v2778, 4294901760
        %2780 = vmatmul.mubr.f32.gmra.mrb[0].mxu0 %v2779
        %v2781 = vpop.f32.mrb[0].mxu0
        %v2782 = vadd.f32 %v2699, %v2781
        %v2783 = vpop.f32.mrb[0].mxu0
        %2784 = vdwg.mxu0
        %2785 = vmatprep.subr.mxu0 0.0
        %v2786 = vand.u32 %v1743, 4294901760
        %v2787 = vsub.f32 %v1743, %v2786
        %v2788 = vand.u32 %v2787, 4294901760
        %2789 = vmatpush1.msra.mxu0 %v2788
        %2790 = vmatprep.subr.mxu0 0.0
        %v2791 = vand.u32 %v1749, 4294901760
        %v2792 = vsub.f32 %v1749, %v2791
        %v2793 = vand.u32 %v2792, 4294901760
        %2794 = vmatpush1.msra.mxu0 %v2793
        %2795 = vmatprep.subr.mxu0 0.0
        %2796 = vmatpush1.msra.mxu0 0.0
        %2797 = vmatprep.subr.mxu0 0.0
        %2798 = vmatpush1.msra.mxu0 0.0
        %2799 = vmatprep.subr.mxu0 0.0
        %2800 = vmatpush1.msra.mxu0 0.0
        %2801 = vmatprep.subr.mxu0 0.0
        %2802 = vmatpush1.msra.mxu0 0.0
        %2803 = vmatprep.subr.mxu0 0.0
        %2804 = vmatpush1.msra.mxu0 0.0
        %2805 = vmatprep.subr.mxu0 0.0
        %2806 = vmatpush1.msra.mxu0 0.0
        %2807 = vmatprep.subr.mxu0 0.0
        %2808 = vmatpush1.msra.mxu0 0.0
        %2809 = vmatprep.subr.mxu0 0.0
        %2810 = vmatpush1.msra.mxu0 0.0
        %2811 = vmatprep.subr.mxu0 0.0
        %2812 = vmatpush1.msra.mxu0 0.0
        %2813 = vmatprep.subr.mxu0 0.0
        %2814 = vmatpush1.msra.mxu0 0.0
        %2815 = vmatprep.subr.mxu0 0.0
        %2816 = vmatpush1.msra.mxu0 0.0
        %2817 = vmatprep.subr.mxu0 0.0
        %2818 = vmatpush1.msra.mxu0 0.0
        %2819 = vmatprep.subr.mxu0 0.0
        %2820 = vmatpush1.msra.mxu0 0.0
        %2821 = vmatprep.subr.mxu0 0.0
        %2822 = vmatpush1.msra.mxu0 0.0
        %2823 = vmatprep.subr.mxu0 0.0
        %2824 = vmatpush1.msra.mxu0 0.0
        %2825 = vmatprep.subr.mxu0 0.0
        %2826 = vmatpush1.msra.mxu0 0.0
        %2827 = vmatprep.subr.mxu0 0.0
        %2828 = vmatpush1.msra.mxu0 0.0
        %2829 = vmatprep.subr.mxu0 0.0
        %2830 = vmatpush1.msra.mxu0 0.0
        %2831 = vmatprep.subr.mxu0 0.0
        %2832 = vmatpush1.msra.mxu0 0.0
        %2833 = vmatprep.subr.mxu0 0.0
        %2834 = vmatpush1.msra.mxu0 0.0
        %2835 = vmatprep.subr.mxu0 0.0
        %2836 = vmatpush1.msra.mxu0 0.0
        %2837 = vmatprep.subr.mxu0 0.0
        %2838 = vmatpush1.msra.mxu0 0.0
        %2839 = vmatprep.subr.mxu0 0.0
        %2840 = vmatpush1.msra.mxu0 0.0
        %2841 = vmatprep.subr.mxu0 0.0
        %2842 = vmatpush1.msra.mxu0 0.0
        %2843 = vmatprep.subr.mxu0 0.0
        %2844 = vmatpush1.msra.mxu0 0.0
        %2845 = vmatprep.subr.mxu0 0.0
        %2846 = vmatpush1.msra.mxu0 0.0
        %2847 = vmatprep.subr.mxu0 0.0
        %2848 = vmatpush1.msra.mxu0 0.0
        %2849 = vmatprep.subr.mxu0 0.0
        %2850 = vmatpush1.msra.mxu0 0.0
        %2851 = vmatprep.subr.mxu0 0.0
        %2852 = vmatpush1.msra.mxu0 0.0
        %2853 = vmatprep.subr.mxu0 0.0
        %2854 = vmatpush1.msra.mxu0 0.0
        %2855 = vmatprep.mubr.f32.mxu0 0.0
        %v2856 = vand.u32 %v2440, 4294901760
        %2857 = vmatmul.mubr.f32.gmra.mrb[0].mxu0 %v2856
        %v2858 = vpop.f32.mrb[0].mxu0
        %v2859 = vadd.f32 %v2774, %v2858
        %v2860 = vpop.f32.mrb[0].mxu0
        %2861 = vmatprep.mubr.f32.mxu0 0.0
        %v2862 = vand.u32 %v2443, 4294901760
        %2863 = vmatmul.mubr.f32.gmra.mrb[0].mxu0 %v2862
        %v2864 = vpop.f32.mrb[0].mxu0
        %v2865 = vadd.f32 %v2782, %v2864
        %v2866 = vpop.f32.mrb[0].mxu0
        %2867 = vdwg.mxu0
        %2868 = vmatprep.subr.mxu0 0.0
        %v2869 = vand.u32 %v1743, 4294901760
        %2870 = vmatpush1.msra.mxu0 %v2869
        %2871 = vmatprep.subr.mxu0 0.0
        %v2872 = vand.u32 %v1749, 4294901760
        %2873 = vmatpush1.msra.mxu0 %v2872
        %2874 = vmatprep.subr.mxu0 0.0
        %2875 = vmatpush1.msra.mxu0 0.0
        %2876 = vmatprep.subr.mxu0 0.0
        %2877 = vmatpush1.msra.mxu0 0.0
        %2878 = vmatprep.subr.mxu0 0.0
        %2879 = vmatpush1.msra.mxu0 0.0
        %2880 = vmatprep.subr.mxu0 0.0
        %2881 = vmatpush1.msra.mxu0 0.0
        %2882 = vmatprep.subr.mxu0 0.0
        %2883 = vmatpush1.msra.mxu0 0.0
        %2884 = vmatprep.subr.mxu0 0.0
        %2885 = vmatpush1.msra.mxu0 0.0
        %2886 = vmatprep.subr.mxu0 0.0
        %2887 = vmatpush1.msra.mxu0 0.0
        %2888 = vmatprep.subr.mxu0 0.0
        %2889 = vmatpush1.msra.mxu0 0.0
        %2890 = vmatprep.subr.mxu0 0.0
        %2891 = vmatpush1.msra.mxu0 0.0
        %2892 = vmatprep.subr.mxu0 0.0
        %2893 = vmatpush1.msra.mxu0 0.0
        %2894 = vmatprep.subr.mxu0 0.0
        %2895 = vmatpush1.msra.mxu0 0.0
        %2896 = vmatprep.subr.mxu0 0.0
        %2897 = vmatpush1.msra.mxu0 0.0
        %2898 = vmatprep.subr.mxu0 0.0
        %2899 = vmatpush1.msra.mxu0 0.0
        %2900 = vmatprep.subr.mxu0 0.0
        %2901 = vmatpush1.msra.mxu0 0.0
        %2902 = vmatprep.subr.mxu0 0.0
        %2903 = vmatpush1.msra.mxu0 0.0
        %2904 = vmatprep.subr.mxu0 0.0
        %2905 = vmatpush1.msra.mxu0 0.0
        %2906 = vmatprep.subr.mxu0 0.0
        %2907 = vmatpush1.msra.mxu0 0.0
        %2908 = vmatprep.subr.mxu0 0.0
        %2909 = vmatpush1.msra.mxu0 0.0
        %2910 = vmatprep.subr.mxu0 0.0
        %2911 = vmatpush1.msra.mxu0 0.0
        %2912 = vmatprep.subr.mxu0 0.0
        %2913 = vmatpush1.msra.mxu0 0.0
        %2914 = vmatprep.subr.mxu0 0.0
        %2915 = vmatpush1.msra.mxu0 0.0
        %2916 = vmatprep.subr.mxu0 0.0
        %2917 = vmatpush1.msra.mxu0 0.0
        %2918 = vmatprep.subr.mxu0 0.0
        %2919 = vmatpush1.msra.mxu0 0.0
        %2920 = vmatprep.subr.mxu0 0.0
        %2921 = vmatpush1.msra.mxu0 0.0
        %2922 = vmatprep.subr.mxu0 0.0
        %2923 = vmatpush1.msra.mxu0 0.0
        %2924 = vmatprep.subr.mxu0 0.0
        %2925 = vmatpush1.msra.mxu0 0.0
        %2926 = vmatprep.subr.mxu0 0.0
        %2927 = vmatpush1.msra.mxu0 0.0
        %2928 = vmatprep.subr.mxu0 0.0
        %2929 = vmatpush1.msra.mxu0 0.0
        %2930 = vmatprep.subr.mxu0 0.0
        %2931 = vmatpush1.msra.mxu0 0.0
        %2932 = vmatprep.subr.mxu0 0.0
        %2933 = vmatpush1.msra.mxu0 0.0
        %2934 = vmatprep.mubr.f32.mxu0 0.0
        %v2935 = vand.u32 %v2440, 4294901760
        %2936 = vmatmul.mubr.f32.gmra.mrb[0].mxu0 %v2935
        %v2937 = vpop.f32.mrb[0].mxu0
        %v2938 = vadd.f32 %v2859, %v2937
        %v2939 = vpop.f32.mrb[0].mxu0
        %2940 = vmatprep.mubr.f32.mxu0 0.0
        %v2941 = vand.u32 %v2443, 4294901760
        %2942 = vmatmul.mubr.f32.gmra.mrb[0].mxu0 %v2941
        %v2943 = vpop.f32.mrb[0].mxu0
        %v2944 = vadd.f32 %v2865, %v2943
        %v2945 = vpop.f32.mrb[0].mxu0
        %2946 = vdwg.mxu0
        %2947 = vmatprep.subr.mxu0 0.0
        %v2948 = vand.u32 %v2429, 4294901760
        %2949 = vmatpush1.msra.mxu0 %v2948
        %2950 = vmatprep.subr.mxu0 0.0
        %v2951 = vand.u32 %v2435, 4294901760
        %2952 = vmatpush1.msra.mxu0 %v2951
        %2953 = vmatprep.subr.mxu0 0.0
        %2954 = vmatpush1.msra.mxu0 0.0
        %2955 = vmatprep.subr.mxu0 0.0
        %2956 = vmatpush1.msra.mxu0 0.0
        %2957 = vmatprep.subr.mxu0 0.0
        %2958 = vmatpush1.msra.mxu0 0.0
        %2959 = vmatprep.subr.mxu0 0.0
        %2960 = vmatpush1.msra.mxu0 0.0
        %2961 = vmatprep.subr.mxu0 0.0
        %2962 = vmatpush1.msra.mxu0 0.0
        %2963 = vmatprep.subr.mxu0 0.0
        %2964 = vmatpush1.msra.mxu0 0.0
        %2965 = vmatprep.subr.mxu0 0.0
        %2966 = vmatpush1.msra.mxu0 0.0
        %2967 = vmatprep.subr.mxu0 0.0
        %2968 = vmatpush1.msra.mxu0 0.0
        %2969 = vmatprep.subr.mxu0 0.0
        %2970 = vmatpush1.msra.mxu0 0.0
        %2971 = vmatprep.subr.mxu0 0.0
        %2972 = vmatpush1.msra.mxu0 0.0
        %2973 = vmatprep.subr.mxu0 0.0
        %2974 = vmatpush1.msra.mxu0 0.0
        %2975 = vmatprep.subr.mxu0 0.0
        %2976 = vmatpush1.msra.mxu0 0.0
        %2977 = vmatprep.subr.mxu0 0.0
        %2978 = vmatpush1.msra.mxu0 0.0
        %2979 = vmatprep.subr.mxu0 0.0
        %2980 = vmatpush1.msra.mxu0 0.0
        %2981 = vmatprep.subr.mxu0 0.0
        %2982 = vmatpush1.msra.mxu0 0.0
        %2983 = vmatprep.subr.mxu0 0.0
        %2984 = vmatpush1.msra.mxu0 0.0
        %2985 = vmatprep.subr.mxu0 0.0
        %2986 = vmatpush1.msra.mxu0 0.0
        %2987 = vmatprep.subr.mxu0 0.0
        %2988 = vmatpush1.msra.mxu0 0.0
        %2989 = vmatprep.subr.mxu0 0.0
        %2990 = vmatpush1.msra.mxu0 0.0
        %2991 = vmatprep.subr.mxu0 0.0
        %2992 = vmatpush1.msra.mxu0 0.0
        %2993 = vmatprep.subr.mxu0 0.0
        %2994 = vmatpush1.msra.mxu0 0.0
        %2995 = vmatprep.subr.mxu0 0.0
        %2996 = vmatpush1.msra.mxu0 0.0
        %2997 = vmatprep.subr.mxu0 0.0
        %2998 = vmatpush1.msra.mxu0 0.0
        %2999 = vmatprep.subr.mxu0 0.0
        %3000 = vmatpush1.msra.mxu0 0.0
        %3001 = vmatprep.subr.mxu0 0.0
        %3002 = vmatpush1.msra.mxu0 0.0
        %3003 = vmatprep.subr.mxu0 0.0
        %3004 = vmatpush1.msra.mxu0 0.0
        %3005 = vmatprep.subr.mxu0 0.0
        %3006 = vmatpush1.msra.mxu0 0.0
        %3007 = vmatprep.subr.mxu0 0.0
        %3008 = vmatpush1.msra.mxu0 0.0
        %3009 = vmatprep.subr.mxu0 0.0
        %3010 = vmatpush1.msra.mxu0 0.0
        %3011 = vmatprep.subr.mxu0 0.0
        %3012 = vmatpush1.msra.mxu0 0.0
        %3013 = vmatprep.mubr.f32.mxu0 0.0
        %v3014 = vand.u32 %v2440, 4294901760
        %v3015 = vsub.f32 %v2440, %v3014
        %v3016 = vand.u32 %v3015, 4294901760
        %v3017 = vsub.f32 %v3015, %v3016
        %v3018 = vand.u32 %v3017, 4294901760
        %3019 = vmatmul.mubr.f32.gmra.mrb[0].mxu0 %v3018
        %v3020 = vpop.f32.mrb[0].mxu0
        %v3021 = vadd.f32 0.0, %v3020
        %v3022 = vpop.f32.mrb[0].mxu0
        %3023 = vmatprep.mubr.f32.mxu0 0.0
        %v3024 = vand.u32 %v2443, 4294901760
        %v3025 = vsub.f32 %v2443, %v3024
        %v3026 = vand.u32 %v3025, 4294901760
        %v3027 = vsub.f32 %v3025, %v3026
        %v3028 = vand.u32 %v3027, 4294901760
        %3029 = vmatmul.mubr.f32.gmra.mrb[0].mxu0 %v3028
        %v3030 = vpop.f32.mrb[0].mxu0
        %v3031 = vadd.f32 0.0, %v3030
        %v3032 = vpop.f32.mrb[0].mxu0
        %3033 = vdwg.mxu0
        %3034 = vmatprep.subr.mxu0 0.0
        %v3035 = vand.u32 %v2429, 4294901760
        %v3036 = vsub.f32 %v2429, %v3035
        %v3037 = vand.u32 %v3036, 4294901760
        %v3038 = vsub.f32 %v3036, %v3037
        %v3039 = vand.u32 %v3038, 4294901760
        %3040 = vmatpush1.msra.mxu0 %v3039
        %3041 = vmatprep.subr.mxu0 0.0
        %v3042 = vand.u32 %v2435, 4294901760
        %v3043 = vsub.f32 %v2435, %v3042
        %v3044 = vand.u32 %v3043, 4294901760
        %v3045 = vsub.f32 %v3043, %v3044
        %v3046 = vand.u32 %v3045, 4294901760
        %3047 = vmatpush1.msra.mxu0 %v3046
        %3048 = vmatprep.subr.mxu0 0.0
        %3049 = vmatpush1.msra.mxu0 0.0
        %3050 = vmatprep.subr.mxu0 0.0
        %3051 = vmatpush1.msra.mxu0 0.0
        %3052 = vmatprep.subr.mxu0 0.0
        %3053 = vmatpush1.msra.mxu0 0.0
        %3054 = vmatprep.subr.mxu0 0.0
        %3055 = vmatpush1.msra.mxu0 0.0
        %3056 = vmatprep.subr.mxu0 0.0
        %3057 = vmatpush1.msra.mxu0 0.0
        %3058 = vmatprep.subr.mxu0 0.0
        %3059 = vmatpush1.msra.mxu0 0.0
        %3060 = vmatprep.subr.mxu0 0.0
        %3061 = vmatpush1.msra.mxu0 0.0
        %3062 = vmatprep.subr.mxu0 0.0
        %3063 = vmatpush1.msra.mxu0 0.0
        %3064 = vmatprep.subr.mxu0 0.0
        %3065 = vmatpush1.msra.mxu0 0.0
        %3066 = vmatprep.subr.mxu0 0.0
        %3067 = vmatpush1.msra.mxu0 0.0
        %3068 = vmatprep.subr.mxu0 0.0
        %3069 = vmatpush1.msra.mxu0 0.0
        %3070 = vmatprep.subr.mxu0 0.0
        %3071 = vmatpush1.msra.mxu0 0.0
        %3072 = vmatprep.subr.mxu0 0.0
        %3073 = vmatpush1.msra.mxu0 0.0
        %3074 = vmatprep.subr.mxu0 0.0
        %3075 = vmatpush1.msra.mxu0 0.0
        %3076 = vmatprep.subr.mxu0 0.0
        %3077 = vmatpush1.msra.mxu0 0.0
        %3078 = vmatprep.subr.mxu0 0.0
        %3079 = vmatpush1.msra.mxu0 0.0
        %3080 = vmatprep.subr.mxu0 0.0
        %3081 = vmatpush1.msra.mxu0 0.0
        %3082 = vmatprep.subr.mxu0 0.0
        %3083 = vmatpush1.msra.mxu0 0.0
        %3084 = vmatprep.subr.mxu0 0.0
        %3085 = vmatpush1.msra.mxu0 0.0
        %3086 = vmatprep.subr.mxu0 0.0
        %3087 = vmatpush1.msra.mxu0 0.0
        %3088 = vmatprep.subr.mxu0 0.0
        %3089 = vmatpush1.msra.mxu0 0.0
        %3090 = vmatprep.subr.mxu0 0.0
        %3091 = vmatpush1.msra.mxu0 0.0
        %3092 = vmatprep.subr.mxu0 0.0
        %3093 = vmatpush1.msra.mxu0 0.0
        %3094 = vmatprep.subr.mxu0 0.0
        %3095 = vmatpush1.msra.mxu0 0.0
        %3096 = vmatprep.subr.mxu0 0.0
        %3097 = vmatpush1.msra.mxu0 0.0
        %3098 = vmatprep.subr.mxu0 0.0
        %3099 = vmatpush1.msra.mxu0 0.0
        %3100 = vmatprep.subr.mxu0 0.0
        %3101 = vmatpush1.msra.mxu0 0.0
        %3102 = vmatprep.subr.mxu0 0.0
        %3103 = vmatpush1.msra.mxu0 0.0
        %3104 = vmatprep.subr.mxu0 0.0
        %3105 = vmatpush1.msra.mxu0 0.0
        %3106 = vmatprep.subr.mxu0 0.0
        %3107 = vmatpush1.msra.mxu0 0.0
        %3108 = vmatprep.mubr.f32.mxu0 0.0
        %v3109 = vand.u32 %v2440, 4294901760
        %3110 = vmatmul.mubr.f32.gmra.mrb[0].mxu0 %v3109
        %v3111 = vpop.f32.mrb[0].mxu0
        %v3112 = vadd.f32 %v3021, %v3111
        %v3113 = vpop.f32.mrb[0].mxu0
        %3114 = vmatprep.mubr.f32.mxu0 0.0
        %v3115 = vand.u32 %v2443, 4294901760
        %3116 = vmatmul.mubr.f32.gmra.mrb[0].mxu0 %v3115
        %v3117 = vpop.f32.mrb[0].mxu0
        %v3118 = vadd.f32 %v3031, %v3117
        %v3119 = vpop.f32.mrb[0].mxu0
        %3120 = vdwg.mxu0
        %3121 = vmatprep.subr.mxu0 0.0
        %v3122 = vand.u32 %v2429, 4294901760
        %v3123 = vsub.f32 %v2429, %v3122
        %3124 = vmatpush1.msra.mxu0 %v3123
        %3125 = vmatprep.subr.mxu0 0.0
        %v3126 = vand.u32 %v2435, 4294901760
        %v3127 = vsub.f32 %v2435, %v3126
        %3128 = vmatpush1.msra.mxu0 %v3127
        %3129 = vmatprep.subr.mxu0 0.0
        %3130 = vmatpush1.msra.mxu0 0.0
        %3131 = vmatprep.subr.mxu0 0.0
        %3132 = vmatpush1.msra.mxu0 0.0
        %3133 = vmatprep.subr.mxu0 0.0
        %3134 = vmatpush1.msra.mxu0 0.0
        %3135 = vmatprep.subr.mxu0 0.0
        %3136 = vmatpush1.msra.mxu0 0.0
        %3137 = vmatprep.subr.mxu0 0.0
        %3138 = vmatpush1.msra.mxu0 0.0
        %3139 = vmatprep.subr.mxu0 0.0
        %3140 = vmatpush1.msra.mxu0 0.0
        %3141 = vmatprep.subr.mxu0 0.0
        %3142 = vmatpush1.msra.mxu0 0.0
        %3143 = vmatprep.subr.mxu0 0.0
        %3144 = vmatpush1.msra.mxu0 0.0
        %3145 = vmatprep.subr.mxu0 0.0
        %3146 = vmatpush1.msra.mxu0 0.0
        %3147 = vmatprep.subr.mxu0 0.0
        %3148 = vmatpush1.msra.mxu0 0.0
        %3149 = vmatprep.subr.mxu0 0.0
        %3150 = vmatpush1.msra.mxu0 0.0
        %3151 = vmatprep.subr.mxu0 0.0
        %3152 = vmatpush1.msra.mxu0 0.0
        %3153 = vmatprep.subr.mxu0 0.0
        %3154 = vmatpush1.msra.mxu0 0.0
        %3155 = vmatprep.subr.mxu0 0.0
        %3156 = vmatpush1.msra.mxu0 0.0
        %3157 = vmatprep.subr.mxu0 0.0
        %3158 = vmatpush1.msra.mxu0 0.0
        %3159 = vmatprep.subr.mxu0 0.0
        %3160 = vmatpush1.msra.mxu0 0.0
        %3161 = vmatprep.subr.mxu0 0.0
        %3162 = vmatpush1.msra.mxu0 0.0
        %3163 = vmatprep.subr.mxu0 0.0
        %3164 = vmatpush1.msra.mxu0 0.0
        %3165 = vmatprep.subr.mxu0 0.0
        %3166 = vmatpush1.msra.mxu0 0.0
        %3167 = vmatprep.subr.mxu0 0.0
        %3168 = vmatpush1.msra.mxu0 0.0
        %3169 = vmatprep.subr.mxu0 0.0
        %3170 = vmatpush1.msra.mxu0 0.0
        %3171 = vmatprep.subr.mxu0 0.0
        %3172 = vmatpush1.msra.mxu0 0.0
        %3173 = vmatprep.subr.mxu0 0.0
        %3174 = vmatpush1.msra.mxu0 0.0
        %3175 = vmatprep.subr.mxu0 0.0
        %3176 = vmatpush1.msra.mxu0 0.0
        %3177 = vmatprep.subr.mxu0 0.0
        %3178 = vmatpush1.msra.mxu0 0.0
        %3179 = vmatprep.subr.mxu0 0.0
        %3180 = vmatpush1.msra.mxu0 0.0
        %3181 = vmatprep.subr.mxu0 0.0
        %3182 = vmatpush1.msra.mxu0 0.0
        %3183 = vmatprep.subr.mxu0 0.0
        %3184 = vmatpush1.msra.mxu0 0.0
        %3185 = vmatprep.subr.mxu0 0.0
        %3186 = vmatpush1.msra.mxu0 0.0
        %3187 = vmatprep.subr.mxu0 0.0
        %3188 = vmatpush1.msra.mxu0 0.0
        %3189 = vmatprep.mubr.f32.mxu0 0.0
        %v3190 = vand.u32 %v2440, 4294901760
        %v3191 = vsub.f32 %v2440, %v3190
        %3192 = vmatmul.mubr.f32.gmra.mrb[0].mxu0 %v3191
        %v3193 = vpop.f32.mrb[0].mxu0
        %v3194 = vadd.f32 %v3112, %v3193
        %v3195 = vpop.f32.mrb[0].mxu0
        %3196 = vmatprep.mubr.f32.mxu0 0.0
        %v3197 = vand.u32 %v2443, 4294901760
        %v3198 = vsub.f32 %v2443, %v3197
        %3199 = vmatmul.mubr.f32.gmra.mrb[0].mxu0 %v3198
        %v3200 = vpop.f32.mrb[0].mxu0
        %v3201 = vadd.f32 %v3118, %v3200
        %v3202 = vpop.f32.mrb[0].mxu0
        %3203 = vdwg.mxu0
        %3204 = vmatprep.subr.mxu0 0.0
        %v3205 = vand.u32 %v2429, 4294901760
        %3206 = vmatpush1.msra.mxu0 %v3205
        %3207 = vmatprep.subr.mxu0 0.0
        %v3208 = vand.u32 %v2435, 4294901760
        %3209 = vmatpush1.msra.mxu0 %v3208
        %3210 = vmatprep.subr.mxu0 0.0
        %3211 = vmatpush1.msra.mxu0 0.0
        %3212 = vmatprep.subr.mxu0 0.0
        %3213 = vmatpush1.msra.mxu0 0.0
        %3214 = vmatprep.subr.mxu0 0.0
        %3215 = vmatpush1.msra.mxu0 0.0
        %3216 = vmatprep.subr.mxu0 0.0
        %3217 = vmatpush1.msra.mxu0 0.0
        %3218 = vmatprep.subr.mxu0 0.0
        %3219 = vmatpush1.msra.mxu0 0.0
        %3220 = vmatprep.subr.mxu0 0.0
        %3221 = vmatpush1.msra.mxu0 0.0
        %3222 = vmatprep.subr.mxu0 0.0
        %3223 = vmatpush1.msra.mxu0 0.0
        %3224 = vmatprep.subr.mxu0 0.0
        %3225 = vmatpush1.msra.mxu0 0.0
        %3226 = vmatprep.subr.mxu0 0.0
        %3227 = vmatpush1.msra.mxu0 0.0
        %3228 = vmatprep.subr.mxu0 0.0
        %3229 = vmatpush1.msra.mxu0 0.0
        %3230 = vmatprep.subr.mxu0 0.0
        %3231 = vmatpush1.msra.mxu0 0.0
        %3232 = vmatprep.subr.mxu0 0.0
        %3233 = vmatpush1.msra.mxu0 0.0
        %3234 = vmatprep.subr.mxu0 0.0
        %3235 = vmatpush1.msra.mxu0 0.0
        %3236 = vmatprep.subr.mxu0 0.0
        %3237 = vmatpush1.msra.mxu0 0.0
        %3238 = vmatprep.subr.mxu0 0.0
        %3239 = vmatpush1.msra.mxu0 0.0
        %3240 = vmatprep.subr.mxu0 0.0
        %3241 = vmatpush1.msra.mxu0 0.0
        %3242 = vmatprep.subr.mxu0 0.0
        %3243 = vmatpush1.msra.mxu0 0.0
        %3244 = vmatprep.subr.mxu0 0.0
        %3245 = vmatpush1.msra.mxu0 0.0
        %3246 = vmatprep.subr.mxu0 0.0
        %3247 = vmatpush1.msra.mxu0 0.0
        %3248 = vmatprep.subr.mxu0 0.0
        %3249 = vmatpush1.msra.mxu0 0.0
        %3250 = vmatprep.subr.mxu0 0.0
        %3251 = vmatpush1.msra.mxu0 0.0
        %3252 = vmatprep.subr.mxu0 0.0
        %3253 = vmatpush1.msra.mxu0 0.0
        %3254 = vmatprep.subr.mxu0 0.0
        %3255 = vmatpush1.msra.mxu0 0.0
        %3256 = vmatprep.subr.mxu0 0.0
        %3257 = vmatpush1.msra.mxu0 0.0
        %3258 = vmatprep.subr.mxu0 0.0
        %3259 = vmatpush1.msra.mxu0 0.0
        %3260 = vmatprep.subr.mxu0 0.0
        %3261 = vmatpush1.msra.mxu0 0.0
        %3262 = vmatprep.subr.mxu0 0.0
        %3263 = vmatpush1.msra.mxu0 0.0
        %3264 = vmatprep.subr.mxu0 0.0
        %3265 = vmatpush1.msra.mxu0 0.0
        %3266 = vmatprep.subr.mxu0 0.0
        %3267 = vmatpush1.msra.mxu0 0.0
        %3268 = vmatprep.subr.mxu0 0.0
        %3269 = vmatpush1.msra.mxu0 0.0
        %3270 = vmatprep.mubr.f32.mxu0 0.0
        %v3271 = vand.u32 %v2440, 4294901760
        %v3272 = vsub.f32 %v2440, %v3271
        %v3273 = vand.u32 %v3272, 4294901760
        %3274 = vmatmul.mubr.f32.gmra.mrb[0].mxu0 %v3273
        %v3275 = vpop.f32.mrb[0].mxu0
        %v3276 = vadd.f32 %v3194, %v3275
        %v3277 = vpop.f32.mrb[0].mxu0
        %3278 = vmatprep.mubr.f32.mxu0 0.0
        %v3279 = vand.u32 %v2443, 4294901760
        %v3280 = vsub.f32 %v2443, %v3279
        %v3281 = vand.u32 %v3280, 4294901760
        %3282 = vmatmul.mubr.f32.gmra.mrb[0].mxu0 %v3281
        %v3283 = vpop.f32.mrb[0].mxu0
        %v3284 = vadd.f32 %v3201, %v3283
        %v3285 = vpop.f32.mrb[0].mxu0
        %3286 = vdwg.mxu0
        %3287 = vmatprep.subr.mxu0 0.0
        %v3288 = vand.u32 %v2429, 4294901760
        %v3289 = vsub.f32 %v2429, %v3288
        %v3290 = vand.u32 %v3289, 4294901760
        %3291 = vmatpush1.msra.mxu0 %v3290
        %3292 = vmatprep.subr.mxu0 0.0
        %v3293 = vand.u32 %v2435, 4294901760
        %v3294 = vsub.f32 %v2435, %v3293
        %v3295 = vand.u32 %v3294, 4294901760
        %3296 = vmatpush1.msra.mxu0 %v3295
        %3297 = vmatprep.subr.mxu0 0.0
        %3298 = vmatpush1.msra.mxu0 0.0
        %3299 = vmatprep.subr.mxu0 0.0
        %3300 = vmatpush1.msra.mxu0 0.0
        %3301 = vmatprep.subr.mxu0 0.0
        %3302 = vmatpush1.msra.mxu0 0.0
        %3303 = vmatprep.subr.mxu0 0.0
        %3304 = vmatpush1.msra.mxu0 0.0
        %3305 = vmatprep.subr.mxu0 0.0
        %3306 = vmatpush1.msra.mxu0 0.0
        %3307 = vmatprep.subr.mxu0 0.0
        %3308 = vmatpush1.msra.mxu0 0.0
        %3309 = vmatprep.subr.mxu0 0.0
        %3310 = vmatpush1.msra.mxu0 0.0
        %3311 = vmatprep.subr.mxu0 0.0
        %3312 = vmatpush1.msra.mxu0 0.0
        %3313 = vmatprep.subr.mxu0 0.0
        %3314 = vmatpush1.msra.mxu0 0.0
        %3315 = vmatprep.subr.mxu0 0.0
        %3316 = vmatpush1.msra.mxu0 0.0
        %3317 = vmatprep.subr.mxu0 0.0
        %3318 = vmatpush1.msra.mxu0 0.0
        %3319 = vmatprep.subr.mxu0 0.0
        %3320 = vmatpush1.msra.mxu0 0.0
        %3321 = vmatprep.subr.mxu0 0.0
        %3322 = vmatpush1.msra.mxu0 0.0
        %3323 = vmatprep.subr.mxu0 0.0
        %3324 = vmatpush1.msra.mxu0 0.0
        %3325 = vmatprep.subr.mxu0 0.0
        %3326 = vmatpush1.msra.mxu0 0.0
        %3327 = vmatprep.subr.mxu0 0.0
        %3328 = vmatpush1.msra.mxu0 0.0
        %3329 = vmatprep.subr.mxu0 0.0
        %3330 = vmatpush1.msra.mxu0 0.0
        %3331 = vmatprep.subr.mxu0 0.0
        %3332 = vmatpush1.msra.mxu0 0.0
        %3333 = vmatprep.subr.mxu0 0.0
        %3334 = vmatpush1.msra.mxu0 0.0
        %3335 = vmatprep.subr.mxu0 0.0
        %3336 = vmatpush1.msra.mxu0 0.0
        %3337 = vmatprep.subr.mxu0 0.0
        %3338 = vmatpush1.msra.mxu0 0.0
        %3339 = vmatprep.subr.mxu0 0.0
        %3340 = vmatpush1.msra.mxu0 0.0
        %3341 = vmatprep.subr.mxu0 0.0
        %3342 = vmatpush1.msra.mxu0 0.0
        %3343 = vmatprep.subr.mxu0 0.0
        %3344 = vmatpush1.msra.mxu0 0.0
        %3345 = vmatprep.subr.mxu0 0.0
        %3346 = vmatpush1.msra.mxu0 0.0
        %3347 = vmatprep.subr.mxu0 0.0
        %3348 = vmatpush1.msra.mxu0 0.0
        %3349 = vmatprep.subr.mxu0 0.0
        %3350 = vmatpush1.msra.mxu0 0.0
        %3351 = vmatprep.subr.mxu0 0.0
        %3352 = vmatpush1.msra.mxu0 0.0
        %3353 = vmatprep.subr.mxu0 0.0
        %3354 = vmatpush1.msra.mxu0 0.0
        %3355 = vmatprep.subr.mxu0 0.0
        %3356 = vmatpush1.msra.mxu0 0.0
        %3357 = vmatprep.mubr.f32.mxu0 0.0
        %v3358 = vand.u32 %v2440, 4294901760
        %3359 = vmatmul.mubr.f32.gmra.mrb[0].mxu0 %v3358
        %v3360 = vpop.f32.mrb[0].mxu0
        %v3361 = vadd.f32 %v3276, %v3360
        %v3362 = vpop.f32.mrb[0].mxu0
        %3363 = vmatprep.mubr.f32.mxu0 0.0
        %v3364 = vand.u32 %v2443, 4294901760
        %3365 = vmatmul.mubr.f32.gmra.mrb[0].mxu0 %v3364
        %v3366 = vpop.f32.mrb[0].mxu0
        %v3367 = vadd.f32 %v3284, %v3366
        %v3368 = vpop.f32.mrb[0].mxu0
        %3369 = vdwg.mxu0
        %3370 = vmatprep.subr.mxu0 0.0
        %v3371 = vand.u32 %v2429, 4294901760
        %3372 = vmatpush1.msra.mxu0 %v3371
        %3373 = vmatprep.subr.mxu0 0.0
        %v3374 = vand.u32 %v2435, 4294901760
        %3375 = vmatpush1.msra.mxu0 %v3374
        %3376 = vmatprep.subr.mxu0 0.0
        %3377 = vmatpush1.msra.mxu0 0.0
        %3378 = vmatprep.subr.mxu0 0.0
        %3379 = vmatpush1.msra.mxu0 0.0
        %3380 = vmatprep.subr.mxu0 0.0
        %3381 = vmatpush1.msra.mxu0 0.0
        %3382 = vmatprep.subr.mxu0 0.0
        %3383 = vmatpush1.msra.mxu0 0.0
        %3384 = vmatprep.subr.mxu0 0.0
        %3385 = vmatpush1.msra.mxu0 0.0
        %3386 = vmatprep.subr.mxu0 0.0
        %3387 = vmatpush1.msra.mxu0 0.0
        %3388 = vmatprep.subr.mxu0 0.0
        %3389 = vmatpush1.msra.mxu0 0.0
        %3390 = vmatprep.subr.mxu0 0.0
        %3391 = vmatpush1.msra.mxu0 0.0
        %3392 = vmatprep.subr.mxu0 0.0
        %3393 = vmatpush1.msra.mxu0 0.0
        %3394 = vmatprep.subr.mxu0 0.0
        %3395 = vmatpush1.msra.mxu0 0.0
        %3396 = vmatprep.subr.mxu0 0.0
        %3397 = vmatpush1.msra.mxu0 0.0
        %3398 = vmatprep.subr.mxu0 0.0
        %3399 = vmatpush1.msra.mxu0 0.0
        %3400 = vmatprep.subr.mxu0 0.0
        %3401 = vmatpush1.msra.mxu0 0.0
        %3402 = vmatprep.subr.mxu0 0.0
        %3403 = vmatpush1.msra.mxu0 0.0
        %3404 = vmatprep.subr.mxu0 0.0
        %3405 = vmatpush1.msra.mxu0 0.0
        %3406 = vmatprep.subr.mxu0 0.0
        %3407 = vmatpush1.msra.mxu0 0.0
        %3408 = vmatprep.subr.mxu0 0.0
        %3409 = vmatpush1.msra.mxu0 0.0
        %3410 = vmatprep.subr.mxu0 0.0
        %3411 = vmatpush1.msra.mxu0 0.0
        %3412 = vmatprep.subr.mxu0 0.0
        %3413 = vmatpush1.msra.mxu0 0.0
        %3414 = vmatprep.subr.mxu0 0.0
        %3415 = vmatpush1.msra.mxu0 0.0
        %3416 = vmatprep.subr.mxu0 0.0
        %3417 = vmatpush1.msra.mxu0 0.0
        %3418 = vmatprep.subr.mxu0 0.0
        %3419 = vmatpush1.msra.mxu0 0.0
        %3420 = vmatprep.subr.mxu0 0.0
        %3421 = vmatpush1.msra.mxu0 0.0
        %3422 = vmatprep.subr.mxu0 0.0
        %3423 = vmatpush1.msra.mxu0 0.0
        %3424 = vmatprep.subr.mxu0 0.0
        %3425 = vmatpush1.msra.mxu0 0.0
        %3426 = vmatprep.subr.mxu0 0.0
        %3427 = vmatpush1.msra.mxu0 0.0
        %3428 = vmatprep.subr.mxu0 0.0
        %3429 = vmatpush1.msra.mxu0 0.0
        %3430 = vmatprep.subr.mxu0 0.0
        %3431 = vmatpush1.msra.mxu0 0.0
        %3432 = vmatprep.subr.mxu0 0.0
        %3433 = vmatpush1.msra.mxu0 0.0
        %3434 = vmatprep.subr.mxu0 0.0
        %3435 = vmatpush1.msra.mxu0 0.0
        %3436 = vmatprep.mubr.f32.mxu0 0.0
        %v3437 = vand.u32 %v2440, 4294901760
        %3438 = vmatmul.mubr.f32.gmra.mrb[0].mxu0 %v3437
        %v3439 = vpop.f32.mrb[0].mxu0
        %v3440 = vadd.f32 %v3361, %v3439
        %v3441 = vpop.f32.mrb[0].mxu0
        %3442 = vmatprep.mubr.f32.mxu0 0.0
        %v3443 = vand.u32 %v2443, 4294901760
        %3444 = vmatmul.mubr.f32.gmra.mrb[0].mxu0 %v3443
        %v3445 = vpop.f32.mrb[0].mxu0
        %v3446 = vadd.f32 %v3367, %v3445
        %v3447 = vpop.f32.mrb[0].mxu0
        %3448 = vdwg.mxu0
        %v3449 = vmul.f32 %v2938, %v2938
        %v3450 = vmul.f32 %v2944, %v2944
        %v3451 = vsub.f32 %v3440, %v3449
        %v3452 = vsub.f32 %v3446, %v3450
        %v3453 = vmax.f32 %v3451, 0.0
        %v3454 = vmax.f32 %v3452, 0.0
        %v3455 = vadd.f32 %v3453, 1e-05
        %v3456 = vadd.f32 %v3454, 1e-05
        %v3457 = vrsqrt.pop %v3455
        %v3458 = vrsqrt.pop %v3456
        %3459 = vset.pattern.permute.xlu0 2
        %3460 = vperm.xlu0 %3459, %v400
        %v3461 = vpop.permute.xlu0 %3460
        %3463 = vset.pattern.permute.xlu0 2
        %3464 = vperm.xlu0 %3463, %v401
        %v3465 = vpop.permute.xlu0 %3464
        %v3467 = vmul.f32 %v3457, %v3461
        %v3468 = vmul.f32 %v3458, %v3465
        %v3469 = vmul.f32 %v2938, %v3467
        %v3470 = vmul.f32 %v2944, %v3468
        %3471 = vset.pattern.permute.xlu0 3
        %3472 = vperm.xlu0 %3471, %v400
        %v3473 = vpop.permute.xlu0 %3472
        %3475 = vset.pattern.permute.xlu0 3
        %3476 = vperm.xlu0 %3475, %v401
        %v3477 = vpop.permute.xlu0 %3476
        %v3479 = vsub.f32 %v3473, %v3469
        %v3480 = vsub.f32 %v3477, %v3470
        %vm3481 = vcmask 64512
        %v3483 = vsel %vm3481, %v3467, 0
        %v3486 = vsel %vm3481, %v3468, 0
        %3488 = vmatprep.subr.mxu0 0.0
        %v3489 = vand.u32 %v404, 4294901760
        %3490 = vmatpush1.msra.mxu0 %v3489
        %3491 = vmatprep.subr.mxu0 0.0
        %3492 = vmatpush1.msra.mxu0 0.0
        %3493 = vmatprep.subr.mxu0 0.0
        %3494 = vmatpush1.msra.mxu0 0.0
        %3495 = vmatprep.subr.mxu0 0.0
        %3496 = vmatpush1.msra.mxu0 0.0
        %3497 = vmatprep.subr.mxu0 0.0
        %3498 = vmatpush1.msra.mxu0 0.0
        %3499 = vmatprep.subr.mxu0 0.0
        %3500 = vmatpush1.msra.mxu0 0.0
        %3501 = vmatprep.subr.mxu0 0.0
        %3502 = vmatpush1.msra.mxu0 0.0
        %3503 = vmatprep.subr.mxu0 0.0
        %3504 = vmatpush1.msra.mxu0 0.0
        %3505 = vmatprep.subr.mxu0 0.0
        %3506 = vmatpush1.msra.mxu0 0.0
        %3507 = vmatprep.subr.mxu0 0.0
        %3508 = vmatpush1.msra.mxu0 0.0
        %3509 = vmatprep.subr.mxu0 0.0
        %3510 = vmatpush1.msra.mxu0 0.0
        %3511 = vmatprep.subr.mxu0 0.0
        %3512 = vmatpush1.msra.mxu0 0.0
        %3513 = vmatprep.subr.mxu0 0.0
        %3514 = vmatpush1.msra.mxu0 0.0
        %3515 = vmatprep.subr.mxu0 0.0
        %3516 = vmatpush1.msra.mxu0 0.0
        %3517 = vmatprep.subr.mxu0 0.0
        %3518 = vmatpush1.msra.mxu0 0.0
        %3519 = vmatprep.subr.mxu0 0.0
        %3520 = vmatpush1.msra.mxu0 0.0
        %3521 = vmatprep.subr.mxu0 0.0
        %3522 = vmatpush1.msra.mxu0 0.0
        %3523 = vmatprep.subr.mxu0 0.0
        %3524 = vmatpush1.msra.mxu0 0.0
        %3525 = vmatprep.subr.mxu0 0.0
        %3526 = vmatpush1.msra.mxu0 0.0
        %3527 = vmatprep.subr.mxu0 0.0
        %3528 = vmatpush1.msra.mxu0 0.0
        %3529 = vmatprep.subr.mxu0 0.0
        %3530 = vmatpush1.msra.mxu0 0.0
        %3531 = vmatprep.subr.mxu0 0.0
        %3532 = vmatpush1.msra.mxu0 0.0
        %3533 = vmatprep.subr.mxu0 0.0
        %3534 = vmatpush1.msra.mxu0 0.0
        %3535 = vmatprep.subr.mxu0 0.0
        %3536 = vmatpush1.msra.mxu0 0.0
        %3537 = vmatprep.subr.mxu0 0.0
        %3538 = vmatpush1.msra.mxu0 0.0
        %3539 = vmatprep.subr.mxu0 0.0
        %3540 = vmatpush1.msra.mxu0 0.0
        %3541 = vmatprep.subr.mxu0 0.0
        %3542 = vmatpush1.msra.mxu0 0.0
        %3543 = vmatprep.subr.mxu0 0.0
        %3544 = vmatpush1.msra.mxu0 0.0
        %3545 = vmatprep.subr.mxu0 0.0
        %3546 = vmatpush1.msra.mxu0 0.0
        %3547 = vmatprep.subr.mxu0 0.0
        %3548 = vmatpush1.msra.mxu0 0.0
        %3549 = vmatprep.subr.mxu0 0.0
        %3550 = vmatpush1.msra.mxu0 0.0
        %3551 = vmatprep.subr.mxu0 0.0
        %3552 = vmatpush1.msra.mxu0 0.0
        %3553 = vmatprep.mubr.f32.mxu0 0.0
        %v3554 = vand.u32 %v3483, 4294901760
        %v3555 = vsub.f32 %v3483, %v3554
        %v3556 = vand.u32 %v3555, 4294901760
        %v3557 = vsub.f32 %v3555, %v3556
        %v3558 = vand.u32 %v3557, 4294901760
        %3559 = vmatmul.mubr.f32.gmra.mrb[0].mxu0 %v3558
        %v3560 = vpop.f32.mrb[0].mxu0
        %v3561 = vadd.f32 0.0, %v3560
        %v3562 = vpop.f32.mrb[0].mxu0
        %3563 = vmatprep.mubr.f32.mxu0 0.0
        %v3564 = vand.u32 %v3486, 4294901760
        %v3565 = vsub.f32 %v3486, %v3564
        %v3566 = vand.u32 %v3565, 4294901760
        %v3567 = vsub.f32 %v3565, %v3566
        %v3568 = vand.u32 %v3567, 4294901760
        %3569 = vmatmul.mubr.f32.gmra.mrb[0].mxu0 %v3568
        %v3570 = vpop.f32.mrb[0].mxu0
        %v3571 = vadd.f32 0.0, %v3570
        %v3572 = vpop.f32.mrb[0].mxu0
        %3573 = vdwg.mxu0
        %3574 = vmatprep.subr.mxu0 0.0
        %v3575 = vand.u32 %v404, 4294901760
        %v3576 = vsub.f32 %v404, %v3575
        %v3577 = vand.u32 %v3576, 4294901760
        %v3578 = vsub.f32 %v3576, %v3577
        %v3579 = vand.u32 %v3578, 4294901760
        %3580 = vmatpush1.msra.mxu0 %v3579
        %3581 = vmatprep.subr.mxu0 0.0
        %3582 = vmatpush1.msra.mxu0 0.0
        %3583 = vmatprep.subr.mxu0 0.0
        %3584 = vmatpush1.msra.mxu0 0.0
        %3585 = vmatprep.subr.mxu0 0.0
        %3586 = vmatpush1.msra.mxu0 0.0
        %3587 = vmatprep.subr.mxu0 0.0
        %3588 = vmatpush1.msra.mxu0 0.0
        %3589 = vmatprep.subr.mxu0 0.0
        %3590 = vmatpush1.msra.mxu0 0.0
        %3591 = vmatprep.subr.mxu0 0.0
        %3592 = vmatpush1.msra.mxu0 0.0
        %3593 = vmatprep.subr.mxu0 0.0
        %3594 = vmatpush1.msra.mxu0 0.0
        %3595 = vmatprep.subr.mxu0 0.0
        %3596 = vmatpush1.msra.mxu0 0.0
        %3597 = vmatprep.subr.mxu0 0.0
        %3598 = vmatpush1.msra.mxu0 0.0
        %3599 = vmatprep.subr.mxu0 0.0
        %3600 = vmatpush1.msra.mxu0 0.0
        %3601 = vmatprep.subr.mxu0 0.0
        %3602 = vmatpush1.msra.mxu0 0.0
        %3603 = vmatprep.subr.mxu0 0.0
        %3604 = vmatpush1.msra.mxu0 0.0
        %3605 = vmatprep.subr.mxu0 0.0
        %3606 = vmatpush1.msra.mxu0 0.0
        %3607 = vmatprep.subr.mxu0 0.0
        %3608 = vmatpush1.msra.mxu0 0.0
        %3609 = vmatprep.subr.mxu0 0.0
        %3610 = vmatpush1.msra.mxu0 0.0
        %3611 = vmatprep.subr.mxu0 0.0
        %3612 = vmatpush1.msra.mxu0 0.0
        %3613 = vmatprep.subr.mxu0 0.0
        %3614 = vmatpush1.msra.mxu0 0.0
        %3615 = vmatprep.subr.mxu0 0.0
        %3616 = vmatpush1.msra.mxu0 0.0
        %3617 = vmatprep.subr.mxu0 0.0
        %3618 = vmatpush1.msra.mxu0 0.0
        %3619 = vmatprep.subr.mxu0 0.0
        %3620 = vmatpush1.msra.mxu0 0.0
        %3621 = vmatprep.subr.mxu0 0.0
        %3622 = vmatpush1.msra.mxu0 0.0
        %3623 = vmatprep.subr.mxu0 0.0
        %3624 = vmatpush1.msra.mxu0 0.0
        %3625 = vmatprep.subr.mxu0 0.0
        %3626 = vmatpush1.msra.mxu0 0.0
        %3627 = vmatprep.subr.mxu0 0.0
        %3628 = vmatpush1.msra.mxu0 0.0
        %3629 = vmatprep.subr.mxu0 0.0
        %3630 = vmatpush1.msra.mxu0 0.0
        %3631 = vmatprep.subr.mxu0 0.0
        %3632 = vmatpush1.msra.mxu0 0.0
        %3633 = vmatprep.subr.mxu0 0.0
        %3634 = vmatpush1.msra.mxu0 0.0
        %3635 = vmatprep.subr.mxu0 0.0
        %3636 = vmatpush1.msra.mxu0 0.0
        %3637 = vmatprep.subr.mxu0 0.0
        %3638 = vmatpush1.msra.mxu0 0.0
        %3639 = vmatprep.subr.mxu0 0.0
        %3640 = vmatpush1.msra.mxu0 0.0
        %3641 = vmatprep.subr.mxu0 0.0
        %3642 = vmatpush1.msra.mxu0 0.0
        %3643 = vmatprep.mubr.f32.mxu0 0.0
        %v3644 = vand.u32 %v3483, 4294901760
        %3645 = vmatmul.mubr.f32.gmra.mrb[0].mxu0 %v3644
        %v3646 = vpop.f32.mrb[0].mxu0
        %v3647 = vadd.f32 %v3561, %v3646
        %v3648 = vpop.f32.mrb[0].mxu0
        %3649 = vmatprep.mubr.f32.mxu0 0.0
        %v3650 = vand.u32 %v3486, 4294901760
        %3651 = vmatmul.mubr.f32.gmra.mrb[0].mxu0 %v3650
        %v3652 = vpop.f32.mrb[0].mxu0
        %v3653 = vadd.f32 %v3571, %v3652
        %v3654 = vpop.f32.mrb[0].mxu0
        %3655 = vdwg.mxu0
        %3656 = vmatprep.subr.mxu0 0.0
        %v3657 = vand.u32 %v404, 4294901760
        %v3658 = vsub.f32 %v404, %v3657
        %3659 = vmatpush1.msra.mxu0 %v3658
        %3660 = vmatprep.subr.mxu0 0.0
        %3661 = vmatpush1.msra.mxu0 0.0
        %3662 = vmatprep.subr.mxu0 0.0
        %3663 = vmatpush1.msra.mxu0 0.0
        %3664 = vmatprep.subr.mxu0 0.0
        %3665 = vmatpush1.msra.mxu0 0.0
        %3666 = vmatprep.subr.mxu0 0.0
        %3667 = vmatpush1.msra.mxu0 0.0
        %3668 = vmatprep.subr.mxu0 0.0
        %3669 = vmatpush1.msra.mxu0 0.0
        %3670 = vmatprep.subr.mxu0 0.0
        %3671 = vmatpush1.msra.mxu0 0.0
        %3672 = vmatprep.subr.mxu0 0.0
        %3673 = vmatpush1.msra.mxu0 0.0
        %3674 = vmatprep.subr.mxu0 0.0
        %3675 = vmatpush1.msra.mxu0 0.0
        %3676 = vmatprep.subr.mxu0 0.0
        %3677 = vmatpush1.msra.mxu0 0.0
        %3678 = vmatprep.subr.mxu0 0.0
        %3679 = vmatpush1.msra.mxu0 0.0
        %3680 = vmatprep.subr.mxu0 0.0
        %3681 = vmatpush1.msra.mxu0 0.0
        %3682 = vmatprep.subr.mxu0 0.0
        %3683 = vmatpush1.msra.mxu0 0.0
        %3684 = vmatprep.subr.mxu0 0.0
        %3685 = vmatpush1.msra.mxu0 0.0
        %3686 = vmatprep.subr.mxu0 0.0
        %3687 = vmatpush1.msra.mxu0 0.0
        %3688 = vmatprep.subr.mxu0 0.0
        %3689 = vmatpush1.msra.mxu0 0.0
        %3690 = vmatprep.subr.mxu0 0.0
        %3691 = vmatpush1.msra.mxu0 0.0
        %3692 = vmatprep.subr.mxu0 0.0
        %3693 = vmatpush1.msra.mxu0 0.0
        %3694 = vmatprep.subr.mxu0 0.0
        %3695 = vmatpush1.msra.mxu0 0.0
        %3696 = vmatprep.subr.mxu0 0.0
        %3697 = vmatpush1.msra.mxu0 0.0
        %3698 = vmatprep.subr.mxu0 0.0
        %3699 = vmatpush1.msra.mxu0 0.0
        %3700 = vmatprep.subr.mxu0 0.0
        %3701 = vmatpush1.msra.mxu0 0.0
        %3702 = vmatprep.subr.mxu0 0.0
        %3703 = vmatpush1.msra.mxu0 0.0
        %3704 = vmatprep.subr.mxu0 0.0
        %3705 = vmatpush1.msra.mxu0 0.0
        %3706 = vmatprep.subr.mxu0 0.0
        %3707 = vmatpush1.msra.mxu0 0.0
        %3708 = vmatprep.subr.mxu0 0.0
        %3709 = vmatpush1.msra.mxu0 0.0
        %3710 = vmatprep.subr.mxu0 0.0
        %3711 = vmatpush1.msra.mxu0 0.0
        %3712 = vmatprep.subr.mxu0 0.0
        %3713 = vmatpush1.msra.mxu0 0.0
        %3714 = vmatprep.subr.mxu0 0.0
        %3715 = vmatpush1.msra.mxu0 0.0
        %3716 = vmatprep.subr.mxu0 0.0
        %3717 = vmatpush1.msra.mxu0 0.0
        %3718 = vmatprep.subr.mxu0 0.0
        %3719 = vmatpush1.msra.mxu0 0.0
        %3720 = vmatprep.subr.mxu0 0.0
        %3721 = vmatpush1.msra.mxu0 0.0
        %3722 = vmatprep.mubr.f32.mxu0 0.0
        %v3723 = vand.u32 %v3483, 4294901760
        %v3724 = vsub.f32 %v3483, %v3723
        %3725 = vmatmul.mubr.f32.gmra.mrb[0].mxu0 %v3724
        %v3726 = vpop.f32.mrb[0].mxu0
        %v3727 = vadd.f32 %v3647, %v3726
        %v3728 = vpop.f32.mrb[0].mxu0
        %3729 = vmatprep.mubr.f32.mxu0 0.0
        %v3730 = vand.u32 %v3486, 4294901760
        %v3731 = vsub.f32 %v3486, %v3730
        %3732 = vmatmul.mubr.f32.gmra.mrb[0].mxu0 %v3731
        %v3733 = vpop.f32.mrb[0].mxu0
        %v3734 = vadd.f32 %v3653, %v3733
        %v3735 = vpop.f32.mrb[0].mxu0
        %3736 = vdwg.mxu0
        %3737 = vmatprep.subr.mxu0 0.0
        %v3738 = vand.u32 %v404, 4294901760
        %3739 = vmatpush1.msra.mxu0 %v3738
        %3740 = vmatprep.subr.mxu0 0.0
        %3741 = vmatpush1.msra.mxu0 0.0
        %3742 = vmatprep.subr.mxu0 0.0
        %3743 = vmatpush1.msra.mxu0 0.0
        %3744 = vmatprep.subr.mxu0 0.0
        %3745 = vmatpush1.msra.mxu0 0.0
        %3746 = vmatprep.subr.mxu0 0.0
        %3747 = vmatpush1.msra.mxu0 0.0
        %3748 = vmatprep.subr.mxu0 0.0
        %3749 = vmatpush1.msra.mxu0 0.0
        %3750 = vmatprep.subr.mxu0 0.0
        %3751 = vmatpush1.msra.mxu0 0.0
        %3752 = vmatprep.subr.mxu0 0.0
        %3753 = vmatpush1.msra.mxu0 0.0
        %3754 = vmatprep.subr.mxu0 0.0
        %3755 = vmatpush1.msra.mxu0 0.0
        %3756 = vmatprep.subr.mxu0 0.0
        %3757 = vmatpush1.msra.mxu0 0.0
        %3758 = vmatprep.subr.mxu0 0.0
        %3759 = vmatpush1.msra.mxu0 0.0
        %3760 = vmatprep.subr.mxu0 0.0
        %3761 = vmatpush1.msra.mxu0 0.0
        %3762 = vmatprep.subr.mxu0 0.0
        %3763 = vmatpush1.msra.mxu0 0.0
        %3764 = vmatprep.subr.mxu0 0.0
        %3765 = vmatpush1.msra.mxu0 0.0
        %3766 = vmatprep.subr.mxu0 0.0
        %3767 = vmatpush1.msra.mxu0 0.0
        %3768 = vmatprep.subr.mxu0 0.0
        %3769 = vmatpush1.msra.mxu0 0.0
        %3770 = vmatprep.subr.mxu0 0.0
        %3771 = vmatpush1.msra.mxu0 0.0
        %3772 = vmatprep.subr.mxu0 0.0
        %3773 = vmatpush1.msra.mxu0 0.0
        %3774 = vmatprep.subr.mxu0 0.0
        %3775 = vmatpush1.msra.mxu0 0.0
        %3776 = vmatprep.subr.mxu0 0.0
        %3777 = vmatpush1.msra.mxu0 0.0
        %3778 = vmatprep.subr.mxu0 0.0
        %3779 = vmatpush1.msra.mxu0 0.0
        %3780 = vmatprep.subr.mxu0 0.0
        %3781 = vmatpush1.msra.mxu0 0.0
        %3782 = vmatprep.subr.mxu0 0.0
        %3783 = vmatpush1.msra.mxu0 0.0
        %3784 = vmatprep.subr.mxu0 0.0
        %3785 = vmatpush1.msra.mxu0 0.0
        %3786 = vmatprep.subr.mxu0 0.0
        %3787 = vmatpush1.msra.mxu0 0.0
        %3788 = vmatprep.subr.mxu0 0.0
        %3789 = vmatpush1.msra.mxu0 0.0
        %3790 = vmatprep.subr.mxu0 0.0
        %3791 = vmatpush1.msra.mxu0 0.0
        %3792 = vmatprep.subr.mxu0 0.0
        %3793 = vmatpush1.msra.mxu0 0.0
        %3794 = vmatprep.subr.mxu0 0.0
        %3795 = vmatpush1.msra.mxu0 0.0
        %3796 = vmatprep.subr.mxu0 0.0
        %3797 = vmatpush1.msra.mxu0 0.0
        %3798 = vmatprep.subr.mxu0 0.0
        %3799 = vmatpush1.msra.mxu0 0.0
        %3800 = vmatprep.subr.mxu0 0.0
        %3801 = vmatpush1.msra.mxu0 0.0
        %3802 = vmatprep.mubr.f32.mxu0 0.0
        %v3803 = vand.u32 %v3483, 4294901760
        %v3804 = vsub.f32 %v3483, %v3803
        %v3805 = vand.u32 %v3804, 4294901760
        %3806 = vmatmul.mubr.f32.gmra.mrb[0].mxu0 %v3805
        %v3807 = vpop.f32.mrb[0].mxu0
        %v3808 = vadd.f32 %v3727, %v3807
        %v3809 = vpop.f32.mrb[0].mxu0
        %3810 = vmatprep.mubr.f32.mxu0 0.0
        %v3811 = vand.u32 %v3486, 4294901760
        %v3812 = vsub.f32 %v3486, %v3811
        %v3813 = vand.u32 %v3812, 4294901760
        %3814 = vmatmul.mubr.f32.gmra.mrb[0].mxu0 %v3813
        %v3815 = vpop.f32.mrb[0].mxu0
        %v3816 = vadd.f32 %v3734, %v3815
        %v3817 = vpop.f32.mrb[0].mxu0
        %3818 = vdwg.mxu0
        %3819 = vmatprep.subr.mxu0 0.0
        %v3820 = vand.u32 %v404, 4294901760
        %v3821 = vsub.f32 %v404, %v3820
        %v3822 = vand.u32 %v3821, 4294901760
        %3823 = vmatpush1.msra.mxu0 %v3822
        %3824 = vmatprep.subr.mxu0 0.0
        %3825 = vmatpush1.msra.mxu0 0.0
        %3826 = vmatprep.subr.mxu0 0.0
        %3827 = vmatpush1.msra.mxu0 0.0
        %3828 = vmatprep.subr.mxu0 0.0
        %3829 = vmatpush1.msra.mxu0 0.0
        %3830 = vmatprep.subr.mxu0 0.0
        %3831 = vmatpush1.msra.mxu0 0.0
        %3832 = vmatprep.subr.mxu0 0.0
        %3833 = vmatpush1.msra.mxu0 0.0
        %3834 = vmatprep.subr.mxu0 0.0
        %3835 = vmatpush1.msra.mxu0 0.0
        %3836 = vmatprep.subr.mxu0 0.0
        %3837 = vmatpush1.msra.mxu0 0.0
        %3838 = vmatprep.subr.mxu0 0.0
        %3839 = vmatpush1.msra.mxu0 0.0
        %3840 = vmatprep.subr.mxu0 0.0
        %3841 = vmatpush1.msra.mxu0 0.0
        %3842 = vmatprep.subr.mxu0 0.0
        %3843 = vmatpush1.msra.mxu0 0.0
        %3844 = vmatprep.subr.mxu0 0.0
        %3845 = vmatpush1.msra.mxu0 0.0
        %3846 = vmatprep.subr.mxu0 0.0
        %3847 = vmatpush1.msra.mxu0 0.0
        %3848 = vmatprep.subr.mxu0 0.0
        %3849 = vmatpush1.msra.mxu0 0.0
        %3850 = vmatprep.subr.mxu0 0.0
        %3851 = vmatpush1.msra.mxu0 0.0
        %3852 = vmatprep.subr.mxu0 0.0
        %3853 = vmatpush1.msra.mxu0 0.0
        %3854 = vmatprep.subr.mxu0 0.0
        %3855 = vmatpush1.msra.mxu0 0.0
        %3856 = vmatprep.subr.mxu0 0.0
        %3857 = vmatpush1.msra.mxu0 0.0
        %3858 = vmatprep.subr.mxu0 0.0
        %3859 = vmatpush1.msra.mxu0 0.0
        %3860 = vmatprep.subr.mxu0 0.0
        %3861 = vmatpush1.msra.mxu0 0.0
        %3862 = vmatprep.subr.mxu0 0.0
        %3863 = vmatpush1.msra.mxu0 0.0
        %3864 = vmatprep.subr.mxu0 0.0
        %3865 = vmatpush1.msra.mxu0 0.0
        %3866 = vmatprep.subr.mxu0 0.0
        %3867 = vmatpush1.msra.mxu0 0.0
        %3868 = vmatprep.subr.mxu0 0.0
        %3869 = vmatpush1.msra.mxu0 0.0
        %3870 = vmatprep.subr.mxu0 0.0
        %3871 = vmatpush1.msra.mxu0 0.0
        %3872 = vmatprep.subr.mxu0 0.0
        %3873 = vmatpush1.msra.mxu0 0.0
        %3874 = vmatprep.subr.mxu0 0.0
        %3875 = vmatpush1.msra.mxu0 0.0
        %3876 = vmatprep.subr.mxu0 0.0
        %3877 = vmatpush1.msra.mxu0 0.0
        %3878 = vmatprep.subr.mxu0 0.0
        %3879 = vmatpush1.msra.mxu0 0.0
        %3880 = vmatprep.subr.mxu0 0.0
        %3881 = vmatpush1.msra.mxu0 0.0
        %3882 = vmatprep.subr.mxu0 0.0
        %3883 = vmatpush1.msra.mxu0 0.0
        %3884 = vmatprep.subr.mxu0 0.0
        %3885 = vmatpush1.msra.mxu0 0.0
        %3886 = vmatprep.mubr.f32.mxu0 0.0
        %v3887 = vand.u32 %v3483, 4294901760
        %3888 = vmatmul.mubr.f32.gmra.mrb[0].mxu0 %v3887
        %v3889 = vpop.f32.mrb[0].mxu0
        %v3890 = vadd.f32 %v3808, %v3889
        %v3891 = vpop.f32.mrb[0].mxu0
        %3892 = vmatprep.mubr.f32.mxu0 0.0
        %v3893 = vand.u32 %v3486, 4294901760
        %3894 = vmatmul.mubr.f32.gmra.mrb[0].mxu0 %v3893
        %v3895 = vpop.f32.mrb[0].mxu0
        %v3896 = vadd.f32 %v3816, %v3895
        %v3897 = vpop.f32.mrb[0].mxu0
        %3898 = vdwg.mxu0
        %3899 = vmatprep.subr.mxu0 0.0
        %v3900 = vand.u32 %v404, 4294901760
        %3901 = vmatpush1.msra.mxu0 %v3900
        %3902 = vmatprep.subr.mxu0 0.0
        %3903 = vmatpush1.msra.mxu0 0.0
        %3904 = vmatprep.subr.mxu0 0.0
        %3905 = vmatpush1.msra.mxu0 0.0
        %3906 = vmatprep.subr.mxu0 0.0
        %3907 = vmatpush1.msra.mxu0 0.0
        %3908 = vmatprep.subr.mxu0 0.0
        %3909 = vmatpush1.msra.mxu0 0.0
        %3910 = vmatprep.subr.mxu0 0.0
        %3911 = vmatpush1.msra.mxu0 0.0
        %3912 = vmatprep.subr.mxu0 0.0
        %3913 = vmatpush1.msra.mxu0 0.0
        %3914 = vmatprep.subr.mxu0 0.0
        %3915 = vmatpush1.msra.mxu0 0.0
        %3916 = vmatprep.subr.mxu0 0.0
        %3917 = vmatpush1.msra.mxu0 0.0
        %3918 = vmatprep.subr.mxu0 0.0
        %3919 = vmatpush1.msra.mxu0 0.0
        %3920 = vmatprep.subr.mxu0 0.0
        %3921 = vmatpush1.msra.mxu0 0.0
        %3922 = vmatprep.subr.mxu0 0.0
        %3923 = vmatpush1.msra.mxu0 0.0
        %3924 = vmatprep.subr.mxu0 0.0
        %3925 = vmatpush1.msra.mxu0 0.0
        %3926 = vmatprep.subr.mxu0 0.0
        %3927 = vmatpush1.msra.mxu0 0.0
        %3928 = vmatprep.subr.mxu0 0.0
        %3929 = vmatpush1.msra.mxu0 0.0
        %3930 = vmatprep.subr.mxu0 0.0
        %3931 = vmatpush1.msra.mxu0 0.0
        %3932 = vmatprep.subr.mxu0 0.0
        %3933 = vmatpush1.msra.mxu0 0.0
        %3934 = vmatprep.subr.mxu0 0.0
        %3935 = vmatpush1.msra.mxu0 0.0
        %3936 = vmatprep.subr.mxu0 0.0
        %3937 = vmatpush1.msra.mxu0 0.0
        %3938 = vmatprep.subr.mxu0 0.0
        %3939 = vmatpush1.msra.mxu0 0.0
        %3940 = vmatprep.subr.mxu0 0.0
        %3941 = vmatpush1.msra.mxu0 0.0
        %3942 = vmatprep.subr.mxu0 0.0
        %3943 = vmatpush1.msra.mxu0 0.0
        %3944 = vmatprep.subr.mxu0 0.0
        %3945 = vmatpush1.msra.mxu0 0.0
        %3946 = vmatprep.subr.mxu0 0.0
        %3947 = vmatpush1.msra.mxu0 0.0
        %3948 = vmatprep.subr.mxu0 0.0
        %3949 = vmatpush1.msra.mxu0 0.0
        %3950 = vmatprep.subr.mxu0 0.0
        %3951 = vmatpush1.msra.mxu0 0.0
        %3952 = vmatprep.subr.mxu0 0.0
        %3953 = vmatpush1.msra.mxu0 0.0
        %3954 = vmatprep.subr.mxu0 0.0
        %3955 = vmatpush1.msra.mxu0 0.0
        %3956 = vmatprep.subr.mxu0 0.0
        %3957 = vmatpush1.msra.mxu0 0.0
        %3958 = vmatprep.subr.mxu0 0.0
        %3959 = vmatpush1.msra.mxu0 0.0
        %3960 = vmatprep.subr.mxu0 0.0
        %3961 = vmatpush1.msra.mxu0 0.0
        %3962 = vmatprep.subr.mxu0 0.0
        %3963 = vmatpush1.msra.mxu0 0.0
        %3964 = vmatprep.mubr.f32.mxu0 0.0
        %v3965 = vand.u32 %v3483, 4294901760
        %3966 = vmatmul.mubr.f32.gmra.mrb[0].mxu0 %v3965
        %v3967 = vpop.f32.mrb[0].mxu0
        %v3968 = vadd.f32 %v3890, %v3967
        %v3969 = vpop.f32.mrb[0].mxu0
        %3970 = vmatprep.mubr.f32.mxu0 0.0
        %v3971 = vand.u32 %v3486, 4294901760
        %3972 = vmatmul.mubr.f32.gmra.mrb[0].mxu0 %v3971
        %v3973 = vpop.f32.mrb[0].mxu0
        %v3974 = vadd.f32 %v3896, %v3973
        %v3975 = vpop.f32.mrb[0].mxu0
        %3976 = vdwg.mxu0
        %v3977 = vmul.f32 %v1056, %v3968
        %v3978 = vmul.f32 %v1057, %v3974
        %v3980 = vsel %vm3481, %v3479, 0
        %v3983 = vsel %vm3481, %v3480, 0
        %3985 = vmatprep.subr.mxu0 0.0
        %v3986 = vand.u32 %v404, 4294901760
        %3987 = vmatpush1.msra.mxu0 %v3986
        %3988 = vmatprep.subr.mxu0 0.0
        %3989 = vmatpush1.msra.mxu0 0.0
        %3990 = vmatprep.subr.mxu0 0.0
        %3991 = vmatpush1.msra.mxu0 0.0
        %3992 = vmatprep.subr.mxu0 0.0
        %3993 = vmatpush1.msra.mxu0 0.0
        %3994 = vmatprep.subr.mxu0 0.0
        %3995 = vmatpush1.msra.mxu0 0.0
        %3996 = vmatprep.subr.mxu0 0.0
        %3997 = vmatpush1.msra.mxu0 0.0
        %3998 = vmatprep.subr.mxu0 0.0
        %3999 = vmatpush1.msra.mxu0 0.0
        %4000 = vmatprep.subr.mxu0 0.0
        %4001 = vmatpush1.msra.mxu0 0.0
        %4002 = vmatprep.subr.mxu0 0.0
        %4003 = vmatpush1.msra.mxu0 0.0
        %4004 = vmatprep.subr.mxu0 0.0
        %4005 = vmatpush1.msra.mxu0 0.0
        %4006 = vmatprep.subr.mxu0 0.0
        %4007 = vmatpush1.msra.mxu0 0.0
        %4008 = vmatprep.subr.mxu0 0.0
        %4009 = vmatpush1.msra.mxu0 0.0
        %4010 = vmatprep.subr.mxu0 0.0
        %4011 = vmatpush1.msra.mxu0 0.0
        %4012 = vmatprep.subr.mxu0 0.0
        %4013 = vmatpush1.msra.mxu0 0.0
        %4014 = vmatprep.subr.mxu0 0.0
        %4015 = vmatpush1.msra.mxu0 0.0
        %4016 = vmatprep.subr.mxu0 0.0
        %4017 = vmatpush1.msra.mxu0 0.0
        %4018 = vmatprep.subr.mxu0 0.0
        %4019 = vmatpush1.msra.mxu0 0.0
        %4020 = vmatprep.subr.mxu0 0.0
        %4021 = vmatpush1.msra.mxu0 0.0
        %4022 = vmatprep.subr.mxu0 0.0
        %4023 = vmatpush1.msra.mxu0 0.0
        %4024 = vmatprep.subr.mxu0 0.0
        %4025 = vmatpush1.msra.mxu0 0.0
        %4026 = vmatprep.subr.mxu0 0.0
        %4027 = vmatpush1.msra.mxu0 0.0
        %4028 = vmatprep.subr.mxu0 0.0
        %4029 = vmatpush1.msra.mxu0 0.0
        %4030 = vmatprep.subr.mxu0 0.0
        %4031 = vmatpush1.msra.mxu0 0.0
        %4032 = vmatprep.subr.mxu0 0.0
        %4033 = vmatpush1.msra.mxu0 0.0
        %4034 = vmatprep.subr.mxu0 0.0
        %4035 = vmatpush1.msra.mxu0 0.0
        %4036 = vmatprep.subr.mxu0 0.0
        %4037 = vmatpush1.msra.mxu0 0.0
        %4038 = vmatprep.subr.mxu0 0.0
        %4039 = vmatpush1.msra.mxu0 0.0
        %4040 = vmatprep.subr.mxu0 0.0
        %4041 = vmatpush1.msra.mxu0 0.0
        %4042 = vmatprep.subr.mxu0 0.0
        %4043 = vmatpush1.msra.mxu0 0.0
        %4044 = vmatprep.subr.mxu0 0.0
        %4045 = vmatpush1.msra.mxu0 0.0
        %4046 = vmatprep.subr.mxu0 0.0
        %4047 = vmatpush1.msra.mxu0 0.0
        %4048 = vmatprep.subr.mxu0 0.0
        %4049 = vmatpush1.msra.mxu0 0.0
        %4050 = vmatprep.mubr.f32.mxu0 0.0
        %v4051 = vand.u32 %v3980, 4294901760
        %v4052 = vsub.f32 %v3980, %v4051
        %v4053 = vand.u32 %v4052, 4294901760
        %v4054 = vsub.f32 %v4052, %v4053
        %v4055 = vand.u32 %v4054, 4294901760
        %4056 = vmatmul.mubr.f32.gmra.mrb[0].mxu0 %v4055
        %v4057 = vpop.f32.mrb[0].mxu0
        %v4058 = vadd.f32 0.0, %v4057
        %v4059 = vpop.f32.mrb[0].mxu0
        %4060 = vmatprep.mubr.f32.mxu0 0.0
        %v4061 = vand.u32 %v3983, 4294901760
        %v4062 = vsub.f32 %v3983, %v4061
        %v4063 = vand.u32 %v4062, 4294901760
        %v4064 = vsub.f32 %v4062, %v4063
        %v4065 = vand.u32 %v4064, 4294901760
        %4066 = vmatmul.mubr.f32.gmra.mrb[0].mxu0 %v4065
        %v4067 = vpop.f32.mrb[0].mxu0
        %v4068 = vadd.f32 0.0, %v4067
        %v4069 = vpop.f32.mrb[0].mxu0
        %4070 = vdwg.mxu0
        %4071 = vmatprep.subr.mxu0 0.0
        %v4072 = vand.u32 %v404, 4294901760
        %v4073 = vsub.f32 %v404, %v4072
        %v4074 = vand.u32 %v4073, 4294901760
        %v4075 = vsub.f32 %v4073, %v4074
        %v4076 = vand.u32 %v4075, 4294901760
        %4077 = vmatpush1.msra.mxu0 %v4076
        %4078 = vmatprep.subr.mxu0 0.0
        %4079 = vmatpush1.msra.mxu0 0.0
        %4080 = vmatprep.subr.mxu0 0.0
        %4081 = vmatpush1.msra.mxu0 0.0
        %4082 = vmatprep.subr.mxu0 0.0
        %4083 = vmatpush1.msra.mxu0 0.0
        %4084 = vmatprep.subr.mxu0 0.0
        %4085 = vmatpush1.msra.mxu0 0.0
        %4086 = vmatprep.subr.mxu0 0.0
        %4087 = vmatpush1.msra.mxu0 0.0
        %4088 = vmatprep.subr.mxu0 0.0
        %4089 = vmatpush1.msra.mxu0 0.0
        %4090 = vmatprep.subr.mxu0 0.0
        %4091 = vmatpush1.msra.mxu0 0.0
        %4092 = vmatprep.subr.mxu0 0.0
        %4093 = vmatpush1.msra.mxu0 0.0
        %4094 = vmatprep.subr.mxu0 0.0
        %4095 = vmatpush1.msra.mxu0 0.0
        %4096 = vmatprep.subr.mxu0 0.0
        %4097 = vmatpush1.msra.mxu0 0.0
        %4098 = vmatprep.subr.mxu0 0.0
        %4099 = vmatpush1.msra.mxu0 0.0
        %4100 = vmatprep.subr.mxu0 0.0
        %4101 = vmatpush1.msra.mxu0 0.0
        %4102 = vmatprep.subr.mxu0 0.0
        %4103 = vmatpush1.msra.mxu0 0.0
        %4104 = vmatprep.subr.mxu0 0.0
        %4105 = vmatpush1.msra.mxu0 0.0
        %4106 = vmatprep.subr.mxu0 0.0
        %4107 = vmatpush1.msra.mxu0 0.0
        %4108 = vmatprep.subr.mxu0 0.0
        %4109 = vmatpush1.msra.mxu0 0.0
        %4110 = vmatprep.subr.mxu0 0.0
        %4111 = vmatpush1.msra.mxu0 0.0
        %4112 = vmatprep.subr.mxu0 0.0
        %4113 = vmatpush1.msra.mxu0 0.0
        %4114 = vmatprep.subr.mxu0 0.0
        %4115 = vmatpush1.msra.mxu0 0.0
        %4116 = vmatprep.subr.mxu0 0.0
        %4117 = vmatpush1.msra.mxu0 0.0
        %4118 = vmatprep.subr.mxu0 0.0
        %4119 = vmatpush1.msra.mxu0 0.0
        %4120 = vmatprep.subr.mxu0 0.0
        %4121 = vmatpush1.msra.mxu0 0.0
        %4122 = vmatprep.subr.mxu0 0.0
        %4123 = vmatpush1.msra.mxu0 0.0
        %4124 = vmatprep.subr.mxu0 0.0
        %4125 = vmatpush1.msra.mxu0 0.0
        %4126 = vmatprep.subr.mxu0 0.0
        %4127 = vmatpush1.msra.mxu0 0.0
        %4128 = vmatprep.subr.mxu0 0.0
        %4129 = vmatpush1.msra.mxu0 0.0
        %4130 = vmatprep.subr.mxu0 0.0
        %4131 = vmatpush1.msra.mxu0 0.0
        %4132 = vmatprep.subr.mxu0 0.0
        %4133 = vmatpush1.msra.mxu0 0.0
        %4134 = vmatprep.subr.mxu0 0.0
        %4135 = vmatpush1.msra.mxu0 0.0
        %4136 = vmatprep.subr.mxu0 0.0
        %4137 = vmatpush1.msra.mxu0 0.0
        %4138 = vmatprep.subr.mxu0 0.0
        %4139 = vmatpush1.msra.mxu0 0.0
        %4140 = vmatprep.mubr.f32.mxu0 0.0
        %v4141 = vand.u32 %v3980, 4294901760
        %4142 = vmatmul.mubr.f32.gmra.mrb[0].mxu0 %v4141
        %v4143 = vpop.f32.mrb[0].mxu0
        %v4144 = vadd.f32 %v4058, %v4143
        %v4145 = vpop.f32.mrb[0].mxu0
        %4146 = vmatprep.mubr.f32.mxu0 0.0
        %v4147 = vand.u32 %v3983, 4294901760
        %4148 = vmatmul.mubr.f32.gmra.mrb[0].mxu0 %v4147
        %v4149 = vpop.f32.mrb[0].mxu0
        %v4150 = vadd.f32 %v4068, %v4149
        %v4151 = vpop.f32.mrb[0].mxu0
        %4152 = vdwg.mxu0
        %4153 = vmatprep.subr.mxu0 0.0
        %v4154 = vand.u32 %v404, 4294901760
        %v4155 = vsub.f32 %v404, %v4154
        %4156 = vmatpush1.msra.mxu0 %v4155
        %4157 = vmatprep.subr.mxu0 0.0
        %4158 = vmatpush1.msra.mxu0 0.0
        %4159 = vmatprep.subr.mxu0 0.0
        %4160 = vmatpush1.msra.mxu0 0.0
        %4161 = vmatprep.subr.mxu0 0.0
        %4162 = vmatpush1.msra.mxu0 0.0
        %4163 = vmatprep.subr.mxu0 0.0
        %4164 = vmatpush1.msra.mxu0 0.0
        %4165 = vmatprep.subr.mxu0 0.0
        %4166 = vmatpush1.msra.mxu0 0.0
        %4167 = vmatprep.subr.mxu0 0.0
        %4168 = vmatpush1.msra.mxu0 0.0
        %4169 = vmatprep.subr.mxu0 0.0
        %4170 = vmatpush1.msra.mxu0 0.0
        %4171 = vmatprep.subr.mxu0 0.0
        %4172 = vmatpush1.msra.mxu0 0.0
        %4173 = vmatprep.subr.mxu0 0.0
        %4174 = vmatpush1.msra.mxu0 0.0
        %4175 = vmatprep.subr.mxu0 0.0
        %4176 = vmatpush1.msra.mxu0 0.0
        %4177 = vmatprep.subr.mxu0 0.0
        %4178 = vmatpush1.msra.mxu0 0.0
        %4179 = vmatprep.subr.mxu0 0.0
        %4180 = vmatpush1.msra.mxu0 0.0
        %4181 = vmatprep.subr.mxu0 0.0
        %4182 = vmatpush1.msra.mxu0 0.0
        %4183 = vmatprep.subr.mxu0 0.0
        %4184 = vmatpush1.msra.mxu0 0.0
        %4185 = vmatprep.subr.mxu0 0.0
        %4186 = vmatpush1.msra.mxu0 0.0
        %4187 = vmatprep.subr.mxu0 0.0
        %4188 = vmatpush1.msra.mxu0 0.0
        %4189 = vmatprep.subr.mxu0 0.0
        %4190 = vmatpush1.msra.mxu0 0.0
        %4191 = vmatprep.subr.mxu0 0.0
        %4192 = vmatpush1.msra.mxu0 0.0
        %4193 = vmatprep.subr.mxu0 0.0
        %4194 = vmatpush1.msra.mxu0 0.0
        %4195 = vmatprep.subr.mxu0 0.0
        %4196 = vmatpush1.msra.mxu0 0.0
        %4197 = vmatprep.subr.mxu0 0.0
        %4198 = vmatpush1.msra.mxu0 0.0
        %4199 = vmatprep.subr.mxu0 0.0
        %4200 = vmatpush1.msra.mxu0 0.0
        %4201 = vmatprep.subr.mxu0 0.0
        %4202 = vmatpush1.msra.mxu0 0.0
        %4203 = vmatprep.subr.mxu0 0.0
        %4204 = vmatpush1.msra.mxu0 0.0
        %4205 = vmatprep.subr.mxu0 0.0
        %4206 = vmatpush1.msra.mxu0 0.0
        %4207 = vmatprep.subr.mxu0 0.0
        %4208 = vmatpush1.msra.mxu0 0.0
        %4209 = vmatprep.subr.mxu0 0.0
        %4210 = vmatpush1.msra.mxu0 0.0
        %4211 = vmatprep.subr.mxu0 0.0
        %4212 = vmatpush1.msra.mxu0 0.0
        %4213 = vmatprep.subr.mxu0 0.0
        %4214 = vmatpush1.msra.mxu0 0.0
        %4215 = vmatprep.subr.mxu0 0.0
        %4216 = vmatpush1.msra.mxu0 0.0
        %4217 = vmatprep.subr.mxu0 0.0
        %4218 = vmatpush1.msra.mxu0 0.0
        %4219 = vmatprep.mubr.f32.mxu0 0.0
        %v4220 = vand.u32 %v3980, 4294901760
        %v4221 = vsub.f32 %v3980, %v4220
        %4222 = vmatmul.mubr.f32.gmra.mrb[0].mxu0 %v4221
        %v4223 = vpop.f32.mrb[0].mxu0
        %v4224 = vadd.f32 %v4144, %v4223
        %v4225 = vpop.f32.mrb[0].mxu0
        %4226 = vmatprep.mubr.f32.mxu0 0.0
        %v4227 = vand.u32 %v3983, 4294901760
        %v4228 = vsub.f32 %v3983, %v4227
        %4229 = vmatmul.mubr.f32.gmra.mrb[0].mxu0 %v4228
        %v4230 = vpop.f32.mrb[0].mxu0
        %v4231 = vadd.f32 %v4150, %v4230
        %v4232 = vpop.f32.mrb[0].mxu0
        %4233 = vdwg.mxu0
        %4234 = vmatprep.subr.mxu0 0.0
        %v4235 = vand.u32 %v404, 4294901760
        %4236 = vmatpush1.msra.mxu0 %v4235
        %4237 = vmatprep.subr.mxu0 0.0
        %4238 = vmatpush1.msra.mxu0 0.0
        %4239 = vmatprep.subr.mxu0 0.0
        %4240 = vmatpush1.msra.mxu0 0.0
        %4241 = vmatprep.subr.mxu0 0.0
        %4242 = vmatpush1.msra.mxu0 0.0
        %4243 = vmatprep.subr.mxu0 0.0
        %4244 = vmatpush1.msra.mxu0 0.0
        %4245 = vmatprep.subr.mxu0 0.0
        %4246 = vmatpush1.msra.mxu0 0.0
        %4247 = vmatprep.subr.mxu0 0.0
        %4248 = vmatpush1.msra.mxu0 0.0
        %4249 = vmatprep.subr.mxu0 0.0
        %4250 = vmatpush1.msra.mxu0 0.0
        %4251 = vmatprep.subr.mxu0 0.0
        %4252 = vmatpush1.msra.mxu0 0.0
        %4253 = vmatprep.subr.mxu0 0.0
        %4254 = vmatpush1.msra.mxu0 0.0
        %4255 = vmatprep.subr.mxu0 0.0
        %4256 = vmatpush1.msra.mxu0 0.0
        %4257 = vmatprep.subr.mxu0 0.0
        %4258 = vmatpush1.msra.mxu0 0.0
        %4259 = vmatprep.subr.mxu0 0.0
        %4260 = vmatpush1.msra.mxu0 0.0
        %4261 = vmatprep.subr.mxu0 0.0
        %4262 = vmatpush1.msra.mxu0 0.0
        %4263 = vmatprep.subr.mxu0 0.0
        %4264 = vmatpush1.msra.mxu0 0.0
        %4265 = vmatprep.subr.mxu0 0.0
        %4266 = vmatpush1.msra.mxu0 0.0
        %4267 = vmatprep.subr.mxu0 0.0
        %4268 = vmatpush1.msra.mxu0 0.0
        %4269 = vmatprep.subr.mxu0 0.0
        %4270 = vmatpush1.msra.mxu0 0.0
        %4271 = vmatprep.subr.mxu0 0.0
        %4272 = vmatpush1.msra.mxu0 0.0
        %4273 = vmatprep.subr.mxu0 0.0
        %4274 = vmatpush1.msra.mxu0 0.0
        %4275 = vmatprep.subr.mxu0 0.0
        %4276 = vmatpush1.msra.mxu0 0.0
        %4277 = vmatprep.subr.mxu0 0.0
        %4278 = vmatpush1.msra.mxu0 0.0
        %4279 = vmatprep.subr.mxu0 0.0
        %4280 = vmatpush1.msra.mxu0 0.0
        %4281 = vmatprep.subr.mxu0 0.0
        %4282 = vmatpush1.msra.mxu0 0.0
        %4283 = vmatprep.subr.mxu0 0.0
        %4284 = vmatpush1.msra.mxu0 0.0
        %4285 = vmatprep.subr.mxu0 0.0
        %4286 = vmatpush1.msra.mxu0 0.0
        %4287 = vmatprep.subr.mxu0 0.0
        %4288 = vmatpush1.msra.mxu0 0.0
        %4289 = vmatprep.subr.mxu0 0.0
        %4290 = vmatpush1.msra.mxu0 0.0
        %4291 = vmatprep.subr.mxu0 0.0
        %4292 = vmatpush1.msra.mxu0 0.0
        %4293 = vmatprep.subr.mxu0 0.0
        %4294 = vmatpush1.msra.mxu0 0.0
        %4295 = vmatprep.subr.mxu0 0.0
        %4296 = vmatpush1.msra.mxu0 0.0
        %4297 = vmatprep.subr.mxu0 0.0
        %4298 = vmatpush1.msra.mxu0 0.0
        %4299 = vmatprep.mubr.f32.mxu0 0.0
        %v4300 = vand.u32 %v3980, 4294901760
        %v4301 = vsub.f32 %v3980, %v4300
        %v4302 = vand.u32 %v4301, 4294901760
        %4303 = vmatmul.mubr.f32.gmra.mrb[0].mxu0 %v4302
        %v4304 = vpop.f32.mrb[0].mxu0
        %v4305 = vadd.f32 %v4224, %v4304
        %v4306 = vpop.f32.mrb[0].mxu0
        %4307 = vmatprep.mubr.f32.mxu0 0.0
        %v4308 = vand.u32 %v3983, 4294901760
        %v4309 = vsub.f32 %v3983, %v4308
        %v4310 = vand.u32 %v4309, 4294901760
        %4311 = vmatmul.mubr.f32.gmra.mrb[0].mxu0 %v4310
        %v4312 = vpop.f32.mrb[0].mxu0
        %v4313 = vadd.f32 %v4231, %v4312
        %v4314 = vpop.f32.mrb[0].mxu0
        %4315 = vdwg.mxu0
        %4316 = vmatprep.subr.mxu0 0.0
        %v4317 = vand.u32 %v404, 4294901760
        %v4318 = vsub.f32 %v404, %v4317
        %v4319 = vand.u32 %v4318, 4294901760
        %4320 = vmatpush1.msra.mxu0 %v4319
        %4321 = vmatprep.subr.mxu0 0.0
        %4322 = vmatpush1.msra.mxu0 0.0
        %4323 = vmatprep.subr.mxu0 0.0
        %4324 = vmatpush1.msra.mxu0 0.0
        %4325 = vmatprep.subr.mxu0 0.0
        %4326 = vmatpush1.msra.mxu0 0.0
        %4327 = vmatprep.subr.mxu0 0.0
        %4328 = vmatpush1.msra.mxu0 0.0
        %4329 = vmatprep.subr.mxu0 0.0
        %4330 = vmatpush1.msra.mxu0 0.0
        %4331 = vmatprep.subr.mxu0 0.0
        %4332 = vmatpush1.msra.mxu0 0.0
        %4333 = vmatprep.subr.mxu0 0.0
        %4334 = vmatpush1.msra.mxu0 0.0
        %4335 = vmatprep.subr.mxu0 0.0
        %4336 = vmatpush1.msra.mxu0 0.0
        %4337 = vmatprep.subr.mxu0 0.0
        %4338 = vmatpush1.msra.mxu0 0.0
        %4339 = vmatprep.subr.mxu0 0.0
        %4340 = vmatpush1.msra.mxu0 0.0
        %4341 = vmatprep.subr.mxu0 0.0
        %4342 = vmatpush1.msra.mxu0 0.0
        %4343 = vmatprep.subr.mxu0 0.0
        %4344 = vmatpush1.msra.mxu0 0.0
        %4345 = vmatprep.subr.mxu0 0.0
        %4346 = vmatpush1.msra.mxu0 0.0
        %4347 = vmatprep.subr.mxu0 0.0
        %4348 = vmatpush1.msra.mxu0 0.0
        %4349 = vmatprep.subr.mxu0 0.0
        %4350 = vmatpush1.msra.mxu0 0.0
        %4351 = vmatprep.subr.mxu0 0.0
        %4352 = vmatpush1.msra.mxu0 0.0
        %4353 = vmatprep.subr.mxu0 0.0
        %4354 = vmatpush1.msra.mxu0 0.0
        %4355 = vmatprep.subr.mxu0 0.0
        %4356 = vmatpush1.msra.mxu0 0.0
        %4357 = vmatprep.subr.mxu0 0.0
        %4358 = vmatpush1.msra.mxu0 0.0
        %4359 = vmatprep.subr.mxu0 0.0
        %4360 = vmatpush1.msra.mxu0 0.0
        %4361 = vmatprep.subr.mxu0 0.0
        %4362 = vmatpush1.msra.mxu0 0.0
        %4363 = vmatprep.subr.mxu0 0.0
        %4364 = vmatpush1.msra.mxu0 0.0
        %4365 = vmatprep.subr.mxu0 0.0
        %4366 = vmatpush1.msra.mxu0 0.0
        %4367 = vmatprep.subr.mxu0 0.0
        %4368 = vmatpush1.msra.mxu0 0.0
        %4369 = vmatprep.subr.mxu0 0.0
        %4370 = vmatpush1.msra.mxu0 0.0
        %4371 = vmatprep.subr.mxu0 0.0
        %4372 = vmatpush1.msra.mxu0 0.0
        %4373 = vmatprep.subr.mxu0 0.0
        %4374 = vmatpush1.msra.mxu0 0.0
        %4375 = vmatprep.subr.mxu0 0.0
        %4376 = vmatpush1.msra.mxu0 0.0
        %4377 = vmatprep.subr.mxu0 0.0
        %4378 = vmatpush1.msra.mxu0 0.0
        %4379 = vmatprep.subr.mxu0 0.0
        %4380 = vmatpush1.msra.mxu0 0.0
        %4381 = vmatprep.subr.mxu0 0.0
        %4382 = vmatpush1.msra.mxu0 0.0
        %4383 = vmatprep.mubr.f32.mxu0 0.0
        %v4384 = vand.u32 %v3980, 4294901760
        %4385 = vmatmul.mubr.f32.gmra.mrb[0].mxu0 %v4384
        %v4386 = vpop.f32.mrb[0].mxu0
        %v4387 = vadd.f32 %v4305, %v4386
        %v4388 = vpop.f32.mrb[0].mxu0
        %4389 = vmatprep.mubr.f32.mxu0 0.0
        %v4390 = vand.u32 %v3983, 4294901760
        %4391 = vmatmul.mubr.f32.gmra.mrb[0].mxu0 %v4390
        %v4392 = vpop.f32.mrb[0].mxu0
        %v4393 = vadd.f32 %v4313, %v4392
        %v4394 = vpop.f32.mrb[0].mxu0
        %4395 = vdwg.mxu0
        %4396 = vmatprep.subr.mxu0 0.0
        %v4397 = vand.u32 %v404, 4294901760
        %4398 = vmatpush1.msra.mxu0 %v4397
        %4399 = vmatprep.subr.mxu0 0.0
        %4400 = vmatpush1.msra.mxu0 0.0
        %4401 = vmatprep.subr.mxu0 0.0
        %4402 = vmatpush1.msra.mxu0 0.0
        %4403 = vmatprep.subr.mxu0 0.0
        %4404 = vmatpush1.msra.mxu0 0.0
        %4405 = vmatprep.subr.mxu0 0.0
        %4406 = vmatpush1.msra.mxu0 0.0
        %4407 = vmatprep.subr.mxu0 0.0
        %4408 = vmatpush1.msra.mxu0 0.0
        %4409 = vmatprep.subr.mxu0 0.0
        %4410 = vmatpush1.msra.mxu0 0.0
        %4411 = vmatprep.subr.mxu0 0.0
        %4412 = vmatpush1.msra.mxu0 0.0
        %4413 = vmatprep.subr.mxu0 0.0
        %4414 = vmatpush1.msra.mxu0 0.0
        %4415 = vmatprep.subr.mxu0 0.0
        %4416 = vmatpush1.msra.mxu0 0.0
        %4417 = vmatprep.subr.mxu0 0.0
        %4418 = vmatpush1.msra.mxu0 0.0
        %4419 = vmatprep.subr.mxu0 0.0
        %4420 = vmatpush1.msra.mxu0 0.0
        %4421 = vmatprep.subr.mxu0 0.0
        %4422 = vmatpush1.msra.mxu0 0.0
        %4423 = vmatprep.subr.mxu0 0.0
        %4424 = vmatpush1.msra.mxu0 0.0
        %4425 = vmatprep.subr.mxu0 0.0
        %4426 = vmatpush1.msra.mxu0 0.0
        %4427 = vmatprep.subr.mxu0 0.0
        %4428 = vmatpush1.msra.mxu0 0.0
        %4429 = vmatprep.subr.mxu0 0.0
        %4430 = vmatpush1.msra.mxu0 0.0
        %4431 = vmatprep.subr.mxu0 0.0
        %4432 = vmatpush1.msra.mxu0 0.0
        %4433 = vmatprep.subr.mxu0 0.0
        %4434 = vmatpush1.msra.mxu0 0.0
        %4435 = vmatprep.subr.mxu0 0.0
        %4436 = vmatpush1.msra.mxu0 0.0
        %4437 = vmatprep.subr.mxu0 0.0
        %4438 = vmatpush1.msra.mxu0 0.0
        %4439 = vmatprep.subr.mxu0 0.0
        %4440 = vmatpush1.msra.mxu0 0.0
        %4441 = vmatprep.subr.mxu0 0.0
        %4442 = vmatpush1.msra.mxu0 0.0
        %4443 = vmatprep.subr.mxu0 0.0
        %4444 = vmatpush1.msra.mxu0 0.0
        %4445 = vmatprep.subr.mxu0 0.0
        %4446 = vmatpush1.msra.mxu0 0.0
        %4447 = vmatprep.subr.mxu0 0.0
        %4448 = vmatpush1.msra.mxu0 0.0
        %4449 = vmatprep.subr.mxu0 0.0
        %4450 = vmatpush1.msra.mxu0 0.0
        %4451 = vmatprep.subr.mxu0 0.0
        %4452 = vmatpush1.msra.mxu0 0.0
        %4453 = vmatprep.subr.mxu0 0.0
        %4454 = vmatpush1.msra.mxu0 0.0
        %4455 = vmatprep.subr.mxu0 0.0
        %4456 = vmatpush1.msra.mxu0 0.0
        %4457 = vmatprep.subr.mxu0 0.0
        %4458 = vmatpush1.msra.mxu0 0.0
        %4459 = vmatprep.subr.mxu0 0.0
        %4460 = vmatpush1.msra.mxu0 0.0
        %4461 = vmatprep.mubr.f32.mxu0 0.0
        %v4462 = vand.u32 %v3980, 4294901760
        %4463 = vmatmul.mubr.f32.gmra.mrb[0].mxu0 %v4462
        %v4464 = vpop.f32.mrb[0].mxu0
        %v4465 = vadd.f32 %v4387, %v4464
        %v4466 = vpop.f32.mrb[0].mxu0
        %4467 = vmatprep.mubr.f32.mxu0 0.0
        %v4468 = vand.u32 %v3983, 4294901760
        %4469 = vmatmul.mubr.f32.gmra.mrb[0].mxu0 %v4468
        %v4470 = vpop.f32.mrb[0].mxu0
        %v4471 = vadd.f32 %v4393, %v4470
        %v4472 = vpop.f32.mrb[0].mxu0
        %4473 = vdwg.mxu0
        %v4474 = vadd.f32 %v3977, %v4465
        %v4475 = vadd.f32 %v3978, %v4471
        %v4476 = vmin.f32 %v4474, 20.0
        %v4477 = vmin.f32 %v4475, 20.0
        %v4478 = vmul.f32 %v4476, 1.442695
        %v4479 = vpow.pop %v4478
        %v4480 = vmul.f32 %v4477, 1.442695
        %v4481 = vpow.pop %v4480
        %v4482 = vadd.f32 %v4479, 2.0
        %v4483 = vadd.f32 %v4481, 2.0
        %v4484 = vmul.f32 %v4479, %v4482
        %v4485 = vmul.f32 %v4481, %v4483
        %v4486 = vmul.f32 %v4474, %v4484
        %v4487 = vmul.f32 %v4475, %v4485
        %v4488 = vadd.f32 %v4484, 2.0
        %v4489 = vadd.f32 %v4485, 2.0
        %v4490 = vrcp.pop %v4488
        %v4491 = vmul.f32 %v4486, %v4490
        %v4492 = vrcp.pop %v4489
        %v4493 = vmul.f32 %v4487, %v4492
        %v4494 = vld [vmem:[%s366] sm:$0xff]
        %v4495 = vld [vmem:[%s366 + $0x8] sm:$0xff]
        %v4496 = vadd.f32 %v4491, %v4494
        %v4497 = vadd.f32 %v4493, %v4495
        %v4498 = vlaneseq
        %v4499 = vand.u32 %v4498, 127
        %vm4500 = vcmp.lt.s32.totalorder %v4499, 0
        %v4501 = vsub.s32 0, %v4499
        %v4502 = vsel %vm4500, %v4501, %v4499
        %v4503 = vshrl.u32 %v4502, 4
        %v4504 = vand.u32 %v4502, 15
        %v4505 = vsub.s32 0, %v4504
        %v4506 = vsel %vm4500, %v4505, %v4504
        %vm4507 = vcmp.ne.s32.totalorder %v4506, 0
        %vm4508 = vcmp.lt.s32.totalorder %v4506, 0
        %vm4509 = vmand %vm4508, %vm4507
        %v4510 = vadd.s32 %v4506, 16
        %v4511 = vsel %vm4509, %v4510, %v4506
        %4512 = vrot.lane.b32.xlu0 %v4496, 2
        %v4513 = vpop.permute.xlu0 %4512
        %4514 = vrot.lane.b32.xlu0 %v4497, 2
        %v4515 = vpop.permute.xlu0 %4514
        %v4516 = vadd.s32 %v4511, 4294967294
        %vm4517 = vcmp.ge.s32.totalorder %v4516, 0
        %vm4518 = vcmp.lt.s32.totalorder %v4516, 16
        %vm4519 = vmand %vm4517, %vm4518
        %v4520 = vsel %vm4519, 1, 0
        %vm4521 = vcmp.eq.s32.totalorder %v4520, 1
        %v4522 = vsel %vm4521, %v4513, 0.0
        %v4523 = vsel %vm4521, %v4515, 0.0
        %4524 = vrot.lane.b32.xlu0 %v4496, 1
        %v4525 = vpop.permute.xlu0 %4524
        %4526 = vrot.lane.b32.xlu0 %v4497, 1
        %v4527 = vpop.permute.xlu0 %4526
        %v4528 = vadd.s32 %v4511, 4294967295
        %vm4529 = vcmp.ge.s32.totalorder %v4528, 0
        %vm4530 = vcmp.lt.s32.totalorder %v4528, 16
        %vm4531 = vmand %vm4529, %vm4530
        %v4532 = vsel %vm4531, 1, 0
        %vm4533 = vcmp.eq.s32.totalorder %v4532, 1
        %v4534 = vsel %vm4533, %v4525, 0.0
        %v4535 = vsel %vm4533, %v4527, 0.0
        %vm4536 = vcmp.ge.s32.totalorder %v4511, 0
        %vm4537 = vcmp.lt.s32.totalorder %v4511, 16
        %vm4538 = vmand %vm4536, %vm4537
        %v4539 = vsel %vm4538, 1, 0
        %vm4540 = vcmp.eq.s32.totalorder %v4539, 1
        %v4541 = vsel %vm4540, %v4496, 0.0
        %v4542 = vsel %vm4540, %v4497, 0.0
        %4543 = vrot.lane.b32.xlu0 %v4496, 127
        %v4544 = vpop.permute.xlu0 %4543
        %4545 = vrot.lane.b32.xlu0 %v4497, 127
        %v4546 = vpop.permute.xlu0 %4545
        %v4547 = vadd.s32 %v4511, 1
        %vm4548 = vcmp.ge.s32.totalorder %v4547, 0
        %vm4549 = vcmp.lt.s32.totalorder %v4547, 16
        %vm4550 = vmand %vm4548, %vm4549
        %v4551 = vsel %vm4550, 1, 0
        %vm4552 = vcmp.eq.s32.totalorder %v4551, 1
        %v4553 = vsel %vm4552, %v4544, 0.0
        %v4554 = vsel %vm4552, %v4546, 0.0
        %4555 = vrot.lane.b32.xlu0 %v4496, 126
        %v4556 = vpop.permute.xlu0 %4555
        %4557 = vrot.lane.b32.xlu0 %v4497, 126
        %v4558 = vpop.permute.xlu0 %4557
        %v4559 = vadd.s32 %v4511, 2
        %vm4560 = vcmp.ge.s32.totalorder %v4559, 0
        %vm4561 = vcmp.lt.s32.totalorder %v4559, 16
        %vm4562 = vmand %vm4560, %vm4561
        %v4563 = vsel %vm4562, 1, 0
        %vm4564 = vcmp.eq.s32.totalorder %v4563, 1
        %v4565 = vsel %vm4564, %v4556, 0.0
        %v4566 = vsel %vm4564, %v4558, 0.0
        %v4567 = vld [vmem:[%s3] sm:$0xff]
        %v4568 = vld [vmem:[%s3 + $0x8] sm:$0xff]
        %4569 = vset.pattern.permute.xlu0 4
        %4570 = vperm.xlu0 %4569, %v400
        %v4571 = vpop.permute.xlu0 %4570
        %4573 = vset.pattern.permute.xlu0 4
        %4574 = vperm.xlu0 %4573, %v401
        %v4575 = vpop.permute.xlu0 %4574
        %vm4577 = vcmask 654336
        %v4579 = vsel %vm4577, %v4567, 0
        %v4582 = vsel %vm4577, %v4568, 0
        %4584 = vmatprep.subr.mxu0 0.0
        %v4585 = vand.u32 %v4522, 4294901760
        %4586 = vmatpush1.msra.mxu0 %v4585
        %4587 = vmatprep.subr.mxu0 0.0
        %v4588 = vand.u32 %v4523, 4294901760
        %4589 = vmatpush1.msra.mxu0 %v4588
        %4590 = vmatprep.subr.mxu0 0.0
        %v4591 = vand.u32 %v4534, 4294901760
        %4592 = vmatpush1.msra.mxu0 %v4591
        %4593 = vmatprep.subr.mxu0 0.0
        %v4594 = vand.u32 %v4535, 4294901760
        %4595 = vmatpush1.msra.mxu0 %v4594
        %4596 = vmatprep.subr.mxu0 0.0
        %v4597 = vand.u32 %v4541, 4294901760
        %4598 = vmatpush1.msra.mxu0 %v4597
        %4599 = vmatprep.subr.mxu0 0.0
        %v4600 = vand.u32 %v4542, 4294901760
        %4601 = vmatpush1.msra.mxu0 %v4600
        %4602 = vmatprep.subr.mxu0 0.0
        %v4603 = vand.u32 %v4553, 4294901760
        %4604 = vmatpush1.msra.mxu0 %v4603
        %4605 = vmatprep.subr.mxu0 0.0
        %v4606 = vand.u32 %v4554, 4294901760
        %4607 = vmatpush1.msra.mxu0 %v4606
        %4608 = vmatprep.subr.mxu0 0.0
        %v4609 = vand.u32 %v4565, 4294901760
        %4610 = vmatpush1.msra.mxu0 %v4609
        %4611 = vmatprep.subr.mxu0 0.0
        %v4612 = vand.u32 %v4566, 4294901760
        %4613 = vmatpush1.msra.mxu0 %v4612
        %4614 = vmatprep.subr.mxu0 0.0
        %4615 = vmatpush1.msra.mxu0 0.0
        %4616 = vmatprep.subr.mxu0 0.0
        %4617 = vmatpush1.msra.mxu0 0.0
        %4618 = vmatprep.subr.mxu0 0.0
        %4619 = vmatpush1.msra.mxu0 0.0
        %4620 = vmatprep.subr.mxu0 0.0
        %4621 = vmatpush1.msra.mxu0 0.0
        %4622 = vmatprep.subr.mxu0 0.0
        %4623 = vmatpush1.msra.mxu0 0.0
        %4624 = vmatprep.subr.mxu0 0.0
        %4625 = vmatpush1.msra.mxu0 0.0
        %4626 = vmatprep.subr.mxu0 0.0
        %4627 = vmatpush1.msra.mxu0 0.0
        %4628 = vmatprep.subr.mxu0 0.0
        %4629 = vmatpush1.msra.mxu0 0.0
        %4630 = vmatprep.subr.mxu0 0.0
        %4631 = vmatpush1.msra.mxu0 0.0
        %4632 = vmatprep.subr.mxu0 0.0
        %4633 = vmatpush1.msra.mxu0 0.0
        %4634 = vmatprep.subr.mxu0 0.0
        %4635 = vmatpush1.msra.mxu0 0.0
        %4636 = vmatprep.subr.mxu0 0.0
        %4637 = vmatpush1.msra.mxu0 0.0
        %4638 = vmatprep.subr.mxu0 0.0
        %4639 = vmatpush1.msra.mxu0 0.0
        %4640 = vmatprep.subr.mxu0 0.0
        %4641 = vmatpush1.msra.mxu0 0.0
        %4642 = vmatprep.subr.mxu0 0.0
        %4643 = vmatpush1.msra.mxu0 0.0
        %4644 = vmatprep.subr.mxu0 0.0
        %4645 = vmatpush1.msra.mxu0 0.0
        %4646 = vmatprep.subr.mxu0 0.0
        %4647 = vmatpush1.msra.mxu0 0.0
        %4648 = vmatprep.subr.mxu0 0.0
        %4649 = vmatpush1.msra.mxu0 0.0
        %4650 = vmatprep.subr.mxu0 0.0
        %4651 = vmatpush1.msra.mxu0 0.0
        %4652 = vmatprep.subr.mxu0 0.0
        %4653 = vmatpush1.msra.mxu0 0.0
        %4654 = vmatprep.subr.mxu0 0.0
        %4655 = vmatpush1.msra.mxu0 0.0
        %4656 = vmatprep.subr.mxu0 0.0
        %4657 = vmatpush1.msra.mxu0 0.0
        %4658 = vmatprep.mubr.f32.mxu0 0.0
        %v4659 = vand.u32 %v4579, 4294901760
        %v4660 = vsub.f32 %v4579, %v4659
        %v4661 = vand.u32 %v4660, 4294901760
        %v4662 = vsub.f32 %v4660, %v4661
        %v4663 = vand.u32 %v4662, 4294901760
        %4664 = vmatmul.mubr.f32.gmra.mrb[0].mxu0 %v4663
        %v4665 = vpop.f32.mrb[0].mxu0
        %v4666 = vadd.f32 %v4571, %v4665
        %v4667 = vpop.f32.mrb[0].mxu0
        %4668 = vmatprep.mubr.f32.mxu0 0.0
        %v4669 = vand.u32 %v4582, 4294901760
        %v4670 = vsub.f32 %v4582, %v4669
        %v4671 = vand.u32 %v4670, 4294901760
        %v4672 = vsub.f32 %v4670, %v4671
        %v4673 = vand.u32 %v4672, 4294901760
        %4674 = vmatmul.mubr.f32.gmra.mrb[0].mxu0 %v4673
        %v4675 = vpop.f32.mrb[0].mxu0
        %v4676 = vadd.f32 %v4575, %v4675
        %v4677 = vpop.f32.mrb[0].mxu0
        %4678 = vdwg.mxu0
        %4679 = vmatprep.subr.mxu0 0.0
        %v4680 = vand.u32 %v4522, 4294901760
        %v4681 = vsub.f32 %v4522, %v4680
        %v4682 = vand.u32 %v4681, 4294901760
        %v4683 = vsub.f32 %v4681, %v4682
        %v4684 = vand.u32 %v4683, 4294901760
        %4685 = vmatpush1.msra.mxu0 %v4684
        %4686 = vmatprep.subr.mxu0 0.0
        %v4687 = vand.u32 %v4523, 4294901760
        %v4688 = vsub.f32 %v4523, %v4687
        %v4689 = vand.u32 %v4688, 4294901760
        %v4690 = vsub.f32 %v4688, %v4689
        %v4691 = vand.u32 %v4690, 4294901760
        %4692 = vmatpush1.msra.mxu0 %v4691
        %4693 = vmatprep.subr.mxu0 0.0
        %v4694 = vand.u32 %v4534, 4294901760
        %v4695 = vsub.f32 %v4534, %v4694
        %v4696 = vand.u32 %v4695, 4294901760
        %v4697 = vsub.f32 %v4695, %v4696
        %v4698 = vand.u32 %v4697, 4294901760
        %4699 = vmatpush1.msra.mxu0 %v4698
        %4700 = vmatprep.subr.mxu0 0.0
        %v4701 = vand.u32 %v4535, 4294901760
        %v4702 = vsub.f32 %v4535, %v4701
        %v4703 = vand.u32 %v4702, 4294901760
        %v4704 = vsub.f32 %v4702, %v4703
        %v4705 = vand.u32 %v4704, 4294901760
        %4706 = vmatpush1.msra.mxu0 %v4705
        %4707 = vmatprep.subr.mxu0 0.0
        %v4708 = vand.u32 %v4541, 4294901760
        %v4709 = vsub.f32 %v4541, %v4708
        %v4710 = vand.u32 %v4709, 4294901760
        %v4711 = vsub.f32 %v4709, %v4710
        %v4712 = vand.u32 %v4711, 4294901760
        %4713 = vmatpush1.msra.mxu0 %v4712
        %4714 = vmatprep.subr.mxu0 0.0
        %v4715 = vand.u32 %v4542, 4294901760
        %v4716 = vsub.f32 %v4542, %v4715
        %v4717 = vand.u32 %v4716, 4294901760
        %v4718 = vsub.f32 %v4716, %v4717
        %v4719 = vand.u32 %v4718, 4294901760
        %4720 = vmatpush1.msra.mxu0 %v4719
        %4721 = vmatprep.subr.mxu0 0.0
        %v4722 = vand.u32 %v4553, 4294901760
        %v4723 = vsub.f32 %v4553, %v4722
        %v4724 = vand.u32 %v4723, 4294901760
        %v4725 = vsub.f32 %v4723, %v4724
        %v4726 = vand.u32 %v4725, 4294901760
        %4727 = vmatpush1.msra.mxu0 %v4726
        %4728 = vmatprep.subr.mxu0 0.0
        %v4729 = vand.u32 %v4554, 4294901760
        %v4730 = vsub.f32 %v4554, %v4729
        %v4731 = vand.u32 %v4730, 4294901760
        %v4732 = vsub.f32 %v4730, %v4731
        %v4733 = vand.u32 %v4732, 4294901760
        %4734 = vmatpush1.msra.mxu0 %v4733
        %4735 = vmatprep.subr.mxu0 0.0
        %v4736 = vand.u32 %v4565, 4294901760
        %v4737 = vsub.f32 %v4565, %v4736
        %v4738 = vand.u32 %v4737, 4294901760
        %v4739 = vsub.f32 %v4737, %v4738
        %v4740 = vand.u32 %v4739, 4294901760
        %4741 = vmatpush1.msra.mxu0 %v4740
        %4742 = vmatprep.subr.mxu0 0.0
        %v4743 = vand.u32 %v4566, 4294901760
        %v4744 = vsub.f32 %v4566, %v4743
        %v4745 = vand.u32 %v4744, 4294901760
        %v4746 = vsub.f32 %v4744, %v4745
        %v4747 = vand.u32 %v4746, 4294901760
        %4748 = vmatpush1.msra.mxu0 %v4747
        %4749 = vmatprep.subr.mxu0 0.0
        %4750 = vmatpush1.msra.mxu0 0.0
        %4751 = vmatprep.subr.mxu0 0.0
        %4752 = vmatpush1.msra.mxu0 0.0
        %4753 = vmatprep.subr.mxu0 0.0
        %4754 = vmatpush1.msra.mxu0 0.0
        %4755 = vmatprep.subr.mxu0 0.0
        %4756 = vmatpush1.msra.mxu0 0.0
        %4757 = vmatprep.subr.mxu0 0.0
        %4758 = vmatpush1.msra.mxu0 0.0
        %4759 = vmatprep.subr.mxu0 0.0
        %4760 = vmatpush1.msra.mxu0 0.0
        %4761 = vmatprep.subr.mxu0 0.0
        %4762 = vmatpush1.msra.mxu0 0.0
        %4763 = vmatprep.subr.mxu0 0.0
        %4764 = vmatpush1.msra.mxu0 0.0
        %4765 = vmatprep.subr.mxu0 0.0
        %4766 = vmatpush1.msra.mxu0 0.0
        %4767 = vmatprep.subr.mxu0 0.0
        %4768 = vmatpush1.msra.mxu0 0.0
        %4769 = vmatprep.subr.mxu0 0.0
        %4770 = vmatpush1.msra.mxu0 0.0
        %4771 = vmatprep.subr.mxu0 0.0
        %4772 = vmatpush1.msra.mxu0 0.0
        %4773 = vmatprep.subr.mxu0 0.0
        %4774 = vmatpush1.msra.mxu0 0.0
        %4775 = vmatprep.subr.mxu0 0.0
        %4776 = vmatpush1.msra.mxu0 0.0
        %4777 = vmatprep.subr.mxu0 0.0
        %4778 = vmatpush1.msra.mxu0 0.0
        %4779 = vmatprep.subr.mxu0 0.0
        %4780 = vmatpush1.msra.mxu0 0.0
        %4781 = vmatprep.subr.mxu0 0.0
        %4782 = vmatpush1.msra.mxu0 0.0
        %4783 = vmatprep.subr.mxu0 0.0
        %4784 = vmatpush1.msra.mxu0 0.0
        %4785 = vmatprep.subr.mxu0 0.0
        %4786 = vmatpush1.msra.mxu0 0.0
        %4787 = vmatprep.subr.mxu0 0.0
        %4788 = vmatpush1.msra.mxu0 0.0
        %4789 = vmatprep.subr.mxu0 0.0
        %4790 = vmatpush1.msra.mxu0 0.0
        %4791 = vmatprep.subr.mxu0 0.0
        %4792 = vmatpush1.msra.mxu0 0.0
        %4793 = vmatprep.mubr.f32.mxu0 0.0
        %v4794 = vand.u32 %v4579, 4294901760
        %4795 = vmatmul.mubr.f32.gmra.mrb[0].mxu0 %v4794
        %v4796 = vpop.f32.mrb[0].mxu0
        %v4797 = vadd.f32 %v4666, %v4796
        %v4798 = vpop.f32.mrb[0].mxu0
        %4799 = vmatprep.mubr.f32.mxu0 0.0
        %v4800 = vand.u32 %v4582, 4294901760
        %4801 = vmatmul.mubr.f32.gmra.mrb[0].mxu0 %v4800
        %v4802 = vpop.f32.mrb[0].mxu0
        %v4803 = vadd.f32 %v4676, %v4802
        %v4804 = vpop.f32.mrb[0].mxu0
        %4805 = vdwg.mxu0
        %4806 = vmatprep.subr.mxu0 0.0
        %v4807 = vand.u32 %v4522, 4294901760
        %v4808 = vsub.f32 %v4522, %v4807
        %4809 = vmatpush1.msra.mxu0 %v4808
        %4810 = vmatprep.subr.mxu0 0.0
        %v4811 = vand.u32 %v4523, 4294901760
        %v4812 = vsub.f32 %v4523, %v4811
        %4813 = vmatpush1.msra.mxu0 %v4812
        %4814 = vmatprep.subr.mxu0 0.0
        %v4815 = vand.u32 %v4534, 4294901760
        %v4816 = vsub.f32 %v4534, %v4815
        %4817 = vmatpush1.msra.mxu0 %v4816
        %4818 = vmatprep.subr.mxu0 0.0
        %v4819 = vand.u32 %v4535, 4294901760
        %v4820 = vsub.f32 %v4535, %v4819
        %4821 = vmatpush1.msra.mxu0 %v4820
        %4822 = vmatprep.subr.mxu0 0.0
        %v4823 = vand.u32 %v4541, 4294901760
        %v4824 = vsub.f32 %v4541, %v4823
        %4825 = vmatpush1.msra.mxu0 %v4824
        %4826 = vmatprep.subr.mxu0 0.0
        %v4827 = vand.u32 %v4542, 4294901760
        %v4828 = vsub.f32 %v4542, %v4827
        %4829 = vmatpush1.msra.mxu0 %v4828
        %4830 = vmatprep.subr.mxu0 0.0
        %v4831 = vand.u32 %v4553, 4294901760
        %v4832 = vsub.f32 %v4553, %v4831
        %4833 = vmatpush1.msra.mxu0 %v4832
        %4834 = vmatprep.subr.mxu0 0.0
        %v4835 = vand.u32 %v4554, 4294901760
        %v4836 = vsub.f32 %v4554, %v4835
        %4837 = vmatpush1.msra.mxu0 %v4836
        %4838 = vmatprep.subr.mxu0 0.0
        %v4839 = vand.u32 %v4565, 4294901760
        %v4840 = vsub.f32 %v4565, %v4839
        %4841 = vmatpush1.msra.mxu0 %v4840
        %4842 = vmatprep.subr.mxu0 0.0
        %v4843 = vand.u32 %v4566, 4294901760
        %v4844 = vsub.f32 %v4566, %v4843
        %4845 = vmatpush1.msra.mxu0 %v4844
        %4846 = vmatprep.subr.mxu0 0.0
        %4847 = vmatpush1.msra.mxu0 0.0
        %4848 = vmatprep.subr.mxu0 0.0
        %4849 = vmatpush1.msra.mxu0 0.0
        %4850 = vmatprep.subr.mxu0 0.0
        %4851 = vmatpush1.msra.mxu0 0.0
        %4852 = vmatprep.subr.mxu0 0.0
        %4853 = vmatpush1.msra.mxu0 0.0
        %4854 = vmatprep.subr.mxu0 0.0
        %4855 = vmatpush1.msra.mxu0 0.0
        %4856 = vmatprep.subr.mxu0 0.0
        %4857 = vmatpush1.msra.mxu0 0.0
        %4858 = vmatprep.subr.mxu0 0.0
        %4859 = vmatpush1.msra.mxu0 0.0
        %4860 = vmatprep.subr.mxu0 0.0
        %4861 = vmatpush1.msra.mxu0 0.0
        %4862 = vmatprep.subr.mxu0 0.0
        %4863 = vmatpush1.msra.mxu0 0.0
        %4864 = vmatprep.subr.mxu0 0.0
        %4865 = vmatpush1.msra.mxu0 0.0
        %4866 = vmatprep.subr.mxu0 0.0
        %4867 = vmatpush1.msra.mxu0 0.0
        %4868 = vmatprep.subr.mxu0 0.0
        %4869 = vmatpush1.msra.mxu0 0.0
        %4870 = vmatprep.subr.mxu0 0.0
        %4871 = vmatpush1.msra.mxu0 0.0
        %4872 = vmatprep.subr.mxu0 0.0
        %4873 = vmatpush1.msra.mxu0 0.0
        %4874 = vmatprep.subr.mxu0 0.0
        %4875 = vmatpush1.msra.mxu0 0.0
        %4876 = vmatprep.subr.mxu0 0.0
        %4877 = vmatpush1.msra.mxu0 0.0
        %4878 = vmatprep.subr.mxu0 0.0
        %4879 = vmatpush1.msra.mxu0 0.0
        %4880 = vmatprep.subr.mxu0 0.0
        %4881 = vmatpush1.msra.mxu0 0.0
        %4882 = vmatprep.subr.mxu0 0.0
        %4883 = vmatpush1.msra.mxu0 0.0
        %4884 = vmatprep.subr.mxu0 0.0
        %4885 = vmatpush1.msra.mxu0 0.0
        %4886 = vmatprep.subr.mxu0 0.0
        %4887 = vmatpush1.msra.mxu0 0.0
        %4888 = vmatprep.subr.mxu0 0.0
        %4889 = vmatpush1.msra.mxu0 0.0
        %4890 = vmatprep.mubr.f32.mxu0 0.0
        %v4891 = vand.u32 %v4579, 4294901760
        %v4892 = vsub.f32 %v4579, %v4891
        %4893 = vmatmul.mubr.f32.gmra.mrb[0].mxu0 %v4892
        %v4894 = vpop.f32.mrb[0].mxu0
        %v4895 = vadd.f32 %v4797, %v4894
        %v4896 = vpop.f32.mrb[0].mxu0
        %4897 = vmatprep.mubr.f32.mxu0 0.0
        %v4898 = vand.u32 %v4582, 4294901760
        %v4899 = vsub.f32 %v4582, %v4898
        %4900 = vmatmul.mubr.f32.gmra.mrb[0].mxu0 %v4899
        %v4901 = vpop.f32.mrb[0].mxu0
        %v4902 = vadd.f32 %v4803, %v4901
        %v4903 = vpop.f32.mrb[0].mxu0
        %4904 = vdwg.mxu0
        %4905 = vmatprep.subr.mxu0 0.0
        %v4906 = vand.u32 %v4522, 4294901760
        %4907 = vmatpush1.msra.mxu0 %v4906
        %4908 = vmatprep.subr.mxu0 0.0
        %v4909 = vand.u32 %v4523, 4294901760
        %4910 = vmatpush1.msra.mxu0 %v4909
        %4911 = vmatprep.subr.mxu0 0.0
        %v4912 = vand.u32 %v4534, 4294901760
        %4913 = vmatpush1.msra.mxu0 %v4912
        %4914 = vmatprep.subr.mxu0 0.0
        %v4915 = vand.u32 %v4535, 4294901760
        %4916 = vmatpush1.msra.mxu0 %v4915
        %4917 = vmatprep.subr.mxu0 0.0
        %v4918 = vand.u32 %v4541, 4294901760
        %4919 = vmatpush1.msra.mxu0 %v4918
        %4920 = vmatprep.subr.mxu0 0.0
        %v4921 = vand.u32 %v4542, 4294901760
        %4922 = vmatpush1.msra.mxu0 %v4921
        %4923 = vmatprep.subr.mxu0 0.0
        %v4924 = vand.u32 %v4553, 4294901760
        %4925 = vmatpush1.msra.mxu0 %v4924
        %4926 = vmatprep.subr.mxu0 0.0
        %v4927 = vand.u32 %v4554, 4294901760
        %4928 = vmatpush1.msra.mxu0 %v4927
        %4929 = vmatprep.subr.mxu0 0.0
        %v4930 = vand.u32 %v4565, 4294901760
        %4931 = vmatpush1.msra.mxu0 %v4930
        %4932 = vmatprep.subr.mxu0 0.0
        %v4933 = vand.u32 %v4566, 4294901760
        %4934 = vmatpush1.msra.mxu0 %v4933
        %4935 = vmatprep.subr.mxu0 0.0
        %4936 = vmatpush1.msra.mxu0 0.0
        %4937 = vmatprep.subr.mxu0 0.0
        %4938 = vmatpush1.msra.mxu0 0.0
        %4939 = vmatprep.subr.mxu0 0.0
        %4940 = vmatpush1.msra.mxu0 0.0
        %4941 = vmatprep.subr.mxu0 0.0
        %4942 = vmatpush1.msra.mxu0 0.0
        %4943 = vmatprep.subr.mxu0 0.0
        %4944 = vmatpush1.msra.mxu0 0.0
        %4945 = vmatprep.subr.mxu0 0.0
        %4946 = vmatpush1.msra.mxu0 0.0
        %4947 = vmatprep.subr.mxu0 0.0
        %4948 = vmatpush1.msra.mxu0 0.0
        %4949 = vmatprep.subr.mxu0 0.0
        %4950 = vmatpush1.msra.mxu0 0.0
        %4951 = vmatprep.subr.mxu0 0.0
        %4952 = vmatpush1.msra.mxu0 0.0
        %4953 = vmatprep.subr.mxu0 0.0
        %4954 = vmatpush1.msra.mxu0 0.0
        %4955 = vmatprep.subr.mxu0 0.0
        %4956 = vmatpush1.msra.mxu0 0.0
        %4957 = vmatprep.subr.mxu0 0.0
        %4958 = vmatpush1.msra.mxu0 0.0
        %4959 = vmatprep.subr.mxu0 0.0
        %4960 = vmatpush1.msra.mxu0 0.0
        %4961 = vmatprep.subr.mxu0 0.0
        %4962 = vmatpush1.msra.mxu0 0.0
        %4963 = vmatprep.subr.mxu0 0.0
        %4964 = vmatpush1.msra.mxu0 0.0
        %4965 = vmatprep.subr.mxu0 0.0
        %4966 = vmatpush1.msra.mxu0 0.0
        %4967 = vmatprep.subr.mxu0 0.0
        %4968 = vmatpush1.msra.mxu0 0.0
        %4969 = vmatprep.subr.mxu0 0.0
        %4970 = vmatpush1.msra.mxu0 0.0
        %4971 = vmatprep.subr.mxu0 0.0
        %4972 = vmatpush1.msra.mxu0 0.0
        %4973 = vmatprep.subr.mxu0 0.0
        %4974 = vmatpush1.msra.mxu0 0.0
        %4975 = vmatprep.subr.mxu0 0.0
        %4976 = vmatpush1.msra.mxu0 0.0
        %4977 = vmatprep.subr.mxu0 0.0
        %4978 = vmatpush1.msra.mxu0 0.0
        %4979 = vmatprep.mubr.f32.mxu0 0.0
        %v4980 = vand.u32 %v4579, 4294901760
        %v4981 = vsub.f32 %v4579, %v4980
        %v4982 = vand.u32 %v4981, 4294901760
        %4983 = vmatmul.mubr.f32.gmra.mrb[0].mxu0 %v4982
        %v4984 = vpop.f32.mrb[0].mxu0
        %v4985 = vadd.f32 %v4895, %v4984
        %v4986 = vpop.f32.mrb[0].mxu0
        %4987 = vmatprep.mubr.f32.mxu0 0.0
        %v4988 = vand.u32 %v4582, 4294901760
        %v4989 = vsub.f32 %v4582, %v4988
        %v4990 = vand.u32 %v4989, 4294901760
        %4991 = vmatmul.mubr.f32.gmra.mrb[0].mxu0 %v4990
        %v4992 = vpop.f32.mrb[0].mxu0
        %v4993 = vadd.f32 %v4902, %v4992
        %v4994 = vpop.f32.mrb[0].mxu0
        %4995 = vdwg.mxu0
        %4996 = vmatprep.subr.mxu0 0.0
        %v4997 = vand.u32 %v4522, 4294901760
        %v4998 = vsub.f32 %v4522, %v4997
        %v4999 = vand.u32 %v4998, 4294901760
        %5000 = vmatpush1.msra.mxu0 %v4999
        %5001 = vmatprep.subr.mxu0 0.0
        %v5002 = vand.u32 %v4523, 4294901760
        %v5003 = vsub.f32 %v4523, %v5002
        %v5004 = vand.u32 %v5003, 4294901760
        %5005 = vmatpush1.msra.mxu0 %v5004
        %5006 = vmatprep.subr.mxu0 0.0
        %v5007 = vand.u32 %v4534, 4294901760
        %v5008 = vsub.f32 %v4534, %v5007
        %v5009 = vand.u32 %v5008, 4294901760
        %5010 = vmatpush1.msra.mxu0 %v5009
        %5011 = vmatprep.subr.mxu0 0.0
        %v5012 = vand.u32 %v4535, 4294901760
        %v5013 = vsub.f32 %v4535, %v5012
        %v5014 = vand.u32 %v5013, 4294901760
        %5015 = vmatpush1.msra.mxu0 %v5014
        %5016 = vmatprep.subr.mxu0 0.0
        %v5017 = vand.u32 %v4541, 4294901760
        %v5018 = vsub.f32 %v4541, %v5017
        %v5019 = vand.u32 %v5018, 4294901760
        %5020 = vmatpush1.msra.mxu0 %v5019
        %5021 = vmatprep.subr.mxu0 0.0
        %v5022 = vand.u32 %v4542, 4294901760
        %v5023 = vsub.f32 %v4542, %v5022
        %v5024 = vand.u32 %v5023, 4294901760
        %5025 = vmatpush1.msra.mxu0 %v5024
        %5026 = vmatprep.subr.mxu0 0.0
        %v5027 = vand.u32 %v4553, 4294901760
        %v5028 = vsub.f32 %v4553, %v5027
        %v5029 = vand.u32 %v5028, 4294901760
        %5030 = vmatpush1.msra.mxu0 %v5029
        %5031 = vmatprep.subr.mxu0 0.0
        %v5032 = vand.u32 %v4554, 4294901760
        %v5033 = vsub.f32 %v4554, %v5032
        %v5034 = vand.u32 %v5033, 4294901760
        %5035 = vmatpush1.msra.mxu0 %v5034
        %5036 = vmatprep.subr.mxu0 0.0
        %v5037 = vand.u32 %v4565, 4294901760
        %v5038 = vsub.f32 %v4565, %v5037
        %v5039 = vand.u32 %v5038, 4294901760
        %5040 = vmatpush1.msra.mxu0 %v5039
        %5041 = vmatprep.subr.mxu0 0.0
        %v5042 = vand.u32 %v4566, 4294901760
        %v5043 = vsub.f32 %v4566, %v5042
        %v5044 = vand.u32 %v5043, 4294901760
        %5045 = vmatpush1.msra.mxu0 %v5044
        %5046 = vmatprep.subr.mxu0 0.0
        %5047 = vmatpush1.msra.mxu0 0.0
        %5048 = vmatprep.subr.mxu0 0.0
        %5049 = vmatpush1.msra.mxu0 0.0
        %5050 = vmatprep.subr.mxu0 0.0
        %5051 = vmatpush1.msra.mxu0 0.0
        %5052 = vmatprep.subr.mxu0 0.0
        %5053 = vmatpush1.msra.mxu0 0.0
        %5054 = vmatprep.subr.mxu0 0.0
        %5055 = vmatpush1.msra.mxu0 0.0
        %5056 = vmatprep.subr.mxu0 0.0
        %5057 = vmatpush1.msra.mxu0 0.0
        %5058 = vmatprep.subr.mxu0 0.0
        %5059 = vmatpush1.msra.mxu0 0.0
        %5060 = vmatprep.subr.mxu0 0.0
        %5061 = vmatpush1.msra.mxu0 0.0
        %5062 = vmatprep.subr.mxu0 0.0
        %5063 = vmatpush1.msra.mxu0 0.0
        %5064 = vmatprep.subr.mxu0 0.0
        %5065 = vmatpush1.msra.mxu0 0.0
        %5066 = vmatprep.subr.mxu0 0.0
        %5067 = vmatpush1.msra.mxu0 0.0
        %5068 = vmatprep.subr.mxu0 0.0
        %5069 = vmatpush1.msra.mxu0 0.0
        %5070 = vmatprep.subr.mxu0 0.0
        %5071 = vmatpush1.msra.mxu0 0.0
        %5072 = vmatprep.subr.mxu0 0.0
        %5073 = vmatpush1.msra.mxu0 0.0
        %5074 = vmatprep.subr.mxu0 0.0
        %5075 = vmatpush1.msra.mxu0 0.0
        %5076 = vmatprep.subr.mxu0 0.0
        %5077 = vmatpush1.msra.mxu0 0.0
        %5078 = vmatprep.subr.mxu0 0.0
        %5079 = vmatpush1.msra.mxu0 0.0
        %5080 = vmatprep.subr.mxu0 0.0
        %5081 = vmatpush1.msra.mxu0 0.0
        %5082 = vmatprep.subr.mxu0 0.0
        %5083 = vmatpush1.msra.mxu0 0.0
        %5084 = vmatprep.subr.mxu0 0.0
        %5085 = vmatpush1.msra.mxu0 0.0
        %5086 = vmatprep.subr.mxu0 0.0
        %5087 = vmatpush1.msra.mxu0 0.0
        %5088 = vmatprep.subr.mxu0 0.0
        %5089 = vmatpush1.msra.mxu0 0.0
        %5090 = vmatprep.mubr.f32.mxu0 0.0
        %v5091 = vand.u32 %v4579, 4294901760
        %5092 = vmatmul.mubr.f32.gmra.mrb[0].mxu0 %v5091
        %v5093 = vpop.f32.mrb[0].mxu0
        %v5094 = vadd.f32 %v4985, %v5093
        %v5095 = vpop.f32.mrb[0].mxu0
        %5096 = vmatprep.mubr.f32.mxu0 0.0
        %v5097 = vand.u32 %v4582, 4294901760
        %5098 = vmatmul.mubr.f32.gmra.mrb[0].mxu0 %v5097
        %v5099 = vpop.f32.mrb[0].mxu0
        %v5100 = vadd.f32 %v4993, %v5099
        %v5101 = vpop.f32.mrb[0].mxu0
        %5102 = vdwg.mxu0
        %5103 = vmatprep.subr.mxu0 0.0
        %v5104 = vand.u32 %v4522, 4294901760
        %5105 = vmatpush1.msra.mxu0 %v5104
        %5106 = vmatprep.subr.mxu0 0.0
        %v5107 = vand.u32 %v4523, 4294901760
        %5108 = vmatpush1.msra.mxu0 %v5107
        %5109 = vmatprep.subr.mxu0 0.0
        %v5110 = vand.u32 %v4534, 4294901760
        %5111 = vmatpush1.msra.mxu0 %v5110
        %5112 = vmatprep.subr.mxu0 0.0
        %v5113 = vand.u32 %v4535, 4294901760
        %5114 = vmatpush1.msra.mxu0 %v5113
        %5115 = vmatprep.subr.mxu0 0.0
        %v5116 = vand.u32 %v4541, 4294901760
        %5117 = vmatpush1.msra.mxu0 %v5116
        %5118 = vmatprep.subr.mxu0 0.0
        %v5119 = vand.u32 %v4542, 4294901760
        %5120 = vmatpush1.msra.mxu0 %v5119
        %5121 = vmatprep.subr.mxu0 0.0
        %v5122 = vand.u32 %v4553, 4294901760
        %5123 = vmatpush1.msra.mxu0 %v5122
        %5124 = vmatprep.subr.mxu0 0.0
        %v5125 = vand.u32 %v4554, 4294901760
        %5126 = vmatpush1.msra.mxu0 %v5125
        %5127 = vmatprep.subr.mxu0 0.0
        %v5128 = vand.u32 %v4565, 4294901760
        %5129 = vmatpush1.msra.mxu0 %v5128
        %5130 = vmatprep.subr.mxu0 0.0
        %v5131 = vand.u32 %v4566, 4294901760
        %5132 = vmatpush1.msra.mxu0 %v5131
        %5133 = vmatprep.subr.mxu0 0.0
        %5134 = vmatpush1.msra.mxu0 0.0
        %5135 = vmatprep.subr.mxu0 0.0
        %5136 = vmatpush1.msra.mxu0 0.0
        %5137 = vmatprep.subr.mxu0 0.0
        %5138 = vmatpush1.msra.mxu0 0.0
        %5139 = vmatprep.subr.mxu0 0.0
        %5140 = vmatpush1.msra.mxu0 0.0
        %5141 = vmatprep.subr.mxu0 0.0
        %5142 = vmatpush1.msra.mxu0 0.0
        %5143 = vmatprep.subr.mxu0 0.0
        %5144 = vmatpush1.msra.mxu0 0.0
        %5145 = vmatprep.subr.mxu0 0.0
        %5146 = vmatpush1.msra.mxu0 0.0
        %5147 = vmatprep.subr.mxu0 0.0
        %5148 = vmatpush1.msra.mxu0 0.0
        %5149 = vmatprep.subr.mxu0 0.0
        %5150 = vmatpush1.msra.mxu0 0.0
        %5151 = vmatprep.subr.mxu0 0.0
        %5152 = vmatpush1.msra.mxu0 0.0
        %5153 = vmatprep.subr.mxu0 0.0
        %5154 = vmatpush1.msra.mxu0 0.0
        %5155 = vmatprep.subr.mxu0 0.0
        %5156 = vmatpush1.msra.mxu0 0.0
        %5157 = vmatprep.subr.mxu0 0.0
        %5158 = vmatpush1.msra.mxu0 0.0
        %5159 = vmatprep.subr.mxu0 0.0
        %5160 = vmatpush1.msra.mxu0 0.0
        %5161 = vmatprep.subr.mxu0 0.0
        %5162 = vmatpush1.msra.mxu0 0.0
        %5163 = vmatprep.subr.mxu0 0.0
        %5164 = vmatpush1.msra.mxu0 0.0
        %5165 = vmatprep.subr.mxu0 0.0
        %5166 = vmatpush1.msra.mxu0 0.0
        %5167 = vmatprep.subr.mxu0 0.0
        %5168 = vmatpush1.msra.mxu0 0.0
        %5169 = vmatprep.subr.mxu0 0.0
        %5170 = vmatpush1.msra.mxu0 0.0
        %5171 = vmatprep.subr.mxu0 0.0
        %5172 = vmatpush1.msra.mxu0 0.0
        %5173 = vmatprep.subr.mxu0 0.0
        %5174 = vmatpush1.msra.mxu0 0.0
        %5175 = vmatprep.subr.mxu0 0.0
        %5176 = vmatpush1.msra.mxu0 0.0
        %5177 = vmatprep.mubr.f32.mxu0 0.0
        %v5178 = vand.u32 %v4579, 4294901760
        %5179 = vmatmul.mubr.f32.gmra.mrb[0].mxu0 %v5178
        %v5180 = vpop.f32.mrb[0].mxu0
        %v5181 = vadd.f32 %v5094, %v5180
        %v5182 = vpop.f32.mrb[0].mxu0
        %5183 = vmatprep.mubr.f32.mxu0 0.0
        %v5184 = vand.u32 %v4582, 4294901760
        %5185 = vmatmul.mubr.f32.gmra.mrb[0].mxu0 %v5184
        %v5186 = vpop.f32.mrb[0].mxu0
        %v5187 = vadd.f32 %v5100, %v5186
        %v5188 = vpop.f32.mrb[0].mxu0
        %5189 = vdwg.mxu0
        %5190 = vmatprep.subr.mxu0 0.0
        %v5191 = vand.u32 %v405, 4294901760
        %5192 = vmatpush1.msra.mxu0 %v5191
        %5193 = vmatprep.subr.mxu0 0.0
        %v5194 = vand.u32 %v406, 4294901760
        %5195 = vmatpush1.msra.mxu0 %v5194
        %5196 = vmatprep.subr.mxu0 0.0
        %v5197 = vand.u32 %v407, 4294901760
        %5198 = vmatpush1.msra.mxu0 %v5197
        %5199 = vmatprep.subr.mxu0 0.0
        %v5200 = vand.u32 %v408, 4294901760
        %5201 = vmatpush1.msra.mxu0 %v5200
        %5202 = vmatprep.subr.mxu0 0.0
        %v5203 = vand.u32 %v409, 4294901760
        %5204 = vmatpush1.msra.mxu0 %v5203
        %5205 = vmatprep.subr.mxu0 0.0
        %v5206 = vand.u32 %v410, 4294901760
        %5207 = vmatpush1.msra.mxu0 %v5206
        %5208 = vmatprep.subr.mxu0 0.0
        %v5209 = vand.u32 %v411, 4294901760
        %5210 = vmatpush1.msra.mxu0 %v5209
        %5211 = vmatprep.subr.mxu0 0.0
        %v5212 = vand.u32 %v412, 4294901760
        %5213 = vmatpush1.msra.mxu0 %v5212
        %5214 = vmatprep.subr.mxu0 0.0
        %v5215 = vand.u32 %v413, 4294901760
        %5216 = vmatpush1.msra.mxu0 %v5215
        %5217 = vmatprep.subr.mxu0 0.0
        %v5218 = vand.u32 %v414, 4294901760
        %5219 = vmatpush1.msra.mxu0 %v5218
        %5220 = vmatprep.subr.mxu0 0.0
        %v5221 = vand.u32 %v415, 4294901760
        %5222 = vmatpush1.msra.mxu0 %v5221
        %5223 = vmatprep.subr.mxu0 0.0
        %v5224 = vand.u32 %v416, 4294901760
        %5225 = vmatpush1.msra.mxu0 %v5224
        %5226 = vmatprep.subr.mxu0 0.0
        %v5227 = vand.u32 %v417, 4294901760
        %5228 = vmatpush1.msra.mxu0 %v5227
        %5229 = vmatprep.subr.mxu0 0.0
        %v5230 = vand.u32 %v418, 4294901760
        %5231 = vmatpush1.msra.mxu0 %v5230
        %5232 = vmatprep.subr.mxu0 0.0
        %v5233 = vand.u32 %v419, 4294901760
        %5234 = vmatpush1.msra.mxu0 %v5233
        %5235 = vmatprep.subr.mxu0 0.0
        %v5236 = vand.u32 %v420, 4294901760
        %5237 = vmatpush1.msra.mxu0 %v5236
        %5238 = vmatprep.subr.mxu0 0.0
        %5239 = vmatpush1.msra.mxu0 0.0
        %5240 = vmatprep.subr.mxu0 0.0
        %5241 = vmatpush1.msra.mxu0 0.0
        %5242 = vmatprep.subr.mxu0 0.0
        %5243 = vmatpush1.msra.mxu0 0.0
        %5244 = vmatprep.subr.mxu0 0.0
        %5245 = vmatpush1.msra.mxu0 0.0
        %5246 = vmatprep.subr.mxu0 0.0
        %5247 = vmatpush1.msra.mxu0 0.0
        %5248 = vmatprep.subr.mxu0 0.0
        %5249 = vmatpush1.msra.mxu0 0.0
        %5250 = vmatprep.subr.mxu0 0.0
        %5251 = vmatpush1.msra.mxu0 0.0
        %5252 = vmatprep.subr.mxu0 0.0
        %5253 = vmatpush1.msra.mxu0 0.0
        %5254 = vmatprep.subr.mxu0 0.0
        %5255 = vmatpush1.msra.mxu0 0.0
        %5256 = vmatprep.subr.mxu0 0.0
        %5257 = vmatpush1.msra.mxu0 0.0
        %5258 = vmatprep.subr.mxu0 0.0
        %5259 = vmatpush1.msra.mxu0 0.0
        %5260 = vmatprep.subr.mxu0 0.0
        %5261 = vmatpush1.msra.mxu0 0.0
        %5262 = vmatprep.subr.mxu0 0.0
        %5263 = vmatpush1.msra.mxu0 0.0
        %5264 = vmatprep.subr.mxu0 0.0
        %5265 = vmatpush1.msra.mxu0 0.0
        %5266 = vmatprep.subr.mxu0 0.0
        %5267 = vmatpush1.msra.mxu0 0.0
        %5268 = vmatprep.subr.mxu0 0.0
        %5269 = vmatpush1.msra.mxu0 0.0
        %5270 = vmatprep.mubr.f32.mxu0 0.0
        %v5271 = vand.u32 %v5181, 4294901760
        %v5272 = vsub.f32 %v5181, %v5271
        %v5273 = vand.u32 %v5272, 4294901760
        %v5274 = vsub.f32 %v5272, %v5273
        %v5275 = vand.u32 %v5274, 4294901760
        %5276 = vmatmul.mubr.f32.gmra.mrb[0].mxu0 %v5275
        %v5277 = vpop.f32.mrb[0].mxu0
        %v5278 = vadd.f32 0.0, %v5277
        %v5279 = vpop.f32.mrb[0].mxu0
        %5280 = vmatprep.mubr.f32.mxu0 0.0
        %v5281 = vand.u32 %v5187, 4294901760
        %v5282 = vsub.f32 %v5187, %v5281
        %v5283 = vand.u32 %v5282, 4294901760
        %v5284 = vsub.f32 %v5282, %v5283
        %v5285 = vand.u32 %v5284, 4294901760
        %5286 = vmatmul.mubr.f32.gmra.mrb[0].mxu0 %v5285
        %v5287 = vpop.f32.mrb[0].mxu0
        %v5288 = vadd.f32 0.0, %v5287
        %v5289 = vpop.f32.mrb[0].mxu0
        %5290 = vdwg.mxu0
        %5291 = vmatprep.subr.mxu0 0.0
        %v5292 = vand.u32 %v405, 4294901760
        %v5293 = vsub.f32 %v405, %v5292
        %v5294 = vand.u32 %v5293, 4294901760
        %v5295 = vsub.f32 %v5293, %v5294
        %v5296 = vand.u32 %v5295, 4294901760
        %5297 = vmatpush1.msra.mxu0 %v5296
        %5298 = vmatprep.subr.mxu0 0.0
        %v5299 = vand.u32 %v406, 4294901760
        %v5300 = vsub.f32 %v406, %v5299
        %v5301 = vand.u32 %v5300, 4294901760
        %v5302 = vsub.f32 %v5300, %v5301
        %v5303 = vand.u32 %v5302, 4294901760
        %5304 = vmatpush1.msra.mxu0 %v5303
        %5305 = vmatprep.subr.mxu0 0.0
        %v5306 = vand.u32 %v407, 4294901760
        %v5307 = vsub.f32 %v407, %v5306
        %v5308 = vand.u32 %v5307, 4294901760
        %v5309 = vsub.f32 %v5307, %v5308
        %v5310 = vand.u32 %v5309, 4294901760
        %5311 = vmatpush1.msra.mxu0 %v5310
        %5312 = vmatprep.subr.mxu0 0.0
        %v5313 = vand.u32 %v408, 4294901760
        %v5314 = vsub.f32 %v408, %v5313
        %v5315 = vand.u32 %v5314, 4294901760
        %v5316 = vsub.f32 %v5314, %v5315
        %v5317 = vand.u32 %v5316, 4294901760
        %5318 = vmatpush1.msra.mxu0 %v5317
        %5319 = vmatprep.subr.mxu0 0.0
        %v5320 = vand.u32 %v409, 4294901760
        %v5321 = vsub.f32 %v409, %v5320
        %v5322 = vand.u32 %v5321, 4294901760
        %v5323 = vsub.f32 %v5321, %v5322
        %v5324 = vand.u32 %v5323, 4294901760
        %5325 = vmatpush1.msra.mxu0 %v5324
        %5326 = vmatprep.subr.mxu0 0.0
        %v5327 = vand.u32 %v410, 4294901760
        %v5328 = vsub.f32 %v410, %v5327
        %v5329 = vand.u32 %v5328, 4294901760
        %v5330 = vsub.f32 %v5328, %v5329
        %v5331 = vand.u32 %v5330, 4294901760
        %5332 = vmatpush1.msra.mxu0 %v5331
        %5333 = vmatprep.subr.mxu0 0.0
        %v5334 = vand.u32 %v411, 4294901760
        %v5335 = vsub.f32 %v411, %v5334
        %v5336 = vand.u32 %v5335, 4294901760
        %v5337 = vsub.f32 %v5335, %v5336
        %v5338 = vand.u32 %v5337, 4294901760
        %5339 = vmatpush1.msra.mxu0 %v5338
        %5340 = vmatprep.subr.mxu0 0.0
        %v5341 = vand.u32 %v412, 4294901760
        %v5342 = vsub.f32 %v412, %v5341
        %v5343 = vand.u32 %v5342, 4294901760
        %v5344 = vsub.f32 %v5342, %v5343
        %v5345 = vand.u32 %v5344, 4294901760
        %5346 = vmatpush1.msra.mxu0 %v5345
        %5347 = vmatprep.subr.mxu0 0.0
        %v5348 = vand.u32 %v413, 4294901760
        %v5349 = vsub.f32 %v413, %v5348
        %v5350 = vand.u32 %v5349, 4294901760
        %v5351 = vsub.f32 %v5349, %v5350
        %v5352 = vand.u32 %v5351, 4294901760
        %5353 = vmatpush1.msra.mxu0 %v5352
        %5354 = vmatprep.subr.mxu0 0.0
        %v5355 = vand.u32 %v414, 4294901760
        %v5356 = vsub.f32 %v414, %v5355
        %v5357 = vand.u32 %v5356, 4294901760
        %v5358 = vsub.f32 %v5356, %v5357
        %v5359 = vand.u32 %v5358, 4294901760
        %5360 = vmatpush1.msra.mxu0 %v5359
        %5361 = vmatprep.subr.mxu0 0.0
        %v5362 = vand.u32 %v415, 4294901760
        %v5363 = vsub.f32 %v415, %v5362
        %v5364 = vand.u32 %v5363, 4294901760
        %v5365 = vsub.f32 %v5363, %v5364
        %v5366 = vand.u32 %v5365, 4294901760
        %5367 = vmatpush1.msra.mxu0 %v5366
        %5368 = vmatprep.subr.mxu0 0.0
        %v5369 = vand.u32 %v416, 4294901760
        %v5370 = vsub.f32 %v416, %v5369
        %v5371 = vand.u32 %v5370, 4294901760
        %v5372 = vsub.f32 %v5370, %v5371
        %v5373 = vand.u32 %v5372, 4294901760
        %5374 = vmatpush1.msra.mxu0 %v5373
        %5375 = vmatprep.subr.mxu0 0.0
        %v5376 = vand.u32 %v417, 4294901760
        %v5377 = vsub.f32 %v417, %v5376
        %v5378 = vand.u32 %v5377, 4294901760
        %v5379 = vsub.f32 %v5377, %v5378
        %v5380 = vand.u32 %v5379, 4294901760
        %5381 = vmatpush1.msra.mxu0 %v5380
        %5382 = vmatprep.subr.mxu0 0.0
        %v5383 = vand.u32 %v418, 4294901760
        %v5384 = vsub.f32 %v418, %v5383
        %v5385 = vand.u32 %v5384, 4294901760
        %v5386 = vsub.f32 %v5384, %v5385
        %v5387 = vand.u32 %v5386, 4294901760
        %5388 = vmatpush1.msra.mxu0 %v5387
        %5389 = vmatprep.subr.mxu0 0.0
        %v5390 = vand.u32 %v419, 4294901760
        %v5391 = vsub.f32 %v419, %v5390
        %v5392 = vand.u32 %v5391, 4294901760
        %v5393 = vsub.f32 %v5391, %v5392
        %v5394 = vand.u32 %v5393, 4294901760
        %5395 = vmatpush1.msra.mxu0 %v5394
        %5396 = vmatprep.subr.mxu0 0.0
        %v5397 = vand.u32 %v420, 4294901760
        %v5398 = vsub.f32 %v420, %v5397
        %v5399 = vand.u32 %v5398, 4294901760
        %v5400 = vsub.f32 %v5398, %v5399
        %v5401 = vand.u32 %v5400, 4294901760
        %5402 = vmatpush1.msra.mxu0 %v5401
        %5403 = vmatprep.subr.mxu0 0.0
        %5404 = vmatpush1.msra.mxu0 0.0
        %5405 = vmatprep.subr.mxu0 0.0
        %5406 = vmatpush1.msra.mxu0 0.0
        %5407 = vmatprep.subr.mxu0 0.0
        %5408 = vmatpush1.msra.mxu0 0.0
        %5409 = vmatprep.subr.mxu0 0.0
        %5410 = vmatpush1.msra.mxu0 0.0
        %5411 = vmatprep.subr.mxu0 0.0
        %5412 = vmatpush1.msra.mxu0 0.0
        %5413 = vmatprep.subr.mxu0 0.0
        %5414 = vmatpush1.msra.mxu0 0.0
        %5415 = vmatprep.subr.mxu0 0.0
        %5416 = vmatpush1.msra.mxu0 0.0
        %5417 = vmatprep.subr.mxu0 0.0
        %5418 = vmatpush1.msra.mxu0 0.0
        %5419 = vmatprep.subr.mxu0 0.0
        %5420 = vmatpush1.msra.mxu0 0.0
        %5421 = vmatprep.subr.mxu0 0.0
        %5422 = vmatpush1.msra.mxu0 0.0
        %5423 = vmatprep.subr.mxu0 0.0
        %5424 = vmatpush1.msra.mxu0 0.0
        %5425 = vmatprep.subr.mxu0 0.0
        %5426 = vmatpush1.msra.mxu0 0.0
        %5427 = vmatprep.subr.mxu0 0.0
        %5428 = vmatpush1.msra.mxu0 0.0
        %5429 = vmatprep.subr.mxu0 0.0
        %5430 = vmatpush1.msra.mxu0 0.0
        %5431 = vmatprep.subr.mxu0 0.0
        %5432 = vmatpush1.msra.mxu0 0.0
        %5433 = vmatprep.subr.mxu0 0.0
        %5434 = vmatpush1.msra.mxu0 0.0
        %5435 = vmatprep.mubr.f32.mxu0 0.0
        %v5436 = vand.u32 %v5181, 4294901760
        %5437 = vmatmul.mubr.f32.gmra.mrb[0].mxu0 %v5436
        %v5438 = vpop.f32.mrb[0].mxu0
        %v5439 = vadd.f32 %v5278, %v5438
        %v5440 = vpop.f32.mrb[0].mxu0
        %5441 = vmatprep.mubr.f32.mxu0 0.0
        %v5442 = vand.u32 %v5187, 4294901760
        %5443 = vmatmul.mubr.f32.gmra.mrb[0].mxu0 %v5442
        %v5444 = vpop.f32.mrb[0].mxu0
        %v5445 = vadd.f32 %v5288, %v5444
        %v5446 = vpop.f32.mrb[0].mxu0
        %5447 = vdwg.mxu0
        %5448 = vmatprep.subr.mxu0 0.0
        %v5449 = vand.u32 %v405, 4294901760
        %v5450 = vsub.f32 %v405, %v5449
        %5451 = vmatpush1.msra.mxu0 %v5450
        %5452 = vmatprep.subr.mxu0 0.0
        %v5453 = vand.u32 %v406, 4294901760
        %v5454 = vsub.f32 %v406, %v5453
        %5455 = vmatpush1.msra.mxu0 %v5454
        %5456 = vmatprep.subr.mxu0 0.0
        %v5457 = vand.u32 %v407, 4294901760
        %v5458 = vsub.f32 %v407, %v5457
        %5459 = vmatpush1.msra.mxu0 %v5458
        %5460 = vmatprep.subr.mxu0 0.0
        %v5461 = vand.u32 %v408, 4294901760
        %v5462 = vsub.f32 %v408, %v5461
        %5463 = vmatpush1.msra.mxu0 %v5462
        %5464 = vmatprep.subr.mxu0 0.0
        %v5465 = vand.u32 %v409, 4294901760
        %v5466 = vsub.f32 %v409, %v5465
        %5467 = vmatpush1.msra.mxu0 %v5466
        %5468 = vmatprep.subr.mxu0 0.0
        %v5469 = vand.u32 %v410, 4294901760
        %v5470 = vsub.f32 %v410, %v5469
        %5471 = vmatpush1.msra.mxu0 %v5470
        %5472 = vmatprep.subr.mxu0 0.0
        %v5473 = vand.u32 %v411, 4294901760
        %v5474 = vsub.f32 %v411, %v5473
        %5475 = vmatpush1.msra.mxu0 %v5474
        %5476 = vmatprep.subr.mxu0 0.0
        %v5477 = vand.u32 %v412, 4294901760
        %v5478 = vsub.f32 %v412, %v5477
        %5479 = vmatpush1.msra.mxu0 %v5478
        %5480 = vmatprep.subr.mxu0 0.0
        %v5481 = vand.u32 %v413, 4294901760
        %v5482 = vsub.f32 %v413, %v5481
        %5483 = vmatpush1.msra.mxu0 %v5482
        %5484 = vmatprep.subr.mxu0 0.0
        %v5485 = vand.u32 %v414, 4294901760
        %v5486 = vsub.f32 %v414, %v5485
        %5487 = vmatpush1.msra.mxu0 %v5486
        %5488 = vmatprep.subr.mxu0 0.0
        %v5489 = vand.u32 %v415, 4294901760
        %v5490 = vsub.f32 %v415, %v5489
        %5491 = vmatpush1.msra.mxu0 %v5490
        %5492 = vmatprep.subr.mxu0 0.0
        %v5493 = vand.u32 %v416, 4294901760
        %v5494 = vsub.f32 %v416, %v5493
        %5495 = vmatpush1.msra.mxu0 %v5494
        %5496 = vmatprep.subr.mxu0 0.0
        %v5497 = vand.u32 %v417, 4294901760
        %v5498 = vsub.f32 %v417, %v5497
        %5499 = vmatpush1.msra.mxu0 %v5498
        %5500 = vmatprep.subr.mxu0 0.0
        %v5501 = vand.u32 %v418, 4294901760
        %v5502 = vsub.f32 %v418, %v5501
        %5503 = vmatpush1.msra.mxu0 %v5502
        %5504 = vmatprep.subr.mxu0 0.0
        %v5505 = vand.u32 %v419, 4294901760
        %v5506 = vsub.f32 %v419, %v5505
        %5507 = vmatpush1.msra.mxu0 %v5506
        %5508 = vmatprep.subr.mxu0 0.0
        %v5509 = vand.u32 %v420, 4294901760
        %v5510 = vsub.f32 %v420, %v5509
        %5511 = vmatpush1.msra.mxu0 %v5510
        %5512 = vmatprep.subr.mxu0 0.0
        %5513 = vmatpush1.msra.mxu0 0.0
        %5514 = vmatprep.subr.mxu0 0.0
        %5515 = vmatpush1.msra.mxu0 0.0
        %5516 = vmatprep.subr.mxu0 0.0
        %5517 = vmatpush1.msra.mxu0 0.0
        %5518 = vmatprep.subr.mxu0 0.0
        %5519 = vmatpush1.msra.mxu0 0.0
        %5520 = vmatprep.subr.mxu0 0.0
        %5521 = vmatpush1.msra.mxu0 0.0
        %5522 = vmatprep.subr.mxu0 0.0
        %5523 = vmatpush1.msra.mxu0 0.0
        %5524 = vmatprep.subr.mxu0 0.0
        %5525 = vmatpush1.msra.mxu0 0.0
        %5526 = vmatprep.subr.mxu0 0.0
        %5527 = vmatpush1.msra.mxu0 0.0
        %5528 = vmatprep.subr.mxu0 0.0
        %5529 = vmatpush1.msra.mxu0 0.0
        %5530 = vmatprep.subr.mxu0 0.0
        %5531 = vmatpush1.msra.mxu0 0.0
        %5532 = vmatprep.subr.mxu0 0.0
        %5533 = vmatpush1.msra.mxu0 0.0
        %5534 = vmatprep.subr.mxu0 0.0
        %5535 = vmatpush1.msra.mxu0 0.0
        %5536 = vmatprep.subr.mxu0 0.0
        %5537 = vmatpush1.msra.mxu0 0.0
        %5538 = vmatprep.subr.mxu0 0.0
        %5539 = vmatpush1.msra.mxu0 0.0
        %5540 = vmatprep.subr.mxu0 0.0
        %5541 = vmatpush1.msra.mxu0 0.0
        %5542 = vmatprep.subr.mxu0 0.0
        %5543 = vmatpush1.msra.mxu0 0.0
        %5544 = vmatprep.mubr.f32.mxu0 0.0
        %v5545 = vand.u32 %v5181, 4294901760
        %v5546 = vsub.f32 %v5181, %v5545
        %5547 = vmatmul.mubr.f32.gmra.mrb[0].mxu0 %v5546
        %v5548 = vpop.f32.mrb[0].mxu0
        %v5549 = vadd.f32 %v5439, %v5548
        %v5550 = vpop.f32.mrb[0].mxu0
        %5551 = vmatprep.mubr.f32.mxu0 0.0
        %v5552 = vand.u32 %v5187, 4294901760
        %v5553 = vsub.f32 %v5187, %v5552
        %5554 = vmatmul.mubr.f32.gmra.mrb[0].mxu0 %v5553
        %v5555 = vpop.f32.mrb[0].mxu0
        %v5556 = vadd.f32 %v5445, %v5555
        %v5557 = vpop.f32.mrb[0].mxu0
        %5558 = vdwg.mxu0
        %5559 = vmatprep.subr.mxu0 0.0
        %v5560 = vand.u32 %v405, 4294901760
        %5561 = vmatpush1.msra.mxu0 %v5560
        %5562 = vmatprep.subr.mxu0 0.0
        %v5563 = vand.u32 %v406, 4294901760
        %5564 = vmatpush1.msra.mxu0 %v5563
        %5565 = vmatprep.subr.mxu0 0.0
        %v5566 = vand.u32 %v407, 4294901760
        %5567 = vmatpush1.msra.mxu0 %v5566
        %5568 = vmatprep.subr.mxu0 0.0
        %v5569 = vand.u32 %v408, 4294901760
        %5570 = vmatpush1.msra.mxu0 %v5569
        %5571 = vmatprep.subr.mxu0 0.0
        %v5572 = vand.u32 %v409, 4294901760
        %5573 = vmatpush1.msra.mxu0 %v5572
        %5574 = vmatprep.subr.mxu0 0.0
        %v5575 = vand.u32 %v410, 4294901760
        %5576 = vmatpush1.msra.mxu0 %v5575
        %5577 = vmatprep.subr.mxu0 0.0
        %v5578 = vand.u32 %v411, 4294901760
        %5579 = vmatpush1.msra.mxu0 %v5578
        %5580 = vmatprep.subr.mxu0 0.0
        %v5581 = vand.u32 %v412, 4294901760
        %5582 = vmatpush1.msra.mxu0 %v5581
        %5583 = vmatprep.subr.mxu0 0.0
        %v5584 = vand.u32 %v413, 4294901760
        %5585 = vmatpush1.msra.mxu0 %v5584
        %5586 = vmatprep.subr.mxu0 0.0
        %v5587 = vand.u32 %v414, 4294901760
        %5588 = vmatpush1.msra.mxu0 %v5587
        %5589 = vmatprep.subr.mxu0 0.0
        %v5590 = vand.u32 %v415, 4294901760
        %5591 = vmatpush1.msra.mxu0 %v5590
        %5592 = vmatprep.subr.mxu0 0.0
        %v5593 = vand.u32 %v416, 4294901760
        %5594 = vmatpush1.msra.mxu0 %v5593
        %5595 = vmatprep.subr.mxu0 0.0
        %v5596 = vand.u32 %v417, 4294901760
        %5597 = vmatpush1.msra.mxu0 %v5596
        %5598 = vmatprep.subr.mxu0 0.0
        %v5599 = vand.u32 %v418, 4294901760
        %5600 = vmatpush1.msra.mxu0 %v5599
        %5601 = vmatprep.subr.mxu0 0.0
        %v5602 = vand.u32 %v419, 4294901760
        %5603 = vmatpush1.msra.mxu0 %v5602
        %5604 = vmatprep.subr.mxu0 0.0
        %v5605 = vand.u32 %v420, 4294901760
        %5606 = vmatpush1.msra.mxu0 %v5605
        %5607 = vmatprep.subr.mxu0 0.0
        %5608 = vmatpush1.msra.mxu0 0.0
        %5609 = vmatprep.subr.mxu0 0.0
        %5610 = vmatpush1.msra.mxu0 0.0
        %5611 = vmatprep.subr.mxu0 0.0
        %5612 = vmatpush1.msra.mxu0 0.0
        %5613 = vmatprep.subr.mxu0 0.0
        %5614 = vmatpush1.msra.mxu0 0.0
        %5615 = vmatprep.subr.mxu0 0.0
        %5616 = vmatpush1.msra.mxu0 0.0
        %5617 = vmatprep.subr.mxu0 0.0
        %5618 = vmatpush1.msra.mxu0 0.0
        %5619 = vmatprep.subr.mxu0 0.0
        %5620 = vmatpush1.msra.mxu0 0.0
        %5621 = vmatprep.subr.mxu0 0.0
        %5622 = vmatpush1.msra.mxu0 0.0
        %5623 = vmatprep.subr.mxu0 0.0
        %5624 = vmatpush1.msra.mxu0 0.0
        %5625 = vmatprep.subr.mxu0 0.0
        %5626 = vmatpush1.msra.mxu0 0.0
        %5627 = vmatprep.subr.mxu0 0.0
        %5628 = vmatpush1.msra.mxu0 0.0
        %5629 = vmatprep.subr.mxu0 0.0
        %5630 = vmatpush1.msra.mxu0 0.0
        %5631 = vmatprep.subr.mxu0 0.0
        %5632 = vmatpush1.msra.mxu0 0.0
        %5633 = vmatprep.subr.mxu0 0.0
        %5634 = vmatpush1.msra.mxu0 0.0
        %5635 = vmatprep.subr.mxu0 0.0
        %5636 = vmatpush1.msra.mxu0 0.0
        %5637 = vmatprep.subr.mxu0 0.0
        %5638 = vmatpush1.msra.mxu0 0.0
        %5639 = vmatprep.mubr.f32.mxu0 0.0
        %v5640 = vand.u32 %v5181, 4294901760
        %v5641 = vsub.f32 %v5181, %v5640
        %v5642 = vand.u32 %v5641, 4294901760
        %5643 = vmatmul.mubr.f32.gmra.mrb[0].mxu0 %v5642
        %v5644 = vpop.f32.mrb[0].mxu0
        %v5645 = vadd.f32 %v5549, %v5644
        %v5646 = vpop.f32.mrb[0].mxu0
        %5647 = vmatprep.mubr.f32.mxu0 0.0
        %v5648 = vand.u32 %v5187, 4294901760
        %v5649 = vsub.f32 %v5187, %v5648
        %v5650 = vand.u32 %v5649, 4294901760
        %5651 = vmatmul.mubr.f32.gmra.mrb[0].mxu0 %v5650
        %v5652 = vpop.f32.mrb[0].mxu0
        %v5653 = vadd.f32 %v5556, %v5652
        %v5654 = vpop.f32.mrb[0].mxu0
        %5655 = vdwg.mxu0
        %5656 = vmatprep.subr.mxu0 0.0
        %v5657 = vand.u32 %v405, 4294901760
        %v5658 = vsub.f32 %v405, %v5657
        %v5659 = vand.u32 %v5658, 4294901760
        %5660 = vmatpush1.msra.mxu0 %v5659
        %5661 = vmatprep.subr.mxu0 0.0
        %v5662 = vand.u32 %v406, 4294901760
        %v5663 = vsub.f32 %v406, %v5662
        %v5664 = vand.u32 %v5663, 4294901760
        %5665 = vmatpush1.msra.mxu0 %v5664
        %5666 = vmatprep.subr.mxu0 0.0
        %v5667 = vand.u32 %v407, 4294901760
        %v5668 = vsub.f32 %v407, %v5667
        %v5669 = vand.u32 %v5668, 4294901760
        %5670 = vmatpush1.msra.mxu0 %v5669
        %5671 = vmatprep.subr.mxu0 0.0
        %v5672 = vand.u32 %v408, 4294901760
        %v5673 = vsub.f32 %v408, %v5672
        %v5674 = vand.u32 %v5673, 4294901760
        %5675 = vmatpush1.msra.mxu0 %v5674
        %5676 = vmatprep.subr.mxu0 0.0
        %v5677 = vand.u32 %v409, 4294901760
        %v5678 = vsub.f32 %v409, %v5677
        %v5679 = vand.u32 %v5678, 4294901760
        %5680 = vmatpush1.msra.mxu0 %v5679
        %5681 = vmatprep.subr.mxu0 0.0
        %v5682 = vand.u32 %v410, 4294901760
        %v5683 = vsub.f32 %v410, %v5682
        %v5684 = vand.u32 %v5683, 4294901760
        %5685 = vmatpush1.msra.mxu0 %v5684
        %5686 = vmatprep.subr.mxu0 0.0
        %v5687 = vand.u32 %v411, 4294901760
        %v5688 = vsub.f32 %v411, %v5687
        %v5689 = vand.u32 %v5688, 4294901760
        %5690 = vmatpush1.msra.mxu0 %v5689
        %5691 = vmatprep.subr.mxu0 0.0
        %v5692 = vand.u32 %v412, 4294901760
        %v5693 = vsub.f32 %v412, %v5692
        %v5694 = vand.u32 %v5693, 4294901760
        %5695 = vmatpush1.msra.mxu0 %v5694
        %5696 = vmatprep.subr.mxu0 0.0
        %v5697 = vand.u32 %v413, 4294901760
        %v5698 = vsub.f32 %v413, %v5697
        %v5699 = vand.u32 %v5698, 4294901760
        %5700 = vmatpush1.msra.mxu0 %v5699
        %5701 = vmatprep.subr.mxu0 0.0
        %v5702 = vand.u32 %v414, 4294901760
        %v5703 = vsub.f32 %v414, %v5702
        %v5704 = vand.u32 %v5703, 4294901760
        %5705 = vmatpush1.msra.mxu0 %v5704
        %5706 = vmatprep.subr.mxu0 0.0
        %v5707 = vand.u32 %v415, 4294901760
        %v5708 = vsub.f32 %v415, %v5707
        %v5709 = vand.u32 %v5708, 4294901760
        %5710 = vmatpush1.msra.mxu0 %v5709
        %5711 = vmatprep.subr.mxu0 0.0
        %v5712 = vand.u32 %v416, 4294901760
        %v5713 = vsub.f32 %v416, %v5712
        %v5714 = vand.u32 %v5713, 4294901760
        %5715 = vmatpush1.msra.mxu0 %v5714
        %5716 = vmatprep.subr.mxu0 0.0
        %v5717 = vand.u32 %v417, 4294901760
        %v5718 = vsub.f32 %v417, %v5717
        %v5719 = vand.u32 %v5718, 4294901760
        %5720 = vmatpush1.msra.mxu0 %v5719
        %5721 = vmatprep.subr.mxu0 0.0
        %v5722 = vand.u32 %v418, 4294901760
        %v5723 = vsub.f32 %v418, %v5722
        %v5724 = vand.u32 %v5723, 4294901760
        %5725 = vmatpush1.msra.mxu0 %v5724
        %5726 = vmatprep.subr.mxu0 0.0
        %v5727 = vand.u32 %v419, 4294901760
        %v5728 = vsub.f32 %v419, %v5727
        %v5729 = vand.u32 %v5728, 4294901760
        %5730 = vmatpush1.msra.mxu0 %v5729
        %5731 = vmatprep.subr.mxu0 0.0
        %v5732 = vand.u32 %v420, 4294901760
        %v5733 = vsub.f32 %v420, %v5732
        %v5734 = vand.u32 %v5733, 4294901760
        %5735 = vmatpush1.msra.mxu0 %v5734
        %5736 = vmatprep.subr.mxu0 0.0
        %5737 = vmatpush1.msra.mxu0 0.0
        %5738 = vmatprep.subr.mxu0 0.0
        %5739 = vmatpush1.msra.mxu0 0.0
        %5740 = vmatprep.subr.mxu0 0.0
        %5741 = vmatpush1.msra.mxu0 0.0
        %5742 = vmatprep.subr.mxu0 0.0
        %5743 = vmatpush1.msra.mxu0 0.0
        %5744 = vmatprep.subr.mxu0 0.0
        %5745 = vmatpush1.msra.mxu0 0.0
        %5746 = vmatprep.subr.mxu0 0.0
        %5747 = vmatpush1.msra.mxu0 0.0
        %5748 = vmatprep.subr.mxu0 0.0
        %5749 = vmatpush1.msra.mxu0 0.0
        %5750 = vmatprep.subr.mxu0 0.0
        %5751 = vmatpush1.msra.mxu0 0.0
        %5752 = vmatprep.subr.mxu0 0.0
        %5753 = vmatpush1.msra.mxu0 0.0
        %5754 = vmatprep.subr.mxu0 0.0
        %5755 = vmatpush1.msra.mxu0 0.0
        %5756 = vmatprep.subr.mxu0 0.0
        %5757 = vmatpush1.msra.mxu0 0.0
        %5758 = vmatprep.subr.mxu0 0.0
        %5759 = vmatpush1.msra.mxu0 0.0
        %5760 = vmatprep.subr.mxu0 0.0
        %5761 = vmatpush1.msra.mxu0 0.0
        %5762 = vmatprep.subr.mxu0 0.0
        %5763 = vmatpush1.msra.mxu0 0.0
        %5764 = vmatprep.subr.mxu0 0.0
        %5765 = vmatpush1.msra.mxu0 0.0
        %5766 = vmatprep.subr.mxu0 0.0
        %5767 = vmatpush1.msra.mxu0 0.0
        %5768 = vmatprep.mubr.f32.mxu0 0.0
        %v5769 = vand.u32 %v5181, 4294901760
        %5770 = vmatmul.mubr.f32.gmra.mrb[0].mxu0 %v5769
        %v5771 = vpop.f32.mrb[0].mxu0
        %v5772 = vadd.f32 %v5645, %v5771
        %v5773 = vpop.f32.mrb[0].mxu0
        %5774 = vmatprep.mubr.f32.mxu0 0.0
        %v5775 = vand.u32 %v5187, 4294901760
        %5776 = vmatmul.mubr.f32.gmra.mrb[0].mxu0 %v5775
        %v5777 = vpop.f32.mrb[0].mxu0
        %v5778 = vadd.f32 %v5653, %v5777
        %v5779 = vpop.f32.mrb[0].mxu0
        %5780 = vdwg.mxu0
        %5781 = vmatprep.subr.mxu0 0.0
        %v5782 = vand.u32 %v405, 4294901760
        %5783 = vmatpush1.msra.mxu0 %v5782
        %5784 = vmatprep.subr.mxu0 0.0
        %v5785 = vand.u32 %v406, 4294901760
        %5786 = vmatpush1.msra.mxu0 %v5785
        %5787 = vmatprep.subr.mxu0 0.0
        %v5788 = vand.u32 %v407, 4294901760
        %5789 = vmatpush1.msra.mxu0 %v5788
        %5790 = vmatprep.subr.mxu0 0.0
        %v5791 = vand.u32 %v408, 4294901760
        %5792 = vmatpush1.msra.mxu0 %v5791
        %5793 = vmatprep.subr.mxu0 0.0
        %v5794 = vand.u32 %v409, 4294901760
        %5795 = vmatpush1.msra.mxu0 %v5794
        %5796 = vmatprep.subr.mxu0 0.0
        %v5797 = vand.u32 %v410, 4294901760
        %5798 = vmatpush1.msra.mxu0 %v5797
        %5799 = vmatprep.subr.mxu0 0.0
        %v5800 = vand.u32 %v411, 4294901760
        %5801 = vmatpush1.msra.mxu0 %v5800
        %5802 = vmatprep.subr.mxu0 0.0
        %v5803 = vand.u32 %v412, 4294901760
        %5804 = vmatpush1.msra.mxu0 %v5803
        %5805 = vmatprep.subr.mxu0 0.0
        %v5806 = vand.u32 %v413, 4294901760
        %5807 = vmatpush1.msra.mxu0 %v5806
        %5808 = vmatprep.subr.mxu0 0.0
        %v5809 = vand.u32 %v414, 4294901760
        %5810 = vmatpush1.msra.mxu0 %v5809
        %5811 = vmatprep.subr.mxu0 0.0
        %v5812 = vand.u32 %v415, 4294901760
        %5813 = vmatpush1.msra.mxu0 %v5812
        %5814 = vmatprep.subr.mxu0 0.0
        %v5815 = vand.u32 %v416, 4294901760
        %5816 = vmatpush1.msra.mxu0 %v5815
        %5817 = vmatprep.subr.mxu0 0.0
        %v5818 = vand.u32 %v417, 4294901760
        %5819 = vmatpush1.msra.mxu0 %v5818
        %5820 = vmatprep.subr.mxu0 0.0
        %v5821 = vand.u32 %v418, 4294901760
        %5822 = vmatpush1.msra.mxu0 %v5821
        %5823 = vmatprep.subr.mxu0 0.0
        %v5824 = vand.u32 %v419, 4294901760
        %5825 = vmatpush1.msra.mxu0 %v5824
        %5826 = vmatprep.subr.mxu0 0.0
        %v5827 = vand.u32 %v420, 4294901760
        %5828 = vmatpush1.msra.mxu0 %v5827
        %5829 = vmatprep.subr.mxu0 0.0
        %5830 = vmatpush1.msra.mxu0 0.0
        %5831 = vmatprep.subr.mxu0 0.0
        %5832 = vmatpush1.msra.mxu0 0.0
        %5833 = vmatprep.subr.mxu0 0.0
        %5834 = vmatpush1.msra.mxu0 0.0
        %5835 = vmatprep.subr.mxu0 0.0
        %5836 = vmatpush1.msra.mxu0 0.0
        %5837 = vmatprep.subr.mxu0 0.0
        %5838 = vmatpush1.msra.mxu0 0.0
        %5839 = vmatprep.subr.mxu0 0.0
        %5840 = vmatpush1.msra.mxu0 0.0
        %5841 = vmatprep.subr.mxu0 0.0
        %5842 = vmatpush1.msra.mxu0 0.0
        %5843 = vmatprep.subr.mxu0 0.0
        %5844 = vmatpush1.msra.mxu0 0.0
        %5845 = vmatprep.subr.mxu0 0.0
        %5846 = vmatpush1.msra.mxu0 0.0
        %5847 = vmatprep.subr.mxu0 0.0
        %5848 = vmatpush1.msra.mxu0 0.0
        %5849 = vmatprep.subr.mxu0 0.0
        %5850 = vmatpush1.msra.mxu0 0.0
        %5851 = vmatprep.subr.mxu0 0.0
        %5852 = vmatpush1.msra.mxu0 0.0
        %5853 = vmatprep.subr.mxu0 0.0
        %5854 = vmatpush1.msra.mxu0 0.0
        %5855 = vmatprep.subr.mxu0 0.0
        %5856 = vmatpush1.msra.mxu0 0.0
        %5857 = vmatprep.subr.mxu0 0.0
        %5858 = vmatpush1.msra.mxu0 0.0
        %5859 = vmatprep.subr.mxu0 0.0
        %5860 = vmatpush1.msra.mxu0 0.0
        %5861 = vmatprep.mubr.f32.mxu0 0.0
        %v5862 = vand.u32 %v5181, 4294901760
        %5863 = vmatmul.mubr.f32.gmra.mrb[0].mxu0 %v5862
        %v5864 = vpop.f32.mrb[0].mxu0
        %v5865 = vadd.f32 %v5772, %v5864
        %v5866 = vpop.f32.mrb[0].mxu0
        %5867 = vmatprep.mubr.f32.mxu0 0.0
        %v5868 = vand.u32 %v5187, 4294901760
        %5869 = vmatmul.mubr.f32.gmra.mrb[0].mxu0 %v5868
        %v5870 = vpop.f32.mrb[0].mxu0
        %v5871 = vadd.f32 %v5778, %v5870
        %v5872 = vpop.f32.mrb[0].mxu0
        %5873 = vdwg.mxu0
        %v5874 = vmul.f32 %v5181, %v5181
        %v5875 = vmul.f32 %v5187, %v5187
        %5876 = vmatprep.subr.mxu0 0.0
        %v5877 = vand.u32 %v405, 4294901760
        %5878 = vmatpush1.msra.mxu0 %v5877
        %5879 = vmatprep.subr.mxu0 0.0
        %v5880 = vand.u32 %v406, 4294901760
        %5881 = vmatpush1.msra.mxu0 %v5880
        %5882 = vmatprep.subr.mxu0 0.0
        %v5883 = vand.u32 %v407, 4294901760
        %5884 = vmatpush1.msra.mxu0 %v5883
        %5885 = vmatprep.subr.mxu0 0.0
        %v5886 = vand.u32 %v408, 4294901760
        %5887 = vmatpush1.msra.mxu0 %v5886
        %5888 = vmatprep.subr.mxu0 0.0
        %v5889 = vand.u32 %v409, 4294901760
        %5890 = vmatpush1.msra.mxu0 %v5889
        %5891 = vmatprep.subr.mxu0 0.0
        %v5892 = vand.u32 %v410, 4294901760
        %5893 = vmatpush1.msra.mxu0 %v5892
        %5894 = vmatprep.subr.mxu0 0.0
        %v5895 = vand.u32 %v411, 4294901760
        %5896 = vmatpush1.msra.mxu0 %v5895
        %5897 = vmatprep.subr.mxu0 0.0
        %v5898 = vand.u32 %v412, 4294901760
        %5899 = vmatpush1.msra.mxu0 %v5898
        %5900 = vmatprep.subr.mxu0 0.0
        %v5901 = vand.u32 %v413, 4294901760
        %5902 = vmatpush1.msra.mxu0 %v5901
        %5903 = vmatprep.subr.mxu0 0.0
        %v5904 = vand.u32 %v414, 4294901760
        %5905 = vmatpush1.msra.mxu0 %v5904
        %5906 = vmatprep.subr.mxu0 0.0
        %v5907 = vand.u32 %v415, 4294901760
        %5908 = vmatpush1.msra.mxu0 %v5907
        %5909 = vmatprep.subr.mxu0 0.0
        %v5910 = vand.u32 %v416, 4294901760
        %5911 = vmatpush1.msra.mxu0 %v5910
        %5912 = vmatprep.subr.mxu0 0.0
        %v5913 = vand.u32 %v417, 4294901760
        %5914 = vmatpush1.msra.mxu0 %v5913
        %5915 = vmatprep.subr.mxu0 0.0
        %v5916 = vand.u32 %v418, 4294901760
        %5917 = vmatpush1.msra.mxu0 %v5916
        %5918 = vmatprep.subr.mxu0 0.0
        %v5919 = vand.u32 %v419, 4294901760
        %5920 = vmatpush1.msra.mxu0 %v5919
        %5921 = vmatprep.subr.mxu0 0.0
        %v5922 = vand.u32 %v420, 4294901760
        %5923 = vmatpush1.msra.mxu0 %v5922
        %5924 = vmatprep.subr.mxu0 0.0
        %5925 = vmatpush1.msra.mxu0 0.0
        %5926 = vmatprep.subr.mxu0 0.0
        %5927 = vmatpush1.msra.mxu0 0.0
        %5928 = vmatprep.subr.mxu0 0.0
        %5929 = vmatpush1.msra.mxu0 0.0
        %5930 = vmatprep.subr.mxu0 0.0
        %5931 = vmatpush1.msra.mxu0 0.0
        %5932 = vmatprep.subr.mxu0 0.0
        %5933 = vmatpush1.msra.mxu0 0.0
        %5934 = vmatprep.subr.mxu0 0.0
        %5935 = vmatpush1.msra.mxu0 0.0
        %5936 = vmatprep.subr.mxu0 0.0
        %5937 = vmatpush1.msra.mxu0 0.0
        %5938 = vmatprep.subr.mxu0 0.0
        %5939 = vmatpush1.msra.mxu0 0.0
        %5940 = vmatprep.subr.mxu0 0.0
        %5941 = vmatpush1.msra.mxu0 0.0
        %5942 = vmatprep.subr.mxu0 0.0
        %5943 = vmatpush1.msra.mxu0 0.0
        %5944 = vmatprep.subr.mxu0 0.0
        %5945 = vmatpush1.msra.mxu0 0.0
        %5946 = vmatprep.subr.mxu0 0.0
        %5947 = vmatpush1.msra.mxu0 0.0
        %5948 = vmatprep.subr.mxu0 0.0
        %5949 = vmatpush1.msra.mxu0 0.0
        %5950 = vmatprep.subr.mxu0 0.0
        %5951 = vmatpush1.msra.mxu0 0.0
        %5952 = vmatprep.subr.mxu0 0.0
        %5953 = vmatpush1.msra.mxu0 0.0
        %5954 = vmatprep.subr.mxu0 0.0
        %5955 = vmatpush1.msra.mxu0 0.0
        %5956 = vmatprep.mubr.f32.mxu0 0.0
        %v5957 = vand.u32 %v5874, 4294901760
        %v5958 = vsub.f32 %v5874, %v5957
        %v5959 = vand.u32 %v5958, 4294901760
        %v5960 = vsub.f32 %v5958, %v5959
        %v5961 = vand.u32 %v5960, 4294901760
        %5962 = vmatmul.mubr.f32.gmra.mrb[0].mxu0 %v5961
        %v5963 = vpop.f32.mrb[0].mxu0
        %v5964 = vadd.f32 0.0, %v5963
        %v5965 = vpop.f32.mrb[0].mxu0
        %5966 = vmatprep.mubr.f32.mxu0 0.0
        %v5967 = vand.u32 %v5875, 4294901760
        %v5968 = vsub.f32 %v5875, %v5967
        %v5969 = vand.u32 %v5968, 4294901760
        %v5970 = vsub.f32 %v5968, %v5969
        %v5971 = vand.u32 %v5970, 4294901760
        %5972 = vmatmul.mubr.f32.gmra.mrb[0].mxu0 %v5971
        %v5973 = vpop.f32.mrb[0].mxu0
        %v5974 = vadd.f32 0.0, %v5973
        %v5975 = vpop.f32.mrb[0].mxu0
        %5976 = vdwg.mxu0
        %5977 = vmatprep.subr.mxu0 0.0
        %v5978 = vand.u32 %v405, 4294901760
        %v5979 = vsub.f32 %v405, %v5978
        %v5980 = vand.u32 %v5979, 4294901760
        %v5981 = vsub.f32 %v5979, %v5980
        %v5982 = vand.u32 %v5981, 4294901760
        %5983 = vmatpush1.msra.mxu0 %v5982
        %5984 = vmatprep.subr.mxu0 0.0
        %v5985 = vand.u32 %v406, 4294901760
        %v5986 = vsub.f32 %v406, %v5985
        %v5987 = vand.u32 %v5986, 4294901760
        %v5988 = vsub.f32 %v5986, %v5987
        %v5989 = vand.u32 %v5988, 4294901760
        %5990 = vmatpush1.msra.mxu0 %v5989
        %5991 = vmatprep.subr.mxu0 0.0
        %v5992 = vand.u32 %v407, 4294901760
        %v5993 = vsub.f32 %v407, %v5992
        %v5994 = vand.u32 %v5993, 4294901760
        %v5995 = vsub.f32 %v5993, %v5994
        %v5996 = vand.u32 %v5995, 4294901760
        %5997 = vmatpush1.msra.mxu0 %v5996
        %5998 = vmatprep.subr.mxu0 0.0
        %v5999 = vand.u32 %v408, 4294901760
        %v6000 = vsub.f32 %v408, %v5999
        %v6001 = vand.u32 %v6000, 4294901760
        %v6002 = vsub.f32 %v6000, %v6001
        %v6003 = vand.u32 %v6002, 4294901760
        %6004 = vmatpush1.msra.mxu0 %v6003
        %6005 = vmatprep.subr.mxu0 0.0
        %v6006 = vand.u32 %v409, 4294901760
        %v6007 = vsub.f32 %v409, %v6006
        %v6008 = vand.u32 %v6007, 4294901760
        %v6009 = vsub.f32 %v6007, %v6008
        %v6010 = vand.u32 %v6009, 4294901760
        %6011 = vmatpush1.msra.mxu0 %v6010
        %6012 = vmatprep.subr.mxu0 0.0
        %v6013 = vand.u32 %v410, 4294901760
        %v6014 = vsub.f32 %v410, %v6013
        %v6015 = vand.u32 %v6014, 4294901760
        %v6016 = vsub.f32 %v6014, %v6015
        %v6017 = vand.u32 %v6016, 4294901760
        %6018 = vmatpush1.msra.mxu0 %v6017
        %6019 = vmatprep.subr.mxu0 0.0
        %v6020 = vand.u32 %v411, 4294901760
        %v6021 = vsub.f32 %v411, %v6020
        %v6022 = vand.u32 %v6021, 4294901760
        %v6023 = vsub.f32 %v6021, %v6022
        %v6024 = vand.u32 %v6023, 4294901760
        %6025 = vmatpush1.msra.mxu0 %v6024
        %6026 = vmatprep.subr.mxu0 0.0
        %v6027 = vand.u32 %v412, 4294901760
        %v6028 = vsub.f32 %v412, %v6027
        %v6029 = vand.u32 %v6028, 4294901760
        %v6030 = vsub.f32 %v6028, %v6029
        %v6031 = vand.u32 %v6030, 4294901760
        %6032 = vmatpush1.msra.mxu0 %v6031
        %6033 = vmatprep.subr.mxu0 0.0
        %v6034 = vand.u32 %v413, 4294901760
        %v6035 = vsub.f32 %v413, %v6034
        %v6036 = vand.u32 %v6035, 4294901760
        %v6037 = vsub.f32 %v6035, %v6036
        %v6038 = vand.u32 %v6037, 4294901760
        %6039 = vmatpush1.msra.mxu0 %v6038
        %6040 = vmatprep.subr.mxu0 0.0
        %v6041 = vand.u32 %v414, 4294901760
        %v6042 = vsub.f32 %v414, %v6041
        %v6043 = vand.u32 %v6042, 4294901760
        %v6044 = vsub.f32 %v6042, %v6043
        %v6045 = vand.u32 %v6044, 4294901760
        %6046 = vmatpush1.msra.mxu0 %v6045
        %6047 = vmatprep.subr.mxu0 0.0
        %v6048 = vand.u32 %v415, 4294901760
        %v6049 = vsub.f32 %v415, %v6048
        %v6050 = vand.u32 %v6049, 4294901760
        %v6051 = vsub.f32 %v6049, %v6050
        %v6052 = vand.u32 %v6051, 4294901760
        %6053 = vmatpush1.msra.mxu0 %v6052
        %6054 = vmatprep.subr.mxu0 0.0
        %v6055 = vand.u32 %v416, 4294901760
        %v6056 = vsub.f32 %v416, %v6055
        %v6057 = vand.u32 %v6056, 4294901760
        %v6058 = vsub.f32 %v6056, %v6057
        %v6059 = vand.u32 %v6058, 4294901760
        %6060 = vmatpush1.msra.mxu0 %v6059
        %6061 = vmatprep.subr.mxu0 0.0
        %v6062 = vand.u32 %v417, 4294901760
        %v6063 = vsub.f32 %v417, %v6062
        %v6064 = vand.u32 %v6063, 4294901760
        %v6065 = vsub.f32 %v6063, %v6064
        %v6066 = vand.u32 %v6065, 4294901760
        %6067 = vmatpush1.msra.mxu0 %v6066
        %6068 = vmatprep.subr.mxu0 0.0
        %v6069 = vand.u32 %v418, 4294901760
        %v6070 = vsub.f32 %v418, %v6069
        %v6071 = vand.u32 %v6070, 4294901760
        %v6072 = vsub.f32 %v6070, %v6071
        %v6073 = vand.u32 %v6072, 4294901760
        %6074 = vmatpush1.msra.mxu0 %v6073
        %6075 = vmatprep.subr.mxu0 0.0
        %v6076 = vand.u32 %v419, 4294901760
        %v6077 = vsub.f32 %v419, %v6076
        %v6078 = vand.u32 %v6077, 4294901760
        %v6079 = vsub.f32 %v6077, %v6078
        %v6080 = vand.u32 %v6079, 4294901760
        %6081 = vmatpush1.msra.mxu0 %v6080
        %6082 = vmatprep.subr.mxu0 0.0
        %v6083 = vand.u32 %v420, 4294901760
        %v6084 = vsub.f32 %v420, %v6083
        %v6085 = vand.u32 %v6084, 4294901760
        %v6086 = vsub.f32 %v6084, %v6085
        %v6087 = vand.u32 %v6086, 4294901760
        %6088 = vmatpush1.msra.mxu0 %v6087
        %6089 = vmatprep.subr.mxu0 0.0
        %6090 = vmatpush1.msra.mxu0 0.0
        %6091 = vmatprep.subr.mxu0 0.0
        %6092 = vmatpush1.msra.mxu0 0.0
        %6093 = vmatprep.subr.mxu0 0.0
        %6094 = vmatpush1.msra.mxu0 0.0
        %6095 = vmatprep.subr.mxu0 0.0
        %6096 = vmatpush1.msra.mxu0 0.0
        %6097 = vmatprep.subr.mxu0 0.0
        %6098 = vmatpush1.msra.mxu0 0.0
        %6099 = vmatprep.subr.mxu0 0.0
        %6100 = vmatpush1.msra.mxu0 0.0
        %6101 = vmatprep.subr.mxu0 0.0
        %6102 = vmatpush1.msra.mxu0 0.0
        %6103 = vmatprep.subr.mxu0 0.0
        %6104 = vmatpush1.msra.mxu0 0.0
        %6105 = vmatprep.subr.mxu0 0.0
        %6106 = vmatpush1.msra.mxu0 0.0
        %6107 = vmatprep.subr.mxu0 0.0
        %6108 = vmatpush1.msra.mxu0 0.0
        %6109 = vmatprep.subr.mxu0 0.0
        %6110 = vmatpush1.msra.mxu0 0.0
        %6111 = vmatprep.subr.mxu0 0.0
        %6112 = vmatpush1.msra.mxu0 0.0
        %6113 = vmatprep.subr.mxu0 0.0
        %6114 = vmatpush1.msra.mxu0 0.0
        %6115 = vmatprep.subr.mxu0 0.0
        %6116 = vmatpush1.msra.mxu0 0.0
        %6117 = vmatprep.subr.mxu0 0.0
        %6118 = vmatpush1.msra.mxu0 0.0
        %6119 = vmatprep.subr.mxu0 0.0
        %6120 = vmatpush1.msra.mxu0 0.0
        %6121 = vmatprep.mubr.f32.mxu0 0.0
        %v6122 = vand.u32 %v5874, 4294901760
        %6123 = vmatmul.mubr.f32.gmra.mrb[0].mxu0 %v6122
        %v6124 = vpop.f32.mrb[0].mxu0
        %v6125 = vadd.f32 %v5964, %v6124
        %v6126 = vpop.f32.mrb[0].mxu0
        %6127 = vmatprep.mubr.f32.mxu0 0.0
        %v6128 = vand.u32 %v5875, 4294901760
        %6129 = vmatmul.mubr.f32.gmra.mrb[0].mxu0 %v6128
        %v6130 = vpop.f32.mrb[0].mxu0
        %v6131 = vadd.f32 %v5974, %v6130
        %v6132 = vpop.f32.mrb[0].mxu0
        %6133 = vdwg.mxu0
        %6134 = vmatprep.subr.mxu0 0.0
        %v6135 = vand.u32 %v405, 4294901760
        %v6136 = vsub.f32 %v405, %v6135
        %6137 = vmatpush1.msra.mxu0 %v6136
        %6138 = vmatprep.subr.mxu0 0.0
        %v6139 = vand.u32 %v406, 4294901760
        %v6140 = vsub.f32 %v406, %v6139
        %6141 = vmatpush1.msra.mxu0 %v6140
        %6142 = vmatprep.subr.mxu0 0.0
        %v6143 = vand.u32 %v407, 4294901760
        %v6144 = vsub.f32 %v407, %v6143
        %6145 = vmatpush1.msra.mxu0 %v6144
        %6146 = vmatprep.subr.mxu0 0.0
        %v6147 = vand.u32 %v408, 4294901760
        %v6148 = vsub.f32 %v408, %v6147
        %6149 = vmatpush1.msra.mxu0 %v6148
        %6150 = vmatprep.subr.mxu0 0.0
        %v6151 = vand.u32 %v409, 4294901760
        %v6152 = vsub.f32 %v409, %v6151
        %6153 = vmatpush1.msra.mxu0 %v6152
        %6154 = vmatprep.subr.mxu0 0.0
        %v6155 = vand.u32 %v410, 4294901760
        %v6156 = vsub.f32 %v410, %v6155
        %6157 = vmatpush1.msra.mxu0 %v6156
        %6158 = vmatprep.subr.mxu0 0.0
        %v6159 = vand.u32 %v411, 4294901760
        %v6160 = vsub.f32 %v411, %v6159
        %6161 = vmatpush1.msra.mxu0 %v6160
        %6162 = vmatprep.subr.mxu0 0.0
        %v6163 = vand.u32 %v412, 4294901760
        %v6164 = vsub.f32 %v412, %v6163
        %6165 = vmatpush1.msra.mxu0 %v6164
        %6166 = vmatprep.subr.mxu0 0.0
        %v6167 = vand.u32 %v413, 4294901760
        %v6168 = vsub.f32 %v413, %v6167
        %6169 = vmatpush1.msra.mxu0 %v6168
        %6170 = vmatprep.subr.mxu0 0.0
        %v6171 = vand.u32 %v414, 4294901760
        %v6172 = vsub.f32 %v414, %v6171
        %6173 = vmatpush1.msra.mxu0 %v6172
        %6174 = vmatprep.subr.mxu0 0.0
        %v6175 = vand.u32 %v415, 4294901760
        %v6176 = vsub.f32 %v415, %v6175
        %6177 = vmatpush1.msra.mxu0 %v6176
        %6178 = vmatprep.subr.mxu0 0.0
        %v6179 = vand.u32 %v416, 4294901760
        %v6180 = vsub.f32 %v416, %v6179
        %6181 = vmatpush1.msra.mxu0 %v6180
        %6182 = vmatprep.subr.mxu0 0.0
        %v6183 = vand.u32 %v417, 4294901760
        %v6184 = vsub.f32 %v417, %v6183
        %6185 = vmatpush1.msra.mxu0 %v6184
        %6186 = vmatprep.subr.mxu0 0.0
        %v6187 = vand.u32 %v418, 4294901760
        %v6188 = vsub.f32 %v418, %v6187
        %6189 = vmatpush1.msra.mxu0 %v6188
        %6190 = vmatprep.subr.mxu0 0.0
        %v6191 = vand.u32 %v419, 4294901760
        %v6192 = vsub.f32 %v419, %v6191
        %6193 = vmatpush1.msra.mxu0 %v6192
        %6194 = vmatprep.subr.mxu0 0.0
        %v6195 = vand.u32 %v420, 4294901760
        %v6196 = vsub.f32 %v420, %v6195
        %6197 = vmatpush1.msra.mxu0 %v6196
        %6198 = vmatprep.subr.mxu0 0.0
        %6199 = vmatpush1.msra.mxu0 0.0
        %6200 = vmatprep.subr.mxu0 0.0
        %6201 = vmatpush1.msra.mxu0 0.0
        %6202 = vmatprep.subr.mxu0 0.0
        %6203 = vmatpush1.msra.mxu0 0.0
        %6204 = vmatprep.subr.mxu0 0.0
        %6205 = vmatpush1.msra.mxu0 0.0
        %6206 = vmatprep.subr.mxu0 0.0
        %6207 = vmatpush1.msra.mxu0 0.0
        %6208 = vmatprep.subr.mxu0 0.0
        %6209 = vmatpush1.msra.mxu0 0.0
        %6210 = vmatprep.subr.mxu0 0.0
        %6211 = vmatpush1.msra.mxu0 0.0
        %6212 = vmatprep.subr.mxu0 0.0
        %6213 = vmatpush1.msra.mxu0 0.0
        %6214 = vmatprep.subr.mxu0 0.0
        %6215 = vmatpush1.msra.mxu0 0.0
        %6216 = vmatprep.subr.mxu0 0.0
        %6217 = vmatpush1.msra.mxu0 0.0
        %6218 = vmatprep.subr.mxu0 0.0
        %6219 = vmatpush1.msra.mxu0 0.0
        %6220 = vmatprep.subr.mxu0 0.0
        %6221 = vmatpush1.msra.mxu0 0.0
        %6222 = vmatprep.subr.mxu0 0.0
        %6223 = vmatpush1.msra.mxu0 0.0
        %6224 = vmatprep.subr.mxu0 0.0
        %6225 = vmatpush1.msra.mxu0 0.0
        %6226 = vmatprep.subr.mxu0 0.0
        %6227 = vmatpush1.msra.mxu0 0.0
        %6228 = vmatprep.subr.mxu0 0.0
        %6229 = vmatpush1.msra.mxu0 0.0
        %6230 = vmatprep.mubr.f32.mxu0 0.0
        %v6231 = vand.u32 %v5874, 4294901760
        %v6232 = vsub.f32 %v5874, %v6231
        %6233 = vmatmul.mubr.f32.gmra.mrb[0].mxu0 %v6232
        %v6234 = vpop.f32.mrb[0].mxu0
        %v6235 = vadd.f32 %v6125, %v6234
        %v6236 = vpop.f32.mrb[0].mxu0
        %6237 = vmatprep.mubr.f32.mxu0 0.0
        %v6238 = vand.u32 %v5875, 4294901760
        %v6239 = vsub.f32 %v5875, %v6238
        %6240 = vmatmul.mubr.f32.gmra.mrb[0].mxu0 %v6239
        %v6241 = vpop.f32.mrb[0].mxu0
        %v6242 = vadd.f32 %v6131, %v6241
        %v6243 = vpop.f32.mrb[0].mxu0
        %6244 = vdwg.mxu0
        %6245 = vmatprep.subr.mxu0 0.0
        %v6246 = vand.u32 %v405, 4294901760
        %6247 = vmatpush1.msra.mxu0 %v6246
        %6248 = vmatprep.subr.mxu0 0.0
        %v6249 = vand.u32 %v406, 4294901760
        %6250 = vmatpush1.msra.mxu0 %v6249
        %6251 = vmatprep.subr.mxu0 0.0
        %v6252 = vand.u32 %v407, 4294901760
        %6253 = vmatpush1.msra.mxu0 %v6252
        %6254 = vmatprep.subr.mxu0 0.0
        %v6255 = vand.u32 %v408, 4294901760
        %6256 = vmatpush1.msra.mxu0 %v6255
        %6257 = vmatprep.subr.mxu0 0.0
        %v6258 = vand.u32 %v409, 4294901760
        %6259 = vmatpush1.msra.mxu0 %v6258
        %6260 = vmatprep.subr.mxu0 0.0
        %v6261 = vand.u32 %v410, 4294901760
        %6262 = vmatpush1.msra.mxu0 %v6261
        %6263 = vmatprep.subr.mxu0 0.0
        %v6264 = vand.u32 %v411, 4294901760
        %6265 = vmatpush1.msra.mxu0 %v6264
        %6266 = vmatprep.subr.mxu0 0.0
        %v6267 = vand.u32 %v412, 4294901760
        %6268 = vmatpush1.msra.mxu0 %v6267
        %6269 = vmatprep.subr.mxu0 0.0
        %v6270 = vand.u32 %v413, 4294901760
        %6271 = vmatpush1.msra.mxu0 %v6270
        %6272 = vmatprep.subr.mxu0 0.0
        %v6273 = vand.u32 %v414, 4294901760
        %6274 = vmatpush1.msra.mxu0 %v6273
        %6275 = vmatprep.subr.mxu0 0.0
        %v6276 = vand.u32 %v415, 4294901760
        %6277 = vmatpush1.msra.mxu0 %v6276
        %6278 = vmatprep.subr.mxu0 0.0
        %v6279 = vand.u32 %v416, 4294901760
        %6280 = vmatpush1.msra.mxu0 %v6279
        %6281 = vmatprep.subr.mxu0 0.0
        %v6282 = vand.u32 %v417, 4294901760
        %6283 = vmatpush1.msra.mxu0 %v6282
        %6284 = vmatprep.subr.mxu0 0.0
        %v6285 = vand.u32 %v418, 4294901760
        %6286 = vmatpush1.msra.mxu0 %v6285
        %6287 = vmatprep.subr.mxu0 0.0
        %v6288 = vand.u32 %v419, 4294901760
        %6289 = vmatpush1.msra.mxu0 %v6288
        %6290 = vmatprep.subr.mxu0 0.0
        %v6291 = vand.u32 %v420, 4294901760
        %6292 = vmatpush1.msra.mxu0 %v6291
        %6293 = vmatprep.subr.mxu0 0.0
        %6294 = vmatpush1.msra.mxu0 0.0
        %6295 = vmatprep.subr.mxu0 0.0
        %6296 = vmatpush1.msra.mxu0 0.0
        %6297 = vmatprep.subr.mxu0 0.0
        %6298 = vmatpush1.msra.mxu0 0.0
        %6299 = vmatprep.subr.mxu0 0.0
        %6300 = vmatpush1.msra.mxu0 0.0
        %6301 = vmatprep.subr.mxu0 0.0
        %6302 = vmatpush1.msra.mxu0 0.0
        %6303 = vmatprep.subr.mxu0 0.0
        %6304 = vmatpush1.msra.mxu0 0.0
        %6305 = vmatprep.subr.mxu0 0.0
        %6306 = vmatpush1.msra.mxu0 0.0
        %6307 = vmatprep.subr.mxu0 0.0
        %6308 = vmatpush1.msra.mxu0 0.0
        %6309 = vmatprep.subr.mxu0 0.0
        %6310 = vmatpush1.msra.mxu0 0.0
        %6311 = vmatprep.subr.mxu0 0.0
        %6312 = vmatpush1.msra.mxu0 0.0
        %6313 = vmatprep.subr.mxu0 0.0
        %6314 = vmatpush1.msra.mxu0 0.0
        %6315 = vmatprep.subr.mxu0 0.0
        %6316 = vmatpush1.msra.mxu0 0.0
        %6317 = vmatprep.subr.mxu0 0.0
        %6318 = vmatpush1.msra.mxu0 0.0
        %6319 = vmatprep.subr.mxu0 0.0
        %6320 = vmatpush1.msra.mxu0 0.0
        %6321 = vmatprep.subr.mxu0 0.0
        %6322 = vmatpush1.msra.mxu0 0.0
        %6323 = vmatprep.subr.mxu0 0.0
        %6324 = vmatpush1.msra.mxu0 0.0
        %6325 = vmatprep.mubr.f32.mxu0 0.0
        %v6326 = vand.u32 %v5874, 4294901760
        %v6327 = vsub.f32 %v5874, %v6326
        %v6328 = vand.u32 %v6327, 4294901760
        %6329 = vmatmul.mubr.f32.gmra.mrb[0].mxu0 %v6328
        %v6330 = vpop.f32.mrb[0].mxu0
        %v6331 = vadd.f32 %v6235, %v6330
        %v6332 = vpop.f32.mrb[0].mxu0
        %6333 = vmatprep.mubr.f32.mxu0 0.0
        %v6334 = vand.u32 %v5875, 4294901760
        %v6335 = vsub.f32 %v5875, %v6334
        %v6336 = vand.u32 %v6335, 4294901760
        %6337 = vmatmul.mubr.f32.gmra.mrb[0].mxu0 %v6336
        %v6338 = vpop.f32.mrb[0].mxu0
        %v6339 = vadd.f32 %v6242, %v6338
        %v6340 = vpop.f32.mrb[0].mxu0
        %6341 = vdwg.mxu0
        %6342 = vmatprep.subr.mxu0 0.0
        %v6343 = vand.u32 %v405, 4294901760
        %v6344 = vsub.f32 %v405, %v6343
        %v6345 = vand.u32 %v6344, 4294901760
        %6346 = vmatpush1.msra.mxu0 %v6345
        %6347 = vmatprep.subr.mxu0 0.0
        %v6348 = vand.u32 %v406, 4294901760
        %v6349 = vsub.f32 %v406, %v6348
        %v6350 = vand.u32 %v6349, 4294901760
        %6351 = vmatpush1.msra.mxu0 %v6350
        %6352 = vmatprep.subr.mxu0 0.0
        %v6353 = vand.u32 %v407, 4294901760
        %v6354 = vsub.f32 %v407, %v6353
        %v6355 = vand.u32 %v6354, 4294901760
        %6356 = vmatpush1.msra.mxu0 %v6355
        %6357 = vmatprep.subr.mxu0 0.0
        %v6358 = vand.u32 %v408, 4294901760
        %v6359 = vsub.f32 %v408, %v6358
        %v6360 = vand.u32 %v6359, 4294901760
        %6361 = vmatpush1.msra.mxu0 %v6360
        %6362 = vmatprep.subr.mxu0 0.0
        %v6363 = vand.u32 %v409, 4294901760
        %v6364 = vsub.f32 %v409, %v6363
        %v6365 = vand.u32 %v6364, 4294901760
        %6366 = vmatpush1.msra.mxu0 %v6365
        %6367 = vmatprep.subr.mxu0 0.0
        %v6368 = vand.u32 %v410, 4294901760
        %v6369 = vsub.f32 %v410, %v6368
        %v6370 = vand.u32 %v6369, 4294901760
        %6371 = vmatpush1.msra.mxu0 %v6370
        %6372 = vmatprep.subr.mxu0 0.0
        %v6373 = vand.u32 %v411, 4294901760
        %v6374 = vsub.f32 %v411, %v6373
        %v6375 = vand.u32 %v6374, 4294901760
        %6376 = vmatpush1.msra.mxu0 %v6375
        %6377 = vmatprep.subr.mxu0 0.0
        %v6378 = vand.u32 %v412, 4294901760
        %v6379 = vsub.f32 %v412, %v6378
        %v6380 = vand.u32 %v6379, 4294901760
        %6381 = vmatpush1.msra.mxu0 %v6380
        %6382 = vmatprep.subr.mxu0 0.0
        %v6383 = vand.u32 %v413, 4294901760
        %v6384 = vsub.f32 %v413, %v6383
        %v6385 = vand.u32 %v6384, 4294901760
        %6386 = vmatpush1.msra.mxu0 %v6385
        %6387 = vmatprep.subr.mxu0 0.0
        %v6388 = vand.u32 %v414, 4294901760
        %v6389 = vsub.f32 %v414, %v6388
        %v6390 = vand.u32 %v6389, 4294901760
        %6391 = vmatpush1.msra.mxu0 %v6390
        %6392 = vmatprep.subr.mxu0 0.0
        %v6393 = vand.u32 %v415, 4294901760
        %v6394 = vsub.f32 %v415, %v6393
        %v6395 = vand.u32 %v6394, 4294901760
        %6396 = vmatpush1.msra.mxu0 %v6395
        %6397 = vmatprep.subr.mxu0 0.0
        %v6398 = vand.u32 %v416, 4294901760
        %v6399 = vsub.f32 %v416, %v6398
        %v6400 = vand.u32 %v6399, 4294901760
        %6401 = vmatpush1.msra.mxu0 %v6400
        %6402 = vmatprep.subr.mxu0 0.0
        %v6403 = vand.u32 %v417, 4294901760
        %v6404 = vsub.f32 %v417, %v6403
        %v6405 = vand.u32 %v6404, 4294901760
        %6406 = vmatpush1.msra.mxu0 %v6405
        %6407 = vmatprep.subr.mxu0 0.0
        %v6408 = vand.u32 %v418, 4294901760
        %v6409 = vsub.f32 %v418, %v6408
        %v6410 = vand.u32 %v6409, 4294901760
        %6411 = vmatpush1.msra.mxu0 %v6410
        %6412 = vmatprep.subr.mxu0 0.0
        %v6413 = vand.u32 %v419, 4294901760
        %v6414 = vsub.f32 %v419, %v6413
        %v6415 = vand.u32 %v6414, 4294901760
        %6416 = vmatpush1.msra.mxu0 %v6415
        %6417 = vmatprep.subr.mxu0 0.0
        %v6418 = vand.u32 %v420, 4294901760
        %v6419 = vsub.f32 %v420, %v6418
        %v6420 = vand.u32 %v6419, 4294901760
        %6421 = vmatpush1.msra.mxu0 %v6420
        %6422 = vmatprep.subr.mxu0 0.0
        %6423 = vmatpush1.msra.mxu0 0.0
        %6424 = vmatprep.subr.mxu0 0.0
        %6425 = vmatpush1.msra.mxu0 0.0
        %6426 = vmatprep.subr.mxu0 0.0
        %6427 = vmatpush1.msra.mxu0 0.0
        %6428 = vmatprep.subr.mxu0 0.0
        %6429 = vmatpush1.msra.mxu0 0.0
        %6430 = vmatprep.subr.mxu0 0.0
        %6431 = vmatpush1.msra.mxu0 0.0
        %6432 = vmatprep.subr.mxu0 0.0
        %6433 = vmatpush1.msra.mxu0 0.0
        %6434 = vmatprep.subr.mxu0 0.0
        %6435 = vmatpush1.msra.mxu0 0.0
        %6436 = vmatprep.subr.mxu0 0.0
        %6437 = vmatpush1.msra.mxu0 0.0
        %6438 = vmatprep.subr.mxu0 0.0
        %6439 = vmatpush1.msra.mxu0 0.0
        %6440 = vmatprep.subr.mxu0 0.0
        %6441 = vmatpush1.msra.mxu0 0.0
        %6442 = vmatprep.subr.mxu0 0.0
        %6443 = vmatpush1.msra.mxu0 0.0
        %6444 = vmatprep.subr.mxu0 0.0
        %6445 = vmatpush1.msra.mxu0 0.0
        %6446 = vmatprep.subr.mxu0 0.0
        %6447 = vmatpush1.msra.mxu0 0.0
        %6448 = vmatprep.subr.mxu0 0.0
        %6449 = vmatpush1.msra.mxu0 0.0
        %6450 = vmatprep.subr.mxu0 0.0
        %6451 = vmatpush1.msra.mxu0 0.0
        %6452 = vmatprep.subr.mxu0 0.0
        %6453 = vmatpush1.msra.mxu0 0.0
        %6454 = vmatprep.mubr.f32.mxu0 0.0
        %v6455 = vand.u32 %v5874, 4294901760
        %6456 = vmatmul.mubr.f32.gmra.mrb[0].mxu0 %v6455
        %v6457 = vpop.f32.mrb[0].mxu0
        %v6458 = vadd.f32 %v6331, %v6457
        %v6459 = vpop.f32.mrb[0].mxu0
        %6460 = vmatprep.mubr.f32.mxu0 0.0
        %v6461 = vand.u32 %v5875, 4294901760
        %6462 = vmatmul.mubr.f32.gmra.mrb[0].mxu0 %v6461
        %v6463 = vpop.f32.mrb[0].mxu0
        %v6464 = vadd.f32 %v6339, %v6463
        %v6465 = vpop.f32.mrb[0].mxu0
        %6466 = vdwg.mxu0
        %6467 = vmatprep.subr.mxu0 0.0
        %v6468 = vand.u32 %v405, 4294901760
        %6469 = vmatpush1.msra.mxu0 %v6468
        %6470 = vmatprep.subr.mxu0 0.0
        %v6471 = vand.u32 %v406, 4294901760
        %6472 = vmatpush1.msra.mxu0 %v6471
        %6473 = vmatprep.subr.mxu0 0.0
        %v6474 = vand.u32 %v407, 4294901760
        %6475 = vmatpush1.msra.mxu0 %v6474
        %6476 = vmatprep.subr.mxu0 0.0
        %v6477 = vand.u32 %v408, 4294901760
        %6478 = vmatpush1.msra.mxu0 %v6477
        %6479 = vmatprep.subr.mxu0 0.0
        %v6480 = vand.u32 %v409, 4294901760
        %6481 = vmatpush1.msra.mxu0 %v6480
        %6482 = vmatprep.subr.mxu0 0.0
        %v6483 = vand.u32 %v410, 4294901760
        %6484 = vmatpush1.msra.mxu0 %v6483
        %6485 = vmatprep.subr.mxu0 0.0
        %v6486 = vand.u32 %v411, 4294901760
        %6487 = vmatpush1.msra.mxu0 %v6486
        %6488 = vmatprep.subr.mxu0 0.0
        %v6489 = vand.u32 %v412, 4294901760
        %6490 = vmatpush1.msra.mxu0 %v6489
        %6491 = vmatprep.subr.mxu0 0.0
        %v6492 = vand.u32 %v413, 4294901760
        %6493 = vmatpush1.msra.mxu0 %v6492
        %6494 = vmatprep.subr.mxu0 0.0
        %v6495 = vand.u32 %v414, 4294901760
        %6496 = vmatpush1.msra.mxu0 %v6495
        %6497 = vmatprep.subr.mxu0 0.0
        %v6498 = vand.u32 %v415, 4294901760
        %6499 = vmatpush1.msra.mxu0 %v6498
        %6500 = vmatprep.subr.mxu0 0.0
        %v6501 = vand.u32 %v416, 4294901760
        %6502 = vmatpush1.msra.mxu0 %v6501
        %6503 = vmatprep.subr.mxu0 0.0
        %v6504 = vand.u32 %v417, 4294901760
        %6505 = vmatpush1.msra.mxu0 %v6504
        %6506 = vmatprep.subr.mxu0 0.0
        %v6507 = vand.u32 %v418, 4294901760
        %6508 = vmatpush1.msra.mxu0 %v6507
        %6509 = vmatprep.subr.mxu0 0.0
        %v6510 = vand.u32 %v419, 4294901760
        %6511 = vmatpush1.msra.mxu0 %v6510
        %6512 = vmatprep.subr.mxu0 0.0
        %v6513 = vand.u32 %v420, 4294901760
        %6514 = vmatpush1.msra.mxu0 %v6513
        %6515 = vmatprep.subr.mxu0 0.0
        %6516 = vmatpush1.msra.mxu0 0.0
        %6517 = vmatprep.subr.mxu0 0.0
        %6518 = vmatpush1.msra.mxu0 0.0
        %6519 = vmatprep.subr.mxu0 0.0
        %6520 = vmatpush1.msra.mxu0 0.0
        %6521 = vmatprep.subr.mxu0 0.0
        %6522 = vmatpush1.msra.mxu0 0.0
        %6523 = vmatprep.subr.mxu0 0.0
        %6524 = vmatpush1.msra.mxu0 0.0
        %6525 = vmatprep.subr.mxu0 0.0
        %6526 = vmatpush1.msra.mxu0 0.0
        %6527 = vmatprep.subr.mxu0 0.0
        %6528 = vmatpush1.msra.mxu0 0.0
        %6529 = vmatprep.subr.mxu0 0.0
        %6530 = vmatpush1.msra.mxu0 0.0
        %6531 = vmatprep.subr.mxu0 0.0
        %6532 = vmatpush1.msra.mxu0 0.0
        %6533 = vmatprep.subr.mxu0 0.0
        %6534 = vmatpush1.msra.mxu0 0.0
        %6535 = vmatprep.subr.mxu0 0.0
        %6536 = vmatpush1.msra.mxu0 0.0
        %6537 = vmatprep.subr.mxu0 0.0
        %6538 = vmatpush1.msra.mxu0 0.0
        %6539 = vmatprep.subr.mxu0 0.0
        %6540 = vmatpush1.msra.mxu0 0.0
        %6541 = vmatprep.subr.mxu0 0.0
        %6542 = vmatpush1.msra.mxu0 0.0
        %6543 = vmatprep.subr.mxu0 0.0
        %6544 = vmatpush1.msra.mxu0 0.0
        %6545 = vmatprep.subr.mxu0 0.0
        %6546 = vmatpush1.msra.mxu0 0.0
        %6547 = vmatprep.mubr.f32.mxu0 0.0
        %v6548 = vand.u32 %v5874, 4294901760
        %6549 = vmatmul.mubr.f32.gmra.mrb[0].mxu0 %v6548
        %v6550 = vpop.f32.mrb[0].mxu0
        %v6551 = vadd.f32 %v6458, %v6550
        %v6552 = vpop.f32.mrb[0].mxu0
        %6553 = vmatprep.mubr.f32.mxu0 0.0
        %v6554 = vand.u32 %v5875, 4294901760
        %6555 = vmatmul.mubr.f32.gmra.mrb[0].mxu0 %v6554
        %v6556 = vpop.f32.mrb[0].mxu0
        %v6557 = vadd.f32 %v6464, %v6556
        %v6558 = vpop.f32.mrb[0].mxu0
        %6559 = vdwg.mxu0
        %6560 = vmatprep.subr.mxu0 0.0
        %v6561 = vand.u32 %v5865, 4294901760
        %6562 = vmatpush1.msra.mxu0 %v6561
        %6563 = vmatprep.subr.mxu0 0.0
        %v6564 = vand.u32 %v5871, 4294901760
        %6565 = vmatpush1.msra.mxu0 %v6564
        %6566 = vmatprep.subr.mxu0 0.0
        %6567 = vmatpush1.msra.mxu0 0.0
        %6568 = vmatprep.subr.mxu0 0.0
        %6569 = vmatpush1.msra.mxu0 0.0
        %6570 = vmatprep.subr.mxu0 0.0
        %6571 = vmatpush1.msra.mxu0 0.0
        %6572 = vmatprep.subr.mxu0 0.0
        %6573 = vmatpush1.msra.mxu0 0.0
        %6574 = vmatprep.subr.mxu0 0.0
        %6575 = vmatpush1.msra.mxu0 0.0
        %6576 = vmatprep.subr.mxu0 0.0
        %6577 = vmatpush1.msra.mxu0 0.0
        %6578 = vmatprep.subr.mxu0 0.0
        %6579 = vmatpush1.msra.mxu0 0.0
        %6580 = vmatprep.subr.mxu0 0.0
        %6581 = vmatpush1.msra.mxu0 0.0
        %6582 = vmatprep.subr.mxu0 0.0
        %6583 = vmatpush1.msra.mxu0 0.0
        %6584 = vmatprep.subr.mxu0 0.0
        %6585 = vmatpush1.msra.mxu0 0.0
        %6586 = vmatprep.subr.mxu0 0.0
        %6587 = vmatpush1.msra.mxu0 0.0
        %6588 = vmatprep.subr.mxu0 0.0
        %6589 = vmatpush1.msra.mxu0 0.0
        %6590 = vmatprep.subr.mxu0 0.0
        %6591 = vmatpush1.msra.mxu0 0.0
        %6592 = vmatprep.subr.mxu0 0.0
        %6593 = vmatpush1.msra.mxu0 0.0
        %6594 = vmatprep.subr.mxu0 0.0
        %6595 = vmatpush1.msra.mxu0 0.0
        %6596 = vmatprep.subr.mxu0 0.0
        %6597 = vmatpush1.msra.mxu0 0.0
        %6598 = vmatprep.subr.mxu0 0.0
        %6599 = vmatpush1.msra.mxu0 0.0
        %6600 = vmatprep.subr.mxu0 0.0
        %6601 = vmatpush1.msra.mxu0 0.0
        %6602 = vmatprep.subr.mxu0 0.0
        %6603 = vmatpush1.msra.mxu0 0.0
        %6604 = vmatprep.subr.mxu0 0.0
        %6605 = vmatpush1.msra.mxu0 0.0
        %6606 = vmatprep.subr.mxu0 0.0
        %6607 = vmatpush1.msra.mxu0 0.0
        %6608 = vmatprep.subr.mxu0 0.0
        %6609 = vmatpush1.msra.mxu0 0.0
        %6610 = vmatprep.subr.mxu0 0.0
        %6611 = vmatpush1.msra.mxu0 0.0
        %6612 = vmatprep.subr.mxu0 0.0
        %6613 = vmatpush1.msra.mxu0 0.0
        %6614 = vmatprep.subr.mxu0 0.0
        %6615 = vmatpush1.msra.mxu0 0.0
        %6616 = vmatprep.subr.mxu0 0.0
        %6617 = vmatpush1.msra.mxu0 0.0
        %6618 = vmatprep.subr.mxu0 0.0
        %6619 = vmatpush1.msra.mxu0 0.0
        %6620 = vmatprep.subr.mxu0 0.0
        %6621 = vmatpush1.msra.mxu0 0.0
        %6622 = vmatprep.subr.mxu0 0.0
        %6623 = vmatpush1.msra.mxu0 0.0
        %6624 = vmatprep.subr.mxu0 0.0
        %6625 = vmatpush1.msra.mxu0 0.0
        %6626 = vmatprep.mubr.f32.mxu0 0.0
        %v6627 = vand.u32 %v2440, 4294901760
        %v6628 = vsub.f32 %v2440, %v6627
        %v6629 = vand.u32 %v6628, 4294901760
        %v6630 = vsub.f32 %v6628, %v6629
        %v6631 = vand.u32 %v6630, 4294901760
        %6632 = vmatmul.mubr.f32.gmra.mrb[0].mxu0 %v6631
        %v6633 = vpop.f32.mrb[0].mxu0
        %v6634 = vadd.f32 0.0, %v6633
        %v6635 = vpop.f32.mrb[0].mxu0
        %6636 = vmatprep.mubr.f32.mxu0 0.0
        %v6637 = vand.u32 %v2443, 4294901760
        %v6638 = vsub.f32 %v2443, %v6637
        %v6639 = vand.u32 %v6638, 4294901760
        %v6640 = vsub.f32 %v6638, %v6639
        %v6641 = vand.u32 %v6640, 4294901760
        %6642 = vmatmul.mubr.f32.gmra.mrb[0].mxu0 %v6641
        %v6643 = vpop.f32.mrb[0].mxu0
        %v6644 = vadd.f32 0.0, %v6643
        %v6645 = vpop.f32.mrb[0].mxu0
        %6646 = vdwg.mxu0
        %6647 = vmatprep.subr.mxu0 0.0
        %v6648 = vand.u32 %v5865, 4294901760
        %v6649 = vsub.f32 %v5865, %v6648
        %v6650 = vand.u32 %v6649, 4294901760
        %v6651 = vsub.f32 %v6649, %v6650
        %v6652 = vand.u32 %v6651, 4294901760
        %6653 = vmatpush1.msra.mxu0 %v6652
        %6654 = vmatprep.subr.mxu0 0.0
        %v6655 = vand.u32 %v5871, 4294901760
        %v6656 = vsub.f32 %v5871, %v6655
        %v6657 = vand.u32 %v6656, 4294901760
        %v6658 = vsub.f32 %v6656, %v6657
        %v6659 = vand.u32 %v6658, 4294901760
        %6660 = vmatpush1.msra.mxu0 %v6659
        %6661 = vmatprep.subr.mxu0 0.0
        %6662 = vmatpush1.msra.mxu0 0.0
        %6663 = vmatprep.subr.mxu0 0.0
        %6664 = vmatpush1.msra.mxu0 0.0
        %6665 = vmatprep.subr.mxu0 0.0
        %6666 = vmatpush1.msra.mxu0 0.0
        %6667 = vmatprep.subr.mxu0 0.0
        %6668 = vmatpush1.msra.mxu0 0.0
        %6669 = vmatprep.subr.mxu0 0.0
        %6670 = vmatpush1.msra.mxu0 0.0
        %6671 = vmatprep.subr.mxu0 0.0
        %6672 = vmatpush1.msra.mxu0 0.0
        %6673 = vmatprep.subr.mxu0 0.0
        %6674 = vmatpush1.msra.mxu0 0.0
        %6675 = vmatprep.subr.mxu0 0.0
        %6676 = vmatpush1.msra.mxu0 0.0
        %6677 = vmatprep.subr.mxu0 0.0
        %6678 = vmatpush1.msra.mxu0 0.0
        %6679 = vmatprep.subr.mxu0 0.0
        %6680 = vmatpush1.msra.mxu0 0.0
        %6681 = vmatprep.subr.mxu0 0.0
        %6682 = vmatpush1.msra.mxu0 0.0
        %6683 = vmatprep.subr.mxu0 0.0
        %6684 = vmatpush1.msra.mxu0 0.0
        %6685 = vmatprep.subr.mxu0 0.0
        %6686 = vmatpush1.msra.mxu0 0.0
        %6687 = vmatprep.subr.mxu0 0.0
        %6688 = vmatpush1.msra.mxu0 0.0
        %6689 = vmatprep.subr.mxu0 0.0
        %6690 = vmatpush1.msra.mxu0 0.0
        %6691 = vmatprep.subr.mxu0 0.0
        %6692 = vmatpush1.msra.mxu0 0.0
        %6693 = vmatprep.subr.mxu0 0.0
        %6694 = vmatpush1.msra.mxu0 0.0
        %6695 = vmatprep.subr.mxu0 0.0
        %6696 = vmatpush1.msra.mxu0 0.0
        %6697 = vmatprep.subr.mxu0 0.0
        %6698 = vmatpush1.msra.mxu0 0.0
        %6699 = vmatprep.subr.mxu0 0.0
        %6700 = vmatpush1.msra.mxu0 0.0
        %6701 = vmatprep.subr.mxu0 0.0
        %6702 = vmatpush1.msra.mxu0 0.0
        %6703 = vmatprep.subr.mxu0 0.0
        %6704 = vmatpush1.msra.mxu0 0.0
        %6705 = vmatprep.subr.mxu0 0.0
        %6706 = vmatpush1.msra.mxu0 0.0
        %6707 = vmatprep.subr.mxu0 0.0
        %6708 = vmatpush1.msra.mxu0 0.0
        %6709 = vmatprep.subr.mxu0 0.0
        %6710 = vmatpush1.msra.mxu0 0.0
        %6711 = vmatprep.subr.mxu0 0.0
        %6712 = vmatpush1.msra.mxu0 0.0
        %6713 = vmatprep.subr.mxu0 0.0
        %6714 = vmatpush1.msra.mxu0 0.0
        %6715 = vmatprep.subr.mxu0 0.0
        %6716 = vmatpush1.msra.mxu0 0.0
        %6717 = vmatprep.subr.mxu0 0.0
        %6718 = vmatpush1.msra.mxu0 0.0
        %6719 = vmatprep.subr.mxu0 0.0
        %6720 = vmatpush1.msra.mxu0 0.0
        %6721 = vmatprep.mubr.f32.mxu0 0.0
        %v6722 = vand.u32 %v2440, 4294901760
        %6723 = vmatmul.mubr.f32.gmra.mrb[0].mxu0 %v6722
        %v6724 = vpop.f32.mrb[0].mxu0
        %v6725 = vadd.f32 %v6634, %v6724
        %v6726 = vpop.f32.mrb[0].mxu0
        %6727 = vmatprep.mubr.f32.mxu0 0.0
        %v6728 = vand.u32 %v2443, 4294901760
        %6729 = vmatmul.mubr.f32.gmra.mrb[0].mxu0 %v6728
        %v6730 = vpop.f32.mrb[0].mxu0
        %v6731 = vadd.f32 %v6644, %v6730
        %v6732 = vpop.f32.mrb[0].mxu0
        %6733 = vdwg.mxu0
        %6734 = vmatprep.subr.mxu0 0.0
        %v6735 = vand.u32 %v5865, 4294901760
        %v6736 = vsub.f32 %v5865, %v6735
        %6737 = vmatpush1.msra.mxu0 %v6736
        %6738 = vmatprep.subr.mxu0 0.0
        %v6739 = vand.u32 %v5871, 4294901760
        %v6740 = vsub.f32 %v5871, %v6739
        %6741 = vmatpush1.msra.mxu0 %v6740
        %6742 = vmatprep.subr.mxu0 0.0
        %6743 = vmatpush1.msra.mxu0 0.0
        %6744 = vmatprep.subr.mxu0 0.0
        %6745 = vmatpush1.msra.mxu0 0.0
        %6746 = vmatprep.subr.mxu0 0.0
        %6747 = vmatpush1.msra.mxu0 0.0
        %6748 = vmatprep.subr.mxu0 0.0
        %6749 = vmatpush1.msra.mxu0 0.0
        %6750 = vmatprep.subr.mxu0 0.0
        %6751 = vmatpush1.msra.mxu0 0.0
        %6752 = vmatprep.subr.mxu0 0.0
        %6753 = vmatpush1.msra.mxu0 0.0
        %6754 = vmatprep.subr.mxu0 0.0
        %6755 = vmatpush1.msra.mxu0 0.0
        %6756 = vmatprep.subr.mxu0 0.0
        %6757 = vmatpush1.msra.mxu0 0.0
        %6758 = vmatprep.subr.mxu0 0.0
        %6759 = vmatpush1.msra.mxu0 0.0
        %6760 = vmatprep.subr.mxu0 0.0
        %6761 = vmatpush1.msra.mxu0 0.0
        %6762 = vmatprep.subr.mxu0 0.0
        %6763 = vmatpush1.msra.mxu0 0.0
        %6764 = vmatprep.subr.mxu0 0.0
        %6765 = vmatpush1.msra.mxu0 0.0
        %6766 = vmatprep.subr.mxu0 0.0
        %6767 = vmatpush1.msra.mxu0 0.0
        %6768 = vmatprep.subr.mxu0 0.0
        %6769 = vmatpush1.msra.mxu0 0.0
        %6770 = vmatprep.subr.mxu0 0.0
        %6771 = vmatpush1.msra.mxu0 0.0
        %6772 = vmatprep.subr.mxu0 0.0
        %6773 = vmatpush1.msra.mxu0 0.0
        %6774 = vmatprep.subr.mxu0 0.0
        %6775 = vmatpush1.msra.mxu0 0.0
        %6776 = vmatprep.subr.mxu0 0.0
        %6777 = vmatpush1.msra.mxu0 0.0
        %6778 = vmatprep.subr.mxu0 0.0
        %6779 = vmatpush1.msra.mxu0 0.0
        %6780 = vmatprep.subr.mxu0 0.0
        %6781 = vmatpush1.msra.mxu0 0.0
        %6782 = vmatprep.subr.mxu0 0.0
        %6783 = vmatpush1.msra.mxu0 0.0
        %6784 = vmatprep.subr.mxu0 0.0
        %6785 = vmatpush1.msra.mxu0 0.0
        %6786 = vmatprep.subr.mxu0 0.0
        %6787 = vmatpush1.msra.mxu0 0.0
        %6788 = vmatprep.subr.mxu0 0.0
        %6789 = vmatpush1.msra.mxu0 0.0
        %6790 = vmatprep.subr.mxu0 0.0
        %6791 = vmatpush1.msra.mxu0 0.0
        %6792 = vmatprep.subr.mxu0 0.0
        %6793 = vmatpush1.msra.mxu0 0.0
        %6794 = vmatprep.subr.mxu0 0.0
        %6795 = vmatpush1.msra.mxu0 0.0
        %6796 = vmatprep.subr.mxu0 0.0
        %6797 = vmatpush1.msra.mxu0 0.0
        %6798 = vmatprep.subr.mxu0 0.0
        %6799 = vmatpush1.msra.mxu0 0.0
        %6800 = vmatprep.subr.mxu0 0.0
        %6801 = vmatpush1.msra.mxu0 0.0
        %6802 = vmatprep.mubr.f32.mxu0 0.0
        %v6803 = vand.u32 %v2440, 4294901760
        %v6804 = vsub.f32 %v2440, %v6803
        %6805 = vmatmul.mubr.f32.gmra.mrb[0].mxu0 %v6804
        %v6806 = vpop.f32.mrb[0].mxu0
        %v6807 = vadd.f32 %v6725, %v6806
        %v6808 = vpop.f32.mrb[0].mxu0
        %6809 = vmatprep.mubr.f32.mxu0 0.0
        %v6810 = vand.u32 %v2443, 4294901760
        %v6811 = vsub.f32 %v2443, %v6810
        %6812 = vmatmul.mubr.f32.gmra.mrb[0].mxu0 %v6811
        %v6813 = vpop.f32.mrb[0].mxu0
        %v6814 = vadd.f32 %v6731, %v6813
        %v6815 = vpop.f32.mrb[0].mxu0
        %6816 = vdwg.mxu0
        %6817 = vmatprep.subr.mxu0 0.0
        %v6818 = vand.u32 %v5865, 4294901760
        %6819 = vmatpush1.msra.mxu0 %v6818
        %6820 = vmatprep.subr.mxu0 0.0
        %v6821 = vand.u32 %v5871, 4294901760
        %6822 = vmatpush1.msra.mxu0 %v6821
        %6823 = vmatprep.subr.mxu0 0.0
        %6824 = vmatpush1.msra.mxu0 0.0
        %6825 = vmatprep.subr.mxu0 0.0
        %6826 = vmatpush1.msra.mxu0 0.0
        %6827 = vmatprep.subr.mxu0 0.0
        %6828 = vmatpush1.msra.mxu0 0.0
        %6829 = vmatprep.subr.mxu0 0.0
        %6830 = vmatpush1.msra.mxu0 0.0
        %6831 = vmatprep.subr.mxu0 0.0
        %6832 = vmatpush1.msra.mxu0 0.0
        %6833 = vmatprep.subr.mxu0 0.0
        %6834 = vmatpush1.msra.mxu0 0.0
        %6835 = vmatprep.subr.mxu0 0.0
        %6836 = vmatpush1.msra.mxu0 0.0
        %6837 = vmatprep.subr.mxu0 0.0
        %6838 = vmatpush1.msra.mxu0 0.0
        %6839 = vmatprep.subr.mxu0 0.0
        %6840 = vmatpush1.msra.mxu0 0.0
        %6841 = vmatprep.subr.mxu0 0.0
        %6842 = vmatpush1.msra.mxu0 0.0
        %6843 = vmatprep.subr.mxu0 0.0
        %6844 = vmatpush1.msra.mxu0 0.0
        %6845 = vmatprep.subr.mxu0 0.0
        %6846 = vmatpush1.msra.mxu0 0.0
        %6847 = vmatprep.subr.mxu0 0.0
        %6848 = vmatpush1.msra.mxu0 0.0
        %6849 = vmatprep.subr.mxu0 0.0
        %6850 = vmatpush1.msra.mxu0 0.0
        %6851 = vmatprep.subr.mxu0 0.0
        %6852 = vmatpush1.msra.mxu0 0.0
        %6853 = vmatprep.subr.mxu0 0.0
        %6854 = vmatpush1.msra.mxu0 0.0
        %6855 = vmatprep.subr.mxu0 0.0
        %6856 = vmatpush1.msra.mxu0 0.0
        %6857 = vmatprep.subr.mxu0 0.0
        %6858 = vmatpush1.msra.mxu0 0.0
        %6859 = vmatprep.subr.mxu0 0.0
        %6860 = vmatpush1.msra.mxu0 0.0
        %6861 = vmatprep.subr.mxu0 0.0
        %6862 = vmatpush1.msra.mxu0 0.0
        %6863 = vmatprep.subr.mxu0 0.0
        %6864 = vmatpush1.msra.mxu0 0.0
        %6865 = vmatprep.subr.mxu0 0.0
        %6866 = vmatpush1.msra.mxu0 0.0
        %6867 = vmatprep.subr.mxu0 0.0
        %6868 = vmatpush1.msra.mxu0 0.0
        %6869 = vmatprep.subr.mxu0 0.0
        %6870 = vmatpush1.msra.mxu0 0.0
        %6871 = vmatprep.subr.mxu0 0.0
        %6872 = vmatpush1.msra.mxu0 0.0
        %6873 = vmatprep.subr.mxu0 0.0
        %6874 = vmatpush1.msra.mxu0 0.0
        %6875 = vmatprep.subr.mxu0 0.0
        %6876 = vmatpush1.msra.mxu0 0.0
        %6877 = vmatprep.subr.mxu0 0.0
        %6878 = vmatpush1.msra.mxu0 0.0
        %6879 = vmatprep.subr.mxu0 0.0
        %6880 = vmatpush1.msra.mxu0 0.0
        %6881 = vmatprep.subr.mxu0 0.0
        %6882 = vmatpush1.msra.mxu0 0.0
        %6883 = vmatprep.mubr.f32.mxu0 0.0
        %v6884 = vand.u32 %v2440, 4294901760
        %v6885 = vsub.f32 %v2440, %v6884
        %v6886 = vand.u32 %v6885, 4294901760
        %6887 = vmatmul.mubr.f32.gmra.mrb[0].mxu0 %v6886
        %v6888 = vpop.f32.mrb[0].mxu0
        %v6889 = vadd.f32 %v6807, %v6888
        %v6890 = vpop.f32.mrb[0].mxu0
        %6891 = vmatprep.mubr.f32.mxu0 0.0
        %v6892 = vand.u32 %v2443, 4294901760
        %v6893 = vsub.f32 %v2443, %v6892
        %v6894 = vand.u32 %v6893, 4294901760
        %6895 = vmatmul.mubr.f32.gmra.mrb[0].mxu0 %v6894
        %v6896 = vpop.f32.mrb[0].mxu0
        %v6897 = vadd.f32 %v6814, %v6896
        %v6898 = vpop.f32.mrb[0].mxu0
        %6899 = vdwg.mxu0
        %6900 = vmatprep.subr.mxu0 0.0
        %v6901 = vand.u32 %v5865, 4294901760
        %v6902 = vsub.f32 %v5865, %v6901
        %v6903 = vand.u32 %v6902, 4294901760
        %6904 = vmatpush1.msra.mxu0 %v6903
        %6905 = vmatprep.subr.mxu0 0.0
        %v6906 = vand.u32 %v5871, 4294901760
        %v6907 = vsub.f32 %v5871, %v6906
        %v6908 = vand.u32 %v6907, 4294901760
        %6909 = vmatpush1.msra.mxu0 %v6908
        %6910 = vmatprep.subr.mxu0 0.0
        %6911 = vmatpush1.msra.mxu0 0.0
        %6912 = vmatprep.subr.mxu0 0.0
        %6913 = vmatpush1.msra.mxu0 0.0
        %6914 = vmatprep.subr.mxu0 0.0
        %6915 = vmatpush1.msra.mxu0 0.0
        %6916 = vmatprep.subr.mxu0 0.0
        %6917 = vmatpush1.msra.mxu0 0.0
        %6918 = vmatprep.subr.mxu0 0.0
        %6919 = vmatpush1.msra.mxu0 0.0
        %6920 = vmatprep.subr.mxu0 0.0
        %6921 = vmatpush1.msra.mxu0 0.0
        %6922 = vmatprep.subr.mxu0 0.0
        %6923 = vmatpush1.msra.mxu0 0.0
        %6924 = vmatprep.subr.mxu0 0.0
        %6925 = vmatpush1.msra.mxu0 0.0
        %6926 = vmatprep.subr.mxu0 0.0
        %6927 = vmatpush1.msra.mxu0 0.0
        %6928 = vmatprep.subr.mxu0 0.0
        %6929 = vmatpush1.msra.mxu0 0.0
        %6930 = vmatprep.subr.mxu0 0.0
        %6931 = vmatpush1.msra.mxu0 0.0
        %6932 = vmatprep.subr.mxu0 0.0
        %6933 = vmatpush1.msra.mxu0 0.0
        %6934 = vmatprep.subr.mxu0 0.0
        %6935 = vmatpush1.msra.mxu0 0.0
        %6936 = vmatprep.subr.mxu0 0.0
        %6937 = vmatpush1.msra.mxu0 0.0
        %6938 = vmatprep.subr.mxu0 0.0
        %6939 = vmatpush1.msra.mxu0 0.0
        %6940 = vmatprep.subr.mxu0 0.0
        %6941 = vmatpush1.msra.mxu0 0.0
        %6942 = vmatprep.subr.mxu0 0.0
        %6943 = vmatpush1.msra.mxu0 0.0
        %6944 = vmatprep.subr.mxu0 0.0
        %6945 = vmatpush1.msra.mxu0 0.0
        %6946 = vmatprep.subr.mxu0 0.0
        %6947 = vmatpush1.msra.mxu0 0.0
        %6948 = vmatprep.subr.mxu0 0.0
        %6949 = vmatpush1.msra.mxu0 0.0
        %6950 = vmatprep.subr.mxu0 0.0
        %6951 = vmatpush1.msra.mxu0 0.0
        %6952 = vmatprep.subr.mxu0 0.0
        %6953 = vmatpush1.msra.mxu0 0.0
        %6954 = vmatprep.subr.mxu0 0.0
        %6955 = vmatpush1.msra.mxu0 0.0
        %6956 = vmatprep.subr.mxu0 0.0
        %6957 = vmatpush1.msra.mxu0 0.0
        %6958 = vmatprep.subr.mxu0 0.0
        %6959 = vmatpush1.msra.mxu0 0.0
        %6960 = vmatprep.subr.mxu0 0.0
        %6961 = vmatpush1.msra.mxu0 0.0
        %6962 = vmatprep.subr.mxu0 0.0
        %6963 = vmatpush1.msra.mxu0 0.0
        %6964 = vmatprep.subr.mxu0 0.0
        %6965 = vmatpush1.msra.mxu0 0.0
        %6966 = vmatprep.subr.mxu0 0.0
        %6967 = vmatpush1.msra.mxu0 0.0
        %6968 = vmatprep.subr.mxu0 0.0
        %6969 = vmatpush1.msra.mxu0 0.0
        %6970 = vmatprep.mubr.f32.mxu0 0.0
        %v6971 = vand.u32 %v2440, 4294901760
        %6972 = vmatmul.mubr.f32.gmra.mrb[0].mxu0 %v6971
        %v6973 = vpop.f32.mrb[0].mxu0
        %v6974 = vadd.f32 %v6889, %v6973
        %v6975 = vpop.f32.mrb[0].mxu0
        %6976 = vmatprep.mubr.f32.mxu0 0.0
        %v6977 = vand.u32 %v2443, 4294901760
        %6978 = vmatmul.mubr.f32.gmra.mrb[0].mxu0 %v6977
        %v6979 = vpop.f32.mrb[0].mxu0
        %v6980 = vadd.f32 %v6897, %v6979
        %v6981 = vpop.f32.mrb[0].mxu0
        %6982 = vdwg.mxu0
        %6983 = vmatprep.subr.mxu0 0.0
        %v6984 = vand.u32 %v5865, 4294901760
        %6985 = vmatpush1.msra.mxu0 %v6984
        %6986 = vmatprep.subr.mxu0 0.0
        %v6987 = vand.u32 %v5871, 4294901760
        %6988 = vmatpush1.msra.mxu0 %v6987
        %6989 = vmatprep.subr.mxu0 0.0
        %6990 = vmatpush1.msra.mxu0 0.0
        %6991 = vmatprep.subr.mxu0 0.0
        %6992 = vmatpush1.msra.mxu0 0.0
        %6993 = vmatprep.subr.mxu0 0.0
        %6994 = vmatpush1.msra.mxu0 0.0
        %6995 = vmatprep.subr.mxu0 0.0
        %6996 = vmatpush1.msra.mxu0 0.0
        %6997 = vmatprep.subr.mxu0 0.0
        %6998 = vmatpush1.msra.mxu0 0.0
        %6999 = vmatprep.subr.mxu0 0.0
        %7000 = vmatpush1.msra.mxu0 0.0
        %7001 = vmatprep.subr.mxu0 0.0
        %7002 = vmatpush1.msra.mxu0 0.0
        %7003 = vmatprep.subr.mxu0 0.0
        %7004 = vmatpush1.msra.mxu0 0.0
        %7005 = vmatprep.subr.mxu0 0.0
        %7006 = vmatpush1.msra.mxu0 0.0
        %7007 = vmatprep.subr.mxu0 0.0
        %7008 = vmatpush1.msra.mxu0 0.0
        %7009 = vmatprep.subr.mxu0 0.0
        %7010 = vmatpush1.msra.mxu0 0.0
        %7011 = vmatprep.subr.mxu0 0.0
        %7012 = vmatpush1.msra.mxu0 0.0
        %7013 = vmatprep.subr.mxu0 0.0
        %7014 = vmatpush1.msra.mxu0 0.0
        %7015 = vmatprep.subr.mxu0 0.0
        %7016 = vmatpush1.msra.mxu0 0.0
        %7017 = vmatprep.subr.mxu0 0.0
        %7018 = vmatpush1.msra.mxu0 0.0
        %7019 = vmatprep.subr.mxu0 0.0
        %7020 = vmatpush1.msra.mxu0 0.0
        %7021 = vmatprep.subr.mxu0 0.0
        %7022 = vmatpush1.msra.mxu0 0.0
        %7023 = vmatprep.subr.mxu0 0.0
        %7024 = vmatpush1.msra.mxu0 0.0
        %7025 = vmatprep.subr.mxu0 0.0
        %7026 = vmatpush1.msra.mxu0 0.0
        %7027 = vmatprep.subr.mxu0 0.0
        %7028 = vmatpush1.msra.mxu0 0.0
        %7029 = vmatprep.subr.mxu0 0.0
        %7030 = vmatpush1.msra.mxu0 0.0
        %7031 = vmatprep.subr.mxu0 0.0
        %7032 = vmatpush1.msra.mxu0 0.0
        %7033 = vmatprep.subr.mxu0 0.0
        %7034 = vmatpush1.msra.mxu0 0.0
        %7035 = vmatprep.subr.mxu0 0.0
        %7036 = vmatpush1.msra.mxu0 0.0
        %7037 = vmatprep.subr.mxu0 0.0
        %7038 = vmatpush1.msra.mxu0 0.0
        %7039 = vmatprep.subr.mxu0 0.0
        %7040 = vmatpush1.msra.mxu0 0.0
        %7041 = vmatprep.subr.mxu0 0.0
        %7042 = vmatpush1.msra.mxu0 0.0
        %7043 = vmatprep.subr.mxu0 0.0
        %7044 = vmatpush1.msra.mxu0 0.0
        %7045 = vmatprep.subr.mxu0 0.0
        %7046 = vmatpush1.msra.mxu0 0.0
        %7047 = vmatprep.subr.mxu0 0.0
        %7048 = vmatpush1.msra.mxu0 0.0
        %7049 = vmatprep.mubr.f32.mxu0 0.0
        %v7050 = vand.u32 %v2440, 4294901760
        %7051 = vmatmul.mubr.f32.gmra.mrb[0].mxu0 %v7050
        %v7052 = vpop.f32.mrb[0].mxu0
        %v7053 = vadd.f32 %v6974, %v7052
        %v7054 = vpop.f32.mrb[0].mxu0
        %7055 = vmatprep.mubr.f32.mxu0 0.0
        %v7056 = vand.u32 %v2443, 4294901760
        %7057 = vmatmul.mubr.f32.gmra.mrb[0].mxu0 %v7056
        %v7058 = vpop.f32.mrb[0].mxu0
        %v7059 = vadd.f32 %v6980, %v7058
        %v7060 = vpop.f32.mrb[0].mxu0
        %7061 = vdwg.mxu0
        %7062 = vmatprep.subr.mxu0 0.0
        %v7063 = vand.u32 %v6551, 4294901760
        %7064 = vmatpush1.msra.mxu0 %v7063
        %7065 = vmatprep.subr.mxu0 0.0
        %v7066 = vand.u32 %v6557, 4294901760
        %7067 = vmatpush1.msra.mxu0 %v7066
        %7068 = vmatprep.subr.mxu0 0.0
        %7069 = vmatpush1.msra.mxu0 0.0
        %7070 = vmatprep.subr.mxu0 0.0
        %7071 = vmatpush1.msra.mxu0 0.0
        %7072 = vmatprep.subr.mxu0 0.0
        %7073 = vmatpush1.msra.mxu0 0.0
        %7074 = vmatprep.subr.mxu0 0.0
        %7075 = vmatpush1.msra.mxu0 0.0
        %7076 = vmatprep.subr.mxu0 0.0
        %7077 = vmatpush1.msra.mxu0 0.0
        %7078 = vmatprep.subr.mxu0 0.0
        %7079 = vmatpush1.msra.mxu0 0.0
        %7080 = vmatprep.subr.mxu0 0.0
        %7081 = vmatpush1.msra.mxu0 0.0
        %7082 = vmatprep.subr.mxu0 0.0
        %7083 = vmatpush1.msra.mxu0 0.0
        %7084 = vmatprep.subr.mxu0 0.0
        %7085 = vmatpush1.msra.mxu0 0.0
        %7086 = vmatprep.subr.mxu0 0.0
        %7087 = vmatpush1.msra.mxu0 0.0
        %7088 = vmatprep.subr.mxu0 0.0
        %7089 = vmatpush1.msra.mxu0 0.0
        %7090 = vmatprep.subr.mxu0 0.0
        %7091 = vmatpush1.msra.mxu0 0.0
        %7092 = vmatprep.subr.mxu0 0.0
        %7093 = vmatpush1.msra.mxu0 0.0
        %7094 = vmatprep.subr.mxu0 0.0
        %7095 = vmatpush1.msra.mxu0 0.0
        %7096 = vmatprep.subr.mxu0 0.0
        %7097 = vmatpush1.msra.mxu0 0.0
        %7098 = vmatprep.subr.mxu0 0.0
        %7099 = vmatpush1.msra.mxu0 0.0
        %7100 = vmatprep.subr.mxu0 0.0
        %7101 = vmatpush1.msra.mxu0 0.0
        %7102 = vmatprep.subr.mxu0 0.0
        %7103 = vmatpush1.msra.mxu0 0.0
        %7104 = vmatprep.subr.mxu0 0.0
        %7105 = vmatpush1.msra.mxu0 0.0
        %7106 = vmatprep.subr.mxu0 0.0
        %7107 = vmatpush1.msra.mxu0 0.0
        %7108 = vmatprep.subr.mxu0 0.0
        %7109 = vmatpush1.msra.mxu0 0.0
        %7110 = vmatprep.subr.mxu0 0.0
        %7111 = vmatpush1.msra.mxu0 0.0
        %7112 = vmatprep.subr.mxu0 0.0
        %7113 = vmatpush1.msra.mxu0 0.0
        %7114 = vmatprep.subr.mxu0 0.0
        %7115 = vmatpush1.msra.mxu0 0.0
        %7116 = vmatprep.subr.mxu0 0.0
        %7117 = vmatpush1.msra.mxu0 0.0
        %7118 = vmatprep.subr.mxu0 0.0
        %7119 = vmatpush1.msra.mxu0 0.0
        %7120 = vmatprep.subr.mxu0 0.0
        %7121 = vmatpush1.msra.mxu0 0.0
        %7122 = vmatprep.subr.mxu0 0.0
        %7123 = vmatpush1.msra.mxu0 0.0
        %7124 = vmatprep.subr.mxu0 0.0
        %7125 = vmatpush1.msra.mxu0 0.0
        %7126 = vmatprep.subr.mxu0 0.0
        %7127 = vmatpush1.msra.mxu0 0.0
        %7128 = vmatprep.mubr.f32.mxu0 0.0
        %v7129 = vand.u32 %v2440, 4294901760
        %v7130 = vsub.f32 %v2440, %v7129
        %v7131 = vand.u32 %v7130, 4294901760
        %v7132 = vsub.f32 %v7130, %v7131
        %v7133 = vand.u32 %v7132, 4294901760
        %7134 = vmatmul.mubr.f32.gmra.mrb[0].mxu0 %v7133
        %v7135 = vpop.f32.mrb[0].mxu0
        %v7136 = vadd.f32 0.0, %v7135
        %v7137 = vpop.f32.mrb[0].mxu0
        %7138 = vmatprep.mubr.f32.mxu0 0.0
        %v7139 = vand.u32 %v2443, 4294901760
        %v7140 = vsub.f32 %v2443, %v7139
        %v7141 = vand.u32 %v7140, 4294901760
        %v7142 = vsub.f32 %v7140, %v7141
        %v7143 = vand.u32 %v7142, 4294901760
        %7144 = vmatmul.mubr.f32.gmra.mrb[0].mxu0 %v7143
        %v7145 = vpop.f32.mrb[0].mxu0
        %v7146 = vadd.f32 0.0, %v7145
        %v7147 = vpop.f32.mrb[0].mxu0
        %7148 = vdwg.mxu0
        %7149 = vmatprep.subr.mxu0 0.0
        %v7150 = vand.u32 %v6551, 4294901760
        %v7151 = vsub.f32 %v6551, %v7150
        %v7152 = vand.u32 %v7151, 4294901760
        %v7153 = vsub.f32 %v7151, %v7152
        %v7154 = vand.u32 %v7153, 4294901760
        %7155 = vmatpush1.msra.mxu0 %v7154
        %7156 = vmatprep.subr.mxu0 0.0
        %v7157 = vand.u32 %v6557, 4294901760
        %v7158 = vsub.f32 %v6557, %v7157
        %v7159 = vand.u32 %v7158, 4294901760
        %v7160 = vsub.f32 %v7158, %v7159
        %v7161 = vand.u32 %v7160, 4294901760
        %7162 = vmatpush1.msra.mxu0 %v7161
        %7163 = vmatprep.subr.mxu0 0.0
        %7164 = vmatpush1.msra.mxu0 0.0
        %7165 = vmatprep.subr.mxu0 0.0
        %7166 = vmatpush1.msra.mxu0 0.0
        %7167 = vmatprep.subr.mxu0 0.0
        %7168 = vmatpush1.msra.mxu0 0.0
        %7169 = vmatprep.subr.mxu0 0.0
        %7170 = vmatpush1.msra.mxu0 0.0
        %7171 = vmatprep.subr.mxu0 0.0
        %7172 = vmatpush1.msra.mxu0 0.0
        %7173 = vmatprep.subr.mxu0 0.0
        %7174 = vmatpush1.msra.mxu0 0.0
        %7175 = vmatprep.subr.mxu0 0.0
        %7176 = vmatpush1.msra.mxu0 0.0
        %7177 = vmatprep.subr.mxu0 0.0
        %7178 = vmatpush1.msra.mxu0 0.0
        %7179 = vmatprep.subr.mxu0 0.0
        %7180 = vmatpush1.msra.mxu0 0.0
        %7181 = vmatprep.subr.mxu0 0.0
        %7182 = vmatpush1.msra.mxu0 0.0
        %7183 = vmatprep.subr.mxu0 0.0
        %7184 = vmatpush1.msra.mxu0 0.0
        %7185 = vmatprep.subr.mxu0 0.0
        %7186 = vmatpush1.msra.mxu0 0.0
        %7187 = vmatprep.subr.mxu0 0.0
        %7188 = vmatpush1.msra.mxu0 0.0
        %7189 = vmatprep.subr.mxu0 0.0
        %7190 = vmatpush1.msra.mxu0 0.0
        %7191 = vmatprep.subr.mxu0 0.0
        %7192 = vmatpush1.msra.mxu0 0.0
        %7193 = vmatprep.subr.mxu0 0.0
        %7194 = vmatpush1.msra.mxu0 0.0
        %7195 = vmatprep.subr.mxu0 0.0
        %7196 = vmatpush1.msra.mxu0 0.0
        %7197 = vmatprep.subr.mxu0 0.0
        %7198 = vmatpush1.msra.mxu0 0.0
        %7199 = vmatprep.subr.mxu0 0.0
        %7200 = vmatpush1.msra.mxu0 0.0
        %7201 = vmatprep.subr.mxu0 0.0
        %7202 = vmatpush1.msra.mxu0 0.0
        %7203 = vmatprep.subr.mxu0 0.0
        %7204 = vmatpush1.msra.mxu0 0.0
        %7205 = vmatprep.subr.mxu0 0.0
        %7206 = vmatpush1.msra.mxu0 0.0
        %7207 = vmatprep.subr.mxu0 0.0
        %7208 = vmatpush1.msra.mxu0 0.0
        %7209 = vmatprep.subr.mxu0 0.0
        %7210 = vmatpush1.msra.mxu0 0.0
        %7211 = vmatprep.subr.mxu0 0.0
        %7212 = vmatpush1.msra.mxu0 0.0
        %7213 = vmatprep.subr.mxu0 0.0
        %7214 = vmatpush1.msra.mxu0 0.0
        %7215 = vmatprep.subr.mxu0 0.0
        %7216 = vmatpush1.msra.mxu0 0.0
        %7217 = vmatprep.subr.mxu0 0.0
        %7218 = vmatpush1.msra.mxu0 0.0
        %7219 = vmatprep.subr.mxu0 0.0
        %7220 = vmatpush1.msra.mxu0 0.0
        %7221 = vmatprep.subr.mxu0 0.0
        %7222 = vmatpush1.msra.mxu0 0.0
        %7223 = vmatprep.mubr.f32.mxu0 0.0
        %v7224 = vand.u32 %v2440, 4294901760
        %7225 = vmatmul.mubr.f32.gmra.mrb[0].mxu0 %v7224
        %v7226 = vpop.f32.mrb[0].mxu0
        %v7227 = vadd.f32 %v7136, %v7226
        %v7228 = vpop.f32.mrb[0].mxu0
        %7229 = vmatprep.mubr.f32.mxu0 0.0
        %v7230 = vand.u32 %v2443, 4294901760
        %7231 = vmatmul.mubr.f32.gmra.mrb[0].mxu0 %v7230
        %v7232 = vpop.f32.mrb[0].mxu0
        %v7233 = vadd.f32 %v7146, %v7232
        %v7234 = vpop.f32.mrb[0].mxu0
        %7235 = vdwg.mxu0
        %7236 = vmatprep.subr.mxu0 0.0
        %v7237 = vand.u32 %v6551, 4294901760
        %v7238 = vsub.f32 %v6551, %v7237
        %7239 = vmatpush1.msra.mxu0 %v7238
        %7240 = vmatprep.subr.mxu0 0.0
        %v7241 = vand.u32 %v6557, 4294901760
        %v7242 = vsub.f32 %v6557, %v7241
        %7243 = vmatpush1.msra.mxu0 %v7242
        %7244 = vmatprep.subr.mxu0 0.0
        %7245 = vmatpush1.msra.mxu0 0.0
        %7246 = vmatprep.subr.mxu0 0.0
        %7247 = vmatpush1.msra.mxu0 0.0
        %7248 = vmatprep.subr.mxu0 0.0
        %7249 = vmatpush1.msra.mxu0 0.0
        %7250 = vmatprep.subr.mxu0 0.0
        %7251 = vmatpush1.msra.mxu0 0.0
        %7252 = vmatprep.subr.mxu0 0.0
        %7253 = vmatpush1.msra.mxu0 0.0
        %7254 = vmatprep.subr.mxu0 0.0
        %7255 = vmatpush1.msra.mxu0 0.0
        %7256 = vmatprep.subr.mxu0 0.0
        %7257 = vmatpush1.msra.mxu0 0.0
        %7258 = vmatprep.subr.mxu0 0.0
        %7259 = vmatpush1.msra.mxu0 0.0
        %7260 = vmatprep.subr.mxu0 0.0
        %7261 = vmatpush1.msra.mxu0 0.0
        %7262 = vmatprep.subr.mxu0 0.0
        %7263 = vmatpush1.msra.mxu0 0.0
        %7264 = vmatprep.subr.mxu0 0.0
        %7265 = vmatpush1.msra.mxu0 0.0
        %7266 = vmatprep.subr.mxu0 0.0
        %7267 = vmatpush1.msra.mxu0 0.0
        %7268 = vmatprep.subr.mxu0 0.0
        %7269 = vmatpush1.msra.mxu0 0.0
        %7270 = vmatprep.subr.mxu0 0.0
        %7271 = vmatpush1.msra.mxu0 0.0
        %7272 = vmatprep.subr.mxu0 0.0
        %7273 = vmatpush1.msra.mxu0 0.0
        %7274 = vmatprep.subr.mxu0 0.0
        %7275 = vmatpush1.msra.mxu0 0.0
        %7276 = vmatprep.subr.mxu0 0.0
        %7277 = vmatpush1.msra.mxu0 0.0
        %7278 = vmatprep.subr.mxu0 0.0
        %7279 = vmatpush1.msra.mxu0 0.0
        %7280 = vmatprep.subr.mxu0 0.0
        %7281 = vmatpush1.msra.mxu0 0.0
        %7282 = vmatprep.subr.mxu0 0.0
        %7283 = vmatpush1.msra.mxu0 0.0
        %7284 = vmatprep.subr.mxu0 0.0
        %7285 = vmatpush1.msra.mxu0 0.0
        %7286 = vmatprep.subr.mxu0 0.0
        %7287 = vmatpush1.msra.mxu0 0.0
        %7288 = vmatprep.subr.mxu0 0.0
        %7289 = vmatpush1.msra.mxu0 0.0
        %7290 = vmatprep.subr.mxu0 0.0
        %7291 = vmatpush1.msra.mxu0 0.0
        %7292 = vmatprep.subr.mxu0 0.0
        %7293 = vmatpush1.msra.mxu0 0.0
        %7294 = vmatprep.subr.mxu0 0.0
        %7295 = vmatpush1.msra.mxu0 0.0
        %7296 = vmatprep.subr.mxu0 0.0
        %7297 = vmatpush1.msra.mxu0 0.0
        %7298 = vmatprep.subr.mxu0 0.0
        %7299 = vmatpush1.msra.mxu0 0.0
        %7300 = vmatprep.subr.mxu0 0.0
        %7301 = vmatpush1.msra.mxu0 0.0
        %7302 = vmatprep.subr.mxu0 0.0
        %7303 = vmatpush1.msra.mxu0 0.0
        %7304 = vmatprep.mubr.f32.mxu0 0.0
        %v7305 = vand.u32 %v2440, 4294901760
        %v7306 = vsub.f32 %v2440, %v7305
        %7307 = vmatmul.mubr.f32.gmra.mrb[0].mxu0 %v7306
        %v7308 = vpop.f32.mrb[0].mxu0
        %v7309 = vadd.f32 %v7227, %v7308
        %v7310 = vpop.f32.mrb[0].mxu0
        %7311 = vmatprep.mubr.f32.mxu0 0.0
        %v7312 = vand.u32 %v2443, 4294901760
        %v7313 = vsub.f32 %v2443, %v7312
        %7314 = vmatmul.mubr.f32.gmra.mrb[0].mxu0 %v7313
        %v7315 = vpop.f32.mrb[0].mxu0
        %v7316 = vadd.f32 %v7233, %v7315
        %v7317 = vpop.f32.mrb[0].mxu0
        %7318 = vdwg.mxu0
        %7319 = vmatprep.subr.mxu0 0.0
        %v7320 = vand.u32 %v6551, 4294901760
        %7321 = vmatpush1.msra.mxu0 %v7320
        %7322 = vmatprep.subr.mxu0 0.0
        %v7323 = vand.u32 %v6557, 4294901760
        %7324 = vmatpush1.msra.mxu0 %v7323
        %7325 = vmatprep.subr.mxu0 0.0
        %7326 = vmatpush1.msra.mxu0 0.0
        %7327 = vmatprep.subr.mxu0 0.0
        %7328 = vmatpush1.msra.mxu0 0.0
        %7329 = vmatprep.subr.mxu0 0.0
        %7330 = vmatpush1.msra.mxu0 0.0
        %7331 = vmatprep.subr.mxu0 0.0
        %7332 = vmatpush1.msra.mxu0 0.0
        %7333 = vmatprep.subr.mxu0 0.0
        %7334 = vmatpush1.msra.mxu0 0.0
        %7335 = vmatprep.subr.mxu0 0.0
        %7336 = vmatpush1.msra.mxu0 0.0
        %7337 = vmatprep.subr.mxu0 0.0
        %7338 = vmatpush1.msra.mxu0 0.0
        %7339 = vmatprep.subr.mxu0 0.0
        %7340 = vmatpush1.msra.mxu0 0.0
        %7341 = vmatprep.subr.mxu0 0.0
        %7342 = vmatpush1.msra.mxu0 0.0
        %7343 = vmatprep.subr.mxu0 0.0
        %7344 = vmatpush1.msra.mxu0 0.0
        %7345 = vmatprep.subr.mxu0 0.0
        %7346 = vmatpush1.msra.mxu0 0.0
        %7347 = vmatprep.subr.mxu0 0.0
        %7348 = vmatpush1.msra.mxu0 0.0
        %7349 = vmatprep.subr.mxu0 0.0
        %7350 = vmatpush1.msra.mxu0 0.0
        %7351 = vmatprep.subr.mxu0 0.0
        %7352 = vmatpush1.msra.mxu0 0.0
        %7353 = vmatprep.subr.mxu0 0.0
        %7354 = vmatpush1.msra.mxu0 0.0
        %7355 = vmatprep.subr.mxu0 0.0
        %7356 = vmatpush1.msra.mxu0 0.0
        %7357 = vmatprep.subr.mxu0 0.0
        %7358 = vmatpush1.msra.mxu0 0.0
        %7359 = vmatprep.subr.mxu0 0.0
        %7360 = vmatpush1.msra.mxu0 0.0
        %7361 = vmatprep.subr.mxu0 0.0
        %7362 = vmatpush1.msra.mxu0 0.0
        %7363 = vmatprep.subr.mxu0 0.0
        %7364 = vmatpush1.msra.mxu0 0.0
        %7365 = vmatprep.subr.mxu0 0.0
        %7366 = vmatpush1.msra.mxu0 0.0
        %7367 = vmatprep.subr.mxu0 0.0
        %7368 = vmatpush1.msra.mxu0 0.0
        %7369 = vmatprep.subr.mxu0 0.0
        %7370 = vmatpush1.msra.mxu0 0.0
        %7371 = vmatprep.subr.mxu0 0.0
        %7372 = vmatpush1.msra.mxu0 0.0
        %7373 = vmatprep.subr.mxu0 0.0
        %7374 = vmatpush1.msra.mxu0 0.0
        %7375 = vmatprep.subr.mxu0 0.0
        %7376 = vmatpush1.msra.mxu0 0.0
        %7377 = vmatprep.subr.mxu0 0.0
        %7378 = vmatpush1.msra.mxu0 0.0
        %7379 = vmatprep.subr.mxu0 0.0
        %7380 = vmatpush1.msra.mxu0 0.0
        %7381 = vmatprep.subr.mxu0 0.0
        %7382 = vmatpush1.msra.mxu0 0.0
        %7383 = vmatprep.subr.mxu0 0.0
        %7384 = vmatpush1.msra.mxu0 0.0
        %7385 = vmatprep.mubr.f32.mxu0 0.0
        %v7386 = vand.u32 %v2440, 4294901760
        %v7387 = vsub.f32 %v2440, %v7386
        %v7388 = vand.u32 %v7387, 4294901760
        %7389 = vmatmul.mubr.f32.gmra.mrb[0].mxu0 %v7388
        %v7390 = vpop.f32.mrb[0].mxu0
        %v7391 = vadd.f32 %v7309, %v7390
        %v7392 = vpop.f32.mrb[0].mxu0
        %7393 = vmatprep.mubr.f32.mxu0 0.0
        %v7394 = vand.u32 %v2443, 4294901760
        %v7395 = vsub.f32 %v2443, %v7394
        %v7396 = vand.u32 %v7395, 4294901760
        %7397 = vmatmul.mubr.f32.gmra.mrb[0].mxu0 %v7396
        %v7398 = vpop.f32.mrb[0].mxu0
        %v7399 = vadd.f32 %v7316, %v7398
        %v7400 = vpop.f32.mrb[0].mxu0
        %7401 = vdwg.mxu0
        %7402 = vmatprep.subr.mxu0 0.0
        %v7403 = vand.u32 %v6551, 4294901760
        %v7404 = vsub.f32 %v6551, %v7403
        %v7405 = vand.u32 %v7404, 4294901760
        %7406 = vmatpush1.msra.mxu0 %v7405
        %7407 = vmatprep.subr.mxu0 0.0
        %v7408 = vand.u32 %v6557, 4294901760
        %v7409 = vsub.f32 %v6557, %v7408
        %v7410 = vand.u32 %v7409, 4294901760
        %7411 = vmatpush1.msra.mxu0 %v7410
        %7412 = vmatprep.subr.mxu0 0.0
        %7413 = vmatpush1.msra.mxu0 0.0
        %7414 = vmatprep.subr.mxu0 0.0
        %7415 = vmatpush1.msra.mxu0 0.0
        %7416 = vmatprep.subr.mxu0 0.0
        %7417 = vmatpush1.msra.mxu0 0.0
        %7418 = vmatprep.subr.mxu0 0.0
        %7419 = vmatpush1.msra.mxu0 0.0
        %7420 = vmatprep.subr.mxu0 0.0
        %7421 = vmatpush1.msra.mxu0 0.0
        %7422 = vmatprep.subr.mxu0 0.0
        %7423 = vmatpush1.msra.mxu0 0.0
        %7424 = vmatprep.subr.mxu0 0.0
        %7425 = vmatpush1.msra.mxu0 0.0
        %7426 = vmatprep.subr.mxu0 0.0
        %7427 = vmatpush1.msra.mxu0 0.0
        %7428 = vmatprep.subr.mxu0 0.0
        %7429 = vmatpush1.msra.mxu0 0.0
        %7430 = vmatprep.subr.mxu0 0.0
        %7431 = vmatpush1.msra.mxu0 0.0
        %7432 = vmatprep.subr.mxu0 0.0
        %7433 = vmatpush1.msra.mxu0 0.0
        %7434 = vmatprep.subr.mxu0 0.0
        %7435 = vmatpush1.msra.mxu0 0.0
        %7436 = vmatprep.subr.mxu0 0.0
        %7437 = vmatpush1.msra.mxu0 0.0
        %7438 = vmatprep.subr.mxu0 0.0
        %7439 = vmatpush1.msra.mxu0 0.0
        %7440 = vmatprep.subr.mxu0 0.0
        %7441 = vmatpush1.msra.mxu0 0.0
        %7442 = vmatprep.subr.mxu0 0.0
        %7443 = vmatpush1.msra.mxu0 0.0
        %7444 = vmatprep.subr.mxu0 0.0
        %7445 = vmatpush1.msra.mxu0 0.0
        %7446 = vmatprep.subr.mxu0 0.0
        %7447 = vmatpush1.msra.mxu0 0.0
        %7448 = vmatprep.subr.mxu0 0.0
        %7449 = vmatpush1.msra.mxu0 0.0
        %7450 = vmatprep.subr.mxu0 0.0
        %7451 = vmatpush1.msra.mxu0 0.0
        %7452 = vmatprep.subr.mxu0 0.0
        %7453 = vmatpush1.msra.mxu0 0.0
        %7454 = vmatprep.subr.mxu0 0.0
        %7455 = vmatpush1.msra.mxu0 0.0
        %7456 = vmatprep.subr.mxu0 0.0
        %7457 = vmatpush1.msra.mxu0 0.0
        %7458 = vmatprep.subr.mxu0 0.0
        %7459 = vmatpush1.msra.mxu0 0.0
        %7460 = vmatprep.subr.mxu0 0.0
        %7461 = vmatpush1.msra.mxu0 0.0
        %7462 = vmatprep.subr.mxu0 0.0
        %7463 = vmatpush1.msra.mxu0 0.0
        %7464 = vmatprep.subr.mxu0 0.0
        %7465 = vmatpush1.msra.mxu0 0.0
        %7466 = vmatprep.subr.mxu0 0.0
        %7467 = vmatpush1.msra.mxu0 0.0
        %7468 = vmatprep.subr.mxu0 0.0
        %7469 = vmatpush1.msra.mxu0 0.0
        %7470 = vmatprep.subr.mxu0 0.0
        %7471 = vmatpush1.msra.mxu0 0.0
        %7472 = vmatprep.mubr.f32.mxu0 0.0
        %v7473 = vand.u32 %v2440, 4294901760
        %7474 = vmatmul.mubr.f32.gmra.mrb[0].mxu0 %v7473
        %v7475 = vpop.f32.mrb[0].mxu0
        %v7476 = vadd.f32 %v7391, %v7475
        %v7477 = vpop.f32.mrb[0].mxu0
        %7478 = vmatprep.mubr.f32.mxu0 0.0
        %v7479 = vand.u32 %v2443, 4294901760
        %7480 = vmatmul.mubr.f32.gmra.mrb[0].mxu0 %v7479
        %v7481 = vpop.f32.mrb[0].mxu0
        %v7482 = vadd.f32 %v7399, %v7481
        %v7483 = vpop.f32.mrb[0].mxu0
        %7484 = vdwg.mxu0
        %7485 = vmatprep.subr.mxu0 0.0
        %v7486 = vand.u32 %v6551, 4294901760
        %7487 = vmatpush1.msra.mxu0 %v7486
        %7488 = vmatprep.subr.mxu0 0.0
        %v7489 = vand.u32 %v6557, 4294901760
        %7490 = vmatpush1.msra.mxu0 %v7489
        %7491 = vmatprep.subr.mxu0 0.0
        %7492 = vmatpush1.msra.mxu0 0.0
        %7493 = vmatprep.subr.mxu0 0.0
        %7494 = vmatpush1.msra.mxu0 0.0
        %7495 = vmatprep.subr.mxu0 0.0
        %7496 = vmatpush1.msra.mxu0 0.0
        %7497 = vmatprep.subr.mxu0 0.0
        %7498 = vmatpush1.msra.mxu0 0.0
        %7499 = vmatprep.subr.mxu0 0.0
        %7500 = vmatpush1.msra.mxu0 0.0
        %7501 = vmatprep.subr.mxu0 0.0
        %7502 = vmatpush1.msra.mxu0 0.0
        %7503 = vmatprep.subr.mxu0 0.0
        %7504 = vmatpush1.msra.mxu0 0.0
        %7505 = vmatprep.subr.mxu0 0.0
        %7506 = vmatpush1.msra.mxu0 0.0
        %7507 = vmatprep.subr.mxu0 0.0
        %7508 = vmatpush1.msra.mxu0 0.0
        %7509 = vmatprep.subr.mxu0 0.0
        %7510 = vmatpush1.msra.mxu0 0.0
        %7511 = vmatprep.subr.mxu0 0.0
        %7512 = vmatpush1.msra.mxu0 0.0
        %7513 = vmatprep.subr.mxu0 0.0
        %7514 = vmatpush1.msra.mxu0 0.0
        %7515 = vmatprep.subr.mxu0 0.0
        %7516 = vmatpush1.msra.mxu0 0.0
        %7517 = vmatprep.subr.mxu0 0.0
        %7518 = vmatpush1.msra.mxu0 0.0
        %7519 = vmatprep.subr.mxu0 0.0
        %7520 = vmatpush1.msra.mxu0 0.0
        %7521 = vmatprep.subr.mxu0 0.0
        %7522 = vmatpush1.msra.mxu0 0.0
        %7523 = vmatprep.subr.mxu0 0.0
        %7524 = vmatpush1.msra.mxu0 0.0
        %7525 = vmatprep.subr.mxu0 0.0
        %7526 = vmatpush1.msra.mxu0 0.0
        %7527 = vmatprep.subr.mxu0 0.0
        %7528 = vmatpush1.msra.mxu0 0.0
        %7529 = vmatprep.subr.mxu0 0.0
        %7530 = vmatpush1.msra.mxu0 0.0
        %7531 = vmatprep.subr.mxu0 0.0
        %7532 = vmatpush1.msra.mxu0 0.0
        %7533 = vmatprep.subr.mxu0 0.0
        %7534 = vmatpush1.msra.mxu0 0.0
        %7535 = vmatprep.subr.mxu0 0.0
        %7536 = vmatpush1.msra.mxu0 0.0
        %7537 = vmatprep.subr.mxu0 0.0
        %7538 = vmatpush1.msra.mxu0 0.0
        %7539 = vmatprep.subr.mxu0 0.0
        %7540 = vmatpush1.msra.mxu0 0.0
        %7541 = vmatprep.subr.mxu0 0.0
        %7542 = vmatpush1.msra.mxu0 0.0
        %7543 = vmatprep.subr.mxu0 0.0
        %7544 = vmatpush1.msra.mxu0 0.0
        %7545 = vmatprep.subr.mxu0 0.0
        %7546 = vmatpush1.msra.mxu0 0.0
        %7547 = vmatprep.subr.mxu0 0.0
        %7548 = vmatpush1.msra.mxu0 0.0
        %7549 = vmatprep.subr.mxu0 0.0
        %7550 = vmatpush1.msra.mxu0 0.0
        %7551 = vmatprep.mubr.f32.mxu0 0.0
        %v7552 = vand.u32 %v2440, 4294901760
        %7553 = vmatmul.mubr.f32.gmra.mrb[0].mxu0 %v7552
        %v7554 = vpop.f32.mrb[0].mxu0
        %v7555 = vadd.f32 %v7476, %v7554
        %v7556 = vpop.f32.mrb[0].mxu0
        %7557 = vmatprep.mubr.f32.mxu0 0.0
        %v7558 = vand.u32 %v2443, 4294901760
        %7559 = vmatmul.mubr.f32.gmra.mrb[0].mxu0 %v7558
        %v7560 = vpop.f32.mrb[0].mxu0
        %v7561 = vadd.f32 %v7482, %v7560
        %v7562 = vpop.f32.mrb[0].mxu0
        %7563 = vdwg.mxu0
        %v7564 = vmul.f32 %v7053, %v7053
        %v7565 = vmul.f32 %v7059, %v7059
        %v7566 = vsub.f32 %v7555, %v7564
        %v7567 = vsub.f32 %v7561, %v7565
        %v7568 = vmax.f32 %v7566, 0.0
        %v7569 = vmax.f32 %v7567, 0.0
        %v7570 = vadd.f32 %v7568, 1e-05
        %v7571 = vadd.f32 %v7569, 1e-05
        %v7572 = vrsqrt.pop %v7570
        %v7573 = vrsqrt.pop %v7571
        %7574 = vset.pattern.permute.xlu0 5
        %7575 = vperm.xlu0 %7574, %v400
        %v7576 = vpop.permute.xlu0 %7575
        %7578 = vset.pattern.permute.xlu0 5
        %7579 = vperm.xlu0 %7578, %v401
        %v7580 = vpop.permute.xlu0 %7579
        %v7582 = vmul.f32 %v7572, %v7576
        %v7583 = vmul.f32 %v7573, %v7580
        %v7584 = vmul.f32 %v7053, %v7582
        %v7585 = vmul.f32 %v7059, %v7583
        %7586 = vset.pattern.permute.xlu0 6
        %7587 = vperm.xlu0 %7586, %v400
        %v7588 = vpop.permute.xlu0 %7587
        %7590 = vset.pattern.permute.xlu0 6
        %7591 = vperm.xlu0 %7590, %v401
        %v7592 = vpop.permute.xlu0 %7591
        %v7594 = vsub.f32 %v7588, %v7584
        %v7595 = vsub.f32 %v7592, %v7585
        %v7597 = vsel %vm3481, %v7582, 0
        %v7600 = vsel %vm3481, %v7583, 0
        %7602 = vmatprep.subr.mxu0 0.0
        %v7603 = vand.u32 %v404, 4294901760
        %7604 = vmatpush1.msra.mxu0 %v7603
        %7605 = vmatprep.subr.mxu0 0.0
        %7606 = vmatpush1.msra.mxu0 0.0
        %7607 = vmatprep.subr.mxu0 0.0
        %7608 = vmatpush1.msra.mxu0 0.0
        %7609 = vmatprep.subr.mxu0 0.0
        %7610 = vmatpush1.msra.mxu0 0.0
        %7611 = vmatprep.subr.mxu0 0.0
        %7612 = vmatpush1.msra.mxu0 0.0
        %7613 = vmatprep.subr.mxu0 0.0
        %7614 = vmatpush1.msra.mxu0 0.0
        %7615 = vmatprep.subr.mxu0 0.0
        %7616 = vmatpush1.msra.mxu0 0.0
        %7617 = vmatprep.subr.mxu0 0.0
        %7618 = vmatpush1.msra.mxu0 0.0
        %7619 = vmatprep.subr.mxu0 0.0
        %7620 = vmatpush1.msra.mxu0 0.0
        %7621 = vmatprep.subr.mxu0 0.0
        %7622 = vmatpush1.msra.mxu0 0.0
        %7623 = vmatprep.subr.mxu0 0.0
        %7624 = vmatpush1.msra.mxu0 0.0
        %7625 = vmatprep.subr.mxu0 0.0
        %7626 = vmatpush1.msra.mxu0 0.0
        %7627 = vmatprep.subr.mxu0 0.0
        %7628 = vmatpush1.msra.mxu0 0.0
        %7629 = vmatprep.subr.mxu0 0.0
        %7630 = vmatpush1.msra.mxu0 0.0
        %7631 = vmatprep.subr.mxu0 0.0
        %7632 = vmatpush1.msra.mxu0 0.0
        %7633 = vmatprep.subr.mxu0 0.0
        %7634 = vmatpush1.msra.mxu0 0.0
        %7635 = vmatprep.subr.mxu0 0.0
        %7636 = vmatpush1.msra.mxu0 0.0
        %7637 = vmatprep.subr.mxu0 0.0
        %7638 = vmatpush1.msra.mxu0 0.0
        %7639 = vmatprep.subr.mxu0 0.0
        %7640 = vmatpush1.msra.mxu0 0.0
        %7641 = vmatprep.subr.mxu0 0.0
        %7642 = vmatpush1.msra.mxu0 0.0
        %7643 = vmatprep.subr.mxu0 0.0
        %7644 = vmatpush1.msra.mxu0 0.0
        %7645 = vmatprep.subr.mxu0 0.0
        %7646 = vmatpush1.msra.mxu0 0.0
        %7647 = vmatprep.subr.mxu0 0.0
        %7648 = vmatpush1.msra.mxu0 0.0
        %7649 = vmatprep.subr.mxu0 0.0
        %7650 = vmatpush1.msra.mxu0 0.0
        %7651 = vmatprep.subr.mxu0 0.0
        %7652 = vmatpush1.msra.mxu0 0.0
        %7653 = vmatprep.subr.mxu0 0.0
        %7654 = vmatpush1.msra.mxu0 0.0
        %7655 = vmatprep.subr.mxu0 0.0
        %7656 = vmatpush1.msra.mxu0 0.0
        %7657 = vmatprep.subr.mxu0 0.0
        %7658 = vmatpush1.msra.mxu0 0.0
        %7659 = vmatprep.subr.mxu0 0.0
        %7660 = vmatpush1.msra.mxu0 0.0
        %7661 = vmatprep.subr.mxu0 0.0
        %7662 = vmatpush1.msra.mxu0 0.0
        %7663 = vmatprep.subr.mxu0 0.0
        %7664 = vmatpush1.msra.mxu0 0.0
        %7665 = vmatprep.subr.mxu0 0.0
        %7666 = vmatpush1.msra.mxu0 0.0
        %7667 = vmatprep.mubr.f32.mxu0 0.0
        %v7668 = vand.u32 %v7597, 4294901760
        %v7669 = vsub.f32 %v7597, %v7668
        %v7670 = vand.u32 %v7669, 4294901760
        %v7671 = vsub.f32 %v7669, %v7670
        %v7672 = vand.u32 %v7671, 4294901760
        %7673 = vmatmul.mubr.f32.gmra.mrb[0].mxu0 %v7672
        %v7674 = vpop.f32.mrb[0].mxu0
        %v7675 = vadd.f32 0.0, %v7674
        %v7676 = vpop.f32.mrb[0].mxu0
        %7677 = vmatprep.mubr.f32.mxu0 0.0
        %v7678 = vand.u32 %v7600, 4294901760
        %v7679 = vsub.f32 %v7600, %v7678
        %v7680 = vand.u32 %v7679, 4294901760
        %v7681 = vsub.f32 %v7679, %v7680
        %v7682 = vand.u32 %v7681, 4294901760
        %7683 = vmatmul.mubr.f32.gmra.mrb[0].mxu0 %v7682
        %v7684 = vpop.f32.mrb[0].mxu0
        %v7685 = vadd.f32 0.0, %v7684
        %v7686 = vpop.f32.mrb[0].mxu0
        %7687 = vdwg.mxu0
        %7688 = vmatprep.subr.mxu0 0.0
        %v7689 = vand.u32 %v404, 4294901760
        %v7690 = vsub.f32 %v404, %v7689
        %v7691 = vand.u32 %v7690, 4294901760
        %v7692 = vsub.f32 %v7690, %v7691
        %v7693 = vand.u32 %v7692, 4294901760
        %7694 = vmatpush1.msra.mxu0 %v7693
        %7695 = vmatprep.subr.mxu0 0.0
        %7696 = vmatpush1.msra.mxu0 0.0
        %7697 = vmatprep.subr.mxu0 0.0
        %7698 = vmatpush1.msra.mxu0 0.0
        %7699 = vmatprep.subr.mxu0 0.0
        %7700 = vmatpush1.msra.mxu0 0.0
        %7701 = vmatprep.subr.mxu0 0.0
        %7702 = vmatpush1.msra.mxu0 0.0
        %7703 = vmatprep.subr.mxu0 0.0
        %7704 = vmatpush1.msra.mxu0 0.0
        %7705 = vmatprep.subr.mxu0 0.0
        %7706 = vmatpush1.msra.mxu0 0.0
        %7707 = vmatprep.subr.mxu0 0.0
        %7708 = vmatpush1.msra.mxu0 0.0
        %7709 = vmatprep.subr.mxu0 0.0
        %7710 = vmatpush1.msra.mxu0 0.0
        %7711 = vmatprep.subr.mxu0 0.0
        %7712 = vmatpush1.msra.mxu0 0.0
        %7713 = vmatprep.subr.mxu0 0.0
        %7714 = vmatpush1.msra.mxu0 0.0
        %7715 = vmatprep.subr.mxu0 0.0
        %7716 = vmatpush1.msra.mxu0 0.0
        %7717 = vmatprep.subr.mxu0 0.0
        %7718 = vmatpush1.msra.mxu0 0.0
        %7719 = vmatprep.subr.mxu0 0.0
        %7720 = vmatpush1.msra.mxu0 0.0
        %7721 = vmatprep.subr.mxu0 0.0
        %7722 = vmatpush1.msra.mxu0 0.0
        %7723 = vmatprep.subr.mxu0 0.0
        %7724 = vmatpush1.msra.mxu0 0.0
        %7725 = vmatprep.subr.mxu0 0.0
        %7726 = vmatpush1.msra.mxu0 0.0
        %7727 = vmatprep.subr.mxu0 0.0
        %7728 = vmatpush1.msra.mxu0 0.0
        %7729 = vmatprep.subr.mxu0 0.0
        %7730 = vmatpush1.msra.mxu0 0.0
        %7731 = vmatprep.subr.mxu0 0.0
        %7732 = vmatpush1.msra.mxu0 0.0
        %7733 = vmatprep.subr.mxu0 0.0
        %7734 = vmatpush1.msra.mxu0 0.0
        %7735 = vmatprep.subr.mxu0 0.0
        %7736 = vmatpush1.msra.mxu0 0.0
        %7737 = vmatprep.subr.mxu0 0.0
        %7738 = vmatpush1.msra.mxu0 0.0
        %7739 = vmatprep.subr.mxu0 0.0
        %7740 = vmatpush1.msra.mxu0 0.0
        %7741 = vmatprep.subr.mxu0 0.0
        %7742 = vmatpush1.msra.mxu0 0.0
        %7743 = vmatprep.subr.mxu0 0.0
        %7744 = vmatpush1.msra.mxu0 0.0
        %7745 = vmatprep.subr.mxu0 0.0
        %7746 = vmatpush1.msra.mxu0 0.0
        %7747 = vmatprep.subr.mxu0 0.0
        %7748 = vmatpush1.msra.mxu0 0.0
        %7749 = vmatprep.subr.mxu0 0.0
        %7750 = vmatpush1.msra.mxu0 0.0
        %7751 = vmatprep.subr.mxu0 0.0
        %7752 = vmatpush1.msra.mxu0 0.0
        %7753 = vmatprep.subr.mxu0 0.0
        %7754 = vmatpush1.msra.mxu0 0.0
        %7755 = vmatprep.subr.mxu0 0.0
        %7756 = vmatpush1.msra.mxu0 0.0
        %7757 = vmatprep.mubr.f32.mxu0 0.0
        %v7758 = vand.u32 %v7597, 4294901760
        %7759 = vmatmul.mubr.f32.gmra.mrb[0].mxu0 %v7758
        %v7760 = vpop.f32.mrb[0].mxu0
        %v7761 = vadd.f32 %v7675, %v7760
        %v7762 = vpop.f32.mrb[0].mxu0
        %7763 = vmatprep.mubr.f32.mxu0 0.0
        %v7764 = vand.u32 %v7600, 4294901760
        %7765 = vmatmul.mubr.f32.gmra.mrb[0].mxu0 %v7764
        %v7766 = vpop.f32.mrb[0].mxu0
        %v7767 = vadd.f32 %v7685, %v7766
        %v7768 = vpop.f32.mrb[0].mxu0
        %7769 = vdwg.mxu0
        %7770 = vmatprep.subr.mxu0 0.0
        %v7771 = vand.u32 %v404, 4294901760
        %v7772 = vsub.f32 %v404, %v7771
        %7773 = vmatpush1.msra.mxu0 %v7772
        %7774 = vmatprep.subr.mxu0 0.0
        %7775 = vmatpush1.msra.mxu0 0.0
        %7776 = vmatprep.subr.mxu0 0.0
        %7777 = vmatpush1.msra.mxu0 0.0
        %7778 = vmatprep.subr.mxu0 0.0
        %7779 = vmatpush1.msra.mxu0 0.0
        %7780 = vmatprep.subr.mxu0 0.0
        %7781 = vmatpush1.msra.mxu0 0.0
        %7782 = vmatprep.subr.mxu0 0.0
        %7783 = vmatpush1.msra.mxu0 0.0
        %7784 = vmatprep.subr.mxu0 0.0
        %7785 = vmatpush1.msra.mxu0 0.0
        %7786 = vmatprep.subr.mxu0 0.0
        %7787 = vmatpush1.msra.mxu0 0.0
        %7788 = vmatprep.subr.mxu0 0.0
        %7789 = vmatpush1.msra.mxu0 0.0
        %7790 = vmatprep.subr.mxu0 0.0
        %7791 = vmatpush1.msra.mxu0 0.0
        %7792 = vmatprep.subr.mxu0 0.0
        %7793 = vmatpush1.msra.mxu0 0.0
        %7794 = vmatprep.subr.mxu0 0.0
        %7795 = vmatpush1.msra.mxu0 0.0
        %7796 = vmatprep.subr.mxu0 0.0
        %7797 = vmatpush1.msra.mxu0 0.0
        %7798 = vmatprep.subr.mxu0 0.0
        %7799 = vmatpush1.msra.mxu0 0.0
        %7800 = vmatprep.subr.mxu0 0.0
        %7801 = vmatpush1.msra.mxu0 0.0
        %7802 = vmatprep.subr.mxu0 0.0
        %7803 = vmatpush1.msra.mxu0 0.0
        %7804 = vmatprep.subr.mxu0 0.0
        %7805 = vmatpush1.msra.mxu0 0.0
        %7806 = vmatprep.subr.mxu0 0.0
        %7807 = vmatpush1.msra.mxu0 0.0
        %7808 = vmatprep.subr.mxu0 0.0
        %7809 = vmatpush1.msra.mxu0 0.0
        %7810 = vmatprep.subr.mxu0 0.0
        %7811 = vmatpush1.msra.mxu0 0.0
        %7812 = vmatprep.subr.mxu0 0.0
        %7813 = vmatpush1.msra.mxu0 0.0
        %7814 = vmatprep.subr.mxu0 0.0
        %7815 = vmatpush1.msra.mxu0 0.0
        %7816 = vmatprep.subr.mxu0 0.0
        %7817 = vmatpush1.msra.mxu0 0.0
        %7818 = vmatprep.subr.mxu0 0.0
        %7819 = vmatpush1.msra.mxu0 0.0
        %7820 = vmatprep.subr.mxu0 0.0
        %7821 = vmatpush1.msra.mxu0 0.0
        %7822 = vmatprep.subr.mxu0 0.0
        %7823 = vmatpush1.msra.mxu0 0.0
        %7824 = vmatprep.subr.mxu0 0.0
        %7825 = vmatpush1.msra.mxu0 0.0
        %7826 = vmatprep.subr.mxu0 0.0
        %7827 = vmatpush1.msra.mxu0 0.0
        %7828 = vmatprep.subr.mxu0 0.0
        %7829 = vmatpush1.msra.mxu0 0.0
        %7830 = vmatprep.subr.mxu0 0.0
        %7831 = vmatpush1.msra.mxu0 0.0
        %7832 = vmatprep.subr.mxu0 0.0
        %7833 = vmatpush1.msra.mxu0 0.0
        %7834 = vmatprep.subr.mxu0 0.0
        %7835 = vmatpush1.msra.mxu0 0.0
        %7836 = vmatprep.mubr.f32.mxu0 0.0
        %v7837 = vand.u32 %v7597, 4294901760
        %v7838 = vsub.f32 %v7597, %v7837
        %7839 = vmatmul.mubr.f32.gmra.mrb[0].mxu0 %v7838
        %v7840 = vpop.f32.mrb[0].mxu0
        %v7841 = vadd.f32 %v7761, %v7840
        %v7842 = vpop.f32.mrb[0].mxu0
        %7843 = vmatprep.mubr.f32.mxu0 0.0
        %v7844 = vand.u32 %v7600, 4294901760
        %v7845 = vsub.f32 %v7600, %v7844
        %7846 = vmatmul.mubr.f32.gmra.mrb[0].mxu0 %v7845
        %v7847 = vpop.f32.mrb[0].mxu0
        %v7848 = vadd.f32 %v7767, %v7847
        %v7849 = vpop.f32.mrb[0].mxu0
        %7850 = vdwg.mxu0
        %7851 = vmatprep.subr.mxu0 0.0
        %v7852 = vand.u32 %v404, 4294901760
        %7853 = vmatpush1.msra.mxu0 %v7852
        %7854 = vmatprep.subr.mxu0 0.0
        %7855 = vmatpush1.msra.mxu0 0.0
        %7856 = vmatprep.subr.mxu0 0.0
        %7857 = vmatpush1.msra.mxu0 0.0
        %7858 = vmatprep.subr.mxu0 0.0
        %7859 = vmatpush1.msra.mxu0 0.0
        %7860 = vmatprep.subr.mxu0 0.0
        %7861 = vmatpush1.msra.mxu0 0.0
        %7862 = vmatprep.subr.mxu0 0.0
        %7863 = vmatpush1.msra.mxu0 0.0
        %7864 = vmatprep.subr.mxu0 0.0
        %7865 = vmatpush1.msra.mxu0 0.0
        %7866 = vmatprep.subr.mxu0 0.0
        %7867 = vmatpush1.msra.mxu0 0.0
        %7868 = vmatprep.subr.mxu0 0.0
        %7869 = vmatpush1.msra.mxu0 0.0
        %7870 = vmatprep.subr.mxu0 0.0
        %7871 = vmatpush1.msra.mxu0 0.0
        %7872 = vmatprep.subr.mxu0 0.0
        %7873 = vmatpush1.msra.mxu0 0.0
        %7874 = vmatprep.subr.mxu0 0.0
        %7875 = vmatpush1.msra.mxu0 0.0
        %7876 = vmatprep.subr.mxu0 0.0
        %7877 = vmatpush1.msra.mxu0 0.0
        %7878 = vmatprep.subr.mxu0 0.0
        %7879 = vmatpush1.msra.mxu0 0.0
        %7880 = vmatprep.subr.mxu0 0.0
        %7881 = vmatpush1.msra.mxu0 0.0
        %7882 = vmatprep.subr.mxu0 0.0
        %7883 = vmatpush1.msra.mxu0 0.0
        %7884 = vmatprep.subr.mxu0 0.0
        %7885 = vmatpush1.msra.mxu0 0.0
        %7886 = vmatprep.subr.mxu0 0.0
        %7887 = vmatpush1.msra.mxu0 0.0
        %7888 = vmatprep.subr.mxu0 0.0
        %7889 = vmatpush1.msra.mxu0 0.0
        %7890 = vmatprep.subr.mxu0 0.0
        %7891 = vmatpush1.msra.mxu0 0.0
        %7892 = vmatprep.subr.mxu0 0.0
        %7893 = vmatpush1.msra.mxu0 0.0
        %7894 = vmatprep.subr.mxu0 0.0
        %7895 = vmatpush1.msra.mxu0 0.0
        %7896 = vmatprep.subr.mxu0 0.0
        %7897 = vmatpush1.msra.mxu0 0.0
        %7898 = vmatprep.subr.mxu0 0.0
        %7899 = vmatpush1.msra.mxu0 0.0
        %7900 = vmatprep.subr.mxu0 0.0
        %7901 = vmatpush1.msra.mxu0 0.0
        %7902 = vmatprep.subr.mxu0 0.0
        %7903 = vmatpush1.msra.mxu0 0.0
        %7904 = vmatprep.subr.mxu0 0.0
        %7905 = vmatpush1.msra.mxu0 0.0
        %7906 = vmatprep.subr.mxu0 0.0
        %7907 = vmatpush1.msra.mxu0 0.0
        %7908 = vmatprep.subr.mxu0 0.0
        %7909 = vmatpush1.msra.mxu0 0.0
        %7910 = vmatprep.subr.mxu0 0.0
        %7911 = vmatpush1.msra.mxu0 0.0
        %7912 = vmatprep.subr.mxu0 0.0
        %7913 = vmatpush1.msra.mxu0 0.0
        %7914 = vmatprep.subr.mxu0 0.0
        %7915 = vmatpush1.msra.mxu0 0.0
        %7916 = vmatprep.mubr.f32.mxu0 0.0
        %v7917 = vand.u32 %v7597, 4294901760
        %v7918 = vsub.f32 %v7597, %v7917
        %v7919 = vand.u32 %v7918, 4294901760
        %7920 = vmatmul.mubr.f32.gmra.mrb[0].mxu0 %v7919
        %v7921 = vpop.f32.mrb[0].mxu0
        %v7922 = vadd.f32 %v7841, %v7921
        %v7923 = vpop.f32.mrb[0].mxu0
        %7924 = vmatprep.mubr.f32.mxu0 0.0
        %v7925 = vand.u32 %v7600, 4294901760
        %v7926 = vsub.f32 %v7600, %v7925
        %v7927 = vand.u32 %v7926, 4294901760
        %7928 = vmatmul.mubr.f32.gmra.mrb[0].mxu0 %v7927
        %v7929 = vpop.f32.mrb[0].mxu0
        %v7930 = vadd.f32 %v7848, %v7929
        %v7931 = vpop.f32.mrb[0].mxu0
        %7932 = vdwg.mxu0
        %7933 = vmatprep.subr.mxu0 0.0
        %v7934 = vand.u32 %v404, 4294901760
        %v7935 = vsub.f32 %v404, %v7934
        %v7936 = vand.u32 %v7935, 4294901760
        %7937 = vmatpush1.msra.mxu0 %v7936
        %7938 = vmatprep.subr.mxu0 0.0
        %7939 = vmatpush1.msra.mxu0 0.0
        %7940 = vmatprep.subr.mxu0 0.0
        %7941 = vmatpush1.msra.mxu0 0.0
        %7942 = vmatprep.subr.mxu0 0.0
        %7943 = vmatpush1.msra.mxu0 0.0
        %7944 = vmatprep.subr.mxu0 0.0
        %7945 = vmatpush1.msra.mxu0 0.0
        %7946 = vmatprep.subr.mxu0 0.0
        %7947 = vmatpush1.msra.mxu0 0.0
        %7948 = vmatprep.subr.mxu0 0.0
        %7949 = vmatpush1.msra.mxu0 0.0
        %7950 = vmatprep.subr.mxu0 0.0
        %7951 = vmatpush1.msra.mxu0 0.0
        %7952 = vmatprep.subr.mxu0 0.0
        %7953 = vmatpush1.msra.mxu0 0.0
        %7954 = vmatprep.subr.mxu0 0.0
        %7955 = vmatpush1.msra.mxu0 0.0
        %7956 = vmatprep.subr.mxu0 0.0
        %7957 = vmatpush1.msra.mxu0 0.0
        %7958 = vmatprep.subr.mxu0 0.0
        %7959 = vmatpush1.msra.mxu0 0.0
        %7960 = vmatprep.subr.mxu0 0.0
        %7961 = vmatpush1.msra.mxu0 0.0
        %7962 = vmatprep.subr.mxu0 0.0
        %7963 = vmatpush1.msra.mxu0 0.0
        %7964 = vmatprep.subr.mxu0 0.0
        %7965 = vmatpush1.msra.mxu0 0.0
        %7966 = vmatprep.subr.mxu0 0.0
        %7967 = vmatpush1.msra.mxu0 0.0
        %7968 = vmatprep.subr.mxu0 0.0
        %7969 = vmatpush1.msra.mxu0 0.0
        %7970 = vmatprep.subr.mxu0 0.0
        %7971 = vmatpush1.msra.mxu0 0.0
        %7972 = vmatprep.subr.mxu0 0.0
        %7973 = vmatpush1.msra.mxu0 0.0
        %7974 = vmatprep.subr.mxu0 0.0
        %7975 = vmatpush1.msra.mxu0 0.0
        %7976 = vmatprep.subr.mxu0 0.0
        %7977 = vmatpush1.msra.mxu0 0.0
        %7978 = vmatprep.subr.mxu0 0.0
        %7979 = vmatpush1.msra.mxu0 0.0
        %7980 = vmatprep.subr.mxu0 0.0
        %7981 = vmatpush1.msra.mxu0 0.0
        %7982 = vmatprep.subr.mxu0 0.0
        %7983 = vmatpush1.msra.mxu0 0.0
        %7984 = vmatprep.subr.mxu0 0.0
        %7985 = vmatpush1.msra.mxu0 0.0
        %7986 = vmatprep.subr.mxu0 0.0
        %7987 = vmatpush1.msra.mxu0 0.0
        %7988 = vmatprep.subr.mxu0 0.0
        %7989 = vmatpush1.msra.mxu0 0.0
        %7990 = vmatprep.subr.mxu0 0.0
        %7991 = vmatpush1.msra.mxu0 0.0
        %7992 = vmatprep.subr.mxu0 0.0
        %7993 = vmatpush1.msra.mxu0 0.0
        %7994 = vmatprep.subr.mxu0 0.0
        %7995 = vmatpush1.msra.mxu0 0.0
        %7996 = vmatprep.subr.mxu0 0.0
        %7997 = vmatpush1.msra.mxu0 0.0
        %7998 = vmatprep.subr.mxu0 0.0
        %7999 = vmatpush1.msra.mxu0 0.0
        %8000 = vmatprep.mubr.f32.mxu0 0.0
        %v8001 = vand.u32 %v7597, 4294901760
        %8002 = vmatmul.mubr.f32.gmra.mrb[0].mxu0 %v8001
        %v8003 = vpop.f32.mrb[0].mxu0
        %v8004 = vadd.f32 %v7922, %v8003
        %v8005 = vpop.f32.mrb[0].mxu0
        %8006 = vmatprep.mubr.f32.mxu0 0.0
        %v8007 = vand.u32 %v7600, 4294901760
        %8008 = vmatmul.mubr.f32.gmra.mrb[0].mxu0 %v8007
        %v8009 = vpop.f32.mrb[0].mxu0
        %v8010 = vadd.f32 %v7930, %v8009
        %v8011 = vpop.f32.mrb[0].mxu0
        %8012 = vdwg.mxu0
        %8013 = vmatprep.subr.mxu0 0.0
        %v8014 = vand.u32 %v404, 4294901760
        %8015 = vmatpush1.msra.mxu0 %v8014
        %8016 = vmatprep.subr.mxu0 0.0
        %8017 = vmatpush1.msra.mxu0 0.0
        %8018 = vmatprep.subr.mxu0 0.0
        %8019 = vmatpush1.msra.mxu0 0.0
        %8020 = vmatprep.subr.mxu0 0.0
        %8021 = vmatpush1.msra.mxu0 0.0
        %8022 = vmatprep.subr.mxu0 0.0
        %8023 = vmatpush1.msra.mxu0 0.0
        %8024 = vmatprep.subr.mxu0 0.0
        %8025 = vmatpush1.msra.mxu0 0.0
        %8026 = vmatprep.subr.mxu0 0.0
        %8027 = vmatpush1.msra.mxu0 0.0
        %8028 = vmatprep.subr.mxu0 0.0
        %8029 = vmatpush1.msra.mxu0 0.0
        %8030 = vmatprep.subr.mxu0 0.0
        %8031 = vmatpush1.msra.mxu0 0.0
        %8032 = vmatprep.subr.mxu0 0.0
        %8033 = vmatpush1.msra.mxu0 0.0
        %8034 = vmatprep.subr.mxu0 0.0
        %8035 = vmatpush1.msra.mxu0 0.0
        %8036 = vmatprep.subr.mxu0 0.0
        %8037 = vmatpush1.msra.mxu0 0.0
        %8038 = vmatprep.subr.mxu0 0.0
        %8039 = vmatpush1.msra.mxu0 0.0
        %8040 = vmatprep.subr.mxu0 0.0
        %8041 = vmatpush1.msra.mxu0 0.0
        %8042 = vmatprep.subr.mxu0 0.0
        %8043 = vmatpush1.msra.mxu0 0.0
        %8044 = vmatprep.subr.mxu0 0.0
        %8045 = vmatpush1.msra.mxu0 0.0
        %8046 = vmatprep.subr.mxu0 0.0
        %8047 = vmatpush1.msra.mxu0 0.0
        %8048 = vmatprep.subr.mxu0 0.0
        %8049 = vmatpush1.msra.mxu0 0.0
        %8050 = vmatprep.subr.mxu0 0.0
        %8051 = vmatpush1.msra.mxu0 0.0
        %8052 = vmatprep.subr.mxu0 0.0
        %8053 = vmatpush1.msra.mxu0 0.0
        %8054 = vmatprep.subr.mxu0 0.0
        %8055 = vmatpush1.msra.mxu0 0.0
        %8056 = vmatprep.subr.mxu0 0.0
        %8057 = vmatpush1.msra.mxu0 0.0
        %8058 = vmatprep.subr.mxu0 0.0
        %8059 = vmatpush1.msra.mxu0 0.0
        %8060 = vmatprep.subr.mxu0 0.0
        %8061 = vmatpush1.msra.mxu0 0.0
        %8062 = vmatprep.subr.mxu0 0.0
        %8063 = vmatpush1.msra.mxu0 0.0
        %8064 = vmatprep.subr.mxu0 0.0
        %8065 = vmatpush1.msra.mxu0 0.0
        %8066 = vmatprep.subr.mxu0 0.0
        %8067 = vmatpush1.msra.mxu0 0.0
        %8068 = vmatprep.subr.mxu0 0.0
        %8069 = vmatpush1.msra.mxu0 0.0
        %8070 = vmatprep.subr.mxu0 0.0
        %8071 = vmatpush1.msra.mxu0 0.0
        %8072 = vmatprep.subr.mxu0 0.0
        %8073 = vmatpush1.msra.mxu0 0.0
        %8074 = vmatprep.subr.mxu0 0.0
        %8075 = vmatpush1.msra.mxu0 0.0
        %8076 = vmatprep.subr.mxu0 0.0
        %8077 = vmatpush1.msra.mxu0 0.0
        %8078 = vmatprep.mubr.f32.mxu0 0.0
        %v8079 = vand.u32 %v7597, 4294901760
        %8080 = vmatmul.mubr.f32.gmra.mrb[0].mxu0 %v8079
        %v8081 = vpop.f32.mrb[0].mxu0
        %v8082 = vadd.f32 %v8004, %v8081
        %v8083 = vpop.f32.mrb[0].mxu0
        %8084 = vmatprep.mubr.f32.mxu0 0.0
        %v8085 = vand.u32 %v7600, 4294901760
        %8086 = vmatmul.mubr.f32.gmra.mrb[0].mxu0 %v8085
        %v8087 = vpop.f32.mrb[0].mxu0
        %v8088 = vadd.f32 %v8010, %v8087
        %v8089 = vpop.f32.mrb[0].mxu0
        %8090 = vdwg.mxu0
        %v8091 = vmul.f32 %v5181, %v8082
        %v8092 = vmul.f32 %v5187, %v8088
        %v8094 = vsel %vm3481, %v7594, 0
        %v8097 = vsel %vm3481, %v7595, 0
        %8099 = vmatprep.subr.mxu0 0.0
        %v8100 = vand.u32 %v404, 4294901760
        %8101 = vmatpush1.msra.mxu0 %v8100
        %8102 = vmatprep.subr.mxu0 0.0
        %8103 = vmatpush1.msra.mxu0 0.0
        %8104 = vmatprep.subr.mxu0 0.0
        %8105 = vmatpush1.msra.mxu0 0.0
        %8106 = vmatprep.subr.mxu0 0.0
        %8107 = vmatpush1.msra.mxu0 0.0
        %8108 = vmatprep.subr.mxu0 0.0
        %8109 = vmatpush1.msra.mxu0 0.0
        %8110 = vmatprep.subr.mxu0 0.0
        %8111 = vmatpush1.msra.mxu0 0.0
        %8112 = vmatprep.subr.mxu0 0.0
        %8113 = vmatpush1.msra.mxu0 0.0
        %8114 = vmatprep.subr.mxu0 0.0
        %8115 = vmatpush1.msra.mxu0 0.0
        %8116 = vmatprep.subr.mxu0 0.0
        %8117 = vmatpush1.msra.mxu0 0.0
        %8118 = vmatprep.subr.mxu0 0.0
        %8119 = vmatpush1.msra.mxu0 0.0
        %8120 = vmatprep.subr.mxu0 0.0
        %8121 = vmatpush1.msra.mxu0 0.0
        %8122 = vmatprep.subr.mxu0 0.0
        %8123 = vmatpush1.msra.mxu0 0.0
        %8124 = vmatprep.subr.mxu0 0.0
        %8125 = vmatpush1.msra.mxu0 0.0
        %8126 = vmatprep.subr.mxu0 0.0
        %8127 = vmatpush1.msra.mxu0 0.0
        %8128 = vmatprep.subr.mxu0 0.0
        %8129 = vmatpush1.msra.mxu0 0.0
        %8130 = vmatprep.subr.mxu0 0.0
        %8131 = vmatpush1.msra.mxu0 0.0
        %8132 = vmatprep.subr.mxu0 0.0
        %8133 = vmatpush1.msra.mxu0 0.0
        %8134 = vmatprep.subr.mxu0 0.0
        %8135 = vmatpush1.msra.mxu0 0.0
        %8136 = vmatprep.subr.mxu0 0.0
        %8137 = vmatpush1.msra.mxu0 0.0
        %8138 = vmatprep.subr.mxu0 0.0
        %8139 = vmatpush1.msra.mxu0 0.0
        %8140 = vmatprep.subr.mxu0 0.0
        %8141 = vmatpush1.msra.mxu0 0.0
        %8142 = vmatprep.subr.mxu0 0.0
        %8143 = vmatpush1.msra.mxu0 0.0
        %8144 = vmatprep.subr.mxu0 0.0
        %8145 = vmatpush1.msra.mxu0 0.0
        %8146 = vmatprep.subr.mxu0 0.0
        %8147 = vmatpush1.msra.mxu0 0.0
        %8148 = vmatprep.subr.mxu0 0.0
        %8149 = vmatpush1.msra.mxu0 0.0
        %8150 = vmatprep.subr.mxu0 0.0
        %8151 = vmatpush1.msra.mxu0 0.0
        %8152 = vmatprep.subr.mxu0 0.0
        %8153 = vmatpush1.msra.mxu0 0.0
        %8154 = vmatprep.subr.mxu0 0.0
        %8155 = vmatpush1.msra.mxu0 0.0
        %8156 = vmatprep.subr.mxu0 0.0
        %8157 = vmatpush1.msra.mxu0 0.0
        %8158 = vmatprep.subr.mxu0 0.0
        %8159 = vmatpush1.msra.mxu0 0.0
        %8160 = vmatprep.subr.mxu0 0.0
        %8161 = vmatpush1.msra.mxu0 0.0
        %8162 = vmatprep.subr.mxu0 0.0
        %8163 = vmatpush1.msra.mxu0 0.0
        %8164 = vmatprep.mubr.f32.mxu0 0.0
        %v8165 = vand.u32 %v8094, 4294901760
        %v8166 = vsub.f32 %v8094, %v8165
        %v8167 = vand.u32 %v8166, 4294901760
        %v8168 = vsub.f32 %v8166, %v8167
        %v8169 = vand.u32 %v8168, 4294901760
        %8170 = vmatmul.mubr.f32.gmra.mrb[0].mxu0 %v8169
        %v8171 = vpop.f32.mrb[0].mxu0
        %v8172 = vadd.f32 0.0, %v8171
        %v8173 = vpop.f32.mrb[0].mxu0
        %8174 = vmatprep.mubr.f32.mxu0 0.0
        %v8175 = vand.u32 %v8097, 4294901760
        %v8176 = vsub.f32 %v8097, %v8175
        %v8177 = vand.u32 %v8176, 4294901760
        %v8178 = vsub.f32 %v8176, %v8177
        %v8179 = vand.u32 %v8178, 4294901760
        %8180 = vmatmul.mubr.f32.gmra.mrb[0].mxu0 %v8179
        %v8181 = vpop.f32.mrb[0].mxu0
        %v8182 = vadd.f32 0.0, %v8181
        %v8183 = vpop.f32.mrb[0].mxu0
        %8184 = vdwg.mxu0
        %8185 = vmatprep.subr.mxu0 0.0
        %v8186 = vand.u32 %v404, 4294901760
        %v8187 = vsub.f32 %v404, %v8186
        %v8188 = vand.u32 %v8187, 4294901760
        %v8189 = vsub.f32 %v8187, %v8188
        %v8190 = vand.u32 %v8189, 4294901760
        %8191 = vmatpush1.msra.mxu0 %v8190
        %8192 = vmatprep.subr.mxu0 0.0
        %8193 = vmatpush1.msra.mxu0 0.0
        %8194 = vmatprep.subr.mxu0 0.0
        %8195 = vmatpush1.msra.mxu0 0.0
        %8196 = vmatprep.subr.mxu0 0.0
        %8197 = vmatpush1.msra.mxu0 0.0
        %8198 = vmatprep.subr.mxu0 0.0
        %8199 = vmatpush1.msra.mxu0 0.0
        %8200 = vmatprep.subr.mxu0 0.0
        %8201 = vmatpush1.msra.mxu0 0.0
        %8202 = vmatprep.subr.mxu0 0.0
        %8203 = vmatpush1.msra.mxu0 0.0
        %8204 = vmatprep.subr.mxu0 0.0
        %8205 = vmatpush1.msra.mxu0 0.0
        %8206 = vmatprep.subr.mxu0 0.0
        %8207 = vmatpush1.msra.mxu0 0.0
        %8208 = vmatprep.subr.mxu0 0.0
        %8209 = vmatpush1.msra.mxu0 0.0
        %8210 = vmatprep.subr.mxu0 0.0
        %8211 = vmatpush1.msra.mxu0 0.0
        %8212 = vmatprep.subr.mxu0 0.0
        %8213 = vmatpush1.msra.mxu0 0.0
        %8214 = vmatprep.subr.mxu0 0.0
        %8215 = vmatpush1.msra.mxu0 0.0
        %8216 = vmatprep.subr.mxu0 0.0
        %8217 = vmatpush1.msra.mxu0 0.0
        %8218 = vmatprep.subr.mxu0 0.0
        %8219 = vmatpush1.msra.mxu0 0.0
        %8220 = vmatprep.subr.mxu0 0.0
        %8221 = vmatpush1.msra.mxu0 0.0
        %8222 = vmatprep.subr.mxu0 0.0
        %8223 = vmatpush1.msra.mxu0 0.0
        %8224 = vmatprep.subr.mxu0 0.0
        %8225 = vmatpush1.msra.mxu0 0.0
        %8226 = vmatprep.subr.mxu0 0.0
        %8227 = vmatpush1.msra.mxu0 0.0
        %8228 = vmatprep.subr.mxu0 0.0
        %8229 = vmatpush1.msra.mxu0 0.0
        %8230 = vmatprep.subr.mxu0 0.0
        %8231 = vmatpush1.msra.mxu0 0.0
        %8232 = vmatprep.subr.mxu0 0.0
        %8233 = vmatpush1.msra.mxu0 0.0
        %8234 = vmatprep.subr.mxu0 0.0
        %8235 = vmatpush1.msra.mxu0 0.0
        %8236 = vmatprep.subr.mxu0 0.0
        %8237 = vmatpush1.msra.mxu0 0.0
        %8238 = vmatprep.subr.mxu0 0.0
        %8239 = vmatpush1.msra.mxu0 0.0
        %8240 = vmatprep.subr.mxu0 0.0
        %8241 = vmatpush1.msra.mxu0 0.0
        %8242 = vmatprep.subr.mxu0 0.0
        %8243 = vmatpush1.msra.mxu0 0.0
        %8244 = vmatprep.subr.mxu0 0.0
        %8245 = vmatpush1.msra.mxu0 0.0
        %8246 = vmatprep.subr.mxu0 0.0
        %8247 = vmatpush1.msra.mxu0 0.0
        %8248 = vmatprep.subr.mxu0 0.0
        %8249 = vmatpush1.msra.mxu0 0.0
        %8250 = vmatprep.subr.mxu0 0.0
        %8251 = vmatpush1.msra.mxu0 0.0
        %8252 = vmatprep.subr.mxu0 0.0
        %8253 = vmatpush1.msra.mxu0 0.0
        %8254 = vmatprep.mubr.f32.mxu0 0.0
        %v8255 = vand.u32 %v8094, 4294901760
        %8256 = vmatmul.mubr.f32.gmra.mrb[0].mxu0 %v8255
        %v8257 = vpop.f32.mrb[0].mxu0
        %v8258 = vadd.f32 %v8172, %v8257
        %v8259 = vpop.f32.mrb[0].mxu0
        %8260 = vmatprep.mubr.f32.mxu0 0.0
        %v8261 = vand.u32 %v8097, 4294901760
        %8262 = vmatmul.mubr.f32.gmra.mrb[0].mxu0 %v8261
        %v8263 = vpop.f32.mrb[0].mxu0
        %v8264 = vadd.f32 %v8182, %v8263
        %v8265 = vpop.f32.mrb[0].mxu0
        %8266 = vdwg.mxu0
        %8267 = vmatprep.subr.mxu0 0.0
        %v8268 = vand.u32 %v404, 4294901760
        %v8269 = vsub.f32 %v404, %v8268
        %8270 = vmatpush1.msra.mxu0 %v8269
        %8271 = vmatprep.subr.mxu0 0.0
        %8272 = vmatpush1.msra.mxu0 0.0
        %8273 = vmatprep.subr.mxu0 0.0
        %8274 = vmatpush1.msra.mxu0 0.0
        %8275 = vmatprep.subr.mxu0 0.0
        %8276 = vmatpush1.msra.mxu0 0.0
        %8277 = vmatprep.subr.mxu0 0.0
        %8278 = vmatpush1.msra.mxu0 0.0
        %8279 = vmatprep.subr.mxu0 0.0
        %8280 = vmatpush1.msra.mxu0 0.0
        %8281 = vmatprep.subr.mxu0 0.0
        %8282 = vmatpush1.msra.mxu0 0.0
        %8283 = vmatprep.subr.mxu0 0.0
        %8284 = vmatpush1.msra.mxu0 0.0
        %8285 = vmatprep.subr.mxu0 0.0
        %8286 = vmatpush1.msra.mxu0 0.0
        %8287 = vmatprep.subr.mxu0 0.0
        %8288 = vmatpush1.msra.mxu0 0.0
        %8289 = vmatprep.subr.mxu0 0.0
        %8290 = vmatpush1.msra.mxu0 0.0
        %8291 = vmatprep.subr.mxu0 0.0
        %8292 = vmatpush1.msra.mxu0 0.0
        %8293 = vmatprep.subr.mxu0 0.0
        %8294 = vmatpush1.msra.mxu0 0.0
        %8295 = vmatprep.subr.mxu0 0.0
        %8296 = vmatpush1.msra.mxu0 0.0
        %8297 = vmatprep.subr.mxu0 0.0
        %8298 = vmatpush1.msra.mxu0 0.0
        %8299 = vmatprep.subr.mxu0 0.0
        %8300 = vmatpush1.msra.mxu0 0.0
        %8301 = vmatprep.subr.mxu0 0.0
        %8302 = vmatpush1.msra.mxu0 0.0
        %8303 = vmatprep.subr.mxu0 0.0
        %8304 = vmatpush1.msra.mxu0 0.0
        %8305 = vmatprep.subr.mxu0 0.0
        %8306 = vmatpush1.msra.mxu0 0.0
        %8307 = vmatprep.subr.mxu0 0.0
        %8308 = vmatpush1.msra.mxu0 0.0
        %8309 = vmatprep.subr.mxu0 0.0
        %8310 = vmatpush1.msra.mxu0 0.0
        %8311 = vmatprep.subr.mxu0 0.0
        %8312 = vmatpush1.msra.mxu0 0.0
        %8313 = vmatprep.subr.mxu0 0.0
        %8314 = vmatpush1.msra.mxu0 0.0
        %8315 = vmatprep.subr.mxu0 0.0
        %8316 = vmatpush1.msra.mxu0 0.0
        %8317 = vmatprep.subr.mxu0 0.0
        %8318 = vmatpush1.msra.mxu0 0.0
        %8319 = vmatprep.subr.mxu0 0.0
        %8320 = vmatpush1.msra.mxu0 0.0
        %8321 = vmatprep.subr.mxu0 0.0
        %8322 = vmatpush1.msra.mxu0 0.0
        %8323 = vmatprep.subr.mxu0 0.0
        %8324 = vmatpush1.msra.mxu0 0.0
        %8325 = vmatprep.subr.mxu0 0.0
        %8326 = vmatpush1.msra.mxu0 0.0
        %8327 = vmatprep.subr.mxu0 0.0
        %8328 = vmatpush1.msra.mxu0 0.0
        %8329 = vmatprep.subr.mxu0 0.0
        %8330 = vmatpush1.msra.mxu0 0.0
        %8331 = vmatprep.subr.mxu0 0.0
        %8332 = vmatpush1.msra.mxu0 0.0
        %8333 = vmatprep.mubr.f32.mxu0 0.0
        %v8334 = vand.u32 %v8094, 4294901760
        %v8335 = vsub.f32 %v8094, %v8334
        %8336 = vmatmul.mubr.f32.gmra.mrb[0].mxu0 %v8335
        %v8337 = vpop.f32.mrb[0].mxu0
        %v8338 = vadd.f32 %v8258, %v8337
        %v8339 = vpop.f32.mrb[0].mxu0
        %8340 = vmatprep.mubr.f32.mxu0 0.0
        %v8341 = vand.u32 %v8097, 4294901760
        %v8342 = vsub.f32 %v8097, %v8341
        %8343 = vmatmul.mubr.f32.gmra.mrb[0].mxu0 %v8342
        %v8344 = vpop.f32.mrb[0].mxu0
        %v8345 = vadd.f32 %v8264, %v8344
        %v8346 = vpop.f32.mrb[0].mxu0
        %8347 = vdwg.mxu0
        %8348 = vmatprep.subr.mxu0 0.0
        %v8349 = vand.u32 %v404, 4294901760
        %8350 = vmatpush1.msra.mxu0 %v8349
        %8351 = vmatprep.subr.mxu0 0.0
        %8352 = vmatpush1.msra.mxu0 0.0
        %8353 = vmatprep.subr.mxu0 0.0
        %8354 = vmatpush1.msra.mxu0 0.0
        %8355 = vmatprep.subr.mxu0 0.0
        %8356 = vmatpush1.msra.mxu0 0.0
        %8357 = vmatprep.subr.mxu0 0.0
        %8358 = vmatpush1.msra.mxu0 0.0
        %8359 = vmatprep.subr.mxu0 0.0
        %8360 = vmatpush1.msra.mxu0 0.0
        %8361 = vmatprep.subr.mxu0 0.0
        %8362 = vmatpush1.msra.mxu0 0.0
        %8363 = vmatprep.subr.mxu0 0.0
        %8364 = vmatpush1.msra.mxu0 0.0
        %8365 = vmatprep.subr.mxu0 0.0
        %8366 = vmatpush1.msra.mxu0 0.0
        %8367 = vmatprep.subr.mxu0 0.0
        %8368 = vmatpush1.msra.mxu0 0.0
        %8369 = vmatprep.subr.mxu0 0.0
        %8370 = vmatpush1.msra.mxu0 0.0
        %8371 = vmatprep.subr.mxu0 0.0
        %8372 = vmatpush1.msra.mxu0 0.0
        %8373 = vmatprep.subr.mxu0 0.0
        %8374 = vmatpush1.msra.mxu0 0.0
        %8375 = vmatprep.subr.mxu0 0.0
        %8376 = vmatpush1.msra.mxu0 0.0
        %8377 = vmatprep.subr.mxu0 0.0
        %8378 = vmatpush1.msra.mxu0 0.0
        %8379 = vmatprep.subr.mxu0 0.0
        %8380 = vmatpush1.msra.mxu0 0.0
        %8381 = vmatprep.subr.mxu0 0.0
        %8382 = vmatpush1.msra.mxu0 0.0
        %8383 = vmatprep.subr.mxu0 0.0
        %8384 = vmatpush1.msra.mxu0 0.0
        %8385 = vmatprep.subr.mxu0 0.0
        %8386 = vmatpush1.msra.mxu0 0.0
        %8387 = vmatprep.subr.mxu0 0.0
        %8388 = vmatpush1.msra.mxu0 0.0
        %8389 = vmatprep.subr.mxu0 0.0
        %8390 = vmatpush1.msra.mxu0 0.0
        %8391 = vmatprep.subr.mxu0 0.0
        %8392 = vmatpush1.msra.mxu0 0.0
        %8393 = vmatprep.subr.mxu0 0.0
        %8394 = vmatpush1.msra.mxu0 0.0
        %8395 = vmatprep.subr.mxu0 0.0
        %8396 = vmatpush1.msra.mxu0 0.0
        %8397 = vmatprep.subr.mxu0 0.0
        %8398 = vmatpush1.msra.mxu0 0.0
        %8399 = vmatprep.subr.mxu0 0.0
        %8400 = vmatpush1.msra.mxu0 0.0
        %8401 = vmatprep.subr.mxu0 0.0
        %8402 = vmatpush1.msra.mxu0 0.0
        %8403 = vmatprep.subr.mxu0 0.0
        %8404 = vmatpush1.msra.mxu0 0.0
        %8405 = vmatprep.subr.mxu0 0.0
        %8406 = vmatpush1.msra.mxu0 0.0
        %8407 = vmatprep.subr.mxu0 0.0
        %8408 = vmatpush1.msra.mxu0 0.0
        %8409 = vmatprep.subr.mxu0 0.0
        %8410 = vmatpush1.msra.mxu0 0.0
        %8411 = vmatprep.subr.mxu0 0.0
        %8412 = vmatpush1.msra.mxu0 0.0
        %8413 = vmatprep.mubr.f32.mxu0 0.0
        %v8414 = vand.u32 %v8094, 4294901760
        %v8415 = vsub.f32 %v8094, %v8414
        %v8416 = vand.u32 %v8415, 4294901760
        %8417 = vmatmul.mubr.f32.gmra.mrb[0].mxu0 %v8416
        %v8418 = vpop.f32.mrb[0].mxu0
        %v8419 = vadd.f32 %v8338, %v8418
        %v8420 = vpop.f32.mrb[0].mxu0
        %8421 = vmatprep.mubr.f32.mxu0 0.0
        %v8422 = vand.u32 %v8097, 4294901760
        %v8423 = vsub.f32 %v8097, %v8422
        %v8424 = vand.u32 %v8423, 4294901760
        %8425 = vmatmul.mubr.f32.gmra.mrb[0].mxu0 %v8424
        %v8426 = vpop.f32.mrb[0].mxu0
        %v8427 = vadd.f32 %v8345, %v8426
        %v8428 = vpop.f32.mrb[0].mxu0
        %8429 = vdwg.mxu0
        %8430 = vmatprep.subr.mxu0 0.0
        %v8431 = vand.u32 %v404, 4294901760
        %v8432 = vsub.f32 %v404, %v8431
        %v8433 = vand.u32 %v8432, 4294901760
        %8434 = vmatpush1.msra.mxu0 %v8433
        %8435 = vmatprep.subr.mxu0 0.0
        %8436 = vmatpush1.msra.mxu0 0.0
        %8437 = vmatprep.subr.mxu0 0.0
        %8438 = vmatpush1.msra.mxu0 0.0
        %8439 = vmatprep.subr.mxu0 0.0
        %8440 = vmatpush1.msra.mxu0 0.0
        %8441 = vmatprep.subr.mxu0 0.0
        %8442 = vmatpush1.msra.mxu0 0.0
        %8443 = vmatprep.subr.mxu0 0.0
        %8444 = vmatpush1.msra.mxu0 0.0
        %8445 = vmatprep.subr.mxu0 0.0
        %8446 = vmatpush1.msra.mxu0 0.0
        %8447 = vmatprep.subr.mxu0 0.0
        %8448 = vmatpush1.msra.mxu0 0.0
        %8449 = vmatprep.subr.mxu0 0.0
        %8450 = vmatpush1.msra.mxu0 0.0
        %8451 = vmatprep.subr.mxu0 0.0
        %8452 = vmatpush1.msra.mxu0 0.0
        %8453 = vmatprep.subr.mxu0 0.0
        %8454 = vmatpush1.msra.mxu0 0.0
        %8455 = vmatprep.subr.mxu0 0.0
        %8456 = vmatpush1.msra.mxu0 0.0
        %8457 = vmatprep.subr.mxu0 0.0
        %8458 = vmatpush1.msra.mxu0 0.0
        %8459 = vmatprep.subr.mxu0 0.0
        %8460 = vmatpush1.msra.mxu0 0.0
        %8461 = vmatprep.subr.mxu0 0.0
        %8462 = vmatpush1.msra.mxu0 0.0
        %8463 = vmatprep.subr.mxu0 0.0
        %8464 = vmatpush1.msra.mxu0 0.0
        %8465 = vmatprep.subr.mxu0 0.0
        %8466 = vmatpush1.msra.mxu0 0.0
        %8467 = vmatprep.subr.mxu0 0.0
        %8468 = vmatpush1.msra.mxu0 0.0
        %8469 = vmatprep.subr.mxu0 0.0
        %8470 = vmatpush1.msra.mxu0 0.0
        %8471 = vmatprep.subr.mxu0 0.0
        %8472 = vmatpush1.msra.mxu0 0.0
        %8473 = vmatprep.subr.mxu0 0.0
        %8474 = vmatpush1.msra.mxu0 0.0
        %8475 = vmatprep.subr.mxu0 0.0
        %8476 = vmatpush1.msra.mxu0 0.0
        %8477 = vmatprep.subr.mxu0 0.0
        %8478 = vmatpush1.msra.mxu0 0.0
        %8479 = vmatprep.subr.mxu0 0.0
        %8480 = vmatpush1.msra.mxu0 0.0
        %8481 = vmatprep.subr.mxu0 0.0
        %8482 = vmatpush1.msra.mxu0 0.0
        %8483 = vmatprep.subr.mxu0 0.0
        %8484 = vmatpush1.msra.mxu0 0.0
        %8485 = vmatprep.subr.mxu0 0.0
        %8486 = vmatpush1.msra.mxu0 0.0
        %8487 = vmatprep.subr.mxu0 0.0
        %8488 = vmatpush1.msra.mxu0 0.0
        %8489 = vmatprep.subr.mxu0 0.0
        %8490 = vmatpush1.msra.mxu0 0.0
        %8491 = vmatprep.subr.mxu0 0.0
        %8492 = vmatpush1.msra.mxu0 0.0
        %8493 = vmatprep.subr.mxu0 0.0
        %8494 = vmatpush1.msra.mxu0 0.0
        %8495 = vmatprep.subr.mxu0 0.0
        %8496 = vmatpush1.msra.mxu0 0.0
        %8497 = vmatprep.mubr.f32.mxu0 0.0
        %v8498 = vand.u32 %v8094, 4294901760
        %8499 = vmatmul.mubr.f32.gmra.mrb[0].mxu0 %v8498
        %v8500 = vpop.f32.mrb[0].mxu0
        %v8501 = vadd.f32 %v8419, %v8500
        %v8502 = vpop.f32.mrb[0].mxu0
        %8503 = vmatprep.mubr.f32.mxu0 0.0
        %v8504 = vand.u32 %v8097, 4294901760
        %8505 = vmatmul.mubr.f32.gmra.mrb[0].mxu0 %v8504
        %v8506 = vpop.f32.mrb[0].mxu0
        %v8507 = vadd.f32 %v8427, %v8506
        %v8508 = vpop.f32.mrb[0].mxu0
        %8509 = vdwg.mxu0
        %8510 = vmatprep.subr.mxu0 0.0
        %v8511 = vand.u32 %v404, 4294901760
        %8512 = vmatpush1.msra.mxu0 %v8511
        %8513 = vmatprep.subr.mxu0 0.0
        %8514 = vmatpush1.msra.mxu0 0.0
        %8515 = vmatprep.subr.mxu0 0.0
        %8516 = vmatpush1.msra.mxu0 0.0
        %8517 = vmatprep.subr.mxu0 0.0
        %8518 = vmatpush1.msra.mxu0 0.0
        %8519 = vmatprep.subr.mxu0 0.0
        %8520 = vmatpush1.msra.mxu0 0.0
        %8521 = vmatprep.subr.mxu0 0.0
        %8522 = vmatpush1.msra.mxu0 0.0
        %8523 = vmatprep.subr.mxu0 0.0
        %8524 = vmatpush1.msra.mxu0 0.0
        %8525 = vmatprep.subr.mxu0 0.0
        %8526 = vmatpush1.msra.mxu0 0.0
        %8527 = vmatprep.subr.mxu0 0.0
        %8528 = vmatpush1.msra.mxu0 0.0
        %8529 = vmatprep.subr.mxu0 0.0
        %8530 = vmatpush1.msra.mxu0 0.0
        %8531 = vmatprep.subr.mxu0 0.0
        %8532 = vmatpush1.msra.mxu0 0.0
        %8533 = vmatprep.subr.mxu0 0.0
        %8534 = vmatpush1.msra.mxu0 0.0
        %8535 = vmatprep.subr.mxu0 0.0
        %8536 = vmatpush1.msra.mxu0 0.0
        %8537 = vmatprep.subr.mxu0 0.0
        %8538 = vmatpush1.msra.mxu0 0.0
        %8539 = vmatprep.subr.mxu0 0.0
        %8540 = vmatpush1.msra.mxu0 0.0
        %8541 = vmatprep.subr.mxu0 0.0
        %8542 = vmatpush1.msra.mxu0 0.0
        %8543 = vmatprep.subr.mxu0 0.0
        %8544 = vmatpush1.msra.mxu0 0.0
        %8545 = vmatprep.subr.mxu0 0.0
        %8546 = vmatpush1.msra.mxu0 0.0
        %8547 = vmatprep.subr.mxu0 0.0
        %8548 = vmatpush1.msra.mxu0 0.0
        %8549 = vmatprep.subr.mxu0 0.0
        %8550 = vmatpush1.msra.mxu0 0.0
        %8551 = vmatprep.subr.mxu0 0.0
        %8552 = vmatpush1.msra.mxu0 0.0
        %8553 = vmatprep.subr.mxu0 0.0
        %8554 = vmatpush1.msra.mxu0 0.0
        %8555 = vmatprep.subr.mxu0 0.0
        %8556 = vmatpush1.msra.mxu0 0.0
        %8557 = vmatprep.subr.mxu0 0.0
        %8558 = vmatpush1.msra.mxu0 0.0
        %8559 = vmatprep.subr.mxu0 0.0
        %8560 = vmatpush1.msra.mxu0 0.0
        %8561 = vmatprep.subr.mxu0 0.0
        %8562 = vmatpush1.msra.mxu0 0.0
        %8563 = vmatprep.subr.mxu0 0.0
        %8564 = vmatpush1.msra.mxu0 0.0
        %8565 = vmatprep.subr.mxu0 0.0
        %8566 = vmatpush1.msra.mxu0 0.0
        %8567 = vmatprep.subr.mxu0 0.0
        %8568 = vmatpush1.msra.mxu0 0.0
        %8569 = vmatprep.subr.mxu0 0.0
        %8570 = vmatpush1.msra.mxu0 0.0
        %8571 = vmatprep.subr.mxu0 0.0
        %8572 = vmatpush1.msra.mxu0 0.0
        %8573 = vmatprep.subr.mxu0 0.0
        %8574 = vmatpush1.msra.mxu0 0.0
        %8575 = vmatprep.mubr.f32.mxu0 0.0
        %v8576 = vand.u32 %v8094, 4294901760
        %8577 = vmatmul.mubr.f32.gmra.mrb[0].mxu0 %v8576
        %v8578 = vpop.f32.mrb[0].mxu0
        %v8579 = vadd.f32 %v8501, %v8578
        %v8580 = vpop.f32.mrb[0].mxu0
        %8581 = vmatprep.mubr.f32.mxu0 0.0
        %v8582 = vand.u32 %v8097, 4294901760
        %8583 = vmatmul.mubr.f32.gmra.mrb[0].mxu0 %v8582
        %v8584 = vpop.f32.mrb[0].mxu0
        %v8585 = vadd.f32 %v8507, %v8584
        %v8586 = vpop.f32.mrb[0].mxu0
        %8587 = vdwg.mxu0
        %v8588 = vadd.f32 %v8091, %v8579
        %v8589 = vadd.f32 %v8092, %v8585
        %v8590 = vmin.f32 %v8588, 20.0
        %v8591 = vmin.f32 %v8589, 20.0
        %v8592 = vmul.f32 %v8590, 1.442695
        %v8593 = vpow.pop %v8592
        %v8594 = vmul.f32 %v8591, 1.442695
        %v8595 = vpow.pop %v8594
        %v8596 = vadd.f32 %v8593, 2.0
        %v8597 = vadd.f32 %v8595, 2.0
        %v8598 = vmul.f32 %v8593, %v8596
        %v8599 = vmul.f32 %v8595, %v8597
        %v8600 = vmul.f32 %v8588, %v8598
        %v8601 = vmul.f32 %v8589, %v8599
        %v8602 = vadd.f32 %v8598, 2.0
        %v8603 = vadd.f32 %v8599, 2.0
        %v8604 = vrcp.pop %v8602
        %v8605 = vmul.f32 %v8600, %v8604
        %v8606 = vrcp.pop %v8603
        %v8607 = vmul.f32 %v8601, %v8606
        %v8608 = vadd.f32 %v8605, %v1066
        %v8609 = vadd.f32 %v8607, %v1067
        %8610 = vst [vmem:[%s399] sm:$0xff] %v8608
        %8611 = vst [vmem:[%s399 + $0x8] sm:$0xff] %v8609
        %s8612 = sand.u32 %s205, 1
        %s8613 = sand.u32 %s205, 1
        %s8614 = smul.addr %s8613, 16
        %s8615 = scalar_lea.vmem [#allocation4], %s8614
        // Predicated region
        $region129: #{residual_temporal_block.1} parent=119 // pred_check
          %p8616 = pneg %p215
        $region130: #{residual_temporal_block.1} parent=119 // pred_check_branch
          %8618 = sbr.rel (%p8616) target = $region132
        $region131: #{residual_temporal_block.1} parent=119 // pred_region
          %s8619 = smul.addr %s19, 8
          %s8620 = scalar_lea.vmem %s8, %s8619
          // Predicated region
          $region133: #{residual_temporal_block.1} parent=131 // pred_check
            _
          $region134: #{residual_temporal_block.1} parent=131 // pred_check_branch
            %8622 = sbr.rel (0) target = $region136
          $region135: #{residual_temporal_block.1} parent=131 // pred_region
            // Predicated region
            $region137: #{residual_temporal_block.1} parent=135 // pred_check
              _
            $region138: #{residual_temporal_block.1} parent=135 // pred_check_branch
              %8624 = sbr.rel (0) target = $region140
            $region139: #{residual_temporal_block.1} parent=135 // pred_region
              // Predicated region
              $region152: #{residual_temporal_block.1} parent=139 // pred_check
                _
              $region153: #{residual_temporal_block.1} parent=139 // pred_check_branch
                %8641 = sbr.rel (0) target = $region155
              $region154: #{residual_temporal_block.1} parent=139 // pred_region
                loop: start=0, step=1, limit=1
                $region156: #{residual_temporal_block.1} parent=154 // loop_pre_header
                  _
                $region157: #{residual_temporal_block.1} parent=154 // loop_header
                  %s8643 = sphi 0, %s8647
                  %p8644 = scmp.ge.s32.totalorder %s8643, 1
                  %s8648 = sphi %s8615, %s8615
                  %s8649 = sphi %s8620, %s8620
                $region158: #{residual_temporal_block.1} parent=154 // loop_header_branch
                  %8646 = sbr.rel (%p8644) target = $region162
                $region159: #{residual_temporal_block.1} parent=154 // loop_body
                  %v8650 = vld [vmem:[%s8648] sm:$0xff]
                  %8651 = vst [vmem:[%s8649] sm:$0xff] %v8650
                  %v8652 = vld [vmem:[%s8648 + $0x8] sm:$0xff]
                  %8653 = vst [vmem:[%s8649 + $0x10] sm:$0xff] %v8652
                $region160: #{residual_temporal_block.1} parent=154 // loop_footer
                  %s8647 = sadd.s32 1, %s8643
                $region161: #{residual_temporal_block.1} parent=154 // loop_footer_branch
                  %8642 = sbr.rel target = $region157
                $region162: #{residual_temporal_block.1} parent=154 // loop_exit
                  _
              $region155: #{residual_temporal_block.1} parent=139 // pred_fallthru
                _
              // Predicated region
              $region163: #{residual_temporal_block.1} parent=139 // pred_check
                _
              $region164: #{residual_temporal_block.1} parent=139 // pred_check_branch
                %8655 = sbr.rel target = $region166
              $region165: #{residual_temporal_block.1} parent=139 // pred_region
                _
              $region166: #{residual_temporal_block.1} parent=139 // pred_fallthru
                _
            $region140: #{residual_temporal_block.1} parent=135 // pred_fallthru
              _
            // Predicated region
            $region141: #{residual_temporal_block.1} parent=135 // pred_check
              _
            $region142: #{residual_temporal_block.1} parent=135 // pred_check_branch
              %8626 = sbr.rel target = $region144
            $region143: #{residual_temporal_block.1} parent=135 // pred_region
              loop: start=0, step=1, limit=1
              $region145: #{residual_temporal_block.1} parent=143 // loop_pre_header
                _
              $region146: #{residual_temporal_block.1} parent=143 // loop_header
                %s8629 = sphi 0, %s8633
                %p8630 = scmp.ge.s32.totalorder %s8629, 1
                %s8634 = sphi %s8615, %s8615
                %s8635 = sphi %s8620, %s8620
              $region147: #{residual_temporal_block.1} parent=143 // loop_header_branch
                %8632 = sbr.rel (%p8630) target = $region151
              $region148: #{residual_temporal_block.1} parent=143 // loop_body
                %v8636 = vld [vmem:[%s8634] sm:$0xff]
                %8637 = vst [vmem:[%s8635] sm:$0xff] %v8636
                %v8638 = vld [vmem:[%s8634 + $0x8] sm:$0xff]
                %8639 = vst [vmem:[%s8635 + $0x10] sm:$0xff] %v8638
              $region149: #{residual_temporal_block.1} parent=143 // loop_footer
                %s8633 = sadd.s32 1, %s8629
              $region150: #{residual_temporal_block.1} parent=143 // loop_footer_branch
                %8628 = sbr.rel target = $region146
              $region151: #{residual_temporal_block.1} parent=143 // loop_exit
                _
            $region144: #{residual_temporal_block.1} parent=135 // pred_fallthru
              _
          $region136: #{residual_temporal_block.1} parent=131 // pred_fallthru
            _
          %8656 = vnop
        $region132: #{residual_temporal_block.1} parent=119 // pred_fallthru
          _
      $region120: #{residual_temporal_block.1} parent=5 // pred_fallthru
        _
      %p8657 = scmp.le.s32.totalorder 2, %s14
      // Predicated region
      $region167: #{residual_temporal_block.1} parent=5 // pred_check
        %p8658 = pneg %p8657
      $region168: #{residual_temporal_block.1} parent=5 // pred_check_branch
        %8660 = sbr.rel (%p8658) target = $region170
      $region169: #{residual_temporal_block.1} parent=5 // pred_region
        %s8661 = ssub.s32 %s14, 2
        // Predicated region
        $region171: #{residual_temporal_block.1} parent=169 // pred_check
          %p8662 = pneg %p221
        $region172: #{residual_temporal_block.1} parent=169 // pred_check_branch
          %8664 = sbr.rel (%p8662) target = $region174
        $region173: #{residual_temporal_block.1} parent=169 // pred_region
          %s8665 = sand.u32 %s206, 1
          %s8666 = sand.u32 %s206, 1
          %s8667 = smul.addr %s8666, 16
          %s8668 = scalar_lea.vmem [#allocation4], %s8667
        $region174: #{residual_temporal_block.1} parent=169 // pred_fallthru
          _
      $region170: #{residual_temporal_block.1} parent=5 // pred_fallthru
        _
    $region6: #{residual_temporal_block.1} parent=1 // loop_footer
      %s18 = sadd.s32 1, %s14
    $region7: #{residual_temporal_block.1} parent=1 // loop_footer_branch
      %13 = sbr.rel target = $region3
    $region8: #{residual_temporal_block.1} parent=1 // loop_exit
      _

</llo_original>
